<compile_context>
chip_gen: v7x
topology: tpu7x:2x2x1
jax: 0.10.0
libtpu: 0.0.40
codegen_flags: <defaults>
</compile_context>

<pallas_src>
import jax
import jax.numpy as jnp
import numpy as np
from jax import lax
from jax.experimental import pallas as pl
from jax.experimental.pallas import tpu as pltpu

NUM_LAYERS = 2


def _round_up(x, m):
    return ((x + m - 1) // m) * m


def _largest_tile(dim, preferred):
    for t in preferred:
        if dim % t == 0:
            return t
    return dim


def _pad_gate_cols(x, H, Hp):
    """Zero-pad the last (4H-wide, [i|f|g|o]-blocked) axis so each gate block is Hp wide."""
    if Hp == H:
        return x
    pads = [(0, 0)] * (x.ndim - 1) + [(0, Hp - H)]
    parts = [jnp.pad(x[..., k * H:(k + 1) * H], pads) for k in range(4)]
    return jnp.concatenate(parts, axis=-1)


# ----------------------------------------------------------------------------
# Recurrent kernel: TS decode steps per grid iteration (grid=(Tp//TS,), serial).
# ----------------------------------------------------------------------------
def rnn_attn_chunk_kernel(att1_ref, mask_ref, img_ref, cap_gates_ref,
                          w_cat_ref, w_full_ref, w_att_ref, w_hh0_ref, w_ih1_ref,
                          b_g0_ref, b_g1_ref, h_init_ref, c_init_ref,
                          h_out_ref, alpha_ref,
                          h_scr, c_scr):
    TS = cap_gates_ref.shape[0]
    Hp = h_scr.shape[-1]
    Ap = att1_ref.shape[-1]

    # --- initialize LSTM state once (init_h/init_c precomputed outside) ---
    @pl.when(pl.program_id(0) == 0)
    def _init():
        h_scr[0] = h_init_ref[...]
        h_scr[1] = h_init_ref[...]
        c_scr[0] = c_init_ref[...]
        c_scr[1] = c_init_ref[...]

    # --- timestep-invariant loads hoisted above the unrolled chunk loop ---
    att1 = att1_ref[...]                                   # [B, Lp, Ap] f32
    mask = mask_ref[...]                                   # [1, Lp]     f32 (0 / -1e30)
    img = img_ref[...].astype(jnp.float32)                 # [B, Lp, F]
    w_full_b = w_full_ref[...][0][None, None, :]           # [1, 1, Ap]
    w_cat = w_cat_ref[...]                                 # [Hp, Ap+4Hp] bf16
    w_att = w_att_ref[...]                                 # [F, 4Hp]     bf16
    w_hh0 = w_hh0_ref[...]                                 # [Hp, 4Hp]    bf16
    w_ih1 = w_ih1_ref[...]                                 # [Hp, 4Hp]    bf16
    b_g0 = b_g0_ref[...]                                   # [1, 4Hp]     f32
    b_g1 = b_g1_ref[...]                                   # [1, 4Hp]     f32

    def lstm_gates(gates, c_prev):
        # Gate slices fall on 128-lane boundaries (Hp multiple of 128).
        i = jax.nn.sigmoid(gates[:, 0 * Hp:1 * Hp])
        f = jax.nn.sigmoid(gates[:, 1 * Hp:2 * Hp])
        g = jnp.tanh(gates[:, 2 * Hp:3 * Hp])
        o = jax.nn.sigmoid(gates[:, 3 * Hp:4 * Hp])
        c_new = f * c_prev + i * g
        h_new = o * jnp.tanh(c_new)
        return h_new, c_new

    def step(ts, carry):
        h0, c0, h1, c1 = carry

        # One fused matmul on the previous top-layer hidden:
        #   [attention decoder projection | layer-1 recurrent gate term]
        fused = jnp.dot(h1.astype(jnp.bfloat16), w_cat,
                        preferred_element_type=jnp.float32)            # [B, Ap+4Hp]
        att2 = fused[:, :Ap]
        hh1_term = fused[:, Ap:]
        # Layer-0 recurrent gate term: independent of the alpha->attn_feat chain.
        hh0_term = jnp.dot(h0.astype(jnp.bfloat16), w_hh0,
                           preferred_element_type=jnp.float32)          # [B, 4Hp]

        # --- Attention_Net (att1 + both biases precomputed; full_att bias cancels) ---
        s = att1 + att2[:, None, :]                                     # [B, Lp, Ap]
        s = jnp.where(s > 0, s, 0.2 * s)                                # LeakyReLU(0.2)
        att = jnp.sum(s * w_full_b, axis=-1) + mask                     # [B, Lp]
        att = att - jnp.max(att, axis=-1, keepdims=True)
        e = jnp.exp(att)
        # exact reciprocal (review correctness note: approx alpha drifts over T)
        alpha = e * pl.reciprocal(jnp.sum(e, axis=-1, keepdims=True), approx=False)
        # TODO(synk): at production L*F use the MXU: jnp.einsum('bl,blf->bf', ...)
        attn_feat = jnp.sum(img * alpha[:, :, None], axis=1)            # [B, F]

        # --- LSTM layer 0 (caption contribution streamed; embed() fused into w_att) ---
        gates0 = (cap_gates_ref[ts].astype(jnp.float32)
                  + jnp.dot(attn_feat.astype(jnp.bfloat16), w_att,
                            preferred_element_type=jnp.float32)
                  + hh0_term + b_g0)
        h0n, c0n = lstm_gates(gates0, c0)

        # --- LSTM layer 1 ---
        gates1 = (jnp.dot(h0n.astype(jnp.bfloat16), w_ih1,
                          preferred_element_type=jnp.float32)
                  + hh1_term + b_g1)
        h1n, c1n = lstm_gates(gates1, c1)

        h_out_ref[ts] = h1n
        alpha_ref[ts] = alpha
        return (h0n, c0n, h1n, c1n)

    carry0 = (h_scr[0], c_scr[0], h_scr[1], c_scr[1])
    h0, c0, h1, c1 = lax.fori_loop(0, TS, step, carry0, unroll=True)
    h_scr[0] = h0
    c_scr[0] = c0
    h_scr[1] = h1
    c_scr[1] = c1


def build_recurrent_call(B, Tp, TS, Lp, F, Ap, Hp):
    G = 4 * Hp

    def const(shape):
        return pl.BlockSpec(shape, lambda g, _s=len(shape): (0,) * _s)

    in_specs = [
        const((B, Lp, Ap)),                            # att1_pre (biases folded), f32
        const((1, Lp)),                                # additive softmax mask, f32
        const((B, Lp, F)),                             # img, bf16
        pl.BlockSpec((TS, B, G), lambda g: (g, 0, 0)),  # caption gate contribution, bf16
        const((Hp, Ap + G)),                           # [W_dec | W_hh1], bf16
        const((1, Ap)),                                # w_full, f32
        const((F, G)),                                 # W_att (embed fused), bf16
        const((Hp, G)),                                # W_hh0, bf16
        const((Hp, G)),                                # W_ih1, bf16
        const((1, G)),                                 # b_gates0, f32
        const((1, G)),                                 # b_gates1, f32
        const((B, Hp)),                                # h_init, f32
        const((B, Hp)),                                # c_init, f32
    ]
    out_specs = [
        pl.BlockSpec((TS, B, Hp), lambda g: (g, 0, 0)),  # top-layer hidden per step
        pl.BlockSpec((TS, B, Lp), lambda g: (g, 0, 0)),  # alpha per step
    ]
    return pl.pallas_call(
        rnn_attn_chunk_kernel,
        out_shape=(jax.ShapeDtypeStruct((Tp, B, Hp), jnp.float32),
                   jax.ShapeDtypeStruct((Tp, B, Lp), jnp.float32)),
        grid_spec=pltpu.PrefetchScalarGridSpec(
            num_scalar_prefetch=0,
            grid=(Tp // TS,),
            in_specs=in_specs,
            out_specs=out_specs,
            scratch_shapes=[pltpu.VMEM((NUM_LAYERS, B, Hp), jnp.float32),
                            pltpu.VMEM((NUM_LAYERS, B, Hp), jnp.float32)]),
        compiler_params=pltpu.CompilerParams(dimension_semantics=("arbitrary",)),
    )


# ----------------------------------------------------------------------------
# Vocab projection: standard tiled matmul over flattened [Tp*B, Hp] hidden states.
# ----------------------------------------------------------------------------
def vocab_matmul_kernel(x_ref, w_ref, b_ref, o_ref):
    o_ref[...] = (jnp.dot(x_ref[...], w_ref[...], preferred_element_type=jnp.float32)
                  + b_ref[...])


def build_vocab_proj_call(M, Hp, Vp, TM, TN):
    return pl.pallas_call(
        vocab_matmul_kernel,
        out_shape=jax.ShapeDtypeStruct((M, Vp), jnp.float32),
        grid_spec=pltpu.PrefetchScalarGridSpec(
            num_scalar_prefetch=0,
            grid=(M // TM, Vp // TN),
            in_specs=[pl.BlockSpec((TM, Hp), lambda i, j: (i, 0)),
                      pl.BlockSpec((Hp, TN), lambda i, j: (0, j)),
                      pl.BlockSpec((1, TN), lambda i, j: (0, j))],
            out_specs=pl.BlockSpec((TM, TN), lambda i, j: (i, j))),
        compiler_params=pltpu.CompilerParams(
            dimension_semantics=("parallel", "parallel")),
    )


# ----------------------------------------------------------------------------
# Parameters & host-side preparation (plain XLA glue, one-time)
# ----------------------------------------------------------------------------
def init_params(key, F, E, A, H, V):
    names_shapes = [
        ("embeddings", (V, E)),
        ("w_enc", (A, F)), ("b_enc", (1, A)),
        ("w_dec", (A, H)), ("b_dec", (1, A)),
        ("w_full", (1, A)), ("b_full", (1, 1)),
        ("w_inith", (H, F)), ("b_inith", (1, H)),
        ("w_initc", (H, F)), ("b_initc", (1, H)),
        ("w_embed", (E, F)), ("b_embed", (1, E)),
        ("w_lin", (V, H)), ("b_lin", (1, V)),
        ("w_ih0", (4 * H, 2 * E)), ("w_hh0", (4 * H, H)),
        ("b_ih0", (1, 4 * H)), ("b_hh0", (1, 4 * H)),
        ("w_ih1", (4 * H, H)), ("w_hh1", (4 * H, H)),
        ("b_ih1", (1, 4 * H)), ("b_hh1", (1, 4 * H)),
    ]
    keys = jax.random.split(key, len(names_shapes))
    return {n: (0.1 * jax.random.normal(k, s, dtype=jnp.float32))
            for (n, s), k in zip(names_shapes, keys)}


def prepare_recurrent_inputs(params, cnn_feature, image_caption, TS):
    """One-time precomputation + padding of all timestep-invariant quantities."""
    with jax.default_matmul_precision("highest"):
        B, F, L = cnn_feature.shape
        T = image_caption.shape[1]
        E = params["embeddings"].shape[1]
        A = params["w_enc"].shape[0]
        H = params["w_dec"].shape[1]
        Ap, Hp, Lp = _round_up(A, 128), _round_up(H, 128), _round_up(L, 128)
        Tp = _round_up(T, TS)

        img = jnp.transpose(cnn_feature, (0, 2, 1))                       # [B, L, F]

        # Timestep-invariant encoder attention projection; fold BOTH attention biases in.
        att1_pre = (jnp.einsum('blf,af->bla', img, params["w_enc"])
                    + params["b_enc"] + params["b_dec"])                  # [B, L, A]
        att1_pre = jnp.pad(att1_pre, ((0, 0), (0, Lp - L), (0, Ap - A)))

        # Additive softmax mask: padded image positions get -1e30 -> alpha == 0 there.
        att_mask = jnp.pad(jnp.zeros((1, L), jnp.float32),
                           ((0, 0), (0, Lp - L)), constant_values=-1e30)

        img_p = jnp.pad(img, ((0, 0), (0, Lp - L), (0, 0))).astype(jnp.bfloat16)

        # Caption-embedding contribution to layer-0 gates, time-major, gate-block padded.
        cap_emb = params["embeddings"][image_caption]                     # [B, T, E]
        w_ih0_cap = params["w_ih0"][:, :E]                                # [4H, E]
        w_ih0_att = params["w_ih0"][:, E:]                                # [4H, E]
        cap_gates = jnp.einsum('tbe,ge->tbg',
                               jnp.transpose(cap_emb, (1, 0, 2)), w_ih0_cap)   # [T, B, 4H]
        cap_gates = _pad_gate_cols(cap_gates, H, Hp)
        cap_gates = jnp.pad(cap_gates,
                            ((0, Tp - T), (0, 0), (0, 0))).astype(jnp.bfloat16)

        # embed() fused into the attention half of w_ih0 (F*4H < F*E + E*4H here).
        w_att = params["w_embed"].T @ w_ih0_att.T                         # [F, 4H]
        w_att = _pad_gate_cols(w_att, H, Hp).astype(jnp.bfloat16)         # [F, 4Hp]
        b_g0 = (params["b_ih0"] + params["b_hh0"]
                + params["b_embed"] @ w_ih0_att.T)                        # [1, 4H]
        b_g0 = _pad_gate_cols(b_g0, H, Hp)
        b_g1 = _pad_gate_cols(params["b_ih1"] + params["b_hh1"], H, Hp)

        def pad_rec_weight(w):     # [4H, H_in] torch layout -> [Hp, 4Hp]
            wt = _pad_gate_cols(w.T, H, Hp)                               # [H, 4Hp]
            return jnp.pad(wt, ((0, Hp - H), (0, 0)))

        w_hh0 = pad_rec_weight(params["w_hh0"]).astype(jnp.bfloat16)
        w_ih1 = pad_rec_weight(params["w_ih1"]).astype(jnp.bfloat16)

        # Concatenate the two matmuls that share the previous top-layer hidden:
        # one [B,Hp] x [Hp, Ap+4Hp] dot yields [att2 | layer-1 recurrent gate term].
        w_dec_t = jnp.pad(params["w_dec"].T, ((0, Hp - H), (0, Ap - A)))
        w_hh1 = pad_rec_weight(params["w_hh1"])
        w_cat = jnp.concatenate([w_dec_t, w_hh1], axis=1).astype(jnp.bfloat16)

        w_full = jnp.pad(params["w_full"], ((0, 0), (0, Ap - A)))         # [1, Ap]

        # init_h / init_c (timestep-invariant), zero-padded on H.
        mean_feat = jnp.mean(cnn_feature, axis=2)                         # [B, F]
        h_init = jnp.pad(mean_feat @ params["w_inith"].T + params["b_inith"],
                         ((0, 0), (0, Hp - H)))
        c_init = jnp.pad(mean_feat @ params["w_initc"].T + params["b_initc"],
                         ((0, 0), (0, Hp - H)))

        args = [att1_pre, att_mask, img_p, cap_gates,
                w_cat, w_full, w_att, w_hh0, w_ih1,
                b_g0, b_g1, h_init, c_init]
        dims = dict(B=B, F=F, T=T, Tp=Tp, TS=TS, Lp=Lp, Ap=Ap, Hp=Hp, L=L, H=H)
    return args, dims


def rnn_attn_forward(params, cnn_feature, image_caption, caption_size, chunk=4):
    """Mirrors RNN_Attn.forward. cnn_feature: [B, F, L], image_caption: [B, T] int32."""
    B, F, L = cnn_feature.shape
    T = image_caption.shape[1]
    assert all(int(c) == T for c in caption_size), "kernel assumes caption_size == T for all"
    V = params["w_lin"].shape[0]
    H = params["w_dec"].shape[1]
    Vp = _round_up(V, 128)

    args, d = prepare_recurrent_inputs(params, cnn_feature, image_caption, chunk)
    rec_call = build_recurrent_call(d["B"], d["Tp"], d["TS"], d["Lp"], d["F"],
                                    d["Ap"], d["Hp"])
    h_tbh, alphas_tbl = rec_call(*args)                                   # [Tp,B,Hp], [Tp,B,Lp]

    # Vocab projection: lane-dense tiled matmul over flattened hidden states.
    M = d["Tp"] * B
    h_flat = h_tbh.reshape(M, d["Hp"]).astype(jnp.bfloat16)
    w_lin_p = jnp.pad(params["w_lin"].T,
                      ((0, d["Hp"] - H), (0, Vp - V))).astype(jnp.bfloat16)
    b_lin_p = jnp.pad(params["b_lin"], ((0, 0), (0, Vp - V)))
    TM = _largest_tile(M, (256, 128, 64, 32, 16, 8))
    TN = _largest_tile(Vp, (256, 128))
    preds = build_vocab_proj_call(M, d["Hp"], Vp, TM, TN)(h_flat, w_lin_p, b_lin_p)

    preds_tbv = preds.reshape(d["Tp"], B, Vp)[:T, :, :V]                  # [T, B, V]
    # pack_padded_sequence(batch_first=True) with all lengths == T: time-major concat.
    packed = preds_tbv.reshape(T * B, V)
    alphas = jnp.transpose(alphas_tbl[:T, :, :L], (1, 0, 2))              # [B, T, L]
    return packed, alphas


# ----------------------------------------------------------------------------
# Pure-JAX reference (sanity check)
# ----------------------------------------------------------------------------
def reference_forward(p, cnn_feature, image_caption):
    with jax.default_matmul_precision("highest"):
        B, F, L = cnn_feature.shape
        T = image_caption.shape[1]
        H = p["w_dec"].shape[1]
        V = p["w_lin"].shape[0]
        img = jnp.transpose(cnn_feature, (0, 2, 1))
        cap_emb = p["embeddings"][image_caption]
        mean_feat = jnp.mean(cnn_feature, axis=2)
        h = jnp.tile((mean_feat @ p["w_inith"].T + p["b_inith"])[None], (NUM_LAYERS, 1, 1))
        c = jnp.tile((mean_feat @ p["w_initc"].T + p["b_initc"])[None], (NUM_LAYERS, 1, 1))
        preds, alphas = [], []
        for t in range(T):
            h_last = h[-1]
            att1 = img @ p["w_enc"].T + p["b_enc"]
            att2 = h_last @ p["w_dec"].T + p["b_dec"]
            s = att1 + att2[:, None, :]
            s = jnp.where(s > 0, s, 0.2 * s)
            att = jnp.sum(s * p["w_full"][0][None, None, :], axis=-1) + p["b_full"][0, 0]
            alpha = jax.nn.softmax(att, axis=1)
            attn_feat = jnp.sum(img * alpha[:, :, None], axis=1)
            emb_att = attn_feat @ p["w_embed"].T + p["b_embed"]
            x = jnp.concatenate([cap_emb[:, t, :], emb_att], axis=1)
            new_h, new_c = [], []
            inp = x
            for l, (wi, wh, bi, bh) in enumerate(
                    [(p["w_ih0"], p["w_hh0"], p["b_ih0"], p["b_hh0"]),
                     (p["w_ih1"], p["w_hh1"], p["b_ih1"], p["b_hh1"])]):
                gates = inp @ wi.T + h[l] @ wh.T + bi + bh
                i = jax.nn.sigmoid(gates[:, 0 * H:1 * H])
                f = jax.nn.sigmoid(gates[:, 1 * H:2 * H])
                g = jnp.tanh(gates[:, 2 * H:3 * H])
                o = jax.nn.sigmoid(gates[:, 3 * H:4 * H])
                cl = f * c[l] + i * g
                hl = o * jnp.tanh(cl)
                new_h.append(hl)
                new_c.append(cl)
                inp = hl
            h = jnp.stack(new_h)
            c = jnp.stack(new_c)
            preds.append(h[-1] @ p["w_lin"].T + p["b_lin"])
            alphas.append(alpha)
        preds_tbv = jnp.stack(preds)                                      # [T, B, V]
        alphas_btl = jnp.transpose(jnp.stack(alphas), (1, 0, 2))
        return preds_tbv.reshape(T * B, V), alphas_btl


if __name__ == "__main__":
    # Small shapes consistent with the module.
    B, T = 2, 8
    F = 8          # nos_filters
    L = 16         # cnn spatial positions (cnn_feature.size(2))
    E = 16         # embed_dim
    A = 16         # attention_dim
    H = 32         # num_hidden_units
    V = 32         # vocab_size
    TS = 4         # timesteps per grid step (chunked recurrence; 2 grid steps)

    key = jax.random.PRNGKey(0)
    k_params, k_cnn, k_cap = jax.random.split(key, 3)
    params = init_params(k_params, F, E, A, H, V)

    cnn_feature = jax.random.normal(k_cnn, (B, F, L), dtype=jnp.float32)
    image_caption = jax.random.randint(k_cap, (B, T), 0, V, dtype=jnp.int32)
    caption_size = [T] * B

    packed, alphas = rnn_attn_forward(params, cnn_feature, image_caption,
                                      caption_size, chunk=TS)
    packed = jax.block_until_ready(packed)
    alphas = jax.block_until_ready(alphas)

    ref_packed, ref_alphas = reference_forward(params, cnn_feature, image_caption)
    np.testing.assert_allclose(np.asarray(packed), np.asarray(ref_packed),
                               rtol=2e-2, atol=2e-2)
    np.testing.assert_allclose(np.asarray(alphas), np.asarray(ref_alphas),
                               rtol=2e-2, atol=2e-2)
    assert packed.shape == (T * B, V) and alphas.shape == (B, T, L)

    print("KERNEL_OK")
</pallas_src>

<mosaic_0001>
module attributes {stable_mosaic.version = 11 : i64} {
  func.func @rnn_attn_chunk_kernel(%arg0: i32, %arg1: memref<2x128x128xf32, #tpu.memory_space<vmem>>, %arg2: memref<1x128xf32, #tpu.memory_space<vmem>>, %arg3: memref<2x128x8xbf16, #tpu.memory_space<vmem>>, %arg4: memref<4x2x512xbf16, #tpu.memory_space<vmem>>, %arg5: memref<128x640xbf16, #tpu.memory_space<vmem>>, %arg6: memref<1x128xf32, #tpu.memory_space<vmem>>, %arg7: memref<8x512xbf16, #tpu.memory_space<vmem>>, %arg8: memref<128x512xbf16, #tpu.memory_space<vmem>>, %arg9: memref<128x512xbf16, #tpu.memory_space<vmem>>, %arg10: memref<1x512xf32, #tpu.memory_space<vmem>>, %arg11: memref<1x512xf32, #tpu.memory_space<vmem>>, %arg12: memref<2x128xf32, #tpu.memory_space<vmem>>, %arg13: memref<2x128xf32, #tpu.memory_space<vmem>>, %arg14: memref<4x2x128xf32, #tpu.memory_space<vmem>>, %arg15: memref<4x2x128xf32, #tpu.memory_space<vmem>>, %arg16: memref<2x2x128xf32, #tpu.memory_space<vmem>>, %arg17: memref<2x2x128xf32, #tpu.memory_space<vmem>>) attributes {dimension_semantics = [#tpu.dimension_semantics<arbitrary>], iteration_bounds = array<i64: 2>, scalar_prefetch = 0 : i64, scratch_operands = 2 : i64, tpu.core_type = #tpu.core_type<tc>, window_params = [{pipeline_mode = #tpu.pipeline_mode<synchronous>, transform_indices = @transform_0, window_bounds = array<i64: 2, 128, 128>}, {pipeline_mode = #tpu.pipeline_mode<synchronous>, transform_indices = @transform_1, window_bounds = array<i64: 1, 128>}, {pipeline_mode = #tpu.pipeline_mode<synchronous>, transform_indices = @transform_2, window_bounds = array<i64: 2, 128, 8>}, {transform_indices = @transform_3, window_bounds = array<i64: 4, 2, 512>}, {pipeline_mode = #tpu.pipeline_mode<synchronous>, transform_indices = @transform_4, window_bounds = array<i64: 128, 640>}, {pipeline_mode = #tpu.pipeline_mode<synchronous>, transform_indices = @transform_5, window_bounds = array<i64: 1, 128>}, {pipeline_mode = #tpu.pipeline_mode<synchronous>, transform_indices = @transform_6, window_bounds = array<i64: 8, 512>}, {pipeline_mode = #tpu.pipeline_mode<synchronous>, transform_indices = @transform_7, window_bounds = array<i64: 128, 512>}, {pipeline_mode = #tpu.pipeline_mode<synchronous>, transform_indices = @transform_8, window_bounds = array<i64: 128, 512>}, {pipeline_mode = #tpu.pipeline_mode<synchronous>, transform_indices = @transform_9, window_bounds = array<i64: 1, 512>}, {pipeline_mode = #tpu.pipeline_mode<synchronous>, transform_indices = @transform_10, window_bounds = array<i64: 1, 512>}, {pipeline_mode = #tpu.pipeline_mode<synchronous>, transform_indices = @transform_11, window_bounds = array<i64: 2, 128>}, {pipeline_mode = #tpu.pipeline_mode<synchronous>, transform_indices = @transform_12, window_bounds = array<i64: 2, 128>}, {transform_indices = @transform_13, window_bounds = array<i64: 4, 2, 128>}, {transform_indices = @transform_14, window_bounds = array<i64: 4, 2, 128>}]} {
    %c0_i32 = arith.constant 0 : i32
    %0 = arith.cmpi eq, %arg0, %c0_i32 : i32
    %1 = arith.extui %0 : i1 to i32
    %c0_i32_0 = arith.constant 0 : i32
    %2 = arith.cmpi ne, %1, %c0_i32_0 : i32
    scf.if %2 {
      %c0_133 = arith.constant 0 : index
      %c0_134 = arith.constant 0 : index
      %460 = vector.load %arg12[%c0_133, %c0_134] : memref<2x128xf32, #tpu.memory_space<vmem>>, vector<2x128xf32>
      %c0_135 = arith.constant 0 : index
      %c0_136 = arith.constant 0 : index
      %c0_137 = arith.constant 0 : index
      %461 = vector.load %arg16[%c0_135, %c0_136, %c0_137] : memref<2x2x128xf32, #tpu.memory_space<vmem>>, vector<1x2x128xf32>
      %462 = vector.shape_cast %461 : vector<1x2x128xf32> to vector<2x128xf32>
      %463 = vector.shape_cast %460 : vector<2x128xf32> to vector<1x2x128xf32>
      tpu.vector_store %arg16[%c0_135, %c0_136, %c0_137], %463 {strides = array<i32>} : memref<2x2x128xf32, #tpu.memory_space<vmem>>, vector<1x2x128xf32>,
      %c0_138 = arith.constant 0 : index
      %c0_139 = arith.constant 0 : index
      %464 = vector.load %arg12[%c0_138, %c0_139] : memref<2x128xf32, #tpu.memory_space<vmem>>, vector<2x128xf32>
      %c1_140 = arith.constant 1 : index
      %c0_141 = arith.constant 0 : index
      %c0_142 = arith.constant 0 : index
      %465 = vector.load %arg16[%c1_140, %c0_141, %c0_142] : memref<2x2x128xf32, #tpu.memory_space<vmem>>, vector<1x2x128xf32>
      %466 = vector.shape_cast %465 : vector<1x2x128xf32> to vector<2x128xf32>
      %467 = vector.shape_cast %464 : vector<2x128xf32> to vector<1x2x128xf32>
      tpu.vector_store %arg16[%c1_140, %c0_141, %c0_142], %467 {strides = array<i32>} : memref<2x2x128xf32, #tpu.memory_space<vmem>>, vector<1x2x128xf32>,
      %c0_143 = arith.constant 0 : index
      %c0_144 = arith.constant 0 : index
      %468 = vector.load %arg13[%c0_143, %c0_144] : memref<2x128xf32, #tpu.memory_space<vmem>>, vector<2x128xf32>
      %c0_145 = arith.constant 0 : index
      %c0_146 = arith.constant 0 : index
      %c0_147 = arith.constant 0 : index
      %469 = vector.load %arg17[%c0_145, %c0_146, %c0_147] : memref<2x2x128xf32, #tpu.memory_space<vmem>>, vector<1x2x128xf32>
      %470 = vector.shape_cast %469 : vector<1x2x128xf32> to vector<2x128xf32>
      %471 = vector.shape_cast %468 : vector<2x128xf32> to vector<1x2x128xf32>
      tpu.vector_store %arg17[%c0_145, %c0_146, %c0_147], %471 {strides = array<i32>} : memref<2x2x128xf32, #tpu.memory_space<vmem>>, vector<1x2x128xf32>,
      %c0_148 = arith.constant 0 : index
      %c0_149 = arith.constant 0 : index
      %472 = vector.load %arg13[%c0_148, %c0_149] : memref<2x128xf32, #tpu.memory_space<vmem>>, vector<2x128xf32>
      %c1_150 = arith.constant 1 : index
      %c0_151 = arith.constant 0 : index
      %c0_152 = arith.constant 0 : index
      %473 = vector.load %arg17[%c1_150, %c0_151, %c0_152] : memref<2x2x128xf32, #tpu.memory_space<vmem>>, vector<1x2x128xf32>
      %474 = vector.shape_cast %473 : vector<1x2x128xf32> to vector<2x128xf32>
      %475 = vector.shape_cast %472 : vector<2x128xf32> to vector<1x2x128xf32>
      tpu.vector_store %arg17[%c1_150, %c0_151, %c0_152], %475 {strides = array<i32>} : memref<2x2x128xf32, #tpu.memory_space<vmem>>, vector<1x2x128xf32>,
    } else {
    }
    %c0 = arith.constant 0 : index
    %c0_1 = arith.constant 0 : index
    %c0_2 = arith.constant 0 : index
    %3 = vector.load %arg1[%c0, %c0_1, %c0_2] : memref<2x128x128xf32, #tpu.memory_space<vmem>>, vector<2x128x128xf32>
    %c0_3 = arith.constant 0 : index
    %c0_4 = arith.constant 0 : index
    %4 = vector.load %arg2[%c0_3, %c0_4] : memref<1x128xf32, #tpu.memory_space<vmem>>, vector<1x128xf32>
    %c0_5 = arith.constant 0 : index
    %c0_6 = arith.constant 0 : index
    %c0_7 = arith.constant 0 : index
    %5 = vector.load %arg3[%c0_5, %c0_6, %c0_7] : memref<2x128x8xbf16, #tpu.memory_space<vmem>>, vector<2x128x8xbf16>
    %6 = arith.extf %5 : vector<2x128x8xbf16> to vector<2x128x8xf32>
    %c0_8 = arith.constant 0 : index
    %c0_9 = arith.constant 0 : index
    %7 = vector.load %arg6[%c0_8, %c0_9] : memref<1x128xf32, #tpu.memory_space<vmem>>, vector<1x128xf32>
    %8 = vector.shape_cast %7 : vector<1x128xf32> to vector<128xf32>
    %9 = vector.shape_cast %8 : vector<128xf32> to vector<1x1x128xf32>
    %c0_10 = arith.constant 0 : index
    %c0_11 = arith.constant 0 : index
    %10 = vector.load %arg5[%c0_10, %c0_11] : memref<128x640xbf16, #tpu.memory_space<vmem>>, vector<128x640xbf16>
    %c0_12 = arith.constant 0 : index
    %c0_13 = arith.constant 0 : index
    %11 = vector.load %arg7[%c0_12, %c0_13] : memref<8x512xbf16, #tpu.memory_space<vmem>>, vector<8x512xbf16>
    %c0_14 = arith.constant 0 : index
    %c0_15 = arith.constant 0 : index
    %12 = vector.load %arg8[%c0_14, %c0_15] : memref<128x512xbf16, #tpu.memory_space<vmem>>, vector<128x512xbf16>
    %c0_16 = arith.constant 0 : index
    %c0_17 = arith.constant 0 : index
    %13 = vector.load %arg9[%c0_16, %c0_17] : memref<128x512xbf16, #tpu.memory_space<vmem>>, vector<128x512xbf16>
    %c0_18 = arith.constant 0 : index
    %c0_19 = arith.constant 0 : index
    %14 = vector.load %arg10[%c0_18, %c0_19] : memref<1x512xf32, #tpu.memory_space<vmem>>, vector<1x512xf32>
    %c0_20 = arith.constant 0 : index
    %c0_21 = arith.constant 0 : index
    %15 = vector.load %arg11[%c0_20, %c0_21] : memref<1x512xf32, #tpu.memory_space<vmem>>, vector<1x512xf32>
    %c0_22 = arith.constant 0 : index
    %c0_23 = arith.constant 0 : index
    %c0_24 = arith.constant 0 : index
    %16 = vector.load %arg16[%c0_22, %c0_23, %c0_24] : memref<2x2x128xf32, #tpu.memory_space<vmem>>, vector<1x2x128xf32>
    %17 = vector.shape_cast %16 : vector<1x2x128xf32> to vector<2x128xf32>
    %c0_25 = arith.constant 0 : index
    %c0_26 = arith.constant 0 : index
    %c0_27 = arith.constant 0 : index
    %18 = vector.load %arg17[%c0_25, %c0_26, %c0_27] : memref<2x2x128xf32, #tpu.memory_space<vmem>>, vector<1x2x128xf32>
    %19 = vector.shape_cast %18 : vector<1x2x128xf32> to vector<2x128xf32>
    %c1 = arith.constant 1 : index
    %c0_28 = arith.constant 0 : index
    %c0_29 = arith.constant 0 : index
    %20 = vector.load %arg16[%c1, %c0_28, %c0_29] : memref<2x2x128xf32, #tpu.memory_space<vmem>>, vector<1x2x128xf32>
    %21 = vector.shape_cast %20 : vector<1x2x128xf32> to vector<2x128xf32>
    %c1_30 = arith.constant 1 : index
    %c0_31 = arith.constant 0 : index
    %c0_32 = arith.constant 0 : index
    %22 = vector.load %arg17[%c1_30, %c0_31, %c0_32] : memref<2x2x128xf32, #tpu.memory_space<vmem>>, vector<1x2x128xf32>
    %23 = vector.shape_cast %22 : vector<1x2x128xf32> to vector<2x128xf32>
    %c0_i32_33 = arith.constant 0 : i32
    %24 = arith.truncf %21 : vector<2x128xf32> to vector<2x128xbf16>
    %cst = arith.constant dense<0.000000e+00> : vector<2x640xf32>
    %25 = tpu.matmul %24, %10, %cst {dimension_numbers = #tpu.dot_dimension_numbers<[1], [0], [0], [1], [0, 0, 1, 1], [], []>} : vector<2x128xbf16>, vector<128x640xbf16>, vector<2x640xf32> -> vector<2x640xf32>
    %26 = vector.extract_strided_slice %25 {offsets = [0, 0], sizes = [2, 128], strides = [1, 1]} : vector<2x640xf32> to vector<2x128xf32>
    %27 = vector.extract_strided_slice %25 {offsets = [0, 128], sizes = [2, 512], strides = [1, 1]} : vector<2x640xf32> to vector<2x512xf32>
    %28 = arith.truncf %17 : vector<2x128xf32> to vector<2x128xbf16>
    %cst_34 = arith.constant dense<0.000000e+00> : vector<2x512xf32>
    %29 = tpu.matmul %28, %12, %cst_34 {dimension_numbers = #tpu.dot_dimension_numbers<[1], [0], [0], [1], [0, 0, 1, 1], [], []>} : vector<2x128xbf16>, vector<128x512xbf16>, vector<2x512xf32> -> vector<2x512xf32>
    %30 = vector.shape_cast %26 : vector<2x128xf32> to vector<2x1x128xf32>
    %31 = vector.broadcast %30 : vector<2x1x128xf32> to vector<2x128x128xf32>
    %32 = arith.addf %3, %31 : vector<2x128x128xf32>
    %cst_35 = arith.constant 0.000000e+00 : f32
    %33 = vector.broadcast %cst_35 : f32 to vector<2x128x128xf32>
    %34 = arith.cmpf ogt, %32, %33 : vector<2x128x128xf32>
    %cst_36 = arith.constant 2.000000e-01 : f32
    %35 = vector.broadcast %cst_36 : f32 to vector<2x128x128xf32>
    %36 = arith.mulf %35, %32 : vector<2x128x128xf32>
    %37 = arith.select %34, %32, %36 : vector<2x128x128xi1>, vector<2x128x128xf32>
    %38 = vector.broadcast %9 : vector<1x1x128xf32> to vector<2x128x128xf32>
    %39 = arith.mulf %37, %38 : vector<2x128x128xf32>
    %cst_37 = arith.constant dense<0.000000e+00> : vector<2x128xf32>
    %40 = vector.multi_reduction <add>, %39, %cst_37 [2] : vector<2x128x128xf32> to vector<2x128xf32>
    %41 = vector.broadcast %4 : vector<1x128xf32> to vector<2x128xf32>
    %42 = arith.addf %40, %41 : vector<2x128xf32>
    %cst_38 = arith.constant dense<0xFF800000> : vector<2xf32>
    %43 = vector.multi_reduction <maximumf>, %42, %cst_38 [1] : vector<2x128xf32> to vector<2xf32>
    %44 = vector.shape_cast %43 : vector<2xf32> to vector<2x1xf32>
    %45 = vector.broadcast %44 : vector<2x1xf32> to vector<2x128xf32>
    %46 = arith.subf %42, %45 : vector<2x128xf32>
    %47 = math.exp %46 : vector<2x128xf32>
    %cst_39 = arith.constant dense<0.000000e+00> : vector<2xf32>
    %48 = vector.multi_reduction <add>, %47, %cst_39 [1] : vector<2x128xf32> to vector<2xf32>
    %49 = vector.shape_cast %48 : vector<2xf32> to vector<2x1xf32>
    %50 = tpu.reciprocal %49 : vector<2x1xf32> -> vector<2x1xf32>
    %51 = vector.broadcast %50 : vector<2x1xf32> to vector<2x128xf32>
    %52 = arith.mulf %47, %51 : vector<2x128xf32>
    %53 = vector.shape_cast %52 : vector<2x128xf32> to vector<2x128x1xf32>
    %54 = vector.broadcast %53 : vector<2x128x1xf32> to vector<2x128x8xf32>
    %55 = arith.mulf %6, %54 : vector<2x128x8xf32>
    %cst_40 = arith.constant dense<0.000000e+00> : vector<2x8xf32>
    %56 = vector.multi_reduction <add>, %55, %cst_40 [1] : vector<2x128x8xf32> to vector<2x8xf32>
    %57 = arith.index_cast %c0_i32_33 : i32 to index
    %c0_41 = arith.constant 0 : index
    %c0_42 = arith.constant 0 : index
    %58 = vector.load %arg4[%57, %c0_41, %c0_42] : memref<4x2x512xbf16, #tpu.memory_space<vmem>>, vector<1x2x512xbf16>
    %59 = vector.shape_cast %58 : vector<1x2x512xbf16> to vector<2x512xbf16>
    %60 = arith.extf %59 : vector<2x512xbf16> to vector<2x512xf32>
    %61 = arith.truncf %56 : vector<2x8xf32> to vector<2x8xbf16>
    %cst_43 = arith.constant dense<0.000000e+00> : vector<2x512xf32>
    %62 = tpu.matmul %61, %11, %cst_43 {dimension_numbers = #tpu.dot_dimension_numbers<[1], [0], [0], [1], [0, 0, 1, 1], [], []>} : vector<2x8xbf16>, vector<8x512xbf16>, vector<2x512xf32> -> vector<2x512xf32>
    %63 = arith.addf %60, %62 : vector<2x512xf32>
    %64 = arith.addf %63, %29 : vector<2x512xf32>
    %65 = vector.broadcast %14 : vector<1x512xf32> to vector<2x512xf32>
    %66 = arith.addf %64, %65 : vector<2x512xf32>
    %67 = vector.extract_strided_slice %66 {offsets = [0, 0], sizes = [2, 128], strides = [1, 1]} : vector<2x512xf32> to vector<2x128xf32>
    %68 = arith.negf %67 : vector<2x128xf32>
    %69 = math.exp %68 : vector<2x128xf32>
    %cst_44 = arith.constant 1.000000e+00 : f32
    %70 = vector.broadcast %cst_44 : f32 to vector<2x128xf32>
    %71 = arith.addf %70, %69 : vector<2x128xf32>
    %72 = arith.divf %70, %71 : vector<2x128xf32>
    %73 = vector.extract_strided_slice %66 {offsets = [0, 128], sizes = [2, 128], strides = [1, 1]} : vector<2x512xf32> to vector<2x128xf32>
    %74 = arith.negf %73 : vector<2x128xf32>
    %75 = math.exp %74 : vector<2x128xf32>
    %cst_45 = arith.constant 1.000000e+00 : f32
    %76 = vector.broadcast %cst_45 : f32 to vector<2x128xf32>
    %77 = arith.addf %76, %75 : vector<2x128xf32>
    %78 = arith.divf %76, %77 : vector<2x128xf32>
    %79 = vector.extract_strided_slice %66 {offsets = [0, 256], sizes = [2, 128], strides = [1, 1]} : vector<2x512xf32> to vector<2x128xf32>
    %80 = math.tanh %79 : vector<2x128xf32>
    %81 = vector.extract_strided_slice %66 {offsets = [0, 384], sizes = [2, 128], strides = [1, 1]} : vector<2x512xf32> to vector<2x128xf32>
    %82 = arith.negf %81 : vector<2x128xf32>
    %83 = math.exp %82 : vector<2x128xf32>
    %cst_46 = arith.constant 1.000000e+00 : f32
    %84 = vector.broadcast %cst_46 : f32 to vector<2x128xf32>
    %85 = arith.addf %84, %83 : vector<2x128xf32>
    %86 = arith.divf %84, %85 : vector<2x128xf32>
    %87 = arith.mulf %78, %19 : vector<2x128xf32>
    %88 = arith.mulf %72, %80 : vector<2x128xf32>
    %89 = arith.addf %87, %88 : vector<2x128xf32>
    %90 = math.tanh %89 : vector<2x128xf32>
    %91 = arith.mulf %86, %90 : vector<2x128xf32>
    %92 = arith.truncf %91 : vector<2x128xf32> to vector<2x128xbf16>
    %cst_47 = arith.constant dense<0.000000e+00> : vector<2x512xf32>
    %93 = tpu.matmul %92, %13, %cst_47 {dimension_numbers = #tpu.dot_dimension_numbers<[1], [0], [0], [1], [0, 0, 1, 1], [], []>} : vector<2x128xbf16>, vector<128x512xbf16>, vector<2x512xf32> -> vector<2x512xf32>
    %94 = arith.addf %93, %27 : vector<2x512xf32>
    %95 = vector.broadcast %15 : vector<1x512xf32> to vector<2x512xf32>
    %96 = arith.addf %94, %95 : vector<2x512xf32>
    %97 = vector.extract_strided_slice %96 {offsets = [0, 0], sizes = [2, 128], strides = [1, 1]} : vector<2x512xf32> to vector<2x128xf32>
    %98 = arith.negf %97 : vector<2x128xf32>
    %99 = math.exp %98 : vector<2x128xf32>
    %cst_48 = arith.constant 1.000000e+00 : f32
    %100 = vector.broadcast %cst_48 : f32 to vector<2x128xf32>
    %101 = arith.addf %100, %99 : vector<2x128xf32>
    %102 = arith.divf %100, %101 : vector<2x128xf32>
    %103 = vector.extract_strided_slice %96 {offsets = [0, 128], sizes = [2, 128], strides = [1, 1]} : vector<2x512xf32> to vector<2x128xf32>
    %104 = arith.negf %103 : vector<2x128xf32>
    %105 = math.exp %104 : vector<2x128xf32>
    %cst_49 = arith.constant 1.000000e+00 : f32
    %106 = vector.broadcast %cst_49 : f32 to vector<2x128xf32>
    %107 = arith.addf %106, %105 : vector<2x128xf32>
    %108 = arith.divf %106, %107 : vector<2x128xf32>
    %109 = vector.extract_strided_slice %96 {offsets = [0, 256], sizes = [2, 128], strides = [1, 1]} : vector<2x512xf32> to vector<2x128xf32>
    %110 = math.tanh %109 : vector<2x128xf32>
    %111 = vector.extract_strided_slice %96 {offsets = [0, 384], sizes = [2, 128], strides = [1, 1]} : vector<2x512xf32> to vector<2x128xf32>
    %112 = arith.negf %111 : vector<2x128xf32>
    %113 = math.exp %112 : vector<2x128xf32>
    %cst_50 = arith.constant 1.000000e+00 : f32
    %114 = vector.broadcast %cst_50 : f32 to vector<2x128xf32>
    %115 = arith.addf %114, %113 : vector<2x128xf32>
    %116 = arith.divf %114, %115 : vector<2x128xf32>
    %117 = arith.mulf %108, %23 : vector<2x128xf32>
    %118 = arith.mulf %102, %110 : vector<2x128xf32>
    %119 = arith.addf %117, %118 : vector<2x128xf32>
    %120 = math.tanh %119 : vector<2x128xf32>
    %121 = arith.mulf %116, %120 : vector<2x128xf32>
    %122 = arith.index_cast %c0_i32_33 : i32 to index
    %c0_51 = arith.constant 0 : index
    %c0_52 = arith.constant 0 : index
    %123 = vector.load %arg14[%122, %c0_51, %c0_52] : memref<4x2x128xf32, #tpu.memory_space<vmem>>, vector<1x2x128xf32>
    %124 = vector.shape_cast %123 : vector<1x2x128xf32> to vector<2x128xf32>
    %125 = vector.shape_cast %121 : vector<2x128xf32> to vector<1x2x128xf32>
    tpu.vector_store %arg14[%122, %c0_51, %c0_52], %125 {strides = array<i32>} : memref<4x2x128xf32, #tpu.memory_space<vmem>>, vector<1x2x128xf32>,
    %126 = arith.index_cast %c0_i32_33 : i32 to index
    %c0_53 = arith.constant 0 : index
    %c0_54 = arith.constant 0 : index
    %127 = vector.load %arg15[%126, %c0_53, %c0_54] : memref<4x2x128xf32, #tpu.memory_space<vmem>>, vector<1x2x128xf32>
    %128 = vector.shape_cast %127 : vector<1x2x128xf32> to vector<2x128xf32>
    %129 = vector.shape_cast %52 : vector<2x128xf32> to vector<1x2x128xf32>
    tpu.vector_store %arg15[%126, %c0_53, %c0_54], %129 {strides = array<i32>} : memref<4x2x128xf32, #tpu.memory_space<vmem>>, vector<1x2x128xf32>,
    %c1_i32 = arith.constant 1 : i32
    %130 = arith.truncf %121 : vector<2x128xf32> to vector<2x128xbf16>
    %cst_55 = arith.constant dense<0.000000e+00> : vector<2x640xf32>
    %131 = tpu.matmul %130, %10, %cst_55 {dimension_numbers = #tpu.dot_dimension_numbers<[1], [0], [0], [1], [0, 0, 1, 1], [], []>} : vector<2x128xbf16>, vector<128x640xbf16>, vector<2x640xf32> -> vector<2x640xf32>
    %132 = vector.extract_strided_slice %131 {offsets = [0, 0], sizes = [2, 128], strides = [1, 1]} : vector<2x640xf32> to vector<2x128xf32>
    %133 = vector.extract_strided_slice %131 {offsets = [0, 128], sizes = [2, 512], strides = [1, 1]} : vector<2x640xf32> to vector<2x512xf32>
    %134 = arith.truncf %91 : vector<2x128xf32> to vector<2x128xbf16>
    %cst_56 = arith.constant dense<0.000000e+00> : vector<2x512xf32>
    %135 = tpu.matmul %134, %12, %cst_56 {dimension_numbers = #tpu.dot_dimension_numbers<[1], [0], [0], [1], [0, 0, 1, 1], [], []>} : vector<2x128xbf16>, vector<128x512xbf16>, vector<2x512xf32> -> vector<2x512xf32>
    %136 = vector.shape_cast %132 : vector<2x128xf32> to vector<2x1x128xf32>
    %137 = vector.broadcast %136 : vector<2x1x128xf32> to vector<2x128x128xf32>
    %138 = arith.addf %3, %137 : vector<2x128x128xf32>
    %cst_57 = arith.constant 0.000000e+00 : f32
    %139 = vector.broadcast %cst_57 : f32 to vector<2x128x128xf32>
    %140 = arith.cmpf ogt, %138, %139 : vector<2x128x128xf32>
    %cst_58 = arith.constant 2.000000e-01 : f32
    %141 = vector.broadcast %cst_58 : f32 to vector<2x128x128xf32>
    %142 = arith.mulf %141, %138 : vector<2x128x128xf32>
    %143 = arith.select %140, %138, %142 : vector<2x128x128xi1>, vector<2x128x128xf32>
    %144 = vector.broadcast %9 : vector<1x1x128xf32> to vector<2x128x128xf32>
    %145 = arith.mulf %143, %144 : vector<2x128x128xf32>
    %cst_59 = arith.constant dense<0.000000e+00> : vector<2x128xf32>
    %146 = vector.multi_reduction <add>, %145, %cst_59 [2] : vector<2x128x128xf32> to vector<2x128xf32>
    %147 = vector.broadcast %4 : vector<1x128xf32> to vector<2x128xf32>
    %148 = arith.addf %146, %147 : vector<2x128xf32>
    %cst_60 = arith.constant dense<0xFF800000> : vector<2xf32>
    %149 = vector.multi_reduction <maximumf>, %148, %cst_60 [1] : vector<2x128xf32> to vector<2xf32>
    %150 = vector.shape_cast %149 : vector<2xf32> to vector<2x1xf32>
    %151 = vector.broadcast %150 : vector<2x1xf32> to vector<2x128xf32>
    %152 = arith.subf %148, %151 : vector<2x128xf32>
    %153 = math.exp %152 : vector<2x128xf32>
    %cst_61 = arith.constant dense<0.000000e+00> : vector<2xf32>
    %154 = vector.multi_reduction <add>, %153, %cst_61 [1] : vector<2x128xf32> to vector<2xf32>
    %155 = vector.shape_cast %154 : vector<2xf32> to vector<2x1xf32>
    %156 = tpu.reciprocal %155 : vector<2x1xf32> -> vector<2x1xf32>
    %157 = vector.broadcast %156 : vector<2x1xf32> to vector<2x128xf32>
    %158 = arith.mulf %153, %157 : vector<2x128xf32>
    %159 = vector.shape_cast %158 : vector<2x128xf32> to vector<2x128x1xf32>
    %160 = vector.broadcast %159 : vector<2x128x1xf32> to vector<2x128x8xf32>
    %161 = arith.mulf %6, %160 : vector<2x128x8xf32>
    %cst_62 = arith.constant dense<0.000000e+00> : vector<2x8xf32>
    %162 = vector.multi_reduction <add>, %161, %cst_62 [1] : vector<2x128x8xf32> to vector<2x8xf32>
    %163 = arith.index_cast %c1_i32 : i32 to index
    %c0_63 = arith.constant 0 : index
    %c0_64 = arith.constant 0 : index
    %164 = vector.load %arg4[%163, %c0_63, %c0_64] : memref<4x2x512xbf16, #tpu.memory_space<vmem>>, vector<1x2x512xbf16>
    %165 = vector.shape_cast %164 : vector<1x2x512xbf16> to vector<2x512xbf16>
    %166 = arith.extf %165 : vector<2x512xbf16> to vector<2x512xf32>
    %167 = arith.truncf %162 : vector<2x8xf32> to vector<2x8xbf16>
    %cst_65 = arith.constant dense<0.000000e+00> : vector<2x512xf32>
    %168 = tpu.matmul %167, %11, %cst_65 {dimension_numbers = #tpu.dot_dimension_numbers<[1], [0], [0], [1], [0, 0, 1, 1], [], []>} : vector<2x8xbf16>, vector<8x512xbf16>, vector<2x512xf32> -> vector<2x512xf32>
    %169 = arith.addf %166, %168 : vector<2x512xf32>
    %170 = arith.addf %169, %135 : vector<2x512xf32>
    %171 = vector.broadcast %14 : vector<1x512xf32> to vector<2x512xf32>
    %172 = arith.addf %170, %171 : vector<2x512xf32>
    %173 = vector.extract_strided_slice %172 {offsets = [0, 0], sizes = [2, 128], strides = [1, 1]} : vector<2x512xf32> to vector<2x128xf32>
    %174 = arith.negf %173 : vector<2x128xf32>
    %175 = math.exp %174 : vector<2x128xf32>
    %cst_66 = arith.constant 1.000000e+00 : f32
    %176 = vector.broadcast %cst_66 : f32 to vector<2x128xf32>
    %177 = arith.addf %176, %175 : vector<2x128xf32>
    %178 = arith.divf %176, %177 : vector<2x128xf32>
    %179 = vector.extract_strided_slice %172 {offsets = [0, 128], sizes = [2, 128], strides = [1, 1]} : vector<2x512xf32> to vector<2x128xf32>
    %180 = arith.negf %179 : vector<2x128xf32>
    %181 = math.exp %180 : vector<2x128xf32>
    %cst_67 = arith.constant 1.000000e+00 : f32
    %182 = vector.broadcast %cst_67 : f32 to vector<2x128xf32>
    %183 = arith.addf %182, %181 : vector<2x128xf32>
    %184 = arith.divf %182, %183 : vector<2x128xf32>
    %185 = vector.extract_strided_slice %172 {offsets = [0, 256], sizes = [2, 128], strides = [1, 1]} : vector<2x512xf32> to vector<2x128xf32>
    %186 = math.tanh %185 : vector<2x128xf32>
    %187 = vector.extract_strided_slice %172 {offsets = [0, 384], sizes = [2, 128], strides = [1, 1]} : vector<2x512xf32> to vector<2x128xf32>
    %188 = arith.negf %187 : vector<2x128xf32>
    %189 = math.exp %188 : vector<2x128xf32>
    %cst_68 = arith.constant 1.000000e+00 : f32
    %190 = vector.broadcast %cst_68 : f32 to vector<2x128xf32>
    %191 = arith.addf %190, %189 : vector<2x128xf32>
    %192 = arith.divf %190, %191 : vector<2x128xf32>
    %193 = arith.mulf %184, %89 : vector<2x128xf32>
    %194 = arith.mulf %178, %186 : vector<2x128xf32>
    %195 = arith.addf %193, %194 : vector<2x128xf32>
    %196 = math.tanh %195 : vector<2x128xf32>
    %197 = arith.mulf %192, %196 : vector<2x128xf32>
    %198 = arith.truncf %197 : vector<2x128xf32> to vector<2x128xbf16>
    %cst_69 = arith.constant dense<0.000000e+00> : vector<2x512xf32>
    %199 = tpu.matmul %198, %13, %cst_69 {dimension_numbers = #tpu.dot_dimension_numbers<[1], [0], [0], [1], [0, 0, 1, 1], [], []>} : vector<2x128xbf16>, vector<128x512xbf16>, vector<2x512xf32> -> vector<2x512xf32>
    %200 = arith.addf %199, %133 : vector<2x512xf32>
    %201 = vector.broadcast %15 : vector<1x512xf32> to vector<2x512xf32>
    %202 = arith.addf %200, %201 : vector<2x512xf32>
    %203 = vector.extract_strided_slice %202 {offsets = [0, 0], sizes = [2, 128], strides = [1, 1]} : vector<2x512xf32> to vector<2x128xf32>
    %204 = arith.negf %203 : vector<2x128xf32>
    %205 = math.exp %204 : vector<2x128xf32>
    %cst_70 = arith.constant 1.000000e+00 : f32
    %206 = vector.broadcast %cst_70 : f32 to vector<2x128xf32>
    %207 = arith.addf %206, %205 : vector<2x128xf32>
    %208 = arith.divf %206, %207 : vector<2x128xf32>
    %209 = vector.extract_strided_slice %202 {offsets = [0, 128], sizes = [2, 128], strides = [1, 1]} : vector<2x512xf32> to vector<2x128xf32>
    %210 = arith.negf %209 : vector<2x128xf32>
    %211 = math.exp %210 : vector<2x128xf32>
    %cst_71 = arith.constant 1.000000e+00 : f32
    %212 = vector.broadcast %cst_71 : f32 to vector<2x128xf32>
    %213 = arith.addf %212, %211 : vector<2x128xf32>
    %214 = arith.divf %212, %213 : vector<2x128xf32>
    %215 = vector.extract_strided_slice %202 {offsets = [0, 256], sizes = [2, 128], strides = [1, 1]} : vector<2x512xf32> to vector<2x128xf32>
    %216 = math.tanh %215 : vector<2x128xf32>
    %217 = vector.extract_strided_slice %202 {offsets = [0, 384], sizes = [2, 128], strides = [1, 1]} : vector<2x512xf32> to vector<2x128xf32>
    %218 = arith.negf %217 : vector<2x128xf32>
    %219 = math.exp %218 : vector<2x128xf32>
    %cst_72 = arith.constant 1.000000e+00 : f32
    %220 = vector.broadcast %cst_72 : f32 to vector<2x128xf32>
    %221 = arith.addf %220, %219 : vector<2x128xf32>
    %222 = arith.divf %220, %221 : vector<2x128xf32>
    %223 = arith.mulf %214, %119 : vector<2x128xf32>
    %224 = arith.mulf %208, %216 : vector<2x128xf32>
    %225 = arith.addf %223, %224 : vector<2x128xf32>
    %226 = math.tanh %225 : vector<2x128xf32>
    %227 = arith.mulf %222, %226 : vector<2x128xf32>
    %228 = arith.index_cast %c1_i32 : i32 to index
    %c0_73 = arith.constant 0 : index
    %c0_74 = arith.constant 0 : index
    %229 = vector.load %arg14[%228, %c0_73, %c0_74] : memref<4x2x128xf32, #tpu.memory_space<vmem>>, vector<1x2x128xf32>
    %230 = vector.shape_cast %229 : vector<1x2x128xf32> to vector<2x128xf32>
    %231 = vector.shape_cast %227 : vector<2x128xf32> to vector<1x2x128xf32>
    tpu.vector_store %arg14[%228, %c0_73, %c0_74], %231 {strides = array<i32>} : memref<4x2x128xf32, #tpu.memory_space<vmem>>, vector<1x2x128xf32>,
    %232 = arith.index_cast %c1_i32 : i32 to index
    %c0_75 = arith.constant 0 : index
    %c0_76 = arith.constant 0 : index
    %233 = vector.load %arg15[%232, %c0_75, %c0_76] : memref<4x2x128xf32, #tpu.memory_space<vmem>>, vector<1x2x128xf32>
    %234 = vector.shape_cast %233 : vector<1x2x128xf32> to vector<2x128xf32>
    %235 = vector.shape_cast %158 : vector<2x128xf32> to vector<1x2x128xf32>
    tpu.vector_store %arg15[%232, %c0_75, %c0_76], %235 {strides = array<i32>} : memref<4x2x128xf32, #tpu.memory_space<vmem>>, vector<1x2x128xf32>,
    %c2_i32 = arith.constant 2 : i32
    %236 = arith.truncf %227 : vector<2x128xf32> to vector<2x128xbf16>
    %cst_77 = arith.constant dense<0.000000e+00> : vector<2x640xf32>
    %237 = tpu.matmul %236, %10, %cst_77 {dimension_numbers = #tpu.dot_dimension_numbers<[1], [0], [0], [1], [0, 0, 1, 1], [], []>} : vector<2x128xbf16>, vector<128x640xbf16>, vector<2x640xf32> -> vector<2x640xf32>
    %238 = vector.extract_strided_slice %237 {offsets = [0, 0], sizes = [2, 128], strides = [1, 1]} : vector<2x640xf32> to vector<2x128xf32>
    %239 = vector.extract_strided_slice %237 {offsets = [0, 128], sizes = [2, 512], strides = [1, 1]} : vector<2x640xf32> to vector<2x512xf32>
    %240 = arith.truncf %197 : vector<2x128xf32> to vector<2x128xbf16>
    %cst_78 = arith.constant dense<0.000000e+00> : vector<2x512xf32>
    %241 = tpu.matmul %240, %12, %cst_78 {dimension_numbers = #tpu.dot_dimension_numbers<[1], [0], [0], [1], [0, 0, 1, 1], [], []>} : vector<2x128xbf16>, vector<128x512xbf16>, vector<2x512xf32> -> vector<2x512xf32>
    %242 = vector.shape_cast %238 : vector<2x128xf32> to vector<2x1x128xf32>
    %243 = vector.broadcast %242 : vector<2x1x128xf32> to vector<2x128x128xf32>
    %244 = arith.addf %3, %243 : vector<2x128x128xf32>
    %cst_79 = arith.constant 0.000000e+00 : f32
    %245 = vector.broadcast %cst_79 : f32 to vector<2x128x128xf32>
    %246 = arith.cmpf ogt, %244, %245 : vector<2x128x128xf32>
    %cst_80 = arith.constant 2.000000e-01 : f32
    %247 = vector.broadcast %cst_80 : f32 to vector<2x128x128xf32>
    %248 = arith.mulf %247, %244 : vector<2x128x128xf32>
    %249 = arith.select %246, %244, %248 : vector<2x128x128xi1>, vector<2x128x128xf32>
    %250 = vector.broadcast %9 : vector<1x1x128xf32> to vector<2x128x128xf32>
    %251 = arith.mulf %249, %250 : vector<2x128x128xf32>
    %cst_81 = arith.constant dense<0.000000e+00> : vector<2x128xf32>
    %252 = vector.multi_reduction <add>, %251, %cst_81 [2] : vector<2x128x128xf32> to vector<2x128xf32>
    %253 = vector.broadcast %4 : vector<1x128xf32> to vector<2x128xf32>
    %254 = arith.addf %252, %253 : vector<2x128xf32>
    %cst_82 = arith.constant dense<0xFF800000> : vector<2xf32>
    %255 = vector.multi_reduction <maximumf>, %254, %cst_82 [1] : vector<2x128xf32> to vector<2xf32>
    %256 = vector.shape_cast %255 : vector<2xf32> to vector<2x1xf32>
    %257 = vector.broadcast %256 : vector<2x1xf32> to vector<2x128xf32>
    %258 = arith.subf %254, %257 : vector<2x128xf32>
    %259 = math.exp %258 : vector<2x128xf32>
    %cst_83 = arith.constant dense<0.000000e+00> : vector<2xf32>
    %260 = vector.multi_reduction <add>, %259, %cst_83 [1] : vector<2x128xf32> to vector<2xf32>
    %261 = vector.shape_cast %260 : vector<2xf32> to vector<2x1xf32>
    %262 = tpu.reciprocal %261 : vector<2x1xf32> -> vector<2x1xf32>
    %263 = vector.broadcast %262 : vector<2x1xf32> to vector<2x128xf32>
    %264 = arith.mulf %259, %263 : vector<2x128xf32>
    %265 = vector.shape_cast %264 : vector<2x128xf32> to vector<2x128x1xf32>
    %266 = vector.broadcast %265 : vector<2x128x1xf32> to vector<2x128x8xf32>
    %267 = arith.mulf %6, %266 : vector<2x128x8xf32>
    %cst_84 = arith.constant dense<0.000000e+00> : vector<2x8xf32>
    %268 = vector.multi_reduction <add>, %267, %cst_84 [1] : vector<2x128x8xf32> to vector<2x8xf32>
    %269 = arith.index_cast %c2_i32 : i32 to index
    %c0_85 = arith.constant 0 : index
    %c0_86 = arith.constant 0 : index
    %270 = vector.load %arg4[%269, %c0_85, %c0_86] : memref<4x2x512xbf16, #tpu.memory_space<vmem>>, vector<1x2x512xbf16>
    %271 = vector.shape_cast %270 : vector<1x2x512xbf16> to vector<2x512xbf16>
    %272 = arith.extf %271 : vector<2x512xbf16> to vector<2x512xf32>
    %273 = arith.truncf %268 : vector<2x8xf32> to vector<2x8xbf16>
    %cst_87 = arith.constant dense<0.000000e+00> : vector<2x512xf32>
    %274 = tpu.matmul %273, %11, %cst_87 {dimension_numbers = #tpu.dot_dimension_numbers<[1], [0], [0], [1], [0, 0, 1, 1], [], []>} : vector<2x8xbf16>, vector<8x512xbf16>, vector<2x512xf32> -> vector<2x512xf32>
    %275 = arith.addf %272, %274 : vector<2x512xf32>
    %276 = arith.addf %275, %241 : vector<2x512xf32>
    %277 = vector.broadcast %14 : vector<1x512xf32> to vector<2x512xf32>
    %278 = arith.addf %276, %277 : vector<2x512xf32>
    %279 = vector.extract_strided_slice %278 {offsets = [0, 0], sizes = [2, 128], strides = [1, 1]} : vector<2x512xf32> to vector<2x128xf32>
    %280 = arith.negf %279 : vector<2x128xf32>
    %281 = math.exp %280 : vector<2x128xf32>
    %cst_88 = arith.constant 1.000000e+00 : f32
    %282 = vector.broadcast %cst_88 : f32 to vector<2x128xf32>
    %283 = arith.addf %282, %281 : vector<2x128xf32>
    %284 = arith.divf %282, %283 : vector<2x128xf32>
    %285 = vector.extract_strided_slice %278 {offsets = [0, 128], sizes = [2, 128], strides = [1, 1]} : vector<2x512xf32> to vector<2x128xf32>
    %286 = arith.negf %285 : vector<2x128xf32>
    %287 = math.exp %286 : vector<2x128xf32>
    %cst_89 = arith.constant 1.000000e+00 : f32
    %288 = vector.broadcast %cst_89 : f32 to vector<2x128xf32>
    %289 = arith.addf %288, %287 : vector<2x128xf32>
    %290 = arith.divf %288, %289 : vector<2x128xf32>
    %291 = vector.extract_strided_slice %278 {offsets = [0, 256], sizes = [2, 128], strides = [1, 1]} : vector<2x512xf32> to vector<2x128xf32>
    %292 = math.tanh %291 : vector<2x128xf32>
    %293 = vector.extract_strided_slice %278 {offsets = [0, 384], sizes = [2, 128], strides = [1, 1]} : vector<2x512xf32> to vector<2x128xf32>
    %294 = arith.negf %293 : vector<2x128xf32>
    %295 = math.exp %294 : vector<2x128xf32>
    %cst_90 = arith.constant 1.000000e+00 : f32
    %296 = vector.broadcast %cst_90 : f32 to vector<2x128xf32>
    %297 = arith.addf %296, %295 : vector<2x128xf32>
    %298 = arith.divf %296, %297 : vector<2x128xf32>
    %299 = arith.mulf %290, %195 : vector<2x128xf32>
    %300 = arith.mulf %284, %292 : vector<2x128xf32>
    %301 = arith.addf %299, %300 : vector<2x128xf32>
    %302 = math.tanh %301 : vector<2x128xf32>
    %303 = arith.mulf %298, %302 : vector<2x128xf32>
    %304 = arith.truncf %303 : vector<2x128xf32> to vector<2x128xbf16>
    %cst_91 = arith.constant dense<0.000000e+00> : vector<2x512xf32>
    %305 = tpu.matmul %304, %13, %cst_91 {dimension_numbers = #tpu.dot_dimension_numbers<[1], [0], [0], [1], [0, 0, 1, 1], [], []>} : vector<2x128xbf16>, vector<128x512xbf16>, vector<2x512xf32> -> vector<2x512xf32>
    %306 = arith.addf %305, %239 : vector<2x512xf32>
    %307 = vector.broadcast %15 : vector<1x512xf32> to vector<2x512xf32>
    %308 = arith.addf %306, %307 : vector<2x512xf32>
    %309 = vector.extract_strided_slice %308 {offsets = [0, 0], sizes = [2, 128], strides = [1, 1]} : vector<2x512xf32> to vector<2x128xf32>
    %310 = arith.negf %309 : vector<2x128xf32>
    %311 = math.exp %310 : vector<2x128xf32>
    %cst_92 = arith.constant 1.000000e+00 : f32
    %312 = vector.broadcast %cst_92 : f32 to vector<2x128xf32>
    %313 = arith.addf %312, %311 : vector<2x128xf32>
    %314 = arith.divf %312, %313 : vector<2x128xf32>
    %315 = vector.extract_strided_slice %308 {offsets = [0, 128], sizes = [2, 128], strides = [1, 1]} : vector<2x512xf32> to vector<2x128xf32>
    %316 = arith.negf %315 : vector<2x128xf32>
    %317 = math.exp %316 : vector<2x128xf32>
    %cst_93 = arith.constant 1.000000e+00 : f32
    %318 = vector.broadcast %cst_93 : f32 to vector<2x128xf32>
    %319 = arith.addf %318, %317 : vector<2x128xf32>
    %320 = arith.divf %318, %319 : vector<2x128xf32>
    %321 = vector.extract_strided_slice %308 {offsets = [0, 256], sizes = [2, 128], strides = [1, 1]} : vector<2x512xf32> to vector<2x128xf32>
    %322 = math.tanh %321 : vector<2x128xf32>
    %323 = vector.extract_strided_slice %308 {offsets = [0, 384], sizes = [2, 128], strides = [1, 1]} : vector<2x512xf32> to vector<2x128xf32>
    %324 = arith.negf %323 : vector<2x128xf32>
    %325 = math.exp %324 : vector<2x128xf32>
    %cst_94 = arith.constant 1.000000e+00 : f32
    %326 = vector.broadcast %cst_94 : f32 to vector<2x128xf32>
    %327 = arith.addf %326, %325 : vector<2x128xf32>
    %328 = arith.divf %326, %327 : vector<2x128xf32>
    %329 = arith.mulf %320, %225 : vector<2x128xf32>
    %330 = arith.mulf %314, %322 : vector<2x128xf32>
    %331 = arith.addf %329, %330 : vector<2x128xf32>
    %332 = math.tanh %331 : vector<2x128xf32>
    %333 = arith.mulf %328, %332 : vector<2x128xf32>
    %334 = arith.index_cast %c2_i32 : i32 to index
    %c0_95 = arith.constant 0 : index
    %c0_96 = arith.constant 0 : index
    %335 = vector.load %arg14[%334, %c0_95, %c0_96] : memref<4x2x128xf32, #tpu.memory_space<vmem>>, vector<1x2x128xf32>
    %336 = vector.shape_cast %335 : vector<1x2x128xf32> to vector<2x128xf32>
    %337 = vector.shape_cast %333 : vector<2x128xf32> to vector<1x2x128xf32>
    tpu.vector_store %arg14[%334, %c0_95, %c0_96], %337 {strides = array<i32>} : memref<4x2x128xf32, #tpu.memory_space<vmem>>, vector<1x2x128xf32>,
    %338 = arith.index_cast %c2_i32 : i32 to index
    %c0_97 = arith.constant 0 : index
    %c0_98 = arith.constant 0 : index
    %339 = vector.load %arg15[%338, %c0_97, %c0_98] : memref<4x2x128xf32, #tpu.memory_space<vmem>>, vector<1x2x128xf32>
    %340 = vector.shape_cast %339 : vector<1x2x128xf32> to vector<2x128xf32>
    %341 = vector.shape_cast %264 : vector<2x128xf32> to vector<1x2x128xf32>
    tpu.vector_store %arg15[%338, %c0_97, %c0_98], %341 {strides = array<i32>} : memref<4x2x128xf32, #tpu.memory_space<vmem>>, vector<1x2x128xf32>,
    %c3_i32 = arith.constant 3 : i32
    %342 = arith.truncf %333 : vector<2x128xf32> to vector<2x128xbf16>
    %cst_99 = arith.constant dense<0.000000e+00> : vector<2x640xf32>
    %343 = tpu.matmul %342, %10, %cst_99 {dimension_numbers = #tpu.dot_dimension_numbers<[1], [0], [0], [1], [0, 0, 1, 1], [], []>} : vector<2x128xbf16>, vector<128x640xbf16>, vector<2x640xf32> -> vector<2x640xf32>
    %344 = vector.extract_strided_slice %343 {offsets = [0, 0], sizes = [2, 128], strides = [1, 1]} : vector<2x640xf32> to vector<2x128xf32>
    %345 = vector.extract_strided_slice %343 {offsets = [0, 128], sizes = [2, 512], strides = [1, 1]} : vector<2x640xf32> to vector<2x512xf32>
    %346 = arith.truncf %303 : vector<2x128xf32> to vector<2x128xbf16>
    %cst_100 = arith.constant dense<0.000000e+00> : vector<2x512xf32>
    %347 = tpu.matmul %346, %12, %cst_100 {dimension_numbers = #tpu.dot_dimension_numbers<[1], [0], [0], [1], [0, 0, 1, 1], [], []>} : vector<2x128xbf16>, vector<128x512xbf16>, vector<2x512xf32> -> vector<2x512xf32>
    %348 = vector.shape_cast %344 : vector<2x128xf32> to vector<2x1x128xf32>
    %349 = vector.broadcast %348 : vector<2x1x128xf32> to vector<2x128x128xf32>
    %350 = arith.addf %3, %349 : vector<2x128x128xf32>
    %cst_101 = arith.constant 0.000000e+00 : f32
    %351 = vector.broadcast %cst_101 : f32 to vector<2x128x128xf32>
    %352 = arith.cmpf ogt, %350, %351 : vector<2x128x128xf32>
    %cst_102 = arith.constant 2.000000e-01 : f32
    %353 = vector.broadcast %cst_102 : f32 to vector<2x128x128xf32>
    %354 = arith.mulf %353, %350 : vector<2x128x128xf32>
    %355 = arith.select %352, %350, %354 : vector<2x128x128xi1>, vector<2x128x128xf32>
    %356 = vector.broadcast %9 : vector<1x1x128xf32> to vector<2x128x128xf32>
    %357 = arith.mulf %355, %356 : vector<2x128x128xf32>
    %cst_103 = arith.constant dense<0.000000e+00> : vector<2x128xf32>
    %358 = vector.multi_reduction <add>, %357, %cst_103 [2] : vector<2x128x128xf32> to vector<2x128xf32>
    %359 = vector.broadcast %4 : vector<1x128xf32> to vector<2x128xf32>
    %360 = arith.addf %358, %359 : vector<2x128xf32>
    %cst_104 = arith.constant dense<0xFF800000> : vector<2xf32>
    %361 = vector.multi_reduction <maximumf>, %360, %cst_104 [1] : vector<2x128xf32> to vector<2xf32>
    %362 = vector.shape_cast %361 : vector<2xf32> to vector<2x1xf32>
    %363 = vector.broadcast %362 : vector<2x1xf32> to vector<2x128xf32>
    %364 = arith.subf %360, %363 : vector<2x128xf32>
    %365 = math.exp %364 : vector<2x128xf32>
    %cst_105 = arith.constant dense<0.000000e+00> : vector<2xf32>
    %366 = vector.multi_reduction <add>, %365, %cst_105 [1] : vector<2x128xf32> to vector<2xf32>
    %367 = vector.shape_cast %366 : vector<2xf32> to vector<2x1xf32>
    %368 = tpu.reciprocal %367 : vector<2x1xf32> -> vector<2x1xf32>
    %369 = vector.broadcast %368 : vector<2x1xf32> to vector<2x128xf32>
    %370 = arith.mulf %365, %369 : vector<2x128xf32>
    %371 = vector.shape_cast %370 : vector<2x128xf32> to vector<2x128x1xf32>
    %372 = vector.broadcast %371 : vector<2x128x1xf32> to vector<2x128x8xf32>
    %373 = arith.mulf %6, %372 : vector<2x128x8xf32>
    %cst_106 = arith.constant dense<0.000000e+00> : vector<2x8xf32>
    %374 = vector.multi_reduction <add>, %373, %cst_106 [1] : vector<2x128x8xf32> to vector<2x8xf32>
    %375 = arith.index_cast %c3_i32 : i32 to index
    %c0_107 = arith.constant 0 : index
    %c0_108 = arith.constant 0 : index
    %376 = vector.load %arg4[%375, %c0_107, %c0_108] : memref<4x2x512xbf16, #tpu.memory_space<vmem>>, vector<1x2x512xbf16>
    %377 = vector.shape_cast %376 : vector<1x2x512xbf16> to vector<2x512xbf16>
    %378 = arith.extf %377 : vector<2x512xbf16> to vector<2x512xf32>
    %379 = arith.truncf %374 : vector<2x8xf32> to vector<2x8xbf16>
    %cst_109 = arith.constant dense<0.000000e+00> : vector<2x512xf32>
    %380 = tpu.matmul %379, %11, %cst_109 {dimension_numbers = #tpu.dot_dimension_numbers<[1], [0], [0], [1], [0, 0, 1, 1], [], []>} : vector<2x8xbf16>, vector<8x512xbf16>, vector<2x512xf32> -> vector<2x512xf32>
    %381 = arith.addf %378, %380 : vector<2x512xf32>
    %382 = arith.addf %381, %347 : vector<2x512xf32>
    %383 = vector.broadcast %14 : vector<1x512xf32> to vector<2x512xf32>
    %384 = arith.addf %382, %383 : vector<2x512xf32>
    %385 = vector.extract_strided_slice %384 {offsets = [0, 0], sizes = [2, 128], strides = [1, 1]} : vector<2x512xf32> to vector<2x128xf32>
    %386 = arith.negf %385 : vector<2x128xf32>
    %387 = math.exp %386 : vector<2x128xf32>
    %cst_110 = arith.constant 1.000000e+00 : f32
    %388 = vector.broadcast %cst_110 : f32 to vector<2x128xf32>
    %389 = arith.addf %388, %387 : vector<2x128xf32>
    %390 = arith.divf %388, %389 : vector<2x128xf32>
    %391 = vector.extract_strided_slice %384 {offsets = [0, 128], sizes = [2, 128], strides = [1, 1]} : vector<2x512xf32> to vector<2x128xf32>
    %392 = arith.negf %391 : vector<2x128xf32>
    %393 = math.exp %392 : vector<2x128xf32>
    %cst_111 = arith.constant 1.000000e+00 : f32
    %394 = vector.broadcast %cst_111 : f32 to vector<2x128xf32>
    %395 = arith.addf %394, %393 : vector<2x128xf32>
    %396 = arith.divf %394, %395 : vector<2x128xf32>
    %397 = vector.extract_strided_slice %384 {offsets = [0, 256], sizes = [2, 128], strides = [1, 1]} : vector<2x512xf32> to vector<2x128xf32>
    %398 = math.tanh %397 : vector<2x128xf32>
    %399 = vector.extract_strided_slice %384 {offsets = [0, 384], sizes = [2, 128], strides = [1, 1]} : vector<2x512xf32> to vector<2x128xf32>
    %400 = arith.negf %399 : vector<2x128xf32>
    %401 = math.exp %400 : vector<2x128xf32>
    %cst_112 = arith.constant 1.000000e+00 : f32
    %402 = vector.broadcast %cst_112 : f32 to vector<2x128xf32>
    %403 = arith.addf %402, %401 : vector<2x128xf32>
    %404 = arith.divf %402, %403 : vector<2x128xf32>
    %405 = arith.mulf %396, %301 : vector<2x128xf32>
    %406 = arith.mulf %390, %398 : vector<2x128xf32>
    %407 = arith.addf %405, %406 : vector<2x128xf32>
    %408 = math.tanh %407 : vector<2x128xf32>
    %409 = arith.mulf %404, %408 : vector<2x128xf32>
    %410 = arith.truncf %409 : vector<2x128xf32> to vector<2x128xbf16>
    %cst_113 = arith.constant dense<0.000000e+00> : vector<2x512xf32>
    %411 = tpu.matmul %410, %13, %cst_113 {dimension_numbers = #tpu.dot_dimension_numbers<[1], [0], [0], [1], [0, 0, 1, 1], [], []>} : vector<2x128xbf16>, vector<128x512xbf16>, vector<2x512xf32> -> vector<2x512xf32>
    %412 = arith.addf %411, %345 : vector<2x512xf32>
    %413 = vector.broadcast %15 : vector<1x512xf32> to vector<2x512xf32>
    %414 = arith.addf %412, %413 : vector<2x512xf32>
    %415 = vector.extract_strided_slice %414 {offsets = [0, 0], sizes = [2, 128], strides = [1, 1]} : vector<2x512xf32> to vector<2x128xf32>
    %416 = arith.negf %415 : vector<2x128xf32>
    %417 = math.exp %416 : vector<2x128xf32>
    %cst_114 = arith.constant 1.000000e+00 : f32
    %418 = vector.broadcast %cst_114 : f32 to vector<2x128xf32>
    %419 = arith.addf %418, %417 : vector<2x128xf32>
    %420 = arith.divf %418, %419 : vector<2x128xf32>
    %421 = vector.extract_strided_slice %414 {offsets = [0, 128], sizes = [2, 128], strides = [1, 1]} : vector<2x512xf32> to vector<2x128xf32>
    %422 = arith.negf %421 : vector<2x128xf32>
    %423 = math.exp %422 : vector<2x128xf32>
    %cst_115 = arith.constant 1.000000e+00 : f32
    %424 = vector.broadcast %cst_115 : f32 to vector<2x128xf32>
    %425 = arith.addf %424, %423 : vector<2x128xf32>
    %426 = arith.divf %424, %425 : vector<2x128xf32>
    %427 = vector.extract_strided_slice %414 {offsets = [0, 256], sizes = [2, 128], strides = [1, 1]} : vector<2x512xf32> to vector<2x128xf32>
    %428 = math.tanh %427 : vector<2x128xf32>
    %429 = vector.extract_strided_slice %414 {offsets = [0, 384], sizes = [2, 128], strides = [1, 1]} : vector<2x512xf32> to vector<2x128xf32>
    %430 = arith.negf %429 : vector<2x128xf32>
    %431 = math.exp %430 : vector<2x128xf32>
    %cst_116 = arith.constant 1.000000e+00 : f32
    %432 = vector.broadcast %cst_116 : f32 to vector<2x128xf32>
    %433 = arith.addf %432, %431 : vector<2x128xf32>
    %434 = arith.divf %432, %433 : vector<2x128xf32>
    %435 = arith.mulf %426, %331 : vector<2x128xf32>
    %436 = arith.mulf %420, %428 : vector<2x128xf32>
    %437 = arith.addf %435, %436 : vector<2x128xf32>
    %438 = math.tanh %437 : vector<2x128xf32>
    %439 = arith.mulf %434, %438 : vector<2x128xf32>
    %440 = arith.index_cast %c3_i32 : i32 to index
    %c0_117 = arith.constant 0 : index
    %c0_118 = arith.constant 0 : index
    %441 = vector.load %arg14[%440, %c0_117, %c0_118] : memref<4x2x128xf32, #tpu.memory_space<vmem>>, vector<1x2x128xf32>
    %442 = vector.shape_cast %441 : vector<1x2x128xf32> to vector<2x128xf32>
    %443 = vector.shape_cast %439 : vector<2x128xf32> to vector<1x2x128xf32>
    tpu.vector_store %arg14[%440, %c0_117, %c0_118], %443 {strides = array<i32>} : memref<4x2x128xf32, #tpu.memory_space<vmem>>, vector<1x2x128xf32>,
    %444 = arith.index_cast %c3_i32 : i32 to index
    %c0_119 = arith.constant 0 : index
    %c0_120 = arith.constant 0 : index
    %445 = vector.load %arg15[%444, %c0_119, %c0_120] : memref<4x2x128xf32, #tpu.memory_space<vmem>>, vector<1x2x128xf32>
    %446 = vector.shape_cast %445 : vector<1x2x128xf32> to vector<2x128xf32>
    %447 = vector.shape_cast %370 : vector<2x128xf32> to vector<1x2x128xf32>
    tpu.vector_store %arg15[%444, %c0_119, %c0_120], %447 {strides = array<i32>} : memref<4x2x128xf32, #tpu.memory_space<vmem>>, vector<1x2x128xf32>,
    %c4_i32 = arith.constant 4 : i32
    %c0_121 = arith.constant 0 : index
    %c0_122 = arith.constant 0 : index
    %c0_123 = arith.constant 0 : index
    %448 = vector.load %arg16[%c0_121, %c0_122, %c0_123] : memref<2x2x128xf32, #tpu.memory_space<vmem>>, vector<1x2x128xf32>
    %449 = vector.shape_cast %448 : vector<1x2x128xf32> to vector<2x128xf32>
    %450 = vector.shape_cast %409 : vector<2x128xf32> to vector<1x2x128xf32>
    tpu.vector_store %arg16[%c0_121, %c0_122, %c0_123], %450 {strides = array<i32>} : memref<2x2x128xf32, #tpu.memory_space<vmem>>, vector<1x2x128xf32>,
    %c0_124 = arith.constant 0 : index
    %c0_125 = arith.constant 0 : index
    %c0_126 = arith.constant 0 : index
    %451 = vector.load %arg17[%c0_124, %c0_125, %c0_126] : memref<2x2x128xf32, #tpu.memory_space<vmem>>, vector<1x2x128xf32>
    %452 = vector.shape_cast %451 : vector<1x2x128xf32> to vector<2x128xf32>
    %453 = vector.shape_cast %407 : vector<2x128xf32> to vector<1x2x128xf32>
    tpu.vector_store %arg17[%c0_124, %c0_125, %c0_126], %453 {strides = array<i32>} : memref<2x2x128xf32, #tpu.memory_space<vmem>>, vector<1x2x128xf32>,
    %c1_127 = arith.constant 1 : index
    %c0_128 = arith.constant 0 : index
    %c0_129 = arith.constant 0 : index
    %454 = vector.load %arg16[%c1_127, %c0_128, %c0_129] : memref<2x2x128xf32, #tpu.memory_space<vmem>>, vector<1x2x128xf32>
    %455 = vector.shape_cast %454 : vector<1x2x128xf32> to vector<2x128xf32>
    %456 = vector.shape_cast %439 : vector<2x128xf32> to vector<1x2x128xf32>
    tpu.vector_store %arg16[%c1_127, %c0_128, %c0_129], %456 {strides = array<i32>} : memref<2x2x128xf32, #tpu.memory_space<vmem>>, vector<1x2x128xf32>,
    %c1_130 = arith.constant 1 : index
    %c0_131 = arith.constant 0 : index
    %c0_132 = arith.constant 0 : index
    %457 = vector.load %arg17[%c1_130, %c0_131, %c0_132] : memref<2x2x128xf32, #tpu.memory_space<vmem>>, vector<1x2x128xf32>
    %458 = vector.shape_cast %457 : vector<1x2x128xf32> to vector<2x128xf32>
    %459 = vector.shape_cast %437 : vector<2x128xf32> to vector<1x2x128xf32>
    tpu.vector_store %arg17[%c1_130, %c0_131, %c0_132], %459 {strides = array<i32>} : memref<2x2x128xf32, #tpu.memory_space<vmem>>, vector<1x2x128xf32>,
    return
  }
  func.func @transform_0(%arg0: i32) -> (i32, i32, i32) {
    %c0_i32 = arith.constant 0 : i32
    %c0_i32_0 = arith.constant 0 : i32
    %c0_i32_1 = arith.constant 0 : i32
    %c0_i32_2 = arith.constant 0 : i32
    return %c0_i32, %c0_i32_0, %c0_i32_1 : i32, i32, i32
  }
  func.func @transform_1(%arg0: i32) -> (i32, i32) {
    %c0_i32 = arith.constant 0 : i32
    %c0_i32_0 = arith.constant 0 : i32
    %c0_i32_1 = arith.constant 0 : i32
    return %c0_i32, %c0_i32_0 : i32, i32
  }
  func.func @transform_2(%arg0: i32) -> (i32, i32, i32) {
    %c0_i32 = arith.constant 0 : i32
    %c0_i32_0 = arith.constant 0 : i32
    %c0_i32_1 = arith.constant 0 : i32
    %c0_i32_2 = arith.constant 0 : i32
    return %c0_i32, %c0_i32_0, %c0_i32_1 : i32, i32, i32
  }
  func.func @transform_3(%arg0: i32) -> (i32, i32, i32) {
    %c0_i32 = arith.constant 0 : i32
    %c0_i32_0 = arith.constant 0 : i32
    %c0_i32_1 = arith.constant 0 : i32
    return %arg0, %c0_i32, %c0_i32_0 : i32, i32, i32
  }
  func.func @transform_4(%arg0: i32) -> (i32, i32) {
    %c0_i32 = arith.constant 0 : i32
    %c0_i32_0 = arith.constant 0 : i32
    %c0_i32_1 = arith.constant 0 : i32
    return %c0_i32, %c0_i32_0 : i32, i32
  }
  func.func @transform_5(%arg0: i32) -> (i32, i32) {
    %c0_i32 = arith.constant 0 : i32
    %c0_i32_0 = arith.constant 0 : i32
    %c0_i32_1 = arith.constant 0 : i32
    return %c0_i32, %c0_i32_0 : i32, i32
  }
  func.func @transform_6(%arg0: i32) -> (i32, i32) {
    %c0_i32 = arith.constant 0 : i32
    %c0_i32_0 = arith.constant 0 : i32
    %c0_i32_1 = arith.constant 0 : i32
    return %c0_i32, %c0_i32_0 : i32, i32
  }
  func.func @transform_7(%arg0: i32) -> (i32, i32) {
    %c0_i32 = arith.constant 0 : i32
    %c0_i32_0 = arith.constant 0 : i32
    %c0_i32_1 = arith.constant 0 : i32
    return %c0_i32, %c0_i32_0 : i32, i32
  }
  func.func @transform_8(%arg0: i32) -> (i32, i32) {
    %c0_i32 = arith.constant 0 : i32
    %c0_i32_0 = arith.constant 0 : i32
    %c0_i32_1 = arith.constant 0 : i32
    return %c0_i32, %c0_i32_0 : i32, i32
  }
  func.func @transform_9(%arg0: i32) -> (i32, i32) {
    %c0_i32 = arith.constant 0 : i32
    %c0_i32_0 = arith.constant 0 : i32
    %c0_i32_1 = arith.constant 0 : i32
    return %c0_i32, %c0_i32_0 : i32, i32
  }
  func.func @transform_10(%arg0: i32) -> (i32, i32) {
    %c0_i32 = arith.constant 0 : i32
    %c0_i32_0 = arith.constant 0 : i32
    %c0_i32_1 = arith.constant 0 : i32
    return %c0_i32, %c0_i32_0 : i32, i32
  }
  func.func @transform_11(%arg0: i32) -> (i32, i32) {
    %c0_i32 = arith.constant 0 : i32
    %c0_i32_0 = arith.constant 0 : i32
    %c0_i32_1 = arith.constant 0 : i32
    return %c0_i32, %c0_i32_0 : i32, i32
  }
  func.func @transform_12(%arg0: i32) -> (i32, i32) {
    %c0_i32 = arith.constant 0 : i32
    %c0_i32_0 = arith.constant 0 : i32
    %c0_i32_1 = arith.constant 0 : i32
    return %c0_i32, %c0_i32_0 : i32, i32
  }
  func.func @transform_13(%arg0: i32) -> (i32, i32, i32) {
    %c0_i32 = arith.constant 0 : i32
    %c0_i32_0 = arith.constant 0 : i32
    %c0_i32_1 = arith.constant 0 : i32
    return %arg0, %c0_i32, %c0_i32_0 : i32, i32, i32
  }
  func.func @transform_14(%arg0: i32) -> (i32, i32, i32) {
    %c0_i32 = arith.constant 0 : i32
    %c0_i32_0 = arith.constant 0 : i32
    %c0_i32_1 = arith.constant 0 : i32
    return %arg0, %c0_i32, %c0_i32_0 : i32, i32, i32
  }
}

</mosaic_0001>

<llo_original>
// kernel: tpu_custom_call.1
$region0: #{tpu_custom_call.1}
  #allocation0 [shape = 'u32[]', space=smem, size = 0x4, offset = 0x4, fixed_abs, tag = 'smem constant byte address 0x4 - core index']
  #allocation1 [shape = 'u32[144,128]{1,0:T(1,128)}', space=vmem, size = 0x12000, scoped, tag = 'internal scratch']
  #allocation2 [shape = 'f32[2,2,128]{2,1,0:T(2,128)}', space=vmem, size = 0x800, scoped, tag = 'scratch operand']
  #allocation3 [shape = 'f32[2,2,128]{2,1,0:T(2,128)}', space=vmem, size = 0x800, scoped, tag = 'scratch operand']
  %s0 = inlined_call_operand.hbm [shape: f32[2,128,128], index: 0, kind: input, shape index: {}]
  %s1 = inlined_call_operand.vmem [shape: f32[1,128], index: 1, kind: input, shape index: {}]
  %s2 = inlined_call_operand.vmem [shape: bf16[2,128,8], index: 2, kind: input, shape index: {}]
  %s3 = inlined_call_operand.vmem [shape: bf16[8,2,512], index: 3, kind: input, shape index: {}]
  %s4 = inlined_call_operand.hbm [shape: bf16[128,640], index: 4, kind: input, shape index: {}]
  %s5 = inlined_call_operand.vmem [shape: f32[1,128], index: 5, kind: input, shape index: {}]
  %s6 = inlined_call_operand.vmem [shape: bf16[8,512], index: 6, kind: input, shape index: {}]
  %s7 = inlined_call_operand.hbm [shape: bf16[128,512], index: 7, kind: input, shape index: {}]
  %s8 = inlined_call_operand.hbm [shape: bf16[128,512], index: 8, kind: input, shape index: {}]
  %s9 = inlined_call_operand.vmem [shape: f32[1,512], index: 9, kind: input, shape index: {}]
  %s10 = inlined_call_operand.vmem [shape: f32[1,512], index: 10, kind: input, shape index: {}]
  %s11 = inlined_call_operand.vmem [shape: f32[2,128], index: 11, kind: input, shape index: {}]
  %s12 = inlined_call_operand.vmem [shape: f32[2,128], index: 12, kind: input, shape index: {}]
  %s13 = inlined_call_operand.hbm [shape: f32[8,2,128], index: 13, kind: output, shape index: {0}]
  %s14 = inlined_call_operand.hbm [shape: f32[8,2,128], index: 14, kind: output, shape index: {1}]
  %15 = xla_tuple %s13, %s14
  %s16 = sld [smem:[#allocation0]]
  $region113: #{tpu_custom_call.1} parent=0
    _
  %s18 = ssub.s32 1, %s16
  %s19 = scalar_select 0, %s18, %s16
  $region1: #{tpu_custom_call.1} parent=0
    #allocation4 [shape = 'u8[131072]{0}', space=vmem, size = 0x20000, scoped, tag = 'input window, operand 0, single buffered']
    #allocation5 [shape = 's32[2]{0}', space=sflag, size = 0x8, scoped, tag = 'scoped memory for tpu_custom_call.1']
    #allocation6 [shape = 's32[2]{0}', space=sflag, size = 0x8, scoped, tag = 'scoped memory for tpu_custom_call.1']
    #allocation7 [shape = 'u8[163840]{0}', space=vmem, size = 0x28000, scoped, tag = 'input window, operand 4, single buffered']
    #allocation8 [shape = 's32[1]{0}', space=sflag, size = 0x4, scoped, tag = 'scoped memory for tpu_custom_call.1']
    #allocation9 [shape = 'u8[131072]{0}', space=vmem, size = 0x20000, scoped, tag = 'input window, operand 7, single buffered']
    #allocation10 [shape = 'u8[131072]{0}', space=vmem, size = 0x20000, scoped, tag = 'input window, operand 8, single buffered']
    #allocation11 [shape = 's32[1]{0}', space=sflag, size = 0x4, scoped, tag = 'scoped memory for tpu_custom_call.1']
    #allocation12 [shape = 'u8[8192]{0}', space=vmem, size = 0x2000, scoped, tag = 'output window, operand 0']
    #allocation13 [shape = 'u8[8192]{0}', space=vmem, size = 0x2000, scoped, tag = 'output window, operand 1']
    #allocation14 [shape = 's32[2]{0}', space=sflag, size = 0x8, scoped, tag = 'scoped memory for tpu_custom_call.1']
    %20 = vsyncpa [#allocation5], 0
    %21 = vsyncpa [#allocation8], 0
    %22 = vsyncpa [#allocation11], 0
    %23 = vsyncpa [#allocation6], 0
    %s24 = scalar_lea.sflag [#allocation6], 1
    %25 = vsyncpa %s24, 0
    %26 = vsyncpa [#allocation14], 0
    %s27 = scalar_lea.sflag [#allocation14], 1
    %28 = vsyncpa %s27, 0
    loop: start=0, step=1, limit=4
    $region2: #{tpu_custom_call.1} parent=1 // loop_pre_header
      _
    $region3: #{tpu_custom_call.1} parent=1 // loop_header
      %s30 = sphi 0, %s34
      %p31 = scmp.ge.s32.totalorder %s30, 4
      %s38 = sphi 0, %s38
      %s40 = sphi 0, %s38
      %s41 = sphi 0, %s40
      %s55 = sphi 0, %s41
      %s59 = sphi 0, %s59
      %s61 = sphi 0, %s59
      %s62 = sphi 0, %s61
      %s76 = sphi 0, %s62
      %s80 = sphi 0, %s80
      %s82 = sphi 0, %s80
      %s83 = sphi 0, %s82
      %s97 = sphi 0, %s83
      %s103 = sphi 0, %s105
      %s106 = sphi 0, %s103
      %s107 = sphi 0, %s106
      %s123 = sphi 0, %s107
      %s127 = sphi 0, %s127
      %s129 = sphi 0, %s127
      %s130 = sphi 0, %s129
      %s144 = sphi 0, %s130
      %s148 = sphi 0, %s148
      %s150 = sphi 0, %s148
      %s151 = sphi 0, %s150
      %s165 = sphi 0, %s151
      %s169 = sphi 0, %s169
      %s171 = sphi 0, %s169
      %s172 = sphi 0, %s171
      %s186 = sphi 0, %s172
      %s190 = sphi 0, %s190
      %s192 = sphi 0, %s190
      %s193 = sphi 0, %s192
      %s207 = sphi 0, %s193
      %s211 = sphi 0, %s211
      %s213 = sphi 0, %s211
      %s214 = sphi 0, %s213
      %s228 = sphi 0, %s214
      %s232 = sphi 0, %s232
      %s234 = sphi 0, %s232
      %s235 = sphi 0, %s234
      %s249 = sphi 0, %s235
      %s253 = sphi 0, %s253
      %s255 = sphi 0, %s253
      %s256 = sphi 0, %s255
      %s270 = sphi 0, %s256
      %s274 = sphi 0, %s274
      %s276 = sphi 0, %s274
      %s277 = sphi 0, %s276
      %s291 = sphi 0, %s277
      %s295 = sphi 0, %s295
      %s297 = sphi 0, %s295
      %s298 = sphi 0, %s297
      %s312 = sphi 0, %s298
      %s318 = sphi 0, %s320
      %s321 = sphi 0, %s318
      %s322 = sphi 0, %s321
      %s338 = sphi 0, %s322
      %s344 = sphi 0, %s346
      %s347 = sphi 0, %s344
      %s348 = sphi 0, %s347
      %s364 = sphi 0, %s348
    $region4: #{tpu_custom_call.1} parent=1 // loop_header_branch
      %33 = sbr.rel (%p31) target = $region8
    $region5: #{tpu_custom_call.1} parent=1 // loop_body
      %s35 = ssub.s32 %s30, 1
      %s36 = ssub.s32 %s30, 2
      %s37 = sadd.s32 %s30, 1
      %s39 = sadd.s32 %s38, 1
      %p42 = scmp.eq.s32.totalorder %s30, 1
      %p43 = scmp.ne.s32.totalorder %s38, %s40
      %p44 = scmp.eq.s32.totalorder %s30, 0
      %p45 = por %p43, %p44
      %p46 = scmp.ne.s32.totalorder %s38, %s40
      %p47 = scmp.eq.s32.totalorder %s35, 1
      %p48 = por %p46, %p47
      %p49 = scmp.ne.s32.totalorder %s40, %s41
      %p50 = scmp.eq.s32.totalorder %s35, 0
      %p51 = por %p49, %p50
      %p52 = scmp.ne.s32.totalorder %s40, %s41
      %p53 = scmp.eq.s32.totalorder %s36, 1
      %p54 = por %p52, %p53
      %p56 = scmp.ne.s32.totalorder %s41, %s55
      %p57 = scmp.eq.s32.totalorder %s36, 0
      %p58 = por %p56, %p57
      %s60 = sadd.s32 %s59, 1
      %p63 = scmp.eq.s32.totalorder %s30, 1
      %p64 = scmp.ne.s32.totalorder %s59, %s61
      %p65 = scmp.eq.s32.totalorder %s30, 0
      %p66 = por %p64, %p65
      %p67 = scmp.ne.s32.totalorder %s59, %s61
      %p68 = scmp.eq.s32.totalorder %s35, 1
      %p69 = por %p67, %p68
      %p70 = scmp.ne.s32.totalorder %s61, %s62
      %p71 = scmp.eq.s32.totalorder %s35, 0
      %p72 = por %p70, %p71
      %p73 = scmp.ne.s32.totalorder %s61, %s62
      %p74 = scmp.eq.s32.totalorder %s36, 1
      %p75 = por %p73, %p74
      %p77 = scmp.ne.s32.totalorder %s62, %s76
      %p78 = scmp.eq.s32.totalorder %s36, 0
      %p79 = por %p77, %p78
      %s81 = sadd.s32 %s80, 1
      %p84 = scmp.eq.s32.totalorder %s30, 1
      %p85 = scmp.ne.s32.totalorder %s80, %s82
      %p86 = scmp.eq.s32.totalorder %s30, 0
      %p87 = por %p85, %p86
      %p88 = scmp.ne.s32.totalorder %s80, %s82
      %p89 = scmp.eq.s32.totalorder %s35, 1
      %p90 = por %p88, %p89
      %p91 = scmp.ne.s32.totalorder %s82, %s83
      %p92 = scmp.eq.s32.totalorder %s35, 0
      %p93 = por %p91, %p92
      %p94 = scmp.ne.s32.totalorder %s82, %s83
      %p95 = scmp.eq.s32.totalorder %s36, 1
      %p96 = por %p94, %p95
      %p98 = scmp.ne.s32.totalorder %s83, %s97
      %p99 = scmp.eq.s32.totalorder %s36, 0
      %p100 = por %p98, %p99
      %s101 = ssub.s32 %s30, %s37
      %p102 = scmp.eq.s32.totalorder %s101, 0
      %s104 = sadd.s32 %s103, 1
      %s105 = scalar_select %p102, %s103, %s104
      %p108 = pneg %p102
      %p109 = scmp.eq.s32.totalorder %s30, 1
      %p110 = por %p108, %p109
      %p111 = scmp.ne.s32.totalorder %s103, %s106
      %p112 = scmp.eq.s32.totalorder %s30, 0
      %p113 = por %p111, %p112
      %p114 = scmp.ne.s32.totalorder %s103, %s106
      %p115 = scmp.eq.s32.totalorder %s35, 1
      %p116 = por %p114, %p115
      %p117 = scmp.ne.s32.totalorder %s106, %s107
      %p118 = scmp.eq.s32.totalorder %s35, 0
      %p119 = por %p117, %p118
      %p120 = scmp.ne.s32.totalorder %s106, %s107
      %p121 = scmp.eq.s32.totalorder %s36, 1
      %p122 = por %p120, %p121
      %p124 = scmp.ne.s32.totalorder %s107, %s123
      %p125 = scmp.eq.s32.totalorder %s36, 0
      %p126 = por %p124, %p125
      %s128 = sadd.s32 %s127, 1
      %p131 = scmp.eq.s32.totalorder %s30, 1
      %p132 = scmp.ne.s32.totalorder %s127, %s129
      %p133 = scmp.eq.s32.totalorder %s30, 0
      %p134 = por %p132, %p133
      %p135 = scmp.ne.s32.totalorder %s127, %s129
      %p136 = scmp.eq.s32.totalorder %s35, 1
      %p137 = por %p135, %p136
      %p138 = scmp.ne.s32.totalorder %s129, %s130
      %p139 = scmp.eq.s32.totalorder %s35, 0
      %p140 = por %p138, %p139
      %p141 = scmp.ne.s32.totalorder %s129, %s130
      %p142 = scmp.eq.s32.totalorder %s36, 1
      %p143 = por %p141, %p142
      %p145 = scmp.ne.s32.totalorder %s130, %s144
      %p146 = scmp.eq.s32.totalorder %s36, 0
      %p147 = por %p145, %p146
      %s149 = sadd.s32 %s148, 1
      %p152 = scmp.eq.s32.totalorder %s30, 1
      %p153 = scmp.ne.s32.totalorder %s148, %s150
      %p154 = scmp.eq.s32.totalorder %s30, 0
      %p155 = por %p153, %p154
      %p156 = scmp.ne.s32.totalorder %s148, %s150
      %p157 = scmp.eq.s32.totalorder %s35, 1
      %p158 = por %p156, %p157
      %p159 = scmp.ne.s32.totalorder %s150, %s151
      %p160 = scmp.eq.s32.totalorder %s35, 0
      %p161 = por %p159, %p160
      %p162 = scmp.ne.s32.totalorder %s150, %s151
      %p163 = scmp.eq.s32.totalorder %s36, 1
      %p164 = por %p162, %p163
      %p166 = scmp.ne.s32.totalorder %s151, %s165
      %p167 = scmp.eq.s32.totalorder %s36, 0
      %p168 = por %p166, %p167
      %s170 = sadd.s32 %s169, 1
      %p173 = scmp.eq.s32.totalorder %s30, 1
      %p174 = scmp.ne.s32.totalorder %s169, %s171
      %p175 = scmp.eq.s32.totalorder %s30, 0
      %p176 = por %p174, %p175
      %p177 = scmp.ne.s32.totalorder %s169, %s171
      %p178 = scmp.eq.s32.totalorder %s35, 1
      %p179 = por %p177, %p178
      %p180 = scmp.ne.s32.totalorder %s171, %s172
      %p181 = scmp.eq.s32.totalorder %s35, 0
      %p182 = por %p180, %p181
      %p183 = scmp.ne.s32.totalorder %s171, %s172
      %p184 = scmp.eq.s32.totalorder %s36, 1
      %p185 = por %p183, %p184
      %p187 = scmp.ne.s32.totalorder %s172, %s186
      %p188 = scmp.eq.s32.totalorder %s36, 0
      %p189 = por %p187, %p188
      %s191 = sadd.s32 %s190, 1
      %p194 = scmp.eq.s32.totalorder %s30, 1
      %p195 = scmp.ne.s32.totalorder %s190, %s192
      %p196 = scmp.eq.s32.totalorder %s30, 0
      %p197 = por %p195, %p196
      %p198 = scmp.ne.s32.totalorder %s190, %s192
      %p199 = scmp.eq.s32.totalorder %s35, 1
      %p200 = por %p198, %p199
      %p201 = scmp.ne.s32.totalorder %s192, %s193
      %p202 = scmp.eq.s32.totalorder %s35, 0
      %p203 = por %p201, %p202
      %p204 = scmp.ne.s32.totalorder %s192, %s193
      %p205 = scmp.eq.s32.totalorder %s36, 1
      %p206 = por %p204, %p205
      %p208 = scmp.ne.s32.totalorder %s193, %s207
      %p209 = scmp.eq.s32.totalorder %s36, 0
      %p210 = por %p208, %p209
      %s212 = sadd.s32 %s211, 1
      %p215 = scmp.eq.s32.totalorder %s30, 1
      %p216 = scmp.ne.s32.totalorder %s211, %s213
      %p217 = scmp.eq.s32.totalorder %s30, 0
      %p218 = por %p216, %p217
      %p219 = scmp.ne.s32.totalorder %s211, %s213
      %p220 = scmp.eq.s32.totalorder %s35, 1
      %p221 = por %p219, %p220
      %p222 = scmp.ne.s32.totalorder %s213, %s214
      %p223 = scmp.eq.s32.totalorder %s35, 0
      %p224 = por %p222, %p223
      %p225 = scmp.ne.s32.totalorder %s213, %s214
      %p226 = scmp.eq.s32.totalorder %s36, 1
      %p227 = por %p225, %p226
      %p229 = scmp.ne.s32.totalorder %s214, %s228
      %p230 = scmp.eq.s32.totalorder %s36, 0
      %p231 = por %p229, %p230
      %s233 = sadd.s32 %s232, 1
      %p236 = scmp.eq.s32.totalorder %s30, 1
      %p237 = scmp.ne.s32.totalorder %s232, %s234
      %p238 = scmp.eq.s32.totalorder %s30, 0
      %p239 = por %p237, %p238
      %p240 = scmp.ne.s32.totalorder %s232, %s234
      %p241 = scmp.eq.s32.totalorder %s35, 1
      %p242 = por %p240, %p241
      %p243 = scmp.ne.s32.totalorder %s234, %s235
      %p244 = scmp.eq.s32.totalorder %s35, 0
      %p245 = por %p243, %p244
      %p246 = scmp.ne.s32.totalorder %s234, %s235
      %p247 = scmp.eq.s32.totalorder %s36, 1
      %p248 = por %p246, %p247
      %p250 = scmp.ne.s32.totalorder %s235, %s249
      %p251 = scmp.eq.s32.totalorder %s36, 0
      %p252 = por %p250, %p251
      %s254 = sadd.s32 %s253, 1
      %p257 = scmp.eq.s32.totalorder %s30, 1
      %p258 = scmp.ne.s32.totalorder %s253, %s255
      %p259 = scmp.eq.s32.totalorder %s30, 0
      %p260 = por %p258, %p259
      %p261 = scmp.ne.s32.totalorder %s253, %s255
      %p262 = scmp.eq.s32.totalorder %s35, 1
      %p263 = por %p261, %p262
      %p264 = scmp.ne.s32.totalorder %s255, %s256
      %p265 = scmp.eq.s32.totalorder %s35, 0
      %p266 = por %p264, %p265
      %p267 = scmp.ne.s32.totalorder %s255, %s256
      %p268 = scmp.eq.s32.totalorder %s36, 1
      %p269 = por %p267, %p268
      %p271 = scmp.ne.s32.totalorder %s256, %s270
      %p272 = scmp.eq.s32.totalorder %s36, 0
      %p273 = por %p271, %p272
      %s275 = sadd.s32 %s274, 1
      %p278 = scmp.eq.s32.totalorder %s30, 1
      %p279 = scmp.ne.s32.totalorder %s274, %s276
      %p280 = scmp.eq.s32.totalorder %s30, 0
      %p281 = por %p279, %p280
      %p282 = scmp.ne.s32.totalorder %s274, %s276
      %p283 = scmp.eq.s32.totalorder %s35, 1
      %p284 = por %p282, %p283
      %p285 = scmp.ne.s32.totalorder %s276, %s277
      %p286 = scmp.eq.s32.totalorder %s35, 0
      %p287 = por %p285, %p286
      %p288 = scmp.ne.s32.totalorder %s276, %s277
      %p289 = scmp.eq.s32.totalorder %s36, 1
      %p290 = por %p288, %p289
      %p292 = scmp.ne.s32.totalorder %s277, %s291
      %p293 = scmp.eq.s32.totalorder %s36, 0
      %p294 = por %p292, %p293
      %s296 = sadd.s32 %s295, 1
      %p299 = scmp.eq.s32.totalorder %s30, 1
      %p300 = scmp.ne.s32.totalorder %s295, %s297
      %p301 = scmp.eq.s32.totalorder %s30, 0
      %p302 = por %p300, %p301
      %p303 = scmp.ne.s32.totalorder %s295, %s297
      %p304 = scmp.eq.s32.totalorder %s35, 1
      %p305 = por %p303, %p304
      %p306 = scmp.ne.s32.totalorder %s297, %s298
      %p307 = scmp.eq.s32.totalorder %s35, 0
      %p308 = por %p306, %p307
      %p309 = scmp.ne.s32.totalorder %s297, %s298
      %p310 = scmp.eq.s32.totalorder %s36, 1
      %p311 = por %p309, %p310
      %p313 = scmp.ne.s32.totalorder %s298, %s312
      %p314 = scmp.eq.s32.totalorder %s36, 0
      %p315 = por %p313, %p314
      %s316 = ssub.s32 %s30, %s37
      %p317 = scmp.eq.s32.totalorder %s316, 0
      %s319 = sadd.s32 %s318, 1
      %s320 = scalar_select %p317, %s318, %s319
      %p323 = pneg %p317
      %p324 = scmp.eq.s32.totalorder %s30, 1
      %p325 = por %p323, %p324
      %p326 = scmp.ne.s32.totalorder %s318, %s321
      %p327 = scmp.eq.s32.totalorder %s30, 0
      %p328 = por %p326, %p327
      %p329 = scmp.ne.s32.totalorder %s318, %s321
      %p330 = scmp.eq.s32.totalorder %s35, 1
      %p331 = por %p329, %p330
      %p332 = scmp.ne.s32.totalorder %s321, %s322
      %p333 = scmp.eq.s32.totalorder %s35, 0
      %p334 = por %p332, %p333
      %p335 = scmp.ne.s32.totalorder %s321, %s322
      %p336 = scmp.eq.s32.totalorder %s36, 1
      %p337 = por %p335, %p336
      %p339 = scmp.ne.s32.totalorder %s322, %s338
      %p340 = scmp.eq.s32.totalorder %s36, 0
      %p341 = por %p339, %p340
      %s342 = ssub.s32 %s30, %s37
      %p343 = scmp.eq.s32.totalorder %s342, 0
      %s345 = sadd.s32 %s344, 1
      %s346 = scalar_select %p343, %s344, %s345
      %p349 = pneg %p343
      %p350 = scmp.eq.s32.totalorder %s30, 1
      %p351 = por %p349, %p350
      %p352 = scmp.ne.s32.totalorder %s344, %s347
      %p353 = scmp.eq.s32.totalorder %s30, 0
      %p354 = por %p352, %p353
      %p355 = scmp.ne.s32.totalorder %s344, %s347
      %p356 = scmp.eq.s32.totalorder %s35, 1
      %p357 = por %p355, %p356
      %p358 = scmp.ne.s32.totalorder %s347, %s348
      %p359 = scmp.eq.s32.totalorder %s35, 0
      %p360 = por %p358, %p359
      %p361 = scmp.ne.s32.totalorder %s347, %s348
      %p362 = scmp.eq.s32.totalorder %s36, 1
      %p363 = por %p361, %p362
      %p365 = scmp.ne.s32.totalorder %s348, %s364
      %p366 = scmp.eq.s32.totalorder %s36, 0
      %p367 = por %p365, %p366
      %p368 = scmp.le.s32.totalorder 1, %s30
      %p369 = scmp.lt.s32.totalorder %s30, 3
      %p370 = pnand %p368, %p369
      %p371 = pneg %p370
      // Predicated region
      $region9: #{tpu_custom_call.1} parent=5 // pred_check
        _
      $region10: #{tpu_custom_call.1} parent=5 // pred_check_branch
        %373 = sbr.rel (%p370) target = $region12
      $region11: #{tpu_custom_call.1} parent=5 // pred_region
        %s374 = ssub.s32 %s30, 1
        // Predicated region
        $region13: #{tpu_custom_call.1} parent=11 // pred_check
          %p375 = pneg %p51
        $region14: #{tpu_custom_call.1} parent=11 // pred_check_branch
          %377 = sbr.rel (%p375) target = $region16
        $region15: #{tpu_custom_call.1} parent=11 // pred_region
          %s379 = ssub.s32 4096, 4096
          %380 = vsyncadd [#allocation5], %s379
          %s381 = sshll.u32 [#allocation4], 4
          %s382 = int_to_ptr.vmem [resolvable:$true] %s381
          %387 = dma.hbm_to_vmem [thread:$0]  %s0, 4096, %s382, [#allocation5], 128, 128, 8
        $region16: #{tpu_custom_call.1} parent=11 // pred_fallthru
          _
        // Predicated region
        $region17: #{tpu_custom_call.1} parent=11 // pred_check
          %p388 = pneg %p72
        $region18: #{tpu_custom_call.1} parent=11 // pred_check_branch
          %390 = sbr.rel (%p388) target = $region20
        $region19: #{tpu_custom_call.1} parent=11 // pred_region
          _
        $region20: #{tpu_custom_call.1} parent=11 // pred_fallthru
          _
        // Predicated region
        $region21: #{tpu_custom_call.1} parent=11 // pred_check
          %p391 = pneg %p93
        $region22: #{tpu_custom_call.1} parent=11 // pred_check_branch
          %393 = sbr.rel (%p391) target = $region24
        $region23: #{tpu_custom_call.1} parent=11 // pred_region
          _
        $region24: #{tpu_custom_call.1} parent=11 // pred_fallthru
          _
        // Predicated region
        $region25: #{tpu_custom_call.1} parent=11 // pred_check
          %p394 = pneg %p140
        $region26: #{tpu_custom_call.1} parent=11 // pred_check_branch
          %396 = sbr.rel (%p394) target = $region28
        $region27: #{tpu_custom_call.1} parent=11 // pred_region
          %s398 = ssub.s32 5120, 5120
          %399 = vsyncadd [#allocation8], %s398
          %s400 = sshll.u32 [#allocation7], 4
          %s401 = int_to_ptr.vmem [resolvable:$true] %s400
          %406 = dma.hbm_to_vmem [thread:$0]  %s4, 5120, %s401, [#allocation8], 320, 320, 20
        $region28: #{tpu_custom_call.1} parent=11 // pred_fallthru
          _
        // Predicated region
        $region29: #{tpu_custom_call.1} parent=11 // pred_check
          %p407 = pneg %p161
        $region30: #{tpu_custom_call.1} parent=11 // pred_check_branch
          %409 = sbr.rel (%p407) target = $region32
        $region31: #{tpu_custom_call.1} parent=11 // pred_region
          _
        $region32: #{tpu_custom_call.1} parent=11 // pred_fallthru
          _
        // Predicated region
        $region33: #{tpu_custom_call.1} parent=11 // pred_check
          %p410 = pneg %p182
        $region34: #{tpu_custom_call.1} parent=11 // pred_check_branch
          %412 = sbr.rel (%p410) target = $region36
        $region35: #{tpu_custom_call.1} parent=11 // pred_region
          _
        $region36: #{tpu_custom_call.1} parent=11 // pred_fallthru
          _
        // Predicated region
        $region37: #{tpu_custom_call.1} parent=11 // pred_check
          %p413 = pneg %p203
        $region38: #{tpu_custom_call.1} parent=11 // pred_check_branch
          %415 = sbr.rel (%p413) target = $region40
        $region39: #{tpu_custom_call.1} parent=11 // pred_region
          %s417 = ssub.s32 4096, 4096
          %418 = vsyncadd [#allocation8], %s417
          %s419 = sshll.u32 [#allocation9], 4
          %s420 = int_to_ptr.vmem [resolvable:$true] %s419
          %425 = dma.hbm_to_vmem [thread:$0]  %s7, 4096, %s420, [#allocation8], 256, 256, 16
        $region40: #{tpu_custom_call.1} parent=11 // pred_fallthru
          _
        // Predicated region
        $region41: #{tpu_custom_call.1} parent=11 // pred_check
          %p426 = pneg %p224
        $region42: #{tpu_custom_call.1} parent=11 // pred_check_branch
          %428 = sbr.rel (%p426) target = $region44
        $region43: #{tpu_custom_call.1} parent=11 // pred_region
          %s430 = ssub.s32 4096, 4096
          %431 = vsyncadd [#allocation11], %s430
          %s432 = sshll.u32 [#allocation10], 4
          %s433 = int_to_ptr.vmem [resolvable:$true] %s432
          %438 = dma.hbm_to_vmem [thread:$0]  %s8, 4096, %s433, [#allocation11], 256, 256, 16
        $region44: #{tpu_custom_call.1} parent=11 // pred_fallthru
          _
        // Predicated region
        $region45: #{tpu_custom_call.1} parent=11 // pred_check
          %p439 = pneg %p245
        $region46: #{tpu_custom_call.1} parent=11 // pred_check_branch
          %441 = sbr.rel (%p439) target = $region48
        $region47: #{tpu_custom_call.1} parent=11 // pred_region
          _
        $region48: #{tpu_custom_call.1} parent=11 // pred_fallthru
          _
        // Predicated region
        $region49: #{tpu_custom_call.1} parent=11 // pred_check
          %p442 = pneg %p266
        $region50: #{tpu_custom_call.1} parent=11 // pred_check_branch
          %444 = sbr.rel (%p442) target = $region52
        $region51: #{tpu_custom_call.1} parent=11 // pred_region
          _
        $region52: #{tpu_custom_call.1} parent=11 // pred_fallthru
          _
        // Predicated region
        $region53: #{tpu_custom_call.1} parent=11 // pred_check
          %p445 = pneg %p287
        $region54: #{tpu_custom_call.1} parent=11 // pred_check_branch
          %447 = sbr.rel (%p445) target = $region56
        $region55: #{tpu_custom_call.1} parent=11 // pred_region
          _
        $region56: #{tpu_custom_call.1} parent=11 // pred_fallthru
          _
        // Predicated region
        $region57: #{tpu_custom_call.1} parent=11 // pred_check
          %p448 = pneg %p308
        $region58: #{tpu_custom_call.1} parent=11 // pred_check_branch
          %450 = sbr.rel (%p448) target = $region60
        $region59: #{tpu_custom_call.1} parent=11 // pred_region
          _
        $region60: #{tpu_custom_call.1} parent=11 // pred_fallthru
          _
      $region12: #{tpu_custom_call.1} parent=5 // pred_fallthru
        _
      %p451 = scmp.lt.s32.totalorder %s30, 2
      // Predicated region
      $region61: #{tpu_custom_call.1} parent=5 // pred_check
        %p452 = pneg %p451
      $region62: #{tpu_custom_call.1} parent=5 // pred_check_branch
        %454 = sbr.rel (%p452) target = $region64
      $region63: #{tpu_custom_call.1} parent=5 // pred_region
        // Predicated region
        $region65: #{tpu_custom_call.1} parent=63 // pred_check
          %p455 = pneg %p113
        $region66: #{tpu_custom_call.1} parent=63 // pred_check_branch
          %457 = sbr.rel (%p455) target = $region68
        $region67: #{tpu_custom_call.1} parent=63 // pred_region
          %s458 = smul.u32 4, %s30
          %p459 = scmp.lt.s32.totalorder %s458, 7
          %s460 = scalar_select %p459, %s458, 7
          %s461 = smul.addr %s460, 4
          %s462 = scalar_lea.vmem %s3, %s461
          %s463 = smul.u32 4, %s30
        $region68: #{tpu_custom_call.1} parent=63 // pred_fallthru
          _
      $region64: #{tpu_custom_call.1} parent=5 // pred_fallthru
        _
      %p464 = scmp.le.s32.totalorder 1, %s30
      %p465 = scmp.lt.s32.totalorder %s30, 3
      %p466 = pnand %p464, %p465
      %p467 = pneg %p466
      // Predicated region
      $region69: #{tpu_custom_call.1} parent=5 // pred_check
        _
      $region70: #{tpu_custom_call.1} parent=5 // pred_check_branch
        %469 = sbr.rel (%p466) target = $region72
      $region71: #{tpu_custom_call.1} parent=5 // pred_region
        %s470 = ssub.s32 %s30, 1
        // Predicated region
        $region73: #{tpu_custom_call.1} parent=71 // pred_check
          %p471 = pneg %p51
        $region74: #{tpu_custom_call.1} parent=71 // pred_check_branch
          %473 = sbr.rel (%p471) target = $region76
        $region75: #{tpu_custom_call.1} parent=71 // pred_region
          %474 = dma.done [#allocation5], 4096
        $region76: #{tpu_custom_call.1} parent=71 // pred_fallthru
          _
        // Predicated region
        $region77: #{tpu_custom_call.1} parent=71 // pred_check
          %p475 = pneg %p140
        $region78: #{tpu_custom_call.1} parent=71 // pred_check_branch
          %477 = sbr.rel (%p475) target = $region80
        $region79: #{tpu_custom_call.1} parent=71 // pred_region
          %478 = dma.done [#allocation8], 5120
        $region80: #{tpu_custom_call.1} parent=71 // pred_fallthru
          _
        // Predicated region
        $region81: #{tpu_custom_call.1} parent=71 // pred_check
          %p479 = pneg %p203
        $region82: #{tpu_custom_call.1} parent=71 // pred_check_branch
          %481 = sbr.rel (%p479) target = $region84
        $region83: #{tpu_custom_call.1} parent=71 // pred_region
          %482 = dma.done [#allocation8], 4096
        $region84: #{tpu_custom_call.1} parent=71 // pred_fallthru
          _
        // Predicated region
        $region85: #{tpu_custom_call.1} parent=71 // pred_check
          %p483 = pneg %p224
        $region86: #{tpu_custom_call.1} parent=71 // pred_check_branch
          %485 = sbr.rel (%p483) target = $region88
        $region87: #{tpu_custom_call.1} parent=71 // pred_region
          %486 = dma.done [#allocation11], 4096
        $region88: #{tpu_custom_call.1} parent=71 // pred_fallthru
          _
        %p487 = pneg %p51
        %p488 = pneg %p48
        %p489 = pneg %p72
        %p490 = pneg %p69
        %p491 = pneg %p93
        %p492 = pneg %p90
        %s493 = smul.u32 4, %s35
        %p494 = scmp.lt.s32.totalorder %s493, 7
        %s495 = scalar_select %p494, %s493, 7
        %s496 = smul.addr %s495, 4
        %s497 = scalar_lea.vmem %s3, %s496
        %p498 = pneg %p119
        %p499 = pneg %p116
        %p500 = pneg %p140
        %p501 = pneg %p137
        %p502 = pneg %p161
        %p503 = pneg %p158
        %p504 = pneg %p182
        %p505 = pneg %p179
        %p506 = pneg %p203
        %p507 = pneg %p200
        %p508 = pneg %p224
        %p509 = pneg %p221
        %p510 = pneg %p245
        %p511 = pneg %p242
        %p512 = pneg %p266
        %p513 = pneg %p263
        %p514 = pneg %p287
        %p515 = pneg %p284
        %p516 = pneg %p308
        %p517 = pneg %p305
        %p518 = pneg %p334
        %p519 = pneg %p331
        %s520 = sand.u32 %s321, 1
        %s521 = scalar_lea.sflag [#allocation6], %s520
        %s522 = sand.u32 %s321, 1
        %s523 = smul.addr %s522, 8
        %s524 = scalar_lea.vmem [#allocation12], %s523
        %p525 = pneg %p360
        %p526 = pneg %p357
        %s527 = sand.u32 %s347, 1
        %s528 = scalar_lea.sflag [#allocation14], %s527
        %s529 = sand.u32 %s347, 1
        %s530 = smul.addr %s529, 8
        %s531 = scalar_lea.vmem [#allocation13], %s530
        %s532 = smul.u32 4, %s35
        %p533 = scmp.lt.s32.totalorder %s532, 7
        %s534 = scalar_select %p533, %s532, 7
        %s535 = smul.addr %s534, 4
        %s536 = scalar_lea.vmem %s3, %s535
        %s537 = smul.u32 4, %s35
        %s538 = smul.u32 4, %s35
        %s539 = smul.u32 4, %s35
        %p541 = scmp.eq.s32.totalorder %s35, 0
        // Predicated region
        $region89: #{tpu_custom_call.1} parent=71 // pred_check
          %p542 = pneg %p541
        $region90: #{tpu_custom_call.1} parent=71 // pred_check_branch
          %544 = sbr.rel (%p542) target = $region92
        $region91: #{tpu_custom_call.1} parent=71 // pred_region
          %v545 = vld [vmem:[%s11] sm:$0x3]
          %546 = vst [vmem:[#allocation2] sm:$0x3] %v545
          %v547 = vld [vmem:[%s11] sm:$0x3]
          %s548 = scalar_lea.vmem [#allocation2], 2
          %549 = vst [vmem:[%s548] sm:$0x3] %v547
          %v550 = vld [vmem:[%s12] sm:$0x3]
          %551 = vst [vmem:[#allocation3] sm:$0x3] %v550
          %v552 = vld [vmem:[%s12] sm:$0x3]
          %s553 = scalar_lea.vmem [#allocation3], 2
          %554 = vst [vmem:[%s553] sm:$0x3] %v552
        $region92: #{tpu_custom_call.1} parent=71 // pred_fallthru
          _
        %v555 = vld [vmem:[#allocation4] sm:$0xff]
        %v556 = vld [vmem:[#allocation4 + $0x8] sm:$0xff]
        %v557 = vld [vmem:[#allocation4 + $0x10] sm:$0xff]
        %v558 = vld [vmem:[#allocation4 + $0x18] sm:$0xff]
        %v559 = vld [vmem:[#allocation4 + $0x20] sm:$0xff]
        %v560 = vld [vmem:[#allocation4 + $0x28] sm:$0xff]
        %v561 = vld [vmem:[#allocation4 + $0x30] sm:$0xff]
        %v562 = vld [vmem:[#allocation4 + $0x38] sm:$0xff]
        %v563 = vld [vmem:[#allocation4 + $0x40] sm:$0xff]
        %v564 = vld [vmem:[#allocation4 + $0x48] sm:$0xff]
        %v565 = vld [vmem:[#allocation4 + $0x50] sm:$0xff]
        %v566 = vld [vmem:[#allocation4 + $0x58] sm:$0xff]
        %v567 = vld [vmem:[#allocation4 + $0x60] sm:$0xff]
        %v568 = vld [vmem:[#allocation4 + $0x68] sm:$0xff]
        %v569 = vld [vmem:[#allocation4 + $0x70] sm:$0xff]
        %v570 = vld [vmem:[#allocation4 + $0x78] sm:$0xff]
        %v571 = vld [vmem:[#allocation4 + $0x80] sm:$0xff]
        %v572 = vld [vmem:[#allocation4 + $0x88] sm:$0xff]
        %v573 = vld [vmem:[#allocation4 + $0x90] sm:$0xff]
        %v574 = vld [vmem:[#allocation4 + $0x98] sm:$0xff]
        %v575 = vld [vmem:[#allocation4 + $0xa0] sm:$0xff]
        %v576 = vld [vmem:[#allocation4 + $0xa8] sm:$0xff]
        %v577 = vld [vmem:[#allocation4 + $0xb0] sm:$0xff]
        %v578 = vld [vmem:[#allocation4 + $0xb8] sm:$0xff]
        %v579 = vld [vmem:[#allocation4 + $0xc0] sm:$0xff]
        %v580 = vld [vmem:[#allocation4 + $0xc8] sm:$0xff]
        %v581 = vld [vmem:[#allocation4 + $0xd0] sm:$0xff]
        %v582 = vld [vmem:[#allocation4 + $0xd8] sm:$0xff]
        %v583 = vld [vmem:[#allocation4 + $0xe0] sm:$0xff]
        %v584 = vld [vmem:[#allocation4 + $0xe8] sm:$0xff]
        %v585 = vld [vmem:[#allocation4 + $0xf0] sm:$0xff]
        %v586 = vld [vmem:[#allocation4 + $0xf8] sm:$0xff]
        %v587 = vld [vmem:[%s1] sm:$0x1]
        %v588 = vld [vmem:[%s2] sm:$0xf]
        %v589 = vld [vmem:[%s2 + $0x4] sm:$0xf]
        %v590 = vld [vmem:[%s2 + $0x8] sm:$0xf]
        %v591 = vld [vmem:[%s2 + $0xc] sm:$0xf]
        %v592 = vld [vmem:[%s2 + $0x10] sm:$0xf]
        %v593 = vld [vmem:[%s2 + $0x14] sm:$0xf]
        %v594 = vld [vmem:[%s2 + $0x18] sm:$0xf]
        %v595 = vld [vmem:[%s2 + $0x1c] sm:$0xf]
        %v596 = vld [vmem:[%s2 + $0x20] sm:$0xf]
        %v597 = vld [vmem:[%s2 + $0x24] sm:$0xf]
        %v598 = vld [vmem:[%s2 + $0x28] sm:$0xf]
        %v599 = vld [vmem:[%s2 + $0x2c] sm:$0xf]
        %v600 = vld [vmem:[%s2 + $0x30] sm:$0xf]
        %v601 = vld [vmem:[%s2 + $0x34] sm:$0xf]
        %v602 = vld [vmem:[%s2 + $0x38] sm:$0xf]
        %v603 = vld [vmem:[%s2 + $0x3c] sm:$0xf]
        %v604 = vld [vmem:[%s2 + $0x40] sm:$0xf]
        %v605 = vld [vmem:[%s2 + $0x44] sm:$0xf]
        %v606 = vld [vmem:[%s2 + $0x48] sm:$0xf]
        %v607 = vld [vmem:[%s2 + $0x4c] sm:$0xf]
        %v608 = vld [vmem:[%s2 + $0x50] sm:$0xf]
        %v609 = vld [vmem:[%s2 + $0x54] sm:$0xf]
        %v610 = vld [vmem:[%s2 + $0x58] sm:$0xf]
        %v611 = vld [vmem:[%s2 + $0x5c] sm:$0xf]
        %v612 = vld [vmem:[%s2 + $0x60] sm:$0xf]
        %v613 = vld [vmem:[%s2 + $0x64] sm:$0xf]
        %v614 = vld [vmem:[%s2 + $0x68] sm:$0xf]
        %v615 = vld [vmem:[%s2 + $0x6c] sm:$0xf]
        %v616 = vld [vmem:[%s2 + $0x70] sm:$0xf]
        %v617 = vld [vmem:[%s2 + $0x74] sm:$0xf]
        %v618 = vld [vmem:[%s2 + $0x78] sm:$0xf]
        %v619 = vld [vmem:[%s2 + $0x7c] sm:$0xf]
        %v620 = vunpack.c.l.bf16 %v588
        %v621 = vunpack.c.l.bf16 %v589
        %v622 = vunpack.c.l.bf16 %v590
        %v623 = vunpack.c.l.bf16 %v591
        %v624 = vunpack.c.l.bf16 %v592
        %v625 = vunpack.c.l.bf16 %v593
        %v626 = vunpack.c.l.bf16 %v594
        %v627 = vunpack.c.l.bf16 %v595
        %v628 = vunpack.c.l.bf16 %v596
        %v629 = vunpack.c.l.bf16 %v597
        %v630 = vunpack.c.l.bf16 %v598
        %v631 = vunpack.c.l.bf16 %v599
        %v632 = vunpack.c.l.bf16 %v600
        %v633 = vunpack.c.l.bf16 %v601
        %v634 = vunpack.c.l.bf16 %v602
        %v635 = vunpack.c.l.bf16 %v603
        %v636 = vunpack.c.l.bf16 %v604
        %v637 = vunpack.c.l.bf16 %v605
        %v638 = vunpack.c.l.bf16 %v606
        %v639 = vunpack.c.l.bf16 %v607
        %v640 = vunpack.c.l.bf16 %v608
        %v641 = vunpack.c.l.bf16 %v609
        %v642 = vunpack.c.l.bf16 %v610
        %v643 = vunpack.c.l.bf16 %v611
        %v644 = vunpack.c.l.bf16 %v612
        %v645 = vunpack.c.l.bf16 %v613
        %v646 = vunpack.c.l.bf16 %v614
        %v647 = vunpack.c.l.bf16 %v615
        %v648 = vunpack.c.l.bf16 %v616
        %v649 = vunpack.c.l.bf16 %v617
        %v650 = vunpack.c.l.bf16 %v618
        %v651 = vunpack.c.l.bf16 %v619
        %v652 = vld [vmem:[%s5] sm:$0x1]
        %v653 = vld [vmem:[#allocation7] sm:$0xff]
        %v654 = vld [vmem:[#allocation7 + $0x8] sm:$0xff]
        %v655 = vld [vmem:[#allocation7 + $0x10] sm:$0xf]
        %v656 = vld [vmem:[#allocation7 + $0x14] sm:$0xff]
        %v657 = vld [vmem:[#allocation7 + $0x1c] sm:$0xff]
        %v658 = vld [vmem:[#allocation7 + $0x24] sm:$0xf]
        %v659 = vld [vmem:[#allocation7 + $0x28] sm:$0xff]
        %v660 = vld [vmem:[#allocation7 + $0x30] sm:$0xff]
        %v661 = vld [vmem:[#allocation7 + $0x38] sm:$0xf]
        %v662 = vld [vmem:[#allocation7 + $0x3c] sm:$0xff]
        %v663 = vld [vmem:[#allocation7 + $0x44] sm:$0xff]
        %v664 = vld [vmem:[#allocation7 + $0x4c] sm:$0xf]
        %v665 = vld [vmem:[#allocation7 + $0x50] sm:$0xff]
        %v666 = vld [vmem:[#allocation7 + $0x58] sm:$0xff]
        %v667 = vld [vmem:[#allocation7 + $0x60] sm:$0xf]
        %v668 = vld [vmem:[#allocation7 + $0x64] sm:$0xff]
        %v669 = vld [vmem:[#allocation7 + $0x6c] sm:$0xff]
        %v670 = vld [vmem:[#allocation7 + $0x74] sm:$0xf]
        %v671 = vld [vmem:[#allocation7 + $0x78] sm:$0xff]
        %v672 = vld [vmem:[#allocation7 + $0x80] sm:$0xff]
        %v673 = vld [vmem:[#allocation7 + $0x88] sm:$0xf]
        %v674 = vld [vmem:[#allocation7 + $0x8c] sm:$0xff]
        %v675 = vld [vmem:[#allocation7 + $0x94] sm:$0xff]
        %v676 = vld [vmem:[#allocation7 + $0x9c] sm:$0xf]
        %v677 = vld [vmem:[#allocation7 + $0xa0] sm:$0xff]
        %v678 = vld [vmem:[#allocation7 + $0xa8] sm:$0xff]
        %v679 = vld [vmem:[#allocation7 + $0xb0] sm:$0xf]
        %v680 = vld [vmem:[#allocation7 + $0xb4] sm:$0xff]
        %v681 = vld [vmem:[#allocation7 + $0xbc] sm:$0xff]
        %v682 = vld [vmem:[#allocation7 + $0xc4] sm:$0xf]
        %v683 = vld [vmem:[#allocation7 + $0xc8] sm:$0xff]
        %v684 = vld [vmem:[#allocation7 + $0xd0] sm:$0xff]
        %v685 = vld [vmem:[#allocation7 + $0xd8] sm:$0xf]
        %v686 = vld [vmem:[#allocation7 + $0xdc] sm:$0xff]
        %v687 = vld [vmem:[#allocation7 + $0xe4] sm:$0xff]
        %v688 = vld [vmem:[#allocation7 + $0xec] sm:$0xf]
        %v689 = vld [vmem:[#allocation7 + $0xf0] sm:$0xff]
        %v690 = vld [vmem:[#allocation7 + $0xf8] sm:$0xff]
        %v691 = vld [vmem:[#allocation7 + $0x100] sm:$0xf]
        %v692 = vld [vmem:[#allocation7 + $0x104] sm:$0xff]
        %v693 = vld [vmem:[#allocation7 + $0x10c] sm:$0xff]
        %v694 = vld [vmem:[#allocation7 + $0x114] sm:$0xf]
        %v695 = vld [vmem:[#allocation7 + $0x118] sm:$0xff]
        %v696 = vld [vmem:[#allocation7 + $0x120] sm:$0xff]
        %v697 = vld [vmem:[#allocation7 + $0x128] sm:$0xf]
        %v698 = vld [vmem:[#allocation7 + $0x12c] sm:$0xff]
        %v699 = vld [vmem:[#allocation7 + $0x134] sm:$0xff]
        %v700 = vld [vmem:[#allocation7 + $0x13c] sm:$0xf]
        %v701 = vld [vmem:[%s6] sm:$0xff]
        %v702 = vld [vmem:[%s6 + $0x8] sm:$0xff]
        %v703 = vld [vmem:[#allocation9] sm:$0xff]
        %v704 = vld [vmem:[#allocation9 + $0x8] sm:$0xff]
        %v705 = vld [vmem:[#allocation9 + $0x10] sm:$0xff]
        %v706 = vld [vmem:[#allocation9 + $0x18] sm:$0xff]
        %v707 = vld [vmem:[#allocation9 + $0x20] sm:$0xff]
        %v708 = vld [vmem:[#allocation9 + $0x28] sm:$0xff]
        %v709 = vld [vmem:[#allocation9 + $0x30] sm:$0xff]
        %v710 = vld [vmem:[#allocation9 + $0x38] sm:$0xff]
        %v711 = vld [vmem:[#allocation9 + $0x40] sm:$0xff]
        %v712 = vld [vmem:[#allocation9 + $0x48] sm:$0xff]
        %v713 = vld [vmem:[#allocation9 + $0x50] sm:$0xff]
        %v714 = vld [vmem:[#allocation9 + $0x58] sm:$0xff]
        %v715 = vld [vmem:[#allocation9 + $0x60] sm:$0xff]
        %v716 = vld [vmem:[#allocation9 + $0x68] sm:$0xff]
        %v717 = vld [vmem:[#allocation9 + $0x70] sm:$0xff]
        %v718 = vld [vmem:[#allocation9 + $0x78] sm:$0xff]
        %v719 = vld [vmem:[#allocation9 + $0x80] sm:$0xff]
        %v720 = vld [vmem:[#allocation9 + $0x88] sm:$0xff]
        %v721 = vld [vmem:[#allocation9 + $0x90] sm:$0xff]
        %v722 = vld [vmem:[#allocation9 + $0x98] sm:$0xff]
        %v723 = vld [vmem:[#allocation9 + $0xa0] sm:$0xff]
        %v724 = vld [vmem:[#allocation9 + $0xa8] sm:$0xff]
        %v725 = vld [vmem:[#allocation9 + $0xb0] sm:$0xff]
        %v726 = vld [vmem:[#allocation9 + $0xb8] sm:$0xff]
        %v727 = vld [vmem:[#allocation9 + $0xc0] sm:$0xff]
        %v728 = vld [vmem:[#allocation9 + $0xc8] sm:$0xff]
        %v729 = vld [vmem:[#allocation9 + $0xd0] sm:$0xff]
        %v730 = vld [vmem:[#allocation9 + $0xd8] sm:$0xff]
        %v731 = vld [vmem:[#allocation9 + $0xe0] sm:$0xff]
        %v732 = vld [vmem:[#allocation9 + $0xe8] sm:$0xff]
        %v733 = vld [vmem:[#allocation9 + $0xf0] sm:$0xff]
        %v734 = vld [vmem:[#allocation9 + $0xf8] sm:$0xff]
        %v735 = vld [vmem:[#allocation10] sm:$0xff]
        %v736 = vld [vmem:[#allocation10 + $0x8] sm:$0xff]
        %v737 = vld [vmem:[#allocation10 + $0x10] sm:$0xff]
        %v738 = vld [vmem:[#allocation10 + $0x18] sm:$0xff]
        %v739 = vld [vmem:[#allocation10 + $0x20] sm:$0xff]
        %v740 = vld [vmem:[#allocation10 + $0x28] sm:$0xff]
        %v741 = vld [vmem:[#allocation10 + $0x30] sm:$0xff]
        %v742 = vld [vmem:[#allocation10 + $0x38] sm:$0xff]
        %v743 = vld [vmem:[#allocation10 + $0x40] sm:$0xff]
        %v744 = vld [vmem:[#allocation10 + $0x48] sm:$0xff]
        %v745 = vld [vmem:[#allocation10 + $0x50] sm:$0xff]
        %v746 = vld [vmem:[#allocation10 + $0x58] sm:$0xff]
        %v747 = vld [vmem:[#allocation10 + $0x60] sm:$0xff]
        %v748 = vld [vmem:[#allocation10 + $0x68] sm:$0xff]
        %v749 = vld [vmem:[#allocation10 + $0x70] sm:$0xff]
        %v750 = vld [vmem:[#allocation10 + $0x78] sm:$0xff]
        %v751 = vld [vmem:[#allocation10 + $0x80] sm:$0xff]
        %v752 = vld [vmem:[#allocation10 + $0x88] sm:$0xff]
        %v753 = vld [vmem:[#allocation10 + $0x90] sm:$0xff]
        %v754 = vld [vmem:[#allocation10 + $0x98] sm:$0xff]
        %v755 = vld [vmem:[#allocation10 + $0xa0] sm:$0xff]
        %v756 = vld [vmem:[#allocation10 + $0xa8] sm:$0xff]
        %v757 = vld [vmem:[#allocation10 + $0xb0] sm:$0xff]
        %v758 = vld [vmem:[#allocation10 + $0xb8] sm:$0xff]
        %v759 = vld [vmem:[#allocation10 + $0xc0] sm:$0xff]
        %v760 = vld [vmem:[#allocation10 + $0xc8] sm:$0xff]
        %v761 = vld [vmem:[#allocation10 + $0xd0] sm:$0xff]
        %v762 = vld [vmem:[#allocation10 + $0xd8] sm:$0xff]
        %v763 = vld [vmem:[#allocation10 + $0xe0] sm:$0xff]
        %v764 = vld [vmem:[#allocation10 + $0xe8] sm:$0xff]
        %v765 = vld [vmem:[#allocation10 + $0xf0] sm:$0xff]
        %v766 = vld [vmem:[#allocation10 + $0xf8] sm:$0xff]
        %v767 = vld [vmem:[%s9] sm:$0xf]
        %v768 = vld [vmem:[%s10] sm:$0xf]
        %v769 = vld [vmem:[#allocation2] sm:$0x3]
        %v770 = vld [vmem:[#allocation3] sm:$0x3]
        %s771 = scalar_lea.vmem [#allocation2], 2
        %v772 = vld [vmem:[%s771] sm:$0x3]
        %s773 = scalar_lea.vmem [#allocation3], 2
        %v774 = vld [vmem:[%s773] sm:$0x3]
        %v775 = vpack.c.bf16 %v772, %v772
        %v824 = vunpack.c.l.b16 %v653
        %v825 = vunpack.c.h.b16 %v653
        %v826 = vunpack.c.l.b16 %v654
        %v827 = vunpack.c.h.b16 %v654
        %v828 = vunpack.c.l.b16 %v655
        %v829 = vunpack.c.l.b16 %v656
        %v830 = vunpack.c.h.b16 %v656
        %v831 = vunpack.c.l.b16 %v657
        %v832 = vunpack.c.h.b16 %v657
        %v833 = vunpack.c.l.b16 %v658
        %v834 = vunpack.c.l.b16 %v659
        %v835 = vunpack.c.h.b16 %v659
        %v836 = vunpack.c.l.b16 %v660
        %v837 = vunpack.c.h.b16 %v660
        %v838 = vunpack.c.l.b16 %v661
        %v839 = vunpack.c.l.b16 %v662
        %v840 = vunpack.c.h.b16 %v662
        %v841 = vunpack.c.l.b16 %v663
        %v842 = vunpack.c.h.b16 %v663
        %v843 = vunpack.c.l.b16 %v664
        %v844 = vunpack.c.l.b16 %v665
        %v845 = vunpack.c.h.b16 %v665
        %v846 = vunpack.c.l.b16 %v666
        %v847 = vunpack.c.h.b16 %v666
        %v848 = vunpack.c.l.b16 %v667
        %v849 = vunpack.c.l.b16 %v668
        %v850 = vunpack.c.h.b16 %v668
        %v851 = vunpack.c.l.b16 %v669
        %v852 = vunpack.c.h.b16 %v669
        %v853 = vunpack.c.l.b16 %v670
        %v854 = vunpack.c.l.b16 %v671
        %v855 = vunpack.c.h.b16 %v671
        %v856 = vunpack.c.l.b16 %v672
        %v857 = vunpack.c.h.b16 %v672
        %v858 = vunpack.c.l.b16 %v673
        %v859 = vunpack.c.l.b16 %v674
        %v860 = vunpack.c.h.b16 %v674
        %v861 = vunpack.c.l.b16 %v675
        %v862 = vunpack.c.h.b16 %v675
        %v863 = vunpack.c.l.b16 %v676
        %v864 = vunpack.c.l.b16 %v677
        %v865 = vunpack.c.h.b16 %v677
        %v866 = vunpack.c.l.b16 %v678
        %v867 = vunpack.c.h.b16 %v678
        %v868 = vunpack.c.l.b16 %v679
        %v869 = vunpack.c.l.b16 %v680
        %v870 = vunpack.c.h.b16 %v680
        %v871 = vunpack.c.l.b16 %v681
        %v872 = vunpack.c.h.b16 %v681
        %v873 = vunpack.c.l.b16 %v682
        %v874 = vunpack.c.l.b16 %v683
        %v875 = vunpack.c.h.b16 %v683
        %v876 = vunpack.c.l.b16 %v684
        %v877 = vunpack.c.h.b16 %v684
        %v878 = vunpack.c.l.b16 %v685
        %v879 = vunpack.c.l.b16 %v686
        %v880 = vunpack.c.h.b16 %v686
        %v881 = vunpack.c.l.b16 %v687
        %v882 = vunpack.c.h.b16 %v687
        %v883 = vunpack.c.l.b16 %v688
        %v884 = vunpack.c.l.b16 %v689
        %v885 = vunpack.c.h.b16 %v689
        %v886 = vunpack.c.l.b16 %v690
        %v887 = vunpack.c.h.b16 %v690
        %v888 = vunpack.c.l.b16 %v691
        %v889 = vunpack.c.l.b16 %v692
        %v890 = vunpack.c.h.b16 %v692
        %v891 = vunpack.c.l.b16 %v693
        %v892 = vunpack.c.h.b16 %v693
        %v893 = vunpack.c.l.b16 %v694
        %v894 = vunpack.c.l.b16 %v695
        %v895 = vunpack.c.h.b16 %v695
        %v896 = vunpack.c.l.b16 %v696
        %v897 = vunpack.c.h.b16 %v696
        %v898 = vunpack.c.l.b16 %v697
        %v899 = vunpack.c.l.b16 %v698
        %v900 = vunpack.c.h.b16 %v698
        %v901 = vunpack.c.l.b16 %v699
        %v902 = vunpack.c.h.b16 %v699
        %v903 = vunpack.c.l.b16 %v700
        %v904 = vpack.c.b16 %v829, %v824
        %v905 = vpack.c.b16 %v830, %v825
        %v906 = vpack.c.b16 %v831, %v826
        %v907 = vpack.c.b16 %v832, %v827
        %v908 = vpack.c.b16 %v833, %v828
        %v909 = vpack.c.b16 %v839, %v834
        %v910 = vpack.c.b16 %v840, %v835
        %v911 = vpack.c.b16 %v841, %v836
        %v912 = vpack.c.b16 %v842, %v837
        %v913 = vpack.c.b16 %v843, %v838
        %v914 = vpack.c.b16 %v849, %v844
        %v915 = vpack.c.b16 %v850, %v845
        %v916 = vpack.c.b16 %v851, %v846
        %v917 = vpack.c.b16 %v852, %v847
        %v918 = vpack.c.b16 %v853, %v848
        %v919 = vpack.c.b16 %v859, %v854
        %v920 = vpack.c.b16 %v860, %v855
        %v921 = vpack.c.b16 %v861, %v856
        %v922 = vpack.c.b16 %v862, %v857
        %v923 = vpack.c.b16 %v863, %v858
        %v924 = vpack.c.b16 %v869, %v864
        %v925 = vpack.c.b16 %v870, %v865
        %v926 = vpack.c.b16 %v871, %v866
        %v927 = vpack.c.b16 %v872, %v867
        %v928 = vpack.c.b16 %v873, %v868
        %v929 = vpack.c.b16 %v879, %v874
        %v930 = vpack.c.b16 %v880, %v875
        %v931 = vpack.c.b16 %v881, %v876
        %v932 = vpack.c.b16 %v882, %v877
        %v933 = vpack.c.b16 %v883, %v878
        %v934 = vpack.c.b16 %v889, %v884
        %v935 = vpack.c.b16 %v890, %v885
        %v936 = vpack.c.b16 %v891, %v886
        %v937 = vpack.c.b16 %v892, %v887
        %v938 = vpack.c.b16 %v893, %v888
        %v939 = vpack.c.b16 %v899, %v894
        %v940 = vpack.c.b16 %v900, %v895
        %v941 = vpack.c.b16 %v901, %v896
        %v942 = vpack.c.b16 %v902, %v897
        %v943 = vpack.c.b16 %v903, %v898
        %984 = vmatprep.subr.bf16.mxu0 %v905
        %985 = vmatpush1.bf16.msra.mxu0 %v904
        %986 = vmatprep.subr.bf16.mxu0 %v910
        %987 = vmatpush1.bf16.msra.mxu0 %v909
        %988 = vmatprep.subr.bf16.mxu0 %v915
        %989 = vmatpush1.bf16.msra.mxu0 %v914
        %990 = vmatprep.subr.bf16.mxu0 %v920
        %991 = vmatpush1.bf16.msra.mxu0 %v919
        %992 = vmatprep.subr.bf16.mxu0 %v925
        %993 = vmatpush1.bf16.msra.mxu0 %v924
        %994 = vmatprep.subr.bf16.mxu0 %v930
        %995 = vmatpush1.bf16.msra.mxu0 %v929
        %996 = vmatprep.subr.bf16.mxu0 %v935
        %997 = vmatpush1.bf16.msra.mxu0 %v934
        %998 = vmatprep.subr.bf16.mxu0 %v940
        %999 = vmatpush1.bf16.msra.mxu0 %v939
        %1000 = vmatprep.subr.bf16.mxu0 0
        %1001 = vmatpush1.bf16.msra.mxu0 0
        %1002 = vmatprep.subr.bf16.mxu0 0
        %1003 = vmatpush1.bf16.msra.mxu0 0
        %1004 = vmatprep.subr.bf16.mxu0 0
        %1005 = vmatpush1.bf16.msra.mxu0 0
        %1006 = vmatprep.subr.bf16.mxu0 0
        %1007 = vmatpush1.bf16.msra.mxu0 0
        %1008 = vmatprep.subr.bf16.mxu0 0
        %1009 = vmatpush1.bf16.msra.mxu0 0
        %1010 = vmatprep.subr.bf16.mxu0 0
        %1011 = vmatpush1.bf16.msra.mxu0 0
        %1012 = vmatprep.subr.bf16.mxu0 0
        %1013 = vmatpush1.bf16.msra.mxu0 0
        %1014 = vmatprep.subr.bf16.mxu0 0
        %1015 = vmatpush1.bf16.msra.mxu0 0
        %1016 = vmatprep.mubr.bf16.mxu0 0
        %1017 = vmatmul.mubr.bf16.gmra.mrb[0].mxu0 %v775
        %v1018 = vpop.f32.mrb[0].mxu0
        %v1019 = vadd.f32 0.0, %v1018
        %v1020 = vpop.f32.mrb[0].mxu0
        %v1021 = vadd.f32 0.0, %v1020
        %v1022 = vpop.f32.mrb[0].mxu0
        %v1023 = vpop.f32.mrb[0].mxu0
        %1024 = vdwg.mxu0
        %1025 = vmatprep.subr.bf16.mxu0 %v907
        %1026 = vmatpush1.bf16.msra.mxu0 %v906
        %1027 = vmatprep.subr.bf16.mxu0 %v912
        %1028 = vmatpush1.bf16.msra.mxu0 %v911
        %1029 = vmatprep.subr.bf16.mxu0 %v917
        %1030 = vmatpush1.bf16.msra.mxu0 %v916
        %1031 = vmatprep.subr.bf16.mxu0 %v922
        %1032 = vmatpush1.bf16.msra.mxu0 %v921
        %1033 = vmatprep.subr.bf16.mxu0 %v927
        %1034 = vmatpush1.bf16.msra.mxu0 %v926
        %1035 = vmatprep.subr.bf16.mxu0 %v932
        %1036 = vmatpush1.bf16.msra.mxu0 %v931
        %1037 = vmatprep.subr.bf16.mxu0 %v937
        %1038 = vmatpush1.bf16.msra.mxu0 %v936
        %1039 = vmatprep.subr.bf16.mxu0 %v942
        %1040 = vmatpush1.bf16.msra.mxu0 %v941
        %1041 = vmatprep.subr.bf16.mxu0 0
        %1042 = vmatpush1.bf16.msra.mxu0 0
        %1043 = vmatprep.subr.bf16.mxu0 0
        %1044 = vmatpush1.bf16.msra.mxu0 0
        %1045 = vmatprep.subr.bf16.mxu0 0
        %1046 = vmatpush1.bf16.msra.mxu0 0
        %1047 = vmatprep.subr.bf16.mxu0 0
        %1048 = vmatpush1.bf16.msra.mxu0 0
        %1049 = vmatprep.subr.bf16.mxu0 0
        %1050 = vmatpush1.bf16.msra.mxu0 0
        %1051 = vmatprep.subr.bf16.mxu0 0
        %1052 = vmatpush1.bf16.msra.mxu0 0
        %1053 = vmatprep.subr.bf16.mxu0 0
        %1054 = vmatpush1.bf16.msra.mxu0 0
        %1055 = vmatprep.subr.bf16.mxu0 0
        %1056 = vmatpush1.bf16.msra.mxu0 0
        %1057 = vmatprep.mubr.bf16.mxu0 0
        %1058 = vmatmul.mubr.bf16.gmra.mrb[0].mxu0 %v775
        %v1059 = vpop.f32.mrb[0].mxu0
        %v1060 = vadd.f32 0.0, %v1059
        %v1061 = vpop.f32.mrb[0].mxu0
        %v1062 = vadd.f32 0.0, %v1061
        %v1063 = vpop.f32.mrb[0].mxu0
        %v1064 = vpop.f32.mrb[0].mxu0
        %1065 = vdwg.mxu0
        %1066 = vmatprep.subr.bf16.mxu0 0
        %1067 = vmatpush1.bf16.msra.mxu0 %v908
        %1068 = vmatprep.subr.bf16.mxu0 0
        %1069 = vmatpush1.bf16.msra.mxu0 %v913
        %1070 = vmatprep.subr.bf16.mxu0 0
        %1071 = vmatpush1.bf16.msra.mxu0 %v918
        %1072 = vmatprep.subr.bf16.mxu0 0
        %1073 = vmatpush1.bf16.msra.mxu0 %v923
        %1074 = vmatprep.subr.bf16.mxu0 0
        %1075 = vmatpush1.bf16.msra.mxu0 %v928
        %1076 = vmatprep.subr.bf16.mxu0 0
        %1077 = vmatpush1.bf16.msra.mxu0 %v933
        %1078 = vmatprep.subr.bf16.mxu0 0
        %1079 = vmatpush1.bf16.msra.mxu0 %v938
        %1080 = vmatprep.subr.bf16.mxu0 0
        %1081 = vmatpush1.bf16.msra.mxu0 %v943
        %1082 = vmatprep.subr.bf16.mxu0 0
        %1083 = vmatpush1.bf16.msra.mxu0 0
        %1084 = vmatprep.subr.bf16.mxu0 0
        %1085 = vmatpush1.bf16.msra.mxu0 0
        %1086 = vmatprep.subr.bf16.mxu0 0
        %1087 = vmatpush1.bf16.msra.mxu0 0
        %1088 = vmatprep.subr.bf16.mxu0 0
        %1089 = vmatpush1.bf16.msra.mxu0 0
        %1090 = vmatprep.subr.bf16.mxu0 0
        %1091 = vmatpush1.bf16.msra.mxu0 0
        %1092 = vmatprep.subr.bf16.mxu0 0
        %1093 = vmatpush1.bf16.msra.mxu0 0
        %1094 = vmatprep.subr.bf16.mxu0 0
        %1095 = vmatpush1.bf16.msra.mxu0 0
        %1096 = vmatprep.subr.bf16.mxu0 0
        %1097 = vmatpush1.bf16.msra.mxu0 0
        %1098 = vmatprep.mubr.bf16.mxu0 0
        %1099 = vmatmul.mubr.bf16.gmra.mrb[0].mxu0 %v775
        %v1100 = vpop.f32.mrb[0].mxu0
        %v1101 = vadd.f32 0.0, %v1100
        %v1102 = vpop.f32.mrb[0].mxu0
        %v1103 = vpop.f32.mrb[0].mxu0
        %v1104 = vpop.f32.mrb[0].mxu0
        %1105 = vdwg.mxu0
        %v1106 = vpack.c.bf16 %v769, %v769
        %v1139 = vunpack.c.l.b16 %v703
        %v1140 = vunpack.c.h.b16 %v703
        %v1141 = vunpack.c.l.b16 %v704
        %v1142 = vunpack.c.h.b16 %v704
        %v1143 = vunpack.c.l.b16 %v705
        %v1144 = vunpack.c.h.b16 %v705
        %v1145 = vunpack.c.l.b16 %v706
        %v1146 = vunpack.c.h.b16 %v706
        %v1147 = vunpack.c.l.b16 %v707
        %v1148 = vunpack.c.h.b16 %v707
        %v1149 = vunpack.c.l.b16 %v708
        %v1150 = vunpack.c.h.b16 %v708
        %v1151 = vunpack.c.l.b16 %v709
        %v1152 = vunpack.c.h.b16 %v709
        %v1153 = vunpack.c.l.b16 %v710
        %v1154 = vunpack.c.h.b16 %v710
        %v1155 = vunpack.c.l.b16 %v711
        %v1156 = vunpack.c.h.b16 %v711
        %v1157 = vunpack.c.l.b16 %v712
        %v1158 = vunpack.c.h.b16 %v712
        %v1159 = vunpack.c.l.b16 %v713
        %v1160 = vunpack.c.h.b16 %v713
        %v1161 = vunpack.c.l.b16 %v714
        %v1162 = vunpack.c.h.b16 %v714
        %v1163 = vunpack.c.l.b16 %v715
        %v1164 = vunpack.c.h.b16 %v715
        %v1165 = vunpack.c.l.b16 %v716
        %v1166 = vunpack.c.h.b16 %v716
        %v1167 = vunpack.c.l.b16 %v717
        %v1168 = vunpack.c.h.b16 %v717
        %v1169 = vunpack.c.l.b16 %v718
        %v1170 = vunpack.c.h.b16 %v718
        %v1171 = vunpack.c.l.b16 %v719
        %v1172 = vunpack.c.h.b16 %v719
        %v1173 = vunpack.c.l.b16 %v720
        %v1174 = vunpack.c.h.b16 %v720
        %v1175 = vunpack.c.l.b16 %v721
        %v1176 = vunpack.c.h.b16 %v721
        %v1177 = vunpack.c.l.b16 %v722
        %v1178 = vunpack.c.h.b16 %v722
        %v1179 = vunpack.c.l.b16 %v723
        %v1180 = vunpack.c.h.b16 %v723
        %v1181 = vunpack.c.l.b16 %v724
        %v1182 = vunpack.c.h.b16 %v724
        %v1183 = vunpack.c.l.b16 %v725
        %v1184 = vunpack.c.h.b16 %v725
        %v1185 = vunpack.c.l.b16 %v726
        %v1186 = vunpack.c.h.b16 %v726
        %v1187 = vunpack.c.l.b16 %v727
        %v1188 = vunpack.c.h.b16 %v727
        %v1189 = vunpack.c.l.b16 %v728
        %v1190 = vunpack.c.h.b16 %v728
        %v1191 = vunpack.c.l.b16 %v729
        %v1192 = vunpack.c.h.b16 %v729
        %v1193 = vunpack.c.l.b16 %v730
        %v1194 = vunpack.c.h.b16 %v730
        %v1195 = vunpack.c.l.b16 %v731
        %v1196 = vunpack.c.h.b16 %v731
        %v1197 = vunpack.c.l.b16 %v732
        %v1198 = vunpack.c.h.b16 %v732
        %v1199 = vunpack.c.l.b16 %v733
        %v1200 = vunpack.c.h.b16 %v733
        %v1201 = vunpack.c.l.b16 %v734
        %v1202 = vunpack.c.h.b16 %v734
        %v1203 = vpack.c.b16 %v1143, %v1139
        %v1204 = vpack.c.b16 %v1144, %v1140
        %v1205 = vpack.c.b16 %v1145, %v1141
        %v1206 = vpack.c.b16 %v1146, %v1142
        %v1207 = vpack.c.b16 %v1151, %v1147
        %v1208 = vpack.c.b16 %v1152, %v1148
        %v1209 = vpack.c.b16 %v1153, %v1149
        %v1210 = vpack.c.b16 %v1154, %v1150
        %v1211 = vpack.c.b16 %v1159, %v1155
        %v1212 = vpack.c.b16 %v1160, %v1156
        %v1213 = vpack.c.b16 %v1161, %v1157
        %v1214 = vpack.c.b16 %v1162, %v1158
        %v1215 = vpack.c.b16 %v1167, %v1163
        %v1216 = vpack.c.b16 %v1168, %v1164
        %v1217 = vpack.c.b16 %v1169, %v1165
        %v1218 = vpack.c.b16 %v1170, %v1166
        %v1219 = vpack.c.b16 %v1175, %v1171
        %v1220 = vpack.c.b16 %v1176, %v1172
        %v1221 = vpack.c.b16 %v1177, %v1173
        %v1222 = vpack.c.b16 %v1178, %v1174
        %v1223 = vpack.c.b16 %v1183, %v1179
        %v1224 = vpack.c.b16 %v1184, %v1180
        %v1225 = vpack.c.b16 %v1185, %v1181
        %v1226 = vpack.c.b16 %v1186, %v1182
        %v1227 = vpack.c.b16 %v1191, %v1187
        %v1228 = vpack.c.b16 %v1192, %v1188
        %v1229 = vpack.c.b16 %v1193, %v1189
        %v1230 = vpack.c.b16 %v1194, %v1190
        %v1231 = vpack.c.b16 %v1199, %v1195
        %v1232 = vpack.c.b16 %v1200, %v1196
        %v1233 = vpack.c.b16 %v1201, %v1197
        %v1234 = vpack.c.b16 %v1202, %v1198
        %1267 = vmatprep.subr.bf16.mxu0 %v1204
        %1268 = vmatpush1.bf16.msra.mxu0 %v1203
        %1269 = vmatprep.subr.bf16.mxu0 %v1208
        %1270 = vmatpush1.bf16.msra.mxu0 %v1207
        %1271 = vmatprep.subr.bf16.mxu0 %v1212
        %1272 = vmatpush1.bf16.msra.mxu0 %v1211
        %1273 = vmatprep.subr.bf16.mxu0 %v1216
        %1274 = vmatpush1.bf16.msra.mxu0 %v1215
        %1275 = vmatprep.subr.bf16.mxu0 %v1220
        %1276 = vmatpush1.bf16.msra.mxu0 %v1219
        %1277 = vmatprep.subr.bf16.mxu0 %v1224
        %1278 = vmatpush1.bf16.msra.mxu0 %v1223
        %1279 = vmatprep.subr.bf16.mxu0 %v1228
        %1280 = vmatpush1.bf16.msra.mxu0 %v1227
        %1281 = vmatprep.subr.bf16.mxu0 %v1232
        %1282 = vmatpush1.bf16.msra.mxu0 %v1231
        %1283 = vmatprep.subr.bf16.mxu0 0
        %1284 = vmatpush1.bf16.msra.mxu0 0
        %1285 = vmatprep.subr.bf16.mxu0 0
        %1286 = vmatpush1.bf16.msra.mxu0 0
        %1287 = vmatprep.subr.bf16.mxu0 0
        %1288 = vmatpush1.bf16.msra.mxu0 0
        %1289 = vmatprep.subr.bf16.mxu0 0
        %1290 = vmatpush1.bf16.msra.mxu0 0
        %1291 = vmatprep.subr.bf16.mxu0 0
        %1292 = vmatpush1.bf16.msra.mxu0 0
        %1293 = vmatprep.subr.bf16.mxu0 0
        %1294 = vmatpush1.bf16.msra.mxu0 0
        %1295 = vmatprep.subr.bf16.mxu0 0
        %1296 = vmatpush1.bf16.msra.mxu0 0
        %1297 = vmatprep.subr.bf16.mxu0 0
        %1298 = vmatpush1.bf16.msra.mxu0 0
        %1299 = vmatprep.mubr.bf16.mxu0 0
        %1300 = vmatmul.mubr.bf16.gmra.mrb[0].mxu0 %v1106
        %v1301 = vpop.f32.mrb[0].mxu0
        %v1302 = vadd.f32 0.0, %v1301
        %v1303 = vpop.f32.mrb[0].mxu0
        %v1304 = vadd.f32 0.0, %v1303
        %v1305 = vpop.f32.mrb[0].mxu0
        %v1306 = vpop.f32.mrb[0].mxu0
        %1307 = vdwg.mxu0
        %1308 = vmatprep.subr.bf16.mxu0 %v1206
        %1309 = vmatpush1.bf16.msra.mxu0 %v1205
        %1310 = vmatprep.subr.bf16.mxu0 %v1210
        %1311 = vmatpush1.bf16.msra.mxu0 %v1209
        %1312 = vmatprep.subr.bf16.mxu0 %v1214
        %1313 = vmatpush1.bf16.msra.mxu0 %v1213
        %1314 = vmatprep.subr.bf16.mxu0 %v1218
        %1315 = vmatpush1.bf16.msra.mxu0 %v1217
        %1316 = vmatprep.subr.bf16.mxu0 %v1222
        %1317 = vmatpush1.bf16.msra.mxu0 %v1221
        %1318 = vmatprep.subr.bf16.mxu0 %v1226
        %1319 = vmatpush1.bf16.msra.mxu0 %v1225
        %1320 = vmatprep.subr.bf16.mxu0 %v1230
        %1321 = vmatpush1.bf16.msra.mxu0 %v1229
        %1322 = vmatprep.subr.bf16.mxu0 %v1234
        %1323 = vmatpush1.bf16.msra.mxu0 %v1233
        %1324 = vmatprep.subr.bf16.mxu0 0
        %1325 = vmatpush1.bf16.msra.mxu0 0
        %1326 = vmatprep.subr.bf16.mxu0 0
        %1327 = vmatpush1.bf16.msra.mxu0 0
        %1328 = vmatprep.subr.bf16.mxu0 0
        %1329 = vmatpush1.bf16.msra.mxu0 0
        %1330 = vmatprep.subr.bf16.mxu0 0
        %1331 = vmatpush1.bf16.msra.mxu0 0
        %1332 = vmatprep.subr.bf16.mxu0 0
        %1333 = vmatpush1.bf16.msra.mxu0 0
        %1334 = vmatprep.subr.bf16.mxu0 0
        %1335 = vmatpush1.bf16.msra.mxu0 0
        %1336 = vmatprep.subr.bf16.mxu0 0
        %1337 = vmatpush1.bf16.msra.mxu0 0
        %1338 = vmatprep.subr.bf16.mxu0 0
        %1339 = vmatpush1.bf16.msra.mxu0 0
        %1340 = vmatprep.mubr.bf16.mxu0 0
        %1341 = vmatmul.mubr.bf16.gmra.mrb[0].mxu0 %v1106
        %v1342 = vpop.f32.mrb[0].mxu0
        %v1343 = vadd.f32 0.0, %v1342
        %v1344 = vpop.f32.mrb[0].mxu0
        %v1345 = vadd.f32 0.0, %v1344
        %v1346 = vpop.f32.mrb[0].mxu0
        %v1347 = vpop.f32.mrb[0].mxu0
        %1348 = vdwg.mxu0
        %v1351 = vunpack.c.l.s4 1966171168
        %v1352 = vunpack.c.0.s8 %v1351
        %v1353 = vlaneseq
        %v1354 = vshrl.u32 %v1353, 7
        %v1355 = vsub.s32 %v1352, %v1354
        %v1356 = vrot.slane %v1019, %v1355
        %v1357 = vcombine.high %v1356, %v1356
        %v1359 = vunpack.c.l.s4 1966171168
        %v1360 = vunpack.c.0.s8 %v1359
        %v1361 = vlaneseq
        %v1362 = vshrl.u32 %v1361, 7
        %v1363 = vsub.s32 %v1360, %v1362
        %v1364 = vrot.slane %v1356, %v1363
        %v1366 = vunpack.c.l.s4 1966171168
        %v1367 = vunpack.c.0.s8 %v1366
        %v1368 = vlaneseq
        %v1369 = vshrl.u32 %v1368, 7
        %v1370 = vsub.s32 %v1367, %v1369
        %v1371 = vrot.slane %v1357, %v1370
        %v1372 = vlaneseq
        %v1373 = vshrl.u32 %v1372, 7
        %v1374 = vsub.s32 0, %v1373
        %v1375 = vrot.slane %v1364, %v1374
        %v1376 = vlaneseq
        %v1377 = vshrl.u32 %v1376, 7
        %v1378 = vsub.s32 0, %v1377
        %v1379 = vrot.slane %v1371, %v1378
        %v1382 = vadd.f32 %v555, %v1375
        %v1383 = vadd.f32 %v556, %v1375
        %v1384 = vadd.f32 %v557, %v1375
        %v1385 = vadd.f32 %v558, %v1375
        %v1386 = vadd.f32 %v559, %v1375
        %v1387 = vadd.f32 %v560, %v1375
        %v1388 = vadd.f32 %v561, %v1375
        %v1389 = vadd.f32 %v562, %v1375
        %v1390 = vadd.f32 %v563, %v1375
        %v1391 = vadd.f32 %v564, %v1375
        %v1392 = vadd.f32 %v565, %v1375
        %v1393 = vadd.f32 %v566, %v1375
        %v1394 = vadd.f32 %v567, %v1375
        %v1395 = vadd.f32 %v568, %v1375
        %v1396 = vadd.f32 %v569, %v1375
        %v1397 = vadd.f32 %v570, %v1375
        %v1398 = vadd.f32 %v571, %v1379
        %v1399 = vadd.f32 %v572, %v1379
        %v1400 = vadd.f32 %v573, %v1379
        %v1401 = vadd.f32 %v574, %v1379
        %v1402 = vadd.f32 %v575, %v1379
        %v1403 = vadd.f32 %v576, %v1379
        %v1404 = vadd.f32 %v577, %v1379
        %v1405 = vadd.f32 %v578, %v1379
        %v1406 = vadd.f32 %v579, %v1379
        %v1407 = vadd.f32 %v580, %v1379
        %v1408 = vadd.f32 %v581, %v1379
        %v1409 = vadd.f32 %v582, %v1379
        %v1410 = vadd.f32 %v583, %v1379
        %v1411 = vadd.f32 %v584, %v1379
        %v1412 = vadd.f32 %v585, %v1379
        %v1413 = vadd.f32 %v586, %v1379
        %vm1414 = vcmp.gt.f32.partialorder %v1382, 0.0
        %vm1415 = vcmp.gt.f32.partialorder %v1383, 0.0
        %vm1416 = vcmp.gt.f32.partialorder %v1384, 0.0
        %vm1417 = vcmp.gt.f32.partialorder %v1385, 0.0
        %vm1418 = vcmp.gt.f32.partialorder %v1386, 0.0
        %vm1419 = vcmp.gt.f32.partialorder %v1387, 0.0
        %vm1420 = vcmp.gt.f32.partialorder %v1388, 0.0
        %vm1421 = vcmp.gt.f32.partialorder %v1389, 0.0
        %vm1422 = vcmp.gt.f32.partialorder %v1390, 0.0
        %vm1423 = vcmp.gt.f32.partialorder %v1391, 0.0
        %vm1424 = vcmp.gt.f32.partialorder %v1392, 0.0
        %vm1425 = vcmp.gt.f32.partialorder %v1393, 0.0
        %vm1426 = vcmp.gt.f32.partialorder %v1394, 0.0
        %vm1427 = vcmp.gt.f32.partialorder %v1395, 0.0
        %vm1428 = vcmp.gt.f32.partialorder %v1396, 0.0
        %vm1429 = vcmp.gt.f32.partialorder %v1397, 0.0
        %vm1430 = vcmp.gt.f32.partialorder %v1398, 0.0
        %vm1431 = vcmp.gt.f32.partialorder %v1399, 0.0
        %vm1432 = vcmp.gt.f32.partialorder %v1400, 0.0
        %vm1433 = vcmp.gt.f32.partialorder %v1401, 0.0
        %vm1434 = vcmp.gt.f32.partialorder %v1402, 0.0
        %vm1435 = vcmp.gt.f32.partialorder %v1403, 0.0
        %vm1436 = vcmp.gt.f32.partialorder %v1404, 0.0
        %vm1437 = vcmp.gt.f32.partialorder %v1405, 0.0
        %vm1438 = vcmp.gt.f32.partialorder %v1406, 0.0
        %vm1439 = vcmp.gt.f32.partialorder %v1407, 0.0
        %vm1440 = vcmp.gt.f32.partialorder %v1408, 0.0
        %vm1441 = vcmp.gt.f32.partialorder %v1409, 0.0
        %vm1442 = vcmp.gt.f32.partialorder %v1410, 0.0
        %vm1443 = vcmp.gt.f32.partialorder %v1411, 0.0
        %vm1444 = vcmp.gt.f32.partialorder %v1412, 0.0
        %vm1445 = vcmp.gt.f32.partialorder %v1413, 0.0
        %v1446 = vmul.f32 %v1382, 0.2
        %v1447 = vmul.f32 %v1383, 0.2
        %v1448 = vmul.f32 %v1384, 0.2
        %v1449 = vmul.f32 %v1385, 0.2
        %v1450 = vmul.f32 %v1386, 0.2
        %v1451 = vmul.f32 %v1387, 0.2
        %v1452 = vmul.f32 %v1388, 0.2
        %v1453 = vmul.f32 %v1389, 0.2
        %v1454 = vmul.f32 %v1390, 0.2
        %v1455 = vmul.f32 %v1391, 0.2
        %v1456 = vmul.f32 %v1392, 0.2
        %v1457 = vmul.f32 %v1393, 0.2
        %v1458 = vmul.f32 %v1394, 0.2
        %v1459 = vmul.f32 %v1395, 0.2
        %v1460 = vmul.f32 %v1396, 0.2
        %v1461 = vmul.f32 %v1397, 0.2
        %v1462 = vmul.f32 %v1398, 0.2
        %v1463 = vmul.f32 %v1399, 0.2
        %v1464 = vmul.f32 %v1400, 0.2
        %v1465 = vmul.f32 %v1401, 0.2
        %v1466 = vmul.f32 %v1402, 0.2
        %v1467 = vmul.f32 %v1403, 0.2
        %v1468 = vmul.f32 %v1404, 0.2
        %v1469 = vmul.f32 %v1405, 0.2
        %v1470 = vmul.f32 %v1406, 0.2
        %v1471 = vmul.f32 %v1407, 0.2
        %v1472 = vmul.f32 %v1408, 0.2
        %v1473 = vmul.f32 %v1409, 0.2
        %v1474 = vmul.f32 %v1410, 0.2
        %v1475 = vmul.f32 %v1411, 0.2
        %v1476 = vmul.f32 %v1412, 0.2
        %v1477 = vmul.f32 %v1413, 0.2
        %v1478 = vsel %vm1414, %v1382, %v1446
        %v1479 = vsel %vm1415, %v1383, %v1447
        %v1480 = vsel %vm1416, %v1384, %v1448
        %v1481 = vsel %vm1417, %v1385, %v1449
        %v1482 = vsel %vm1418, %v1386, %v1450
        %v1483 = vsel %vm1419, %v1387, %v1451
        %v1484 = vsel %vm1420, %v1388, %v1452
        %v1485 = vsel %vm1421, %v1389, %v1453
        %v1486 = vsel %vm1422, %v1390, %v1454
        %v1487 = vsel %vm1423, %v1391, %v1455
        %v1488 = vsel %vm1424, %v1392, %v1456
        %v1489 = vsel %vm1425, %v1393, %v1457
        %v1490 = vsel %vm1426, %v1394, %v1458
        %v1491 = vsel %vm1427, %v1395, %v1459
        %v1492 = vsel %vm1428, %v1396, %v1460
        %v1493 = vsel %vm1429, %v1397, %v1461
        %v1494 = vsel %vm1430, %v1398, %v1462
        %v1495 = vsel %vm1431, %v1399, %v1463
        %v1496 = vsel %vm1432, %v1400, %v1464
        %v1497 = vsel %vm1433, %v1401, %v1465
        %v1498 = vsel %vm1434, %v1402, %v1466
        %v1499 = vsel %vm1435, %v1403, %v1467
        %v1500 = vsel %vm1436, %v1404, %v1468
        %v1501 = vsel %vm1437, %v1405, %v1469
        %v1502 = vsel %vm1438, %v1406, %v1470
        %v1503 = vsel %vm1439, %v1407, %v1471
        %v1504 = vsel %vm1440, %v1408, %v1472
        %v1505 = vsel %vm1441, %v1409, %v1473
        %v1506 = vsel %vm1442, %v1410, %v1474
        %v1507 = vsel %vm1443, %v1411, %v1475
        %v1508 = vsel %vm1444, %v1412, %v1476
        %v1509 = vsel %vm1445, %v1413, %v1477
        %v1511 = vlaneseq
        %v1512 = vshrl.u32 %v1511, 7
        %v1513 = vsub.s32 0, %v1512
        %v1514 = vrot.slane %v652, %v1513
        %v1516 = vmul.f32 %v1478, %v1514
        %v1517 = vmul.f32 %v1479, %v1514
        %v1518 = vmul.f32 %v1480, %v1514
        %v1519 = vmul.f32 %v1481, %v1514
        %v1520 = vmul.f32 %v1482, %v1514
        %v1521 = vmul.f32 %v1483, %v1514
        %v1522 = vmul.f32 %v1484, %v1514
        %v1523 = vmul.f32 %v1485, %v1514
        %v1524 = vmul.f32 %v1486, %v1514
        %v1525 = vmul.f32 %v1487, %v1514
        %v1526 = vmul.f32 %v1488, %v1514
        %v1527 = vmul.f32 %v1489, %v1514
        %v1528 = vmul.f32 %v1490, %v1514
        %v1529 = vmul.f32 %v1491, %v1514
        %v1530 = vmul.f32 %v1492, %v1514
        %v1531 = vmul.f32 %v1493, %v1514
        %v1532 = vmul.f32 %v1494, %v1514
        %v1533 = vmul.f32 %v1495, %v1514
        %v1534 = vmul.f32 %v1496, %v1514
        %v1535 = vmul.f32 %v1497, %v1514
        %v1536 = vmul.f32 %v1498, %v1514
        %v1537 = vmul.f32 %v1499, %v1514
        %v1538 = vmul.f32 %v1500, %v1514
        %v1539 = vmul.f32 %v1501, %v1514
        %v1540 = vmul.f32 %v1502, %v1514
        %v1541 = vmul.f32 %v1503, %v1514
        %v1542 = vmul.f32 %v1504, %v1514
        %v1543 = vmul.f32 %v1505, %v1514
        %v1544 = vmul.f32 %v1506, %v1514
        %v1545 = vmul.f32 %v1507, %v1514
        %v1546 = vmul.f32 %v1508, %v1514
        %v1547 = vmul.f32 %v1509, %v1514
        %1548 = vadd.xlane.f32.xlu0 %v1516
        %v1549 = vpop.xlane.xlu0 %1548
        %1550 = vadd.xlane.f32.xlu0 %v1517
        %v1551 = vpop.xlane.xlu0 %1550
        %1552 = vadd.xlane.f32.xlu0 %v1518
        %v1553 = vpop.xlane.xlu0 %1552
        %1554 = vadd.xlane.f32.xlu0 %v1519
        %v1555 = vpop.xlane.xlu0 %1554
        %1556 = vadd.xlane.f32.xlu0 %v1520
        %v1557 = vpop.xlane.xlu0 %1556
        %1558 = vadd.xlane.f32.xlu0 %v1521
        %v1559 = vpop.xlane.xlu0 %1558
        %1560 = vadd.xlane.f32.xlu0 %v1522
        %v1561 = vpop.xlane.xlu0 %1560
        %1562 = vadd.xlane.f32.xlu0 %v1523
        %v1563 = vpop.xlane.xlu0 %1562
        %1564 = vadd.xlane.f32.xlu0 %v1524
        %v1565 = vpop.xlane.xlu0 %1564
        %1566 = vadd.xlane.f32.xlu0 %v1525
        %v1567 = vpop.xlane.xlu0 %1566
        %1568 = vadd.xlane.f32.xlu0 %v1526
        %v1569 = vpop.xlane.xlu0 %1568
        %1570 = vadd.xlane.f32.xlu0 %v1527
        %v1571 = vpop.xlane.xlu0 %1570
        %1572 = vadd.xlane.f32.xlu0 %v1528
        %v1573 = vpop.xlane.xlu0 %1572
        %1574 = vadd.xlane.f32.xlu0 %v1529
        %v1575 = vpop.xlane.xlu0 %1574
        %1576 = vadd.xlane.f32.xlu0 %v1530
        %v1577 = vpop.xlane.xlu0 %1576
        %1578 = vadd.xlane.f32.xlu0 %v1531
        %v1579 = vpop.xlane.xlu0 %1578
        %1580 = vadd.xlane.f32.xlu0 %v1532
        %v1581 = vpop.xlane.xlu0 %1580
        %1582 = vadd.xlane.f32.xlu0 %v1533
        %v1583 = vpop.xlane.xlu0 %1582
        %1584 = vadd.xlane.f32.xlu0 %v1534
        %v1585 = vpop.xlane.xlu0 %1584
        %1586 = vadd.xlane.f32.xlu0 %v1535
        %v1587 = vpop.xlane.xlu0 %1586
        %1588 = vadd.xlane.f32.xlu0 %v1536
        %v1589 = vpop.xlane.xlu0 %1588
        %1590 = vadd.xlane.f32.xlu0 %v1537
        %v1591 = vpop.xlane.xlu0 %1590
        %1592 = vadd.xlane.f32.xlu0 %v1538
        %v1593 = vpop.xlane.xlu0 %1592
        %1594 = vadd.xlane.f32.xlu0 %v1539
        %v1595 = vpop.xlane.xlu0 %1594
        %1596 = vadd.xlane.f32.xlu0 %v1540
        %v1597 = vpop.xlane.xlu0 %1596
        %1598 = vadd.xlane.f32.xlu0 %v1541
        %v1599 = vpop.xlane.xlu0 %1598
        %1600 = vadd.xlane.f32.xlu0 %v1542
        %v1601 = vpop.xlane.xlu0 %1600
        %1602 = vadd.xlane.f32.xlu0 %v1543
        %v1603 = vpop.xlane.xlu0 %1602
        %1604 = vadd.xlane.f32.xlu0 %v1544
        %v1605 = vpop.xlane.xlu0 %1604
        %1606 = vadd.xlane.f32.xlu0 %v1545
        %v1607 = vpop.xlane.xlu0 %1606
        %1608 = vadd.xlane.f32.xlu0 %v1546
        %v1609 = vpop.xlane.xlu0 %1608
        %1610 = vadd.xlane.f32.xlu0 %v1547
        %v1611 = vpop.xlane.xlu0 %1610
        %v1613 = vlaneseq
        %v1614 = vshrl.u32 %v1613, 7
        %v1615 = vsub.s32 0, %v1614
        %v1616 = vrot.slane %v587, %v1615
        %1618 = vbcast.lane.b32.xlu0 %v1616, 256
        %v1619 = vpop.permute.xlu0 %1618
        %s1621 = sor.u32 256, 8
        %1622 = vbcast.lane.b32.xlu0 %v1616, %s1621
        %v1623 = vpop.permute.xlu0 %1622
        %s1625 = sor.u32 256, 16
        %1626 = vbcast.lane.b32.xlu0 %v1616, %s1625
        %v1627 = vpop.permute.xlu0 %1626
        %s1629 = sor.u32 256, 24
        %1630 = vbcast.lane.b32.xlu0 %v1616, %s1629
        %v1631 = vpop.permute.xlu0 %1630
        %s1633 = sor.u32 256, 32
        %1634 = vbcast.lane.b32.xlu0 %v1616, %s1633
        %v1635 = vpop.permute.xlu0 %1634
        %s1637 = sor.u32 256, 40
        %1638 = vbcast.lane.b32.xlu0 %v1616, %s1637
        %v1639 = vpop.permute.xlu0 %1638
        %s1641 = sor.u32 256, 48
        %1642 = vbcast.lane.b32.xlu0 %v1616, %s1641
        %v1643 = vpop.permute.xlu0 %1642
        %s1645 = sor.u32 256, 56
        %1646 = vbcast.lane.b32.xlu0 %v1616, %s1645
        %v1647 = vpop.permute.xlu0 %1646
        %s1649 = sor.u32 256, 64
        %1650 = vbcast.lane.b32.xlu0 %v1616, %s1649
        %v1651 = vpop.permute.xlu0 %1650
        %s1653 = sor.u32 256, 72
        %1654 = vbcast.lane.b32.xlu0 %v1616, %s1653
        %v1655 = vpop.permute.xlu0 %1654
        %s1657 = sor.u32 256, 80
        %1658 = vbcast.lane.b32.xlu0 %v1616, %s1657
        %v1659 = vpop.permute.xlu0 %1658
        %s1661 = sor.u32 256, 88
        %1662 = vbcast.lane.b32.xlu0 %v1616, %s1661
        %v1663 = vpop.permute.xlu0 %1662
        %s1665 = sor.u32 256, 96
        %1666 = vbcast.lane.b32.xlu0 %v1616, %s1665
        %v1667 = vpop.permute.xlu0 %1666
        %s1669 = sor.u32 256, 104
        %1670 = vbcast.lane.b32.xlu0 %v1616, %s1669
        %v1671 = vpop.permute.xlu0 %1670
        %s1673 = sor.u32 256, 112
        %1674 = vbcast.lane.b32.xlu0 %v1616, %s1673
        %v1675 = vpop.permute.xlu0 %1674
        %s1677 = sor.u32 256, 120
        %1678 = vbcast.lane.b32.xlu0 %v1616, %s1677
        %v1679 = vpop.permute.xlu0 %1678
        %v1696 = vadd.f32 %v1549, %v1619
        %v1697 = vadd.f32 %v1551, %v1623
        %v1698 = vadd.f32 %v1553, %v1627
        %v1699 = vadd.f32 %v1555, %v1631
        %v1700 = vadd.f32 %v1557, %v1635
        %v1701 = vadd.f32 %v1559, %v1639
        %v1702 = vadd.f32 %v1561, %v1643
        %v1703 = vadd.f32 %v1563, %v1647
        %v1704 = vadd.f32 %v1565, %v1651
        %v1705 = vadd.f32 %v1567, %v1655
        %v1706 = vadd.f32 %v1569, %v1659
        %v1707 = vadd.f32 %v1571, %v1663
        %v1708 = vadd.f32 %v1573, %v1667
        %v1709 = vadd.f32 %v1575, %v1671
        %v1710 = vadd.f32 %v1577, %v1675
        %v1711 = vadd.f32 %v1579, %v1679
        %v1712 = vadd.f32 %v1581, %v1619
        %v1713 = vadd.f32 %v1583, %v1623
        %v1714 = vadd.f32 %v1585, %v1627
        %v1715 = vadd.f32 %v1587, %v1631
        %v1716 = vadd.f32 %v1589, %v1635
        %v1717 = vadd.f32 %v1591, %v1639
        %v1718 = vadd.f32 %v1593, %v1643
        %v1719 = vadd.f32 %v1595, %v1647
        %v1720 = vadd.f32 %v1597, %v1651
        %v1721 = vadd.f32 %v1599, %v1655
        %v1722 = vadd.f32 %v1601, %v1659
        %v1723 = vadd.f32 %v1603, %v1663
        %v1724 = vadd.f32 %v1605, %v1667
        %v1725 = vadd.f32 %v1607, %v1671
        %v1726 = vadd.f32 %v1609, %v1675
        %v1727 = vadd.f32 %v1611, %v1679
        %1760 = vset.pattern.permute.xlu0 0
        %1761 = vperm.xlu0 %1760, %v1696
        %v1762 = vpop.permute.xlu0 %1761
        %1763 = vset.pattern.permute.xlu0 0
        %1764 = vperm.xlu0 %1763, %v1697
        %v1765 = vpop.permute.xlu0 %1764
        %1766 = vset.pattern.permute.xlu0 0
        %1767 = vperm.xlu0 %1766, %v1698
        %v1768 = vpop.permute.xlu0 %1767
        %1769 = vset.pattern.permute.xlu0 0
        %1770 = vperm.xlu0 %1769, %v1699
        %v1771 = vpop.permute.xlu0 %1770
        %1772 = vset.pattern.permute.xlu0 0
        %1773 = vperm.xlu0 %1772, %v1700
        %v1774 = vpop.permute.xlu0 %1773
        %1775 = vset.pattern.permute.xlu0 0
        %1776 = vperm.xlu0 %1775, %v1701
        %v1777 = vpop.permute.xlu0 %1776
        %1778 = vset.pattern.permute.xlu0 0
        %1779 = vperm.xlu0 %1778, %v1702
        %v1780 = vpop.permute.xlu0 %1779
        %1781 = vset.pattern.permute.xlu0 0
        %1782 = vperm.xlu0 %1781, %v1703
        %v1783 = vpop.permute.xlu0 %1782
        %1784 = vset.pattern.permute.xlu0 0
        %1785 = vperm.xlu0 %1784, %v1704
        %v1786 = vpop.permute.xlu0 %1785
        %1787 = vset.pattern.permute.xlu0 0
        %1788 = vperm.xlu0 %1787, %v1705
        %v1789 = vpop.permute.xlu0 %1788
        %1790 = vset.pattern.permute.xlu0 0
        %1791 = vperm.xlu0 %1790, %v1706
        %v1792 = vpop.permute.xlu0 %1791
        %1793 = vset.pattern.permute.xlu0 0
        %1794 = vperm.xlu0 %1793, %v1707
        %v1795 = vpop.permute.xlu0 %1794
        %1796 = vset.pattern.permute.xlu0 0
        %1797 = vperm.xlu0 %1796, %v1708
        %v1798 = vpop.permute.xlu0 %1797
        %1799 = vset.pattern.permute.xlu0 0
        %1800 = vperm.xlu0 %1799, %v1709
        %v1801 = vpop.permute.xlu0 %1800
        %1802 = vset.pattern.permute.xlu0 0
        %1803 = vperm.xlu0 %1802, %v1710
        %v1804 = vpop.permute.xlu0 %1803
        %1805 = vset.pattern.permute.xlu0 0
        %1806 = vperm.xlu0 %1805, %v1711
        %v1807 = vpop.permute.xlu0 %1806
        %1808 = vset.pattern.permute.xlu0 0
        %1809 = vperm.xlu0 %1808, %v1712
        %v1810 = vpop.permute.xlu0 %1809
        %1811 = vset.pattern.permute.xlu0 0
        %1812 = vperm.xlu0 %1811, %v1713
        %v1813 = vpop.permute.xlu0 %1812
        %1814 = vset.pattern.permute.xlu0 0
        %1815 = vperm.xlu0 %1814, %v1714
        %v1816 = vpop.permute.xlu0 %1815
        %1817 = vset.pattern.permute.xlu0 0
        %1818 = vperm.xlu0 %1817, %v1715
        %v1819 = vpop.permute.xlu0 %1818
        %1820 = vset.pattern.permute.xlu0 0
        %1821 = vperm.xlu0 %1820, %v1716
        %v1822 = vpop.permute.xlu0 %1821
        %1823 = vset.pattern.permute.xlu0 0
        %1824 = vperm.xlu0 %1823, %v1717
        %v1825 = vpop.permute.xlu0 %1824
        %1826 = vset.pattern.permute.xlu0 0
        %1827 = vperm.xlu0 %1826, %v1718
        %v1828 = vpop.permute.xlu0 %1827
        %1829 = vset.pattern.permute.xlu0 0
        %1830 = vperm.xlu0 %1829, %v1719
        %v1831 = vpop.permute.xlu0 %1830
        %1832 = vset.pattern.permute.xlu0 0
        %1833 = vperm.xlu0 %1832, %v1720
        %v1834 = vpop.permute.xlu0 %1833
        %1835 = vset.pattern.permute.xlu0 0
        %1836 = vperm.xlu0 %1835, %v1721
        %v1837 = vpop.permute.xlu0 %1836
        %1838 = vset.pattern.permute.xlu0 0
        %1839 = vperm.xlu0 %1838, %v1722
        %v1840 = vpop.permute.xlu0 %1839
        %1841 = vset.pattern.permute.xlu0 0
        %1842 = vperm.xlu0 %1841, %v1723
        %v1843 = vpop.permute.xlu0 %1842
        %1844 = vset.pattern.permute.xlu0 0
        %1845 = vperm.xlu0 %1844, %v1724
        %v1846 = vpop.permute.xlu0 %1845
        %1847 = vset.pattern.permute.xlu0 0
        %1848 = vperm.xlu0 %1847, %v1725
        %v1849 = vpop.permute.xlu0 %1848
        %1850 = vset.pattern.permute.xlu0 0
        %1851 = vperm.xlu0 %1850, %v1726
        %v1852 = vpop.permute.xlu0 %1851
        %1853 = vset.pattern.permute.xlu0 0
        %1854 = vperm.xlu0 %1853, %v1727
        %v1855 = vpop.permute.xlu0 %1854
        %v1856 = vlaneseq
        %v1857 = vand.u32 %v1856, 127
        %v1858 = vlaneseq
        %v1859 = vshrl.u32 %v1858, 7
        %v1860 = vsub.s32 %v1857, %v1859
        %v1861 = vrot.slane %v1762, %v1860
        %v1862 = vadd.s32 %v1857, 4294967288
        %v1863 = vlaneseq
        %v1864 = vshrl.u32 %v1863, 7
        %v1865 = vsub.s32 %v1862, %v1864
        %v1866 = vrot.slane %v1765, %v1865
        %vm1867 = vcmask 130112
        %v1868 = vsel %vm1867, %v1866, %v1861
        %v1869 = vadd.s32 %v1857, 4294967280
        %v1870 = vlaneseq
        %v1871 = vshrl.u32 %v1870, 7
        %v1872 = vsub.s32 %v1869, %v1871
        %v1873 = vrot.slane %v1768, %v1872
        %vm1874 = vcmask 195712
        %v1875 = vsel %vm1874, %v1873, %v1868
        %v1876 = vadd.s32 %v1857, 4294967272
        %v1877 = vlaneseq
        %v1878 = vshrl.u32 %v1877, 7
        %v1879 = vsub.s32 %v1876, %v1878
        %v1880 = vrot.slane %v1771, %v1879
        %vm1881 = vcmask 261312
        %v1882 = vsel %vm1881, %v1880, %v1875
        %v1883 = vadd.s32 %v1857, 4294967264
        %v1884 = vlaneseq
        %v1885 = vshrl.u32 %v1884, 7
        %v1886 = vsub.s32 %v1883, %v1885
        %v1887 = vrot.slane %v1774, %v1886
        %vm1888 = vcmask 326912
        %v1889 = vsel %vm1888, %v1887, %v1882
        %v1890 = vadd.s32 %v1857, 4294967256
        %v1891 = vlaneseq
        %v1892 = vshrl.u32 %v1891, 7
        %v1893 = vsub.s32 %v1890, %v1892
        %v1894 = vrot.slane %v1777, %v1893
        %vm1895 = vcmask 392512
        %v1896 = vsel %vm1895, %v1894, %v1889
        %v1897 = vadd.s32 %v1857, 4294967248
        %v1898 = vlaneseq
        %v1899 = vshrl.u32 %v1898, 7
        %v1900 = vsub.s32 %v1897, %v1899
        %v1901 = vrot.slane %v1780, %v1900
        %vm1902 = vcmask 458112
        %v1903 = vsel %vm1902, %v1901, %v1896
        %v1904 = vadd.s32 %v1857, 4294967240
        %v1905 = vlaneseq
        %v1906 = vshrl.u32 %v1905, 7
        %v1907 = vsub.s32 %v1904, %v1906
        %v1908 = vrot.slane %v1783, %v1907
        %vm1909 = vcmask 523712
        %v1910 = vsel %vm1909, %v1908, %v1903
        %v1911 = vadd.s32 %v1857, 4294967232
        %v1912 = vlaneseq
        %v1913 = vshrl.u32 %v1912, 7
        %v1914 = vsub.s32 %v1911, %v1913
        %v1915 = vrot.slane %v1786, %v1914
        %vm1916 = vcmask 589312
        %v1917 = vsel %vm1916, %v1915, %v1910
        %v1918 = vadd.s32 %v1857, 4294967224
        %v1919 = vlaneseq
        %v1920 = vshrl.u32 %v1919, 7
        %v1921 = vsub.s32 %v1918, %v1920
        %v1922 = vrot.slane %v1789, %v1921
        %vm1923 = vcmask 654912
        %v1924 = vsel %vm1923, %v1922, %v1917
        %v1925 = vadd.s32 %v1857, 4294967216
        %v1926 = vlaneseq
        %v1927 = vshrl.u32 %v1926, 7
        %v1928 = vsub.s32 %v1925, %v1927
        %v1929 = vrot.slane %v1792, %v1928
        %vm1930 = vcmask 720512
        %v1931 = vsel %vm1930, %v1929, %v1924
        %v1932 = vadd.s32 %v1857, 4294967208
        %v1933 = vlaneseq
        %v1934 = vshrl.u32 %v1933, 7
        %v1935 = vsub.s32 %v1932, %v1934
        %v1936 = vrot.slane %v1795, %v1935
        %vm1937 = vcmask 786112
        %v1938 = vsel %vm1937, %v1936, %v1931
        %v1939 = vadd.s32 %v1857, 4294967200
        %v1940 = vlaneseq
        %v1941 = vshrl.u32 %v1940, 7
        %v1942 = vsub.s32 %v1939, %v1941
        %v1943 = vrot.slane %v1798, %v1942
        %vm1944 = vcmask 851712
        %v1945 = vsel %vm1944, %v1943, %v1938
        %v1946 = vadd.s32 %v1857, 4294967192
        %v1947 = vlaneseq
        %v1948 = vshrl.u32 %v1947, 7
        %v1949 = vsub.s32 %v1946, %v1948
        %v1950 = vrot.slane %v1801, %v1949
        %vm1951 = vcmask 917312
        %v1952 = vsel %vm1951, %v1950, %v1945
        %v1953 = vadd.s32 %v1857, 4294967184
        %v1954 = vlaneseq
        %v1955 = vshrl.u32 %v1954, 7
        %v1956 = vsub.s32 %v1953, %v1955
        %v1957 = vrot.slane %v1804, %v1956
        %vm1958 = vcmask 982912
        %v1959 = vsel %vm1958, %v1957, %v1952
        %v1960 = vadd.s32 %v1857, 4294967176
        %v1961 = vlaneseq
        %v1962 = vshrl.u32 %v1961, 7
        %v1963 = vsub.s32 %v1960, %v1962
        %v1964 = vrot.slane %v1807, %v1963
        %vm1965 = vcmask 1048512
        %v1966 = vsel %vm1965, %v1964, %v1959
        %v1967 = vlaneseq
        %v1968 = vshrl.u32 %v1967, 7
        %v1969 = vsub.s32 %v1857, %v1968
        %v1970 = vrot.slane %v1810, %v1969
        %v1971 = vlaneseq
        %v1972 = vshrl.u32 %v1971, 7
        %v1973 = vsub.s32 %v1862, %v1972
        %v1974 = vrot.slane %v1813, %v1973
        %v1975 = vsel %vm1867, %v1974, %v1970
        %v1976 = vlaneseq
        %v1977 = vshrl.u32 %v1976, 7
        %v1978 = vsub.s32 %v1869, %v1977
        %v1979 = vrot.slane %v1816, %v1978
        %v1980 = vsel %vm1874, %v1979, %v1975
        %v1981 = vlaneseq
        %v1982 = vshrl.u32 %v1981, 7
        %v1983 = vsub.s32 %v1876, %v1982
        %v1984 = vrot.slane %v1819, %v1983
        %v1985 = vsel %vm1881, %v1984, %v1980
        %v1986 = vlaneseq
        %v1987 = vshrl.u32 %v1986, 7
        %v1988 = vsub.s32 %v1883, %v1987
        %v1989 = vrot.slane %v1822, %v1988
        %v1990 = vsel %vm1888, %v1989, %v1985
        %v1991 = vlaneseq
        %v1992 = vshrl.u32 %v1991, 7
        %v1993 = vsub.s32 %v1890, %v1992
        %v1994 = vrot.slane %v1825, %v1993
        %v1995 = vsel %vm1895, %v1994, %v1990
        %v1996 = vlaneseq
        %v1997 = vshrl.u32 %v1996, 7
        %v1998 = vsub.s32 %v1897, %v1997
        %v1999 = vrot.slane %v1828, %v1998
        %v2000 = vsel %vm1902, %v1999, %v1995
        %v2001 = vlaneseq
        %v2002 = vshrl.u32 %v2001, 7
        %v2003 = vsub.s32 %v1904, %v2002
        %v2004 = vrot.slane %v1831, %v2003
        %v2005 = vsel %vm1909, %v2004, %v2000
        %v2006 = vlaneseq
        %v2007 = vshrl.u32 %v2006, 7
        %v2008 = vsub.s32 %v1911, %v2007
        %v2009 = vrot.slane %v1834, %v2008
        %v2010 = vsel %vm1916, %v2009, %v2005
        %v2011 = vlaneseq
        %v2012 = vshrl.u32 %v2011, 7
        %v2013 = vsub.s32 %v1918, %v2012
        %v2014 = vrot.slane %v1837, %v2013
        %v2015 = vsel %vm1923, %v2014, %v2010
        %v2016 = vlaneseq
        %v2017 = vshrl.u32 %v2016, 7
        %v2018 = vsub.s32 %v1925, %v2017
        %v2019 = vrot.slane %v1840, %v2018
        %v2020 = vsel %vm1930, %v2019, %v2015
        %v2021 = vlaneseq
        %v2022 = vshrl.u32 %v2021, 7
        %v2023 = vsub.s32 %v1932, %v2022
        %v2024 = vrot.slane %v1843, %v2023
        %v2025 = vsel %vm1937, %v2024, %v2020
        %v2026 = vlaneseq
        %v2027 = vshrl.u32 %v2026, 7
        %v2028 = vsub.s32 %v1939, %v2027
        %v2029 = vrot.slane %v1846, %v2028
        %v2030 = vsel %vm1944, %v2029, %v2025
        %v2031 = vlaneseq
        %v2032 = vshrl.u32 %v2031, 7
        %v2033 = vsub.s32 %v1946, %v2032
        %v2034 = vrot.slane %v1849, %v2033
        %v2035 = vsel %vm1951, %v2034, %v2030
        %v2036 = vlaneseq
        %v2037 = vshrl.u32 %v2036, 7
        %v2038 = vsub.s32 %v1953, %v2037
        %v2039 = vrot.slane %v1852, %v2038
        %v2040 = vsel %vm1958, %v2039, %v2035
        %v2041 = vlaneseq
        %v2042 = vshrl.u32 %v2041, 7
        %v2043 = vsub.s32 %v1960, %v2042
        %v2044 = vrot.slane %v1855, %v2043
        %v2045 = vsel %vm1965, %v2044, %v2040
        %vm2046 = vcmask 1041409
        %v2047 = vsel %vm2046, %v2045, %v1966
        %vm2049 = vcmask 1041408
        %v2050 = vsel %vm2049, %v2047, -inf
        %2051 = vmax.xlane.f32.xlu0 %v2050
        %v2052 = vpop.xlane.xlu0 %2051
        %v2054 = vlaneseq
        %v2055 = vshrl.u32 %v2054, 7
        %v2056 = vsub.s32 0, %v2055
        %v2057 = vrot.slane %v2052, %v2056
        %v2058 = vlaneseq
        %v2059 = vshrl.u32 %v2058, 7
        %v2060 = vsub.s32 1, %v2059
        %v2061 = vrot.slane %v2052, %v2060
        %v2064 = vsub.f32 %v1696, %v2057
        %v2065 = vsub.f32 %v1697, %v2057
        %v2066 = vsub.f32 %v1698, %v2057
        %v2067 = vsub.f32 %v1699, %v2057
        %v2068 = vsub.f32 %v1700, %v2057
        %v2069 = vsub.f32 %v1701, %v2057
        %v2070 = vsub.f32 %v1702, %v2057
        %v2071 = vsub.f32 %v1703, %v2057
        %v2072 = vsub.f32 %v1704, %v2057
        %v2073 = vsub.f32 %v1705, %v2057
        %v2074 = vsub.f32 %v1706, %v2057
        %v2075 = vsub.f32 %v1707, %v2057
        %v2076 = vsub.f32 %v1708, %v2057
        %v2077 = vsub.f32 %v1709, %v2057
        %v2078 = vsub.f32 %v1710, %v2057
        %v2079 = vsub.f32 %v1711, %v2057
        %v2080 = vsub.f32 %v1712, %v2061
        %v2081 = vsub.f32 %v1713, %v2061
        %v2082 = vsub.f32 %v1714, %v2061
        %v2083 = vsub.f32 %v1715, %v2061
        %v2084 = vsub.f32 %v1716, %v2061
        %v2085 = vsub.f32 %v1717, %v2061
        %v2086 = vsub.f32 %v1718, %v2061
        %v2087 = vsub.f32 %v1719, %v2061
        %v2088 = vsub.f32 %v1720, %v2061
        %v2089 = vsub.f32 %v1721, %v2061
        %v2090 = vsub.f32 %v1722, %v2061
        %v2091 = vsub.f32 %v1723, %v2061
        %v2092 = vsub.f32 %v1724, %v2061
        %v2093 = vsub.f32 %v1725, %v2061
        %v2094 = vsub.f32 %v1726, %v2061
        %v2095 = vsub.f32 %v1727, %v2061
        %v2096 = vmul.f32 %v2064, 1.442695
        %v2097 = vpow.pop %v2096
        %v2098 = vmul.f32 %v2065, 1.442695
        %v2099 = vpow.pop %v2098
        %v2100 = vmul.f32 %v2066, 1.442695
        %v2101 = vpow.pop %v2100
        %v2102 = vmul.f32 %v2067, 1.442695
        %v2103 = vpow.pop %v2102
        %v2104 = vmul.f32 %v2068, 1.442695
        %v2105 = vpow.pop %v2104
        %v2106 = vmul.f32 %v2069, 1.442695
        %v2107 = vpow.pop %v2106
        %v2108 = vmul.f32 %v2070, 1.442695
        %v2109 = vpow.pop %v2108
        %v2110 = vmul.f32 %v2071, 1.442695
        %v2111 = vpow.pop %v2110
        %v2112 = vmul.f32 %v2072, 1.442695
        %v2113 = vpow.pop %v2112
        %v2114 = vmul.f32 %v2073, 1.442695
        %v2115 = vpow.pop %v2114
        %v2116 = vmul.f32 %v2074, 1.442695
        %v2117 = vpow.pop %v2116
        %v2118 = vmul.f32 %v2075, 1.442695
        %v2119 = vpow.pop %v2118
        %v2120 = vmul.f32 %v2076, 1.442695
        %v2121 = vpow.pop %v2120
        %v2122 = vmul.f32 %v2077, 1.442695
        %v2123 = vpow.pop %v2122
        %v2124 = vmul.f32 %v2078, 1.442695
        %v2125 = vpow.pop %v2124
        %v2126 = vmul.f32 %v2079, 1.442695
        %v2127 = vpow.pop %v2126
        %v2128 = vmul.f32 %v2080, 1.442695
        %v2129 = vpow.pop %v2128
        %v2130 = vmul.f32 %v2081, 1.442695
        %v2131 = vpow.pop %v2130
        %v2132 = vmul.f32 %v2082, 1.442695
        %v2133 = vpow.pop %v2132
        %v2134 = vmul.f32 %v2083, 1.442695
        %v2135 = vpow.pop %v2134
        %v2136 = vmul.f32 %v2084, 1.442695
        %v2137 = vpow.pop %v2136
        %v2138 = vmul.f32 %v2085, 1.442695
        %v2139 = vpow.pop %v2138
        %v2140 = vmul.f32 %v2086, 1.442695
        %v2141 = vpow.pop %v2140
        %v2142 = vmul.f32 %v2087, 1.442695
        %v2143 = vpow.pop %v2142
        %v2144 = vmul.f32 %v2088, 1.442695
        %v2145 = vpow.pop %v2144
        %v2146 = vmul.f32 %v2089, 1.442695
        %v2147 = vpow.pop %v2146
        %v2148 = vmul.f32 %v2090, 1.442695
        %v2149 = vpow.pop %v2148
        %v2150 = vmul.f32 %v2091, 1.442695
        %v2151 = vpow.pop %v2150
        %v2152 = vmul.f32 %v2092, 1.442695
        %v2153 = vpow.pop %v2152
        %v2154 = vmul.f32 %v2093, 1.442695
        %v2155 = vpow.pop %v2154
        %v2156 = vmul.f32 %v2094, 1.442695
        %v2157 = vpow.pop %v2156
        %v2158 = vmul.f32 %v2095, 1.442695
        %v2159 = vpow.pop %v2158
        %2192 = vset.pattern.permute.xlu0 0
        %2193 = vperm.xlu0 %2192, %v2097
        %v2194 = vpop.permute.xlu0 %2193
        %2195 = vset.pattern.permute.xlu0 0
        %2196 = vperm.xlu0 %2195, %v2099
        %v2197 = vpop.permute.xlu0 %2196
        %2198 = vset.pattern.permute.xlu0 0
        %2199 = vperm.xlu0 %2198, %v2101
        %v2200 = vpop.permute.xlu0 %2199
        %2201 = vset.pattern.permute.xlu0 0
        %2202 = vperm.xlu0 %2201, %v2103
        %v2203 = vpop.permute.xlu0 %2202
        %2204 = vset.pattern.permute.xlu0 0
        %2205 = vperm.xlu0 %2204, %v2105
        %v2206 = vpop.permute.xlu0 %2205
        %2207 = vset.pattern.permute.xlu0 0
        %2208 = vperm.xlu0 %2207, %v2107
        %v2209 = vpop.permute.xlu0 %2208
        %2210 = vset.pattern.permute.xlu0 0
        %2211 = vperm.xlu0 %2210, %v2109
        %v2212 = vpop.permute.xlu0 %2211
        %2213 = vset.pattern.permute.xlu0 0
        %2214 = vperm.xlu0 %2213, %v2111
        %v2215 = vpop.permute.xlu0 %2214
        %2216 = vset.pattern.permute.xlu0 0
        %2217 = vperm.xlu0 %2216, %v2113
        %v2218 = vpop.permute.xlu0 %2217
        %2219 = vset.pattern.permute.xlu0 0
        %2220 = vperm.xlu0 %2219, %v2115
        %v2221 = vpop.permute.xlu0 %2220
        %2222 = vset.pattern.permute.xlu0 0
        %2223 = vperm.xlu0 %2222, %v2117
        %v2224 = vpop.permute.xlu0 %2223
        %2225 = vset.pattern.permute.xlu0 0
        %2226 = vperm.xlu0 %2225, %v2119
        %v2227 = vpop.permute.xlu0 %2226
        %2228 = vset.pattern.permute.xlu0 0
        %2229 = vperm.xlu0 %2228, %v2121
        %v2230 = vpop.permute.xlu0 %2229
        %2231 = vset.pattern.permute.xlu0 0
        %2232 = vperm.xlu0 %2231, %v2123
        %v2233 = vpop.permute.xlu0 %2232
        %2234 = vset.pattern.permute.xlu0 0
        %2235 = vperm.xlu0 %2234, %v2125
        %v2236 = vpop.permute.xlu0 %2235
        %2237 = vset.pattern.permute.xlu0 0
        %2238 = vperm.xlu0 %2237, %v2127
        %v2239 = vpop.permute.xlu0 %2238
        %2240 = vset.pattern.permute.xlu0 0
        %2241 = vperm.xlu0 %2240, %v2129
        %v2242 = vpop.permute.xlu0 %2241
        %2243 = vset.pattern.permute.xlu0 0
        %2244 = vperm.xlu0 %2243, %v2131
        %v2245 = vpop.permute.xlu0 %2244
        %2246 = vset.pattern.permute.xlu0 0
        %2247 = vperm.xlu0 %2246, %v2133
        %v2248 = vpop.permute.xlu0 %2247
        %2249 = vset.pattern.permute.xlu0 0
        %2250 = vperm.xlu0 %2249, %v2135
        %v2251 = vpop.permute.xlu0 %2250
        %2252 = vset.pattern.permute.xlu0 0
        %2253 = vperm.xlu0 %2252, %v2137
        %v2254 = vpop.permute.xlu0 %2253
        %2255 = vset.pattern.permute.xlu0 0
        %2256 = vperm.xlu0 %2255, %v2139
        %v2257 = vpop.permute.xlu0 %2256
        %2258 = vset.pattern.permute.xlu0 0
        %2259 = vperm.xlu0 %2258, %v2141
        %v2260 = vpop.permute.xlu0 %2259
        %2261 = vset.pattern.permute.xlu0 0
        %2262 = vperm.xlu0 %2261, %v2143
        %v2263 = vpop.permute.xlu0 %2262
        %2264 = vset.pattern.permute.xlu0 0
        %2265 = vperm.xlu0 %2264, %v2145
        %v2266 = vpop.permute.xlu0 %2265
        %2267 = vset.pattern.permute.xlu0 0
        %2268 = vperm.xlu0 %2267, %v2147
        %v2269 = vpop.permute.xlu0 %2268
        %2270 = vset.pattern.permute.xlu0 0
        %2271 = vperm.xlu0 %2270, %v2149
        %v2272 = vpop.permute.xlu0 %2271
        %2273 = vset.pattern.permute.xlu0 0
        %2274 = vperm.xlu0 %2273, %v2151
        %v2275 = vpop.permute.xlu0 %2274
        %2276 = vset.pattern.permute.xlu0 0
        %2277 = vperm.xlu0 %2276, %v2153
        %v2278 = vpop.permute.xlu0 %2277
        %2279 = vset.pattern.permute.xlu0 0
        %2280 = vperm.xlu0 %2279, %v2155
        %v2281 = vpop.permute.xlu0 %2280
        %2282 = vset.pattern.permute.xlu0 0
        %2283 = vperm.xlu0 %2282, %v2157
        %v2284 = vpop.permute.xlu0 %2283
        %2285 = vset.pattern.permute.xlu0 0
        %2286 = vperm.xlu0 %2285, %v2159
        %v2287 = vpop.permute.xlu0 %2286
        %v2288 = vlaneseq
        %v2289 = vshrl.u32 %v2288, 7
        %v2290 = vsub.s32 %v1857, %v2289
        %v2291 = vrot.slane %v2194, %v2290
        %v2292 = vlaneseq
        %v2293 = vshrl.u32 %v2292, 7
        %v2294 = vsub.s32 %v1862, %v2293
        %v2295 = vrot.slane %v2197, %v2294
        %v2296 = vsel %vm1867, %v2295, %v2291
        %v2297 = vlaneseq
        %v2298 = vshrl.u32 %v2297, 7
        %v2299 = vsub.s32 %v1869, %v2298
        %v2300 = vrot.slane %v2200, %v2299
        %v2301 = vsel %vm1874, %v2300, %v2296
        %v2302 = vlaneseq
        %v2303 = vshrl.u32 %v2302, 7
        %v2304 = vsub.s32 %v1876, %v2303
        %v2305 = vrot.slane %v2203, %v2304
        %v2306 = vsel %vm1881, %v2305, %v2301
        %v2307 = vlaneseq
        %v2308 = vshrl.u32 %v2307, 7
        %v2309 = vsub.s32 %v1883, %v2308
        %v2310 = vrot.slane %v2206, %v2309
        %v2311 = vsel %vm1888, %v2310, %v2306
        %v2312 = vlaneseq
        %v2313 = vshrl.u32 %v2312, 7
        %v2314 = vsub.s32 %v1890, %v2313
        %v2315 = vrot.slane %v2209, %v2314
        %v2316 = vsel %vm1895, %v2315, %v2311
        %v2317 = vlaneseq
        %v2318 = vshrl.u32 %v2317, 7
        %v2319 = vsub.s32 %v1897, %v2318
        %v2320 = vrot.slane %v2212, %v2319
        %v2321 = vsel %vm1902, %v2320, %v2316
        %v2322 = vlaneseq
        %v2323 = vshrl.u32 %v2322, 7
        %v2324 = vsub.s32 %v1904, %v2323
        %v2325 = vrot.slane %v2215, %v2324
        %v2326 = vsel %vm1909, %v2325, %v2321
        %v2327 = vlaneseq
        %v2328 = vshrl.u32 %v2327, 7
        %v2329 = vsub.s32 %v1911, %v2328
        %v2330 = vrot.slane %v2218, %v2329
        %v2331 = vsel %vm1916, %v2330, %v2326
        %v2332 = vlaneseq
        %v2333 = vshrl.u32 %v2332, 7
        %v2334 = vsub.s32 %v1918, %v2333
        %v2335 = vrot.slane %v2221, %v2334
        %v2336 = vsel %vm1923, %v2335, %v2331
        %v2337 = vlaneseq
        %v2338 = vshrl.u32 %v2337, 7
        %v2339 = vsub.s32 %v1925, %v2338
        %v2340 = vrot.slane %v2224, %v2339
        %v2341 = vsel %vm1930, %v2340, %v2336
        %v2342 = vlaneseq
        %v2343 = vshrl.u32 %v2342, 7
        %v2344 = vsub.s32 %v1932, %v2343
        %v2345 = vrot.slane %v2227, %v2344
        %v2346 = vsel %vm1937, %v2345, %v2341
        %v2347 = vlaneseq
        %v2348 = vshrl.u32 %v2347, 7
        %v2349 = vsub.s32 %v1939, %v2348
        %v2350 = vrot.slane %v2230, %v2349
        %v2351 = vsel %vm1944, %v2350, %v2346
        %v2352 = vlaneseq
        %v2353 = vshrl.u32 %v2352, 7
        %v2354 = vsub.s32 %v1946, %v2353
        %v2355 = vrot.slane %v2233, %v2354
        %v2356 = vsel %vm1951, %v2355, %v2351
        %v2357 = vlaneseq
        %v2358 = vshrl.u32 %v2357, 7
        %v2359 = vsub.s32 %v1953, %v2358
        %v2360 = vrot.slane %v2236, %v2359
        %v2361 = vsel %vm1958, %v2360, %v2356
        %v2362 = vlaneseq
        %v2363 = vshrl.u32 %v2362, 7
        %v2364 = vsub.s32 %v1960, %v2363
        %v2365 = vrot.slane %v2239, %v2364
        %v2366 = vsel %vm1965, %v2365, %v2361
        %v2367 = vlaneseq
        %v2368 = vshrl.u32 %v2367, 7
        %v2369 = vsub.s32 %v1857, %v2368
        %v2370 = vrot.slane %v2242, %v2369
        %v2371 = vlaneseq
        %v2372 = vshrl.u32 %v2371, 7
        %v2373 = vsub.s32 %v1862, %v2372
        %v2374 = vrot.slane %v2245, %v2373
        %v2375 = vsel %vm1867, %v2374, %v2370
        %v2376 = vlaneseq
        %v2377 = vshrl.u32 %v2376, 7
        %v2378 = vsub.s32 %v1869, %v2377
        %v2379 = vrot.slane %v2248, %v2378
        %v2380 = vsel %vm1874, %v2379, %v2375
        %v2381 = vlaneseq
        %v2382 = vshrl.u32 %v2381, 7
        %v2383 = vsub.s32 %v1876, %v2382
        %v2384 = vrot.slane %v2251, %v2383
        %v2385 = vsel %vm1881, %v2384, %v2380
        %v2386 = vlaneseq
        %v2387 = vshrl.u32 %v2386, 7
        %v2388 = vsub.s32 %v1883, %v2387
        %v2389 = vrot.slane %v2254, %v2388
        %v2390 = vsel %vm1888, %v2389, %v2385
        %v2391 = vlaneseq
        %v2392 = vshrl.u32 %v2391, 7
        %v2393 = vsub.s32 %v1890, %v2392
        %v2394 = vrot.slane %v2257, %v2393
        %v2395 = vsel %vm1895, %v2394, %v2390
        %v2396 = vlaneseq
        %v2397 = vshrl.u32 %v2396, 7
        %v2398 = vsub.s32 %v1897, %v2397
        %v2399 = vrot.slane %v2260, %v2398
        %v2400 = vsel %vm1902, %v2399, %v2395
        %v2401 = vlaneseq
        %v2402 = vshrl.u32 %v2401, 7
        %v2403 = vsub.s32 %v1904, %v2402
        %v2404 = vrot.slane %v2263, %v2403
        %v2405 = vsel %vm1909, %v2404, %v2400
        %v2406 = vlaneseq
        %v2407 = vshrl.u32 %v2406, 7
        %v2408 = vsub.s32 %v1911, %v2407
        %v2409 = vrot.slane %v2266, %v2408
        %v2410 = vsel %vm1916, %v2409, %v2405
        %v2411 = vlaneseq
        %v2412 = vshrl.u32 %v2411, 7
        %v2413 = vsub.s32 %v1918, %v2412
        %v2414 = vrot.slane %v2269, %v2413
        %v2415 = vsel %vm1923, %v2414, %v2410
        %v2416 = vlaneseq
        %v2417 = vshrl.u32 %v2416, 7
        %v2418 = vsub.s32 %v1925, %v2417
        %v2419 = vrot.slane %v2272, %v2418
        %v2420 = vsel %vm1930, %v2419, %v2415
        %v2421 = vlaneseq
        %v2422 = vshrl.u32 %v2421, 7
        %v2423 = vsub.s32 %v1932, %v2422
        %v2424 = vrot.slane %v2275, %v2423
        %v2425 = vsel %vm1937, %v2424, %v2420
        %v2426 = vlaneseq
        %v2427 = vshrl.u32 %v2426, 7
        %v2428 = vsub.s32 %v1939, %v2427
        %v2429 = vrot.slane %v2278, %v2428
        %v2430 = vsel %vm1944, %v2429, %v2425
        %v2431 = vlaneseq
        %v2432 = vshrl.u32 %v2431, 7
        %v2433 = vsub.s32 %v1946, %v2432
        %v2434 = vrot.slane %v2281, %v2433
        %v2435 = vsel %vm1951, %v2434, %v2430
        %v2436 = vlaneseq
        %v2437 = vshrl.u32 %v2436, 7
        %v2438 = vsub.s32 %v1953, %v2437
        %v2439 = vrot.slane %v2284, %v2438
        %v2440 = vsel %vm1958, %v2439, %v2435
        %v2441 = vlaneseq
        %v2442 = vshrl.u32 %v2441, 7
        %v2443 = vsub.s32 %v1960, %v2442
        %v2444 = vrot.slane %v2287, %v2443
        %v2445 = vsel %vm1965, %v2444, %v2440
        %v2446 = vsel %vm2046, %v2445, %v2366
        %v2448 = vsel %vm2049, %v2446, 0.0
        %2449 = vadd.xlane.f32.xlu0 %v2448
        %v2450 = vpop.xlane.xlu0 %2449
        %v2451 = vrcp.pop %v2450
        %v2453 = vlaneseq
        %v2454 = vshrl.u32 %v2453, 7
        %v2455 = vsub.s32 0, %v2454
        %v2456 = vrot.slane %v2451, %v2455
        %v2457 = vlaneseq
        %v2458 = vshrl.u32 %v2457, 7
        %v2459 = vsub.s32 1, %v2458
        %v2460 = vrot.slane %v2451, %v2459
        %v2463 = vmul.f32 %v2097, %v2456
        %v2464 = vmul.f32 %v2099, %v2456
        %v2465 = vmul.f32 %v2101, %v2456
        %v2466 = vmul.f32 %v2103, %v2456
        %v2467 = vmul.f32 %v2105, %v2456
        %v2468 = vmul.f32 %v2107, %v2456
        %v2469 = vmul.f32 %v2109, %v2456
        %v2470 = vmul.f32 %v2111, %v2456
        %v2471 = vmul.f32 %v2113, %v2456
        %v2472 = vmul.f32 %v2115, %v2456
        %v2473 = vmul.f32 %v2117, %v2456
        %v2474 = vmul.f32 %v2119, %v2456
        %v2475 = vmul.f32 %v2121, %v2456
        %v2476 = vmul.f32 %v2123, %v2456
        %v2477 = vmul.f32 %v2125, %v2456
        %v2478 = vmul.f32 %v2127, %v2456
        %v2479 = vmul.f32 %v2129, %v2460
        %v2480 = vmul.f32 %v2131, %v2460
        %v2481 = vmul.f32 %v2133, %v2460
        %v2482 = vmul.f32 %v2135, %v2460
        %v2483 = vmul.f32 %v2137, %v2460
        %v2484 = vmul.f32 %v2139, %v2460
        %v2485 = vmul.f32 %v2141, %v2460
        %v2486 = vmul.f32 %v2143, %v2460
        %v2487 = vmul.f32 %v2145, %v2460
        %v2488 = vmul.f32 %v2147, %v2460
        %v2489 = vmul.f32 %v2149, %v2460
        %v2490 = vmul.f32 %v2151, %v2460
        %v2491 = vmul.f32 %v2153, %v2460
        %v2492 = vmul.f32 %v2155, %v2460
        %v2493 = vmul.f32 %v2157, %v2460
        %v2494 = vmul.f32 %v2159, %v2460
        %2496 = vset.pattern.permute.xlu0 0
        %2497 = vperm.xlu0 %2496, %v2463
        %v2498 = vpop.permute.xlu0 %2497
        %2501 = vset.pattern.permute.xlu0 0
        %2502 = vperm.xlu0 %2501, %v2464
        %v2503 = vpop.permute.xlu0 %2502
        %2506 = vset.pattern.permute.xlu0 0
        %2507 = vperm.xlu0 %2506, %v2465
        %v2508 = vpop.permute.xlu0 %2507
        %2511 = vset.pattern.permute.xlu0 0
        %2512 = vperm.xlu0 %2511, %v2466
        %v2513 = vpop.permute.xlu0 %2512
        %2516 = vset.pattern.permute.xlu0 0
        %2517 = vperm.xlu0 %2516, %v2467
        %v2518 = vpop.permute.xlu0 %2517
        %2521 = vset.pattern.permute.xlu0 0
        %2522 = vperm.xlu0 %2521, %v2468
        %v2523 = vpop.permute.xlu0 %2522
        %2526 = vset.pattern.permute.xlu0 0
        %2527 = vperm.xlu0 %2526, %v2469
        %v2528 = vpop.permute.xlu0 %2527
        %2531 = vset.pattern.permute.xlu0 0
        %2532 = vperm.xlu0 %2531, %v2470
        %v2533 = vpop.permute.xlu0 %2532
        %2536 = vset.pattern.permute.xlu0 0
        %2537 = vperm.xlu0 %2536, %v2471
        %v2538 = vpop.permute.xlu0 %2537
        %2541 = vset.pattern.permute.xlu0 0
        %2542 = vperm.xlu0 %2541, %v2472
        %v2543 = vpop.permute.xlu0 %2542
        %2546 = vset.pattern.permute.xlu0 0
        %2547 = vperm.xlu0 %2546, %v2473
        %v2548 = vpop.permute.xlu0 %2547
        %2551 = vset.pattern.permute.xlu0 0
        %2552 = vperm.xlu0 %2551, %v2474
        %v2553 = vpop.permute.xlu0 %2552
        %2556 = vset.pattern.permute.xlu0 0
        %2557 = vperm.xlu0 %2556, %v2475
        %v2558 = vpop.permute.xlu0 %2557
        %2561 = vset.pattern.permute.xlu0 0
        %2562 = vperm.xlu0 %2561, %v2476
        %v2563 = vpop.permute.xlu0 %2562
        %2566 = vset.pattern.permute.xlu0 0
        %2567 = vperm.xlu0 %2566, %v2477
        %v2568 = vpop.permute.xlu0 %2567
        %2571 = vset.pattern.permute.xlu0 0
        %2572 = vperm.xlu0 %2571, %v2478
        %v2573 = vpop.permute.xlu0 %2572
        %2576 = vset.pattern.permute.xlu0 0
        %2577 = vperm.xlu0 %2576, %v2479
        %v2578 = vpop.permute.xlu0 %2577
        %2581 = vset.pattern.permute.xlu0 0
        %2582 = vperm.xlu0 %2581, %v2480
        %v2583 = vpop.permute.xlu0 %2582
        %2586 = vset.pattern.permute.xlu0 0
        %2587 = vperm.xlu0 %2586, %v2481
        %v2588 = vpop.permute.xlu0 %2587
        %2591 = vset.pattern.permute.xlu0 0
        %2592 = vperm.xlu0 %2591, %v2482
        %v2593 = vpop.permute.xlu0 %2592
        %2596 = vset.pattern.permute.xlu0 0
        %2597 = vperm.xlu0 %2596, %v2483
        %v2598 = vpop.permute.xlu0 %2597
        %2601 = vset.pattern.permute.xlu0 0
        %2602 = vperm.xlu0 %2601, %v2484
        %v2603 = vpop.permute.xlu0 %2602
        %2606 = vset.pattern.permute.xlu0 0
        %2607 = vperm.xlu0 %2606, %v2485
        %v2608 = vpop.permute.xlu0 %2607
        %2611 = vset.pattern.permute.xlu0 0
        %2612 = vperm.xlu0 %2611, %v2486
        %v2613 = vpop.permute.xlu0 %2612
        %2616 = vset.pattern.permute.xlu0 0
        %2617 = vperm.xlu0 %2616, %v2487
        %v2618 = vpop.permute.xlu0 %2617
        %2621 = vset.pattern.permute.xlu0 0
        %2622 = vperm.xlu0 %2621, %v2488
        %v2623 = vpop.permute.xlu0 %2622
        %2626 = vset.pattern.permute.xlu0 0
        %2627 = vperm.xlu0 %2626, %v2489
        %v2628 = vpop.permute.xlu0 %2627
        %2631 = vset.pattern.permute.xlu0 0
        %2632 = vperm.xlu0 %2631, %v2490
        %v2633 = vpop.permute.xlu0 %2632
        %2636 = vset.pattern.permute.xlu0 0
        %2637 = vperm.xlu0 %2636, %v2491
        %v2638 = vpop.permute.xlu0 %2637
        %2641 = vset.pattern.permute.xlu0 0
        %2642 = vperm.xlu0 %2641, %v2492
        %v2643 = vpop.permute.xlu0 %2642
        %2646 = vset.pattern.permute.xlu0 0
        %2647 = vperm.xlu0 %2646, %v2493
        %v2648 = vpop.permute.xlu0 %2647
        %2651 = vset.pattern.permute.xlu0 0
        %2652 = vperm.xlu0 %2651, %v2494
        %v2653 = vpop.permute.xlu0 %2652
        %v2655 = vmul.f32 %v620, %v2498
        %v2656 = vmul.f32 %v621, %v2503
        %v2657 = vmul.f32 %v622, %v2508
        %v2658 = vmul.f32 %v623, %v2513
        %v2659 = vmul.f32 %v624, %v2518
        %v2660 = vmul.f32 %v625, %v2523
        %v2661 = vmul.f32 %v626, %v2528
        %v2662 = vmul.f32 %v627, %v2533
        %v2663 = vmul.f32 %v628, %v2538
        %v2664 = vmul.f32 %v629, %v2543
        %v2665 = vmul.f32 %v630, %v2548
        %v2666 = vmul.f32 %v631, %v2553
        %v2667 = vmul.f32 %v632, %v2558
        %v2668 = vmul.f32 %v633, %v2563
        %v2669 = vmul.f32 %v634, %v2568
        %v2670 = vmul.f32 %v635, %v2573
        %v2671 = vmul.f32 %v636, %v2578
        %v2672 = vmul.f32 %v637, %v2583
        %v2673 = vmul.f32 %v638, %v2588
        %v2674 = vmul.f32 %v639, %v2593
        %v2675 = vmul.f32 %v640, %v2598
        %v2676 = vmul.f32 %v641, %v2603
        %v2677 = vmul.f32 %v642, %v2608
        %v2678 = vmul.f32 %v643, %v2613
        %v2679 = vmul.f32 %v644, %v2618
        %v2680 = vmul.f32 %v645, %v2623
        %v2681 = vmul.f32 %v646, %v2628
        %v2682 = vmul.f32 %v647, %v2633
        %v2683 = vmul.f32 %v648, %v2638
        %v2684 = vmul.f32 %v649, %v2643
        %v2685 = vmul.f32 %v650, %v2648
        %v2686 = vmul.f32 %v651, %v2653
        %vm2687 = vcmask 64512
        %v2688 = vsel %vm2687, %v2655, 0.0
        %v2689 = vsel %vm2687, %v2656, 0.0
        %v2690 = vadd.f32 %v2688, %v2689
        %v2691 = vsel %vm2687, %v2657, 0.0
        %v2692 = vadd.f32 %v2690, %v2691
        %v2693 = vsel %vm2687, %v2658, 0.0
        %v2694 = vadd.f32 %v2692, %v2693
        %v2695 = vsel %vm2687, %v2659, 0.0
        %v2696 = vadd.f32 %v2694, %v2695
        %v2697 = vsel %vm2687, %v2660, 0.0
        %v2698 = vadd.f32 %v2696, %v2697
        %v2699 = vsel %vm2687, %v2661, 0.0
        %v2700 = vadd.f32 %v2698, %v2699
        %v2701 = vsel %vm2687, %v2662, 0.0
        %v2702 = vadd.f32 %v2700, %v2701
        %v2703 = vsel %vm2687, %v2663, 0.0
        %v2704 = vadd.f32 %v2702, %v2703
        %v2705 = vsel %vm2687, %v2664, 0.0
        %v2706 = vadd.f32 %v2704, %v2705
        %v2707 = vsel %vm2687, %v2665, 0.0
        %v2708 = vadd.f32 %v2706, %v2707
        %v2709 = vsel %vm2687, %v2666, 0.0
        %v2710 = vadd.f32 %v2708, %v2709
        %v2711 = vsel %vm2687, %v2667, 0.0
        %v2712 = vadd.f32 %v2710, %v2711
        %v2713 = vsel %vm2687, %v2668, 0.0
        %v2714 = vadd.f32 %v2712, %v2713
        %v2715 = vsel %vm2687, %v2669, 0.0
        %v2716 = vadd.f32 %v2714, %v2715
        %v2717 = vsel %vm2687, %v2670, 0.0
        %v2718 = vadd.f32 %v2716, %v2717
        %v2719 = vrot.slane %v2718, 4
        %v2720 = vadd.f32 %v2718, %v2719
        %v2721 = vrot.slane %v2720, 2
        %v2722 = vadd.f32 %v2720, %v2721
        %v2723 = vrot.slane %v2722, 1
        %v2724 = vadd.f32 %v2722, %v2723
        %v2725 = vsel %vm2687, %v2671, 0.0
        %v2726 = vsel %vm2687, %v2672, 0.0
        %v2727 = vadd.f32 %v2725, %v2726
        %v2728 = vsel %vm2687, %v2673, 0.0
        %v2729 = vadd.f32 %v2727, %v2728
        %v2730 = vsel %vm2687, %v2674, 0.0
        %v2731 = vadd.f32 %v2729, %v2730
        %v2732 = vsel %vm2687, %v2675, 0.0
        %v2733 = vadd.f32 %v2731, %v2732
        %v2734 = vsel %vm2687, %v2676, 0.0
        %v2735 = vadd.f32 %v2733, %v2734
        %v2736 = vsel %vm2687, %v2677, 0.0
        %v2737 = vadd.f32 %v2735, %v2736
        %v2738 = vsel %vm2687, %v2678, 0.0
        %v2739 = vadd.f32 %v2737, %v2738
        %v2740 = vsel %vm2687, %v2679, 0.0
        %v2741 = vadd.f32 %v2739, %v2740
        %v2742 = vsel %vm2687, %v2680, 0.0
        %v2743 = vadd.f32 %v2741, %v2742
        %v2744 = vsel %vm2687, %v2681, 0.0
        %v2745 = vadd.f32 %v2743, %v2744
        %v2746 = vsel %vm2687, %v2682, 0.0
        %v2747 = vadd.f32 %v2745, %v2746
        %v2748 = vsel %vm2687, %v2683, 0.0
        %v2749 = vadd.f32 %v2747, %v2748
        %v2750 = vsel %vm2687, %v2684, 0.0
        %v2751 = vadd.f32 %v2749, %v2750
        %v2752 = vsel %vm2687, %v2685, 0.0
        %v2753 = vadd.f32 %v2751, %v2752
        %v2754 = vsel %vm2687, %v2686, 0.0
        %v2755 = vadd.f32 %v2753, %v2754
        %v2756 = vrot.slane %v2755, 4
        %v2757 = vadd.f32 %v2755, %v2756
        %v2758 = vrot.slane %v2757, 2
        %v2759 = vadd.f32 %v2757, %v2758
        %v2760 = vrot.slane %v2759, 1
        %v2761 = vadd.f32 %v2759, %v2760
        %v2762 = vld [vmem:[%s536] sm:$0xf]
        %v2763 = vunpack.c.l.bf16 %v2762
        %v2764 = vpack.c.bf16 %v2724, %v2724
        %v2765 = vpack.c.bf16 %v2761, %v2761
        %v2768 = vunpack.c.l.b16 %v2764
        %v2769 = vunpack.c.l.b16 %v2765
        %v2770 = vsel %vm2046, %v2769, %v2768
        %v2771 = vpack.c.b16 %v2770, %v2770
        %v2774 = vunpack.c.l.b16 %v701
        %v2775 = vunpack.c.h.b16 %v701
        %v2776 = vunpack.c.l.b16 %v702
        %v2777 = vunpack.c.h.b16 %v702
        %v2778 = vpack.c.b16 %v2774, %v2774
        %v2779 = vpack.c.b16 %v2775, %v2775
        %v2780 = vpack.c.b16 %v2776, %v2776
        %v2781 = vpack.c.b16 %v2777, %v2777
        %v2783 = vsel %vm2687, %v2771, 0
        %vm2785 = vcmask 1043456
        %v2787 = vsel %vm2785, %v2778, 0
        %v2790 = vsel %vm2785, %v2779, 0
        %v2793 = vsel %vm2785, %v2780, 0
        %v2796 = vsel %vm2785, %v2781, 0
        %2798 = vmatprep.subr.bf16.mxu0 %v2790
        %2799 = vmatpush1.bf16.msra.mxu0 %v2787
        %2800 = vmatprep.subr.bf16.mxu0 0
        %2801 = vmatpush1.bf16.msra.mxu0 0
        %2802 = vmatprep.subr.bf16.mxu0 0
        %2803 = vmatpush1.bf16.msra.mxu0 0
        %2804 = vmatprep.subr.bf16.mxu0 0
        %2805 = vmatpush1.bf16.msra.mxu0 0
        %2806 = vmatprep.subr.bf16.mxu0 0
        %2807 = vmatpush1.bf16.msra.mxu0 0
        %2808 = vmatprep.subr.bf16.mxu0 0
        %2809 = vmatpush1.bf16.msra.mxu0 0
        %2810 = vmatprep.subr.bf16.mxu0 0
        %2811 = vmatpush1.bf16.msra.mxu0 0
        %2812 = vmatprep.subr.bf16.mxu0 0
        %2813 = vmatpush1.bf16.msra.mxu0 0
        %2814 = vmatprep.subr.bf16.mxu0 0
        %2815 = vmatpush1.bf16.msra.mxu0 0
        %2816 = vmatprep.subr.bf16.mxu0 0
        %2817 = vmatpush1.bf16.msra.mxu0 0
        %2818 = vmatprep.subr.bf16.mxu0 0
        %2819 = vmatpush1.bf16.msra.mxu0 0
        %2820 = vmatprep.subr.bf16.mxu0 0
        %2821 = vmatpush1.bf16.msra.mxu0 0
        %2822 = vmatprep.subr.bf16.mxu0 0
        %2823 = vmatpush1.bf16.msra.mxu0 0
        %2824 = vmatprep.subr.bf16.mxu0 0
        %2825 = vmatpush1.bf16.msra.mxu0 0
        %2826 = vmatprep.subr.bf16.mxu0 0
        %2827 = vmatpush1.bf16.msra.mxu0 0
        %2828 = vmatprep.subr.bf16.mxu0 0
        %2829 = vmatpush1.bf16.msra.mxu0 0
        %2830 = vmatprep.mubr.bf16.mxu0 0
        %2831 = vmatmul.mubr.bf16.gmra.mrb[0].mxu0 %v2783
        %v2832 = vpop.f32.mrb[0].mxu0
        %v2833 = vadd.f32 0.0, %v2832
        %v2834 = vpop.f32.mrb[0].mxu0
        %v2835 = vadd.f32 0.0, %v2834
        %v2836 = vpop.f32.mrb[0].mxu0
        %v2837 = vpop.f32.mrb[0].mxu0
        %2838 = vdwg.mxu0
        %2839 = vmatprep.subr.bf16.mxu0 %v2796
        %2840 = vmatpush1.bf16.msra.mxu0 %v2793
        %2841 = vmatprep.subr.bf16.mxu0 0
        %2842 = vmatpush1.bf16.msra.mxu0 0
        %2843 = vmatprep.subr.bf16.mxu0 0
        %2844 = vmatpush1.bf16.msra.mxu0 0
        %2845 = vmatprep.subr.bf16.mxu0 0
        %2846 = vmatpush1.bf16.msra.mxu0 0
        %2847 = vmatprep.subr.bf16.mxu0 0
        %2848 = vmatpush1.bf16.msra.mxu0 0
        %2849 = vmatprep.subr.bf16.mxu0 0
        %2850 = vmatpush1.bf16.msra.mxu0 0
        %2851 = vmatprep.subr.bf16.mxu0 0
        %2852 = vmatpush1.bf16.msra.mxu0 0
        %2853 = vmatprep.subr.bf16.mxu0 0
        %2854 = vmatpush1.bf16.msra.mxu0 0
        %2855 = vmatprep.subr.bf16.mxu0 0
        %2856 = vmatpush1.bf16.msra.mxu0 0
        %2857 = vmatprep.subr.bf16.mxu0 0
        %2858 = vmatpush1.bf16.msra.mxu0 0
        %2859 = vmatprep.subr.bf16.mxu0 0
        %2860 = vmatpush1.bf16.msra.mxu0 0
        %2861 = vmatprep.subr.bf16.mxu0 0
        %2862 = vmatpush1.bf16.msra.mxu0 0
        %2863 = vmatprep.subr.bf16.mxu0 0
        %2864 = vmatpush1.bf16.msra.mxu0 0
        %2865 = vmatprep.subr.bf16.mxu0 0
        %2866 = vmatpush1.bf16.msra.mxu0 0
        %2867 = vmatprep.subr.bf16.mxu0 0
        %2868 = vmatpush1.bf16.msra.mxu0 0
        %2869 = vmatprep.subr.bf16.mxu0 0
        %2870 = vmatpush1.bf16.msra.mxu0 0
        %2871 = vmatprep.mubr.bf16.mxu0 0
        %2872 = vmatmul.mubr.bf16.gmra.mrb[0].mxu0 %v2783
        %v2873 = vpop.f32.mrb[0].mxu0
        %v2874 = vadd.f32 0.0, %v2873
        %v2875 = vpop.f32.mrb[0].mxu0
        %v2876 = vadd.f32 0.0, %v2875
        %v2877 = vpop.f32.mrb[0].mxu0
        %v2878 = vpop.f32.mrb[0].mxu0
        %2879 = vdwg.mxu0
        %v2884 = vcombine.low %v2833, %v2835
        %v2885 = vcombine.low %v2874, %v2876
        %v2887 = vunpack.c.l.s4 1983009808
        %v2888 = vunpack.c.0.s8 %v2887
        %v2889 = vlaneseq
        %v2890 = vshrl.u32 %v2889, 7
        %v2891 = vsub.s32 %v2888, %v2890
        %v2892 = vrot.slane %v2884, %v2891
        %v2894 = vunpack.c.l.s4 1983009808
        %v2895 = vunpack.c.0.s8 %v2894
        %v2896 = vlaneseq
        %v2897 = vshrl.u32 %v2896, 7
        %v2898 = vsub.s32 %v2895, %v2897
        %v2899 = vrot.slane %v2885, %v2898
        %v2900 = vcombine.low %v2892, %v2899
        %v2902 = vadd.f32 %v2763, %v2900
        %v2907 = vcombine.low %v1302, %v1304
        %v2908 = vcombine.low %v1343, %v1345
        %v2910 = vunpack.c.l.s4 1983009808
        %v2911 = vunpack.c.0.s8 %v2910
        %v2912 = vlaneseq
        %v2913 = vshrl.u32 %v2912, 7
        %v2914 = vsub.s32 %v2911, %v2913
        %v2915 = vrot.slane %v2907, %v2914
        %v2917 = vunpack.c.l.s4 1983009808
        %v2918 = vunpack.c.0.s8 %v2917
        %v2919 = vlaneseq
        %v2920 = vshrl.u32 %v2919, 7
        %v2921 = vsub.s32 %v2918, %v2920
        %v2922 = vrot.slane %v2908, %v2921
        %v2923 = vcombine.low %v2915, %v2922
        %v2925 = vadd.f32 %v2902, %v2923
        %v2927 = vlaneseq
        %v2928 = vshrl.u32 %v2927, 7
        %v2929 = vsub.s32 0, %v2928
        %v2930 = vrot.slane %v767, %v2929
        %v2931 = vlaneseq
        %v2932 = vshrl.u32 %v2931, 7
        %v2933 = vsub.s32 1, %v2932
        %v2934 = vrot.slane %v767, %v2933
        %v2935 = vlaneseq
        %v2936 = vshrl.u32 %v2935, 7
        %v2937 = vsub.s32 2, %v2936
        %v2938 = vrot.slane %v767, %v2937
        %v2939 = vlaneseq
        %v2940 = vshrl.u32 %v2939, 7
        %v2941 = vsub.s32 3, %v2940
        %v2942 = vrot.slane %v767, %v2941
        %v2943 = vcombine.low %v2930, %v2934
        %v2944 = vcombine.low %v2938, %v2942
        %v2946 = vunpack.c.l.s4 1983009808
        %v2947 = vunpack.c.0.s8 %v2946
        %v2948 = vlaneseq
        %v2949 = vshrl.u32 %v2948, 7
        %v2950 = vsub.s32 %v2947, %v2949
        %v2951 = vrot.slane %v2943, %v2950
        %v2953 = vunpack.c.l.s4 1983009808
        %v2954 = vunpack.c.0.s8 %v2953
        %v2955 = vlaneseq
        %v2956 = vshrl.u32 %v2955, 7
        %v2957 = vsub.s32 %v2954, %v2956
        %v2958 = vrot.slane %v2944, %v2957
        %v2959 = vcombine.low %v2951, %v2958
        %v2961 = vadd.f32 %v2925, %v2959
        %v2962 = vxor.u32 %v2961, 2147483648
        %v2963 = vmul.f32 %v2962, 1.442695
        %v2964 = vpow.pop %v2963
        %v2965 = vadd.f32 %v2964, 1.0
        %v2966 = vrcp.pop %v2965
        %v2967 = vmul.f32 1.0, %v2966
        %v2969 = vrot.slane %v2961, 2
        %v2971 = vxor.u32 %v2969, 2147483648
        %v2972 = vmul.f32 %v2971, 1.442695
        %v2973 = vpow.pop %v2972
        %v2974 = vadd.f32 %v2973, 1.0
        %v2975 = vrcp.pop %v2974
        %v2976 = vmul.f32 1.0, %v2975
        %v2977 = vrot.slane %v2961, 4
        %v2979 = vtanh.pop %v2977
        %v2980 = vrot.slane %v2961, 6
        %v2982 = vxor.u32 %v2980, 2147483648
        %v2983 = vmul.f32 %v2982, 1.442695
        %v2984 = vpow.pop %v2983
        %v2985 = vadd.f32 %v2984, 1.0
        %v2986 = vrcp.pop %v2985
        %v2987 = vmul.f32 1.0, %v2986
        %v2988 = vmul.f32 %v2976, %v770
        %v2989 = vmul.f32 %v2967, %v2979
        %v2990 = vadd.f32 %v2988, %v2989
        %v2991 = vtanh.pop %v2990
        %v2992 = vmul.f32 %v2987, %v2991
        %v2993 = vpack.c.bf16 %v2992, %v2992
        %v3026 = vunpack.c.l.b16 %v735
        %v3027 = vunpack.c.h.b16 %v735
        %v3028 = vunpack.c.l.b16 %v736
        %v3029 = vunpack.c.h.b16 %v736
        %v3030 = vunpack.c.l.b16 %v737
        %v3031 = vunpack.c.h.b16 %v737
        %v3032 = vunpack.c.l.b16 %v738
        %v3033 = vunpack.c.h.b16 %v738
        %v3034 = vunpack.c.l.b16 %v739
        %v3035 = vunpack.c.h.b16 %v739
        %v3036 = vunpack.c.l.b16 %v740
        %v3037 = vunpack.c.h.b16 %v740
        %v3038 = vunpack.c.l.b16 %v741
        %v3039 = vunpack.c.h.b16 %v741
        %v3040 = vunpack.c.l.b16 %v742
        %v3041 = vunpack.c.h.b16 %v742
        %v3042 = vunpack.c.l.b16 %v743
        %v3043 = vunpack.c.h.b16 %v743
        %v3044 = vunpack.c.l.b16 %v744
        %v3045 = vunpack.c.h.b16 %v744
        %v3046 = vunpack.c.l.b16 %v745
        %v3047 = vunpack.c.h.b16 %v745
        %v3048 = vunpack.c.l.b16 %v746
        %v3049 = vunpack.c.h.b16 %v746
        %v3050 = vunpack.c.l.b16 %v747
        %v3051 = vunpack.c.h.b16 %v747
        %v3052 = vunpack.c.l.b16 %v748
        %v3053 = vunpack.c.h.b16 %v748
        %v3054 = vunpack.c.l.b16 %v749
        %v3055 = vunpack.c.h.b16 %v749
        %v3056 = vunpack.c.l.b16 %v750
        %v3057 = vunpack.c.h.b16 %v750
        %v3058 = vunpack.c.l.b16 %v751
        %v3059 = vunpack.c.h.b16 %v751
        %v3060 = vunpack.c.l.b16 %v752
        %v3061 = vunpack.c.h.b16 %v752
        %v3062 = vunpack.c.l.b16 %v753
        %v3063 = vunpack.c.h.b16 %v753
        %v3064 = vunpack.c.l.b16 %v754
        %v3065 = vunpack.c.h.b16 %v754
        %v3066 = vunpack.c.l.b16 %v755
        %v3067 = vunpack.c.h.b16 %v755
        %v3068 = vunpack.c.l.b16 %v756
        %v3069 = vunpack.c.h.b16 %v756
        %v3070 = vunpack.c.l.b16 %v757
        %v3071 = vunpack.c.h.b16 %v757
        %v3072 = vunpack.c.l.b16 %v758
        %v3073 = vunpack.c.h.b16 %v758
        %v3074 = vunpack.c.l.b16 %v759
        %v3075 = vunpack.c.h.b16 %v759
        %v3076 = vunpack.c.l.b16 %v760
        %v3077 = vunpack.c.h.b16 %v760
        %v3078 = vunpack.c.l.b16 %v761
        %v3079 = vunpack.c.h.b16 %v761
        %v3080 = vunpack.c.l.b16 %v762
        %v3081 = vunpack.c.h.b16 %v762
        %v3082 = vunpack.c.l.b16 %v763
        %v3083 = vunpack.c.h.b16 %v763
        %v3084 = vunpack.c.l.b16 %v764
        %v3085 = vunpack.c.h.b16 %v764
        %v3086 = vunpack.c.l.b16 %v765
        %v3087 = vunpack.c.h.b16 %v765
        %v3088 = vunpack.c.l.b16 %v766
        %v3089 = vunpack.c.h.b16 %v766
        %v3090 = vpack.c.b16 %v3030, %v3026
        %v3091 = vpack.c.b16 %v3031, %v3027
        %v3092 = vpack.c.b16 %v3032, %v3028
        %v3093 = vpack.c.b16 %v3033, %v3029
        %v3094 = vpack.c.b16 %v3038, %v3034
        %v3095 = vpack.c.b16 %v3039, %v3035
        %v3096 = vpack.c.b16 %v3040, %v3036
        %v3097 = vpack.c.b16 %v3041, %v3037
        %v3098 = vpack.c.b16 %v3046, %v3042
        %v3099 = vpack.c.b16 %v3047, %v3043
        %v3100 = vpack.c.b16 %v3048, %v3044
        %v3101 = vpack.c.b16 %v3049, %v3045
        %v3102 = vpack.c.b16 %v3054, %v3050
        %v3103 = vpack.c.b16 %v3055, %v3051
        %v3104 = vpack.c.b16 %v3056, %v3052
        %v3105 = vpack.c.b16 %v3057, %v3053
        %v3106 = vpack.c.b16 %v3062, %v3058
        %v3107 = vpack.c.b16 %v3063, %v3059
        %v3108 = vpack.c.b16 %v3064, %v3060
        %v3109 = vpack.c.b16 %v3065, %v3061
        %v3110 = vpack.c.b16 %v3070, %v3066
        %v3111 = vpack.c.b16 %v3071, %v3067
        %v3112 = vpack.c.b16 %v3072, %v3068
        %v3113 = vpack.c.b16 %v3073, %v3069
        %v3114 = vpack.c.b16 %v3078, %v3074
        %v3115 = vpack.c.b16 %v3079, %v3075
        %v3116 = vpack.c.b16 %v3080, %v3076
        %v3117 = vpack.c.b16 %v3081, %v3077
        %v3118 = vpack.c.b16 %v3086, %v3082
        %v3119 = vpack.c.b16 %v3087, %v3083
        %v3120 = vpack.c.b16 %v3088, %v3084
        %v3121 = vpack.c.b16 %v3089, %v3085
        %3154 = vmatprep.subr.bf16.mxu0 %v3091
        %3155 = vmatpush1.bf16.msra.mxu0 %v3090
        %3156 = vmatprep.subr.bf16.mxu0 %v3095
        %3157 = vmatpush1.bf16.msra.mxu0 %v3094
        %3158 = vmatprep.subr.bf16.mxu0 %v3099
        %3159 = vmatpush1.bf16.msra.mxu0 %v3098
        %3160 = vmatprep.subr.bf16.mxu0 %v3103
        %3161 = vmatpush1.bf16.msra.mxu0 %v3102
        %3162 = vmatprep.subr.bf16.mxu0 %v3107
        %3163 = vmatpush1.bf16.msra.mxu0 %v3106
        %3164 = vmatprep.subr.bf16.mxu0 %v3111
        %3165 = vmatpush1.bf16.msra.mxu0 %v3110
        %3166 = vmatprep.subr.bf16.mxu0 %v3115
        %3167 = vmatpush1.bf16.msra.mxu0 %v3114
        %3168 = vmatprep.subr.bf16.mxu0 %v3119
        %3169 = vmatpush1.bf16.msra.mxu0 %v3118
        %3170 = vmatprep.subr.bf16.mxu0 0
        %3171 = vmatpush1.bf16.msra.mxu0 0
        %3172 = vmatprep.subr.bf16.mxu0 0
        %3173 = vmatpush1.bf16.msra.mxu0 0
        %3174 = vmatprep.subr.bf16.mxu0 0
        %3175 = vmatpush1.bf16.msra.mxu0 0
        %3176 = vmatprep.subr.bf16.mxu0 0
        %3177 = vmatpush1.bf16.msra.mxu0 0
        %3178 = vmatprep.subr.bf16.mxu0 0
        %3179 = vmatpush1.bf16.msra.mxu0 0
        %3180 = vmatprep.subr.bf16.mxu0 0
        %3181 = vmatpush1.bf16.msra.mxu0 0
        %3182 = vmatprep.subr.bf16.mxu0 0
        %3183 = vmatpush1.bf16.msra.mxu0 0
        %3184 = vmatprep.subr.bf16.mxu0 0
        %3185 = vmatpush1.bf16.msra.mxu0 0
        %3186 = vmatprep.mubr.bf16.mxu0 0
        %3187 = vmatmul.mubr.bf16.gmra.mrb[0].mxu0 %v2993
        %v3188 = vpop.f32.mrb[0].mxu0
        %v3189 = vadd.f32 %v1021, %v3188
        %v3190 = vpop.f32.mrb[0].mxu0
        %v3191 = vadd.f32 %v1060, %v3190
        %v3192 = vpop.f32.mrb[0].mxu0
        %v3193 = vpop.f32.mrb[0].mxu0
        %3194 = vdwg.mxu0
        %3195 = vmatprep.subr.bf16.mxu0 %v3093
        %3196 = vmatpush1.bf16.msra.mxu0 %v3092
        %3197 = vmatprep.subr.bf16.mxu0 %v3097
        %3198 = vmatpush1.bf16.msra.mxu0 %v3096
        %3199 = vmatprep.subr.bf16.mxu0 %v3101
        %3200 = vmatpush1.bf16.msra.mxu0 %v3100
        %3201 = vmatprep.subr.bf16.mxu0 %v3105
        %3202 = vmatpush1.bf16.msra.mxu0 %v3104
        %3203 = vmatprep.subr.bf16.mxu0 %v3109
        %3204 = vmatpush1.bf16.msra.mxu0 %v3108
        %3205 = vmatprep.subr.bf16.mxu0 %v3113
        %3206 = vmatpush1.bf16.msra.mxu0 %v3112
        %3207 = vmatprep.subr.bf16.mxu0 %v3117
        %3208 = vmatpush1.bf16.msra.mxu0 %v3116
        %3209 = vmatprep.subr.bf16.mxu0 %v3121
        %3210 = vmatpush1.bf16.msra.mxu0 %v3120
        %3211 = vmatprep.subr.bf16.mxu0 0
        %3212 = vmatpush1.bf16.msra.mxu0 0
        %3213 = vmatprep.subr.bf16.mxu0 0
        %3214 = vmatpush1.bf16.msra.mxu0 0
        %3215 = vmatprep.subr.bf16.mxu0 0
        %3216 = vmatpush1.bf16.msra.mxu0 0
        %3217 = vmatprep.subr.bf16.mxu0 0
        %3218 = vmatpush1.bf16.msra.mxu0 0
        %3219 = vmatprep.subr.bf16.mxu0 0
        %3220 = vmatpush1.bf16.msra.mxu0 0
        %3221 = vmatprep.subr.bf16.mxu0 0
        %3222 = vmatpush1.bf16.msra.mxu0 0
        %3223 = vmatprep.subr.bf16.mxu0 0
        %3224 = vmatpush1.bf16.msra.mxu0 0
        %3225 = vmatprep.subr.bf16.mxu0 0
        %3226 = vmatpush1.bf16.msra.mxu0 0
        %3227 = vmatprep.mubr.bf16.mxu0 0
        %3228 = vmatmul.mubr.bf16.gmra.mrb[0].mxu0 %v2993
        %v3229 = vpop.f32.mrb[0].mxu0
        %v3230 = vadd.f32 %v1062, %v3229
        %v3231 = vpop.f32.mrb[0].mxu0
        %v3232 = vadd.f32 %v1101, %v3231
        %v3233 = vpop.f32.mrb[0].mxu0
        %v3234 = vpop.f32.mrb[0].mxu0
        %3235 = vdwg.mxu0
        %v3237 = vlaneseq
        %v3238 = vshrl.u32 %v3237, 7
        %v3239 = vsub.s32 0, %v3238
        %v3240 = vrot.slane %v768, %v3239
        %v3241 = vlaneseq
        %v3242 = vshrl.u32 %v3241, 7
        %v3243 = vsub.s32 1, %v3242
        %v3244 = vrot.slane %v768, %v3243
        %v3245 = vlaneseq
        %v3246 = vshrl.u32 %v3245, 7
        %v3247 = vsub.s32 2, %v3246
        %v3248 = vrot.slane %v768, %v3247
        %v3249 = vlaneseq
        %v3250 = vshrl.u32 %v3249, 7
        %v3251 = vsub.s32 3, %v3250
        %v3252 = vrot.slane %v768, %v3251
        %v3257 = vadd.f32 %v3189, %v3240
        %v3258 = vadd.f32 %v3191, %v3244
        %v3259 = vadd.f32 %v3230, %v3248
        %v3260 = vadd.f32 %v3232, %v3252
        %v3261 = vxor.u32 %v3257, 2147483648
        %v3262 = vmul.f32 %v3261, 1.442695
        %v3263 = vpow.pop %v3262
        %v3264 = vadd.f32 %v3263, 1.0
        %v3265 = vrcp.pop %v3264
        %v3266 = vmul.f32 1.0, %v3265
        %v3267 = vxor.u32 %v3258, 2147483648
        %v3268 = vmul.f32 %v3267, 1.442695
        %v3269 = vpow.pop %v3268
        %v3270 = vadd.f32 %v3269, 1.0
        %v3271 = vrcp.pop %v3270
        %v3272 = vmul.f32 1.0, %v3271
        %v3273 = vtanh.pop %v3259
        %v3274 = vxor.u32 %v3260, 2147483648
        %v3275 = vmul.f32 %v3274, 1.442695
        %v3276 = vpow.pop %v3275
        %v3277 = vadd.f32 %v3276, 1.0
        %v3278 = vrcp.pop %v3277
        %v3279 = vmul.f32 1.0, %v3278
        %v3280 = vmul.f32 %v3272, %v774
        %v3281 = vmul.f32 %v3266, %v3273
        %v3282 = vadd.f32 %v3280, %v3281
        %v3283 = vtanh.pop %v3282
        %v3284 = vmul.f32 %v3279, %v3283
        %3285 = vst [vmem:[%s524] sm:$0x3] %v3284
        %v3286 = vlaneseq
        %v3287 = vshrl.u32 %v3286, 7
        %v3288 = vsub.s32 %v1857, %v3287
        %v3289 = vrot.slane %v2498, %v3288
        %v3290 = vlaneseq
        %v3291 = vshrl.u32 %v3290, 7
        %v3292 = vsub.s32 %v1862, %v3291
        %v3293 = vrot.slane %v2503, %v3292
        %v3294 = vsel %vm1867, %v3293, %v3289
        %v3295 = vlaneseq
        %v3296 = vshrl.u32 %v3295, 7
        %v3297 = vsub.s32 %v1869, %v3296
        %v3298 = vrot.slane %v2508, %v3297
        %v3299 = vsel %vm1874, %v3298, %v3294
        %v3300 = vlaneseq
        %v3301 = vshrl.u32 %v3300, 7
        %v3302 = vsub.s32 %v1876, %v3301
        %v3303 = vrot.slane %v2513, %v3302
        %v3304 = vsel %vm1881, %v3303, %v3299
        %v3305 = vlaneseq
        %v3306 = vshrl.u32 %v3305, 7
        %v3307 = vsub.s32 %v1883, %v3306
        %v3308 = vrot.slane %v2518, %v3307
        %v3309 = vsel %vm1888, %v3308, %v3304
        %v3310 = vlaneseq
        %v3311 = vshrl.u32 %v3310, 7
        %v3312 = vsub.s32 %v1890, %v3311
        %v3313 = vrot.slane %v2523, %v3312
        %v3314 = vsel %vm1895, %v3313, %v3309
        %v3315 = vlaneseq
        %v3316 = vshrl.u32 %v3315, 7
        %v3317 = vsub.s32 %v1897, %v3316
        %v3318 = vrot.slane %v2528, %v3317
        %v3319 = vsel %vm1902, %v3318, %v3314
        %v3320 = vlaneseq
        %v3321 = vshrl.u32 %v3320, 7
        %v3322 = vsub.s32 %v1904, %v3321
        %v3323 = vrot.slane %v2533, %v3322
        %v3324 = vsel %vm1909, %v3323, %v3319
        %v3325 = vlaneseq
        %v3326 = vshrl.u32 %v3325, 7
        %v3327 = vsub.s32 %v1911, %v3326
        %v3328 = vrot.slane %v2538, %v3327
        %v3329 = vsel %vm1916, %v3328, %v3324
        %v3330 = vlaneseq
        %v3331 = vshrl.u32 %v3330, 7
        %v3332 = vsub.s32 %v1918, %v3331
        %v3333 = vrot.slane %v2543, %v3332
        %v3334 = vsel %vm1923, %v3333, %v3329
        %v3335 = vlaneseq
        %v3336 = vshrl.u32 %v3335, 7
        %v3337 = vsub.s32 %v1925, %v3336
        %v3338 = vrot.slane %v2548, %v3337
        %v3339 = vsel %vm1930, %v3338, %v3334
        %v3340 = vlaneseq
        %v3341 = vshrl.u32 %v3340, 7
        %v3342 = vsub.s32 %v1932, %v3341
        %v3343 = vrot.slane %v2553, %v3342
        %v3344 = vsel %vm1937, %v3343, %v3339
        %v3345 = vlaneseq
        %v3346 = vshrl.u32 %v3345, 7
        %v3347 = vsub.s32 %v1939, %v3346
        %v3348 = vrot.slane %v2558, %v3347
        %v3349 = vsel %vm1944, %v3348, %v3344
        %v3350 = vlaneseq
        %v3351 = vshrl.u32 %v3350, 7
        %v3352 = vsub.s32 %v1946, %v3351
        %v3353 = vrot.slane %v2563, %v3352
        %v3354 = vsel %vm1951, %v3353, %v3349
        %v3355 = vlaneseq
        %v3356 = vshrl.u32 %v3355, 7
        %v3357 = vsub.s32 %v1953, %v3356
        %v3358 = vrot.slane %v2568, %v3357
        %v3359 = vsel %vm1958, %v3358, %v3354
        %v3360 = vlaneseq
        %v3361 = vshrl.u32 %v3360, 7
        %v3362 = vsub.s32 %v1960, %v3361
        %v3363 = vrot.slane %v2573, %v3362
        %v3364 = vsel %vm1965, %v3363, %v3359
        %v3365 = vlaneseq
        %v3366 = vshrl.u32 %v3365, 7
        %v3367 = vsub.s32 %v1857, %v3366
        %v3368 = vrot.slane %v2578, %v3367
        %v3369 = vlaneseq
        %v3370 = vshrl.u32 %v3369, 7
        %v3371 = vsub.s32 %v1862, %v3370
        %v3372 = vrot.slane %v2583, %v3371
        %v3373 = vsel %vm1867, %v3372, %v3368
        %v3374 = vlaneseq
        %v3375 = vshrl.u32 %v3374, 7
        %v3376 = vsub.s32 %v1869, %v3375
        %v3377 = vrot.slane %v2588, %v3376
        %v3378 = vsel %vm1874, %v3377, %v3373
        %v3379 = vlaneseq
        %v3380 = vshrl.u32 %v3379, 7
        %v3381 = vsub.s32 %v1876, %v3380
        %v3382 = vrot.slane %v2593, %v3381
        %v3383 = vsel %vm1881, %v3382, %v3378
        %v3384 = vlaneseq
        %v3385 = vshrl.u32 %v3384, 7
        %v3386 = vsub.s32 %v1883, %v3385
        %v3387 = vrot.slane %v2598, %v3386
        %v3388 = vsel %vm1888, %v3387, %v3383
        %v3389 = vlaneseq
        %v3390 = vshrl.u32 %v3389, 7
        %v3391 = vsub.s32 %v1890, %v3390
        %v3392 = vrot.slane %v2603, %v3391
        %v3393 = vsel %vm1895, %v3392, %v3388
        %v3394 = vlaneseq
        %v3395 = vshrl.u32 %v3394, 7
        %v3396 = vsub.s32 %v1897, %v3395
        %v3397 = vrot.slane %v2608, %v3396
        %v3398 = vsel %vm1902, %v3397, %v3393
        %v3399 = vlaneseq
        %v3400 = vshrl.u32 %v3399, 7
        %v3401 = vsub.s32 %v1904, %v3400
        %v3402 = vrot.slane %v2613, %v3401
        %v3403 = vsel %vm1909, %v3402, %v3398
        %v3404 = vlaneseq
        %v3405 = vshrl.u32 %v3404, 7
        %v3406 = vsub.s32 %v1911, %v3405
        %v3407 = vrot.slane %v2618, %v3406
        %v3408 = vsel %vm1916, %v3407, %v3403
        %v3409 = vlaneseq
        %v3410 = vshrl.u32 %v3409, 7
        %v3411 = vsub.s32 %v1918, %v3410
        %v3412 = vrot.slane %v2623, %v3411
        %v3413 = vsel %vm1923, %v3412, %v3408
        %v3414 = vlaneseq
        %v3415 = vshrl.u32 %v3414, 7
        %v3416 = vsub.s32 %v1925, %v3415
        %v3417 = vrot.slane %v2628, %v3416
        %v3418 = vsel %vm1930, %v3417, %v3413
        %v3419 = vlaneseq
        %v3420 = vshrl.u32 %v3419, 7
        %v3421 = vsub.s32 %v1932, %v3420
        %v3422 = vrot.slane %v2633, %v3421
        %v3423 = vsel %vm1937, %v3422, %v3418
        %v3424 = vlaneseq
        %v3425 = vshrl.u32 %v3424, 7
        %v3426 = vsub.s32 %v1939, %v3425
        %v3427 = vrot.slane %v2638, %v3426
        %v3428 = vsel %vm1944, %v3427, %v3423
        %v3429 = vlaneseq
        %v3430 = vshrl.u32 %v3429, 7
        %v3431 = vsub.s32 %v1946, %v3430
        %v3432 = vrot.slane %v2643, %v3431
        %v3433 = vsel %vm1951, %v3432, %v3428
        %v3434 = vlaneseq
        %v3435 = vshrl.u32 %v3434, 7
        %v3436 = vsub.s32 %v1953, %v3435
        %v3437 = vrot.slane %v2648, %v3436
        %v3438 = vsel %vm1958, %v3437, %v3433
        %v3439 = vlaneseq
        %v3440 = vshrl.u32 %v3439, 7
        %v3441 = vsub.s32 %v1960, %v3440
        %v3442 = vrot.slane %v2653, %v3441
        %v3443 = vsel %vm1965, %v3442, %v3438
        %v3444 = vsel %vm2046, %v3443, %v3364
        %3446 = vst [vmem:[%s531] sm:$0x3] %v3444
        %v3447 = vpack.c.bf16 %v3284, %v3284
        %3448 = vmatprep.subr.bf16.mxu0 %v905
        %3449 = vmatpush1.bf16.msra.mxu0 %v904
        %3450 = vmatprep.subr.bf16.mxu0 %v910
        %3451 = vmatpush1.bf16.msra.mxu0 %v909
        %3452 = vmatprep.subr.bf16.mxu0 %v915
        %3453 = vmatpush1.bf16.msra.mxu0 %v914
        %3454 = vmatprep.subr.bf16.mxu0 %v920
        %3455 = vmatpush1.bf16.msra.mxu0 %v919
        %3456 = vmatprep.subr.bf16.mxu0 %v925
        %3457 = vmatpush1.bf16.msra.mxu0 %v924
        %3458 = vmatprep.subr.bf16.mxu0 %v930
        %3459 = vmatpush1.bf16.msra.mxu0 %v929
        %3460 = vmatprep.subr.bf16.mxu0 %v935
        %3461 = vmatpush1.bf16.msra.mxu0 %v934
        %3462 = vmatprep.subr.bf16.mxu0 %v940
        %3463 = vmatpush1.bf16.msra.mxu0 %v939
        %3464 = vmatprep.subr.bf16.mxu0 0
        %3465 = vmatpush1.bf16.msra.mxu0 0
        %3466 = vmatprep.subr.bf16.mxu0 0
        %3467 = vmatpush1.bf16.msra.mxu0 0
        %3468 = vmatprep.subr.bf16.mxu0 0
        %3469 = vmatpush1.bf16.msra.mxu0 0
        %3470 = vmatprep.subr.bf16.mxu0 0
        %3471 = vmatpush1.bf16.msra.mxu0 0
        %3472 = vmatprep.subr.bf16.mxu0 0
        %3473 = vmatpush1.bf16.msra.mxu0 0
        %3474 = vmatprep.subr.bf16.mxu0 0
        %3475 = vmatpush1.bf16.msra.mxu0 0
        %3476 = vmatprep.subr.bf16.mxu0 0
        %3477 = vmatpush1.bf16.msra.mxu0 0
        %3478 = vmatprep.subr.bf16.mxu0 0
        %3479 = vmatpush1.bf16.msra.mxu0 0
        %3480 = vmatprep.mubr.bf16.mxu0 0
        %3481 = vmatmul.mubr.bf16.gmra.mrb[0].mxu0 %v3447
        %v3482 = vpop.f32.mrb[0].mxu0
        %v3483 = vadd.f32 0.0, %v3482
        %v3484 = vpop.f32.mrb[0].mxu0
        %v3485 = vadd.f32 0.0, %v3484
        %v3486 = vpop.f32.mrb[0].mxu0
        %v3487 = vpop.f32.mrb[0].mxu0
        %3488 = vdwg.mxu0
        %3489 = vmatprep.subr.bf16.mxu0 %v907
        %3490 = vmatpush1.bf16.msra.mxu0 %v906
        %3491 = vmatprep.subr.bf16.mxu0 %v912
        %3492 = vmatpush1.bf16.msra.mxu0 %v911
        %3493 = vmatprep.subr.bf16.mxu0 %v917
        %3494 = vmatpush1.bf16.msra.mxu0 %v916
        %3495 = vmatprep.subr.bf16.mxu0 %v922
        %3496 = vmatpush1.bf16.msra.mxu0 %v921
        %3497 = vmatprep.subr.bf16.mxu0 %v927
        %3498 = vmatpush1.bf16.msra.mxu0 %v926
        %3499 = vmatprep.subr.bf16.mxu0 %v932
        %3500 = vmatpush1.bf16.msra.mxu0 %v931
        %3501 = vmatprep.subr.bf16.mxu0 %v937
        %3502 = vmatpush1.bf16.msra.mxu0 %v936
        %3503 = vmatprep.subr.bf16.mxu0 %v942
        %3504 = vmatpush1.bf16.msra.mxu0 %v941
        %3505 = vmatprep.subr.bf16.mxu0 0
        %3506 = vmatpush1.bf16.msra.mxu0 0
        %3507 = vmatprep.subr.bf16.mxu0 0
        %3508 = vmatpush1.bf16.msra.mxu0 0
        %3509 = vmatprep.subr.bf16.mxu0 0
        %3510 = vmatpush1.bf16.msra.mxu0 0
        %3511 = vmatprep.subr.bf16.mxu0 0
        %3512 = vmatpush1.bf16.msra.mxu0 0
        %3513 = vmatprep.subr.bf16.mxu0 0
        %3514 = vmatpush1.bf16.msra.mxu0 0
        %3515 = vmatprep.subr.bf16.mxu0 0
        %3516 = vmatpush1.bf16.msra.mxu0 0
        %3517 = vmatprep.subr.bf16.mxu0 0
        %3518 = vmatpush1.bf16.msra.mxu0 0
        %3519 = vmatprep.subr.bf16.mxu0 0
        %3520 = vmatpush1.bf16.msra.mxu0 0
        %3521 = vmatprep.mubr.bf16.mxu0 0
        %3522 = vmatmul.mubr.bf16.gmra.mrb[0].mxu0 %v3447
        %v3523 = vpop.f32.mrb[0].mxu0
        %v3524 = vadd.f32 0.0, %v3523
        %v3525 = vpop.f32.mrb[0].mxu0
        %v3526 = vadd.f32 0.0, %v3525
        %v3527 = vpop.f32.mrb[0].mxu0
        %v3528 = vpop.f32.mrb[0].mxu0
        %3529 = vdwg.mxu0
        %3530 = vmatprep.subr.bf16.mxu0 0
        %3531 = vmatpush1.bf16.msra.mxu0 %v908
        %3532 = vmatprep.subr.bf16.mxu0 0
        %3533 = vmatpush1.bf16.msra.mxu0 %v913
        %3534 = vmatprep.subr.bf16.mxu0 0
        %3535 = vmatpush1.bf16.msra.mxu0 %v918
        %3536 = vmatprep.subr.bf16.mxu0 0
        %3537 = vmatpush1.bf16.msra.mxu0 %v923
        %3538 = vmatprep.subr.bf16.mxu0 0
        %3539 = vmatpush1.bf16.msra.mxu0 %v928
        %3540 = vmatprep.subr.bf16.mxu0 0
        %3541 = vmatpush1.bf16.msra.mxu0 %v933
        %3542 = vmatprep.subr.bf16.mxu0 0
        %3543 = vmatpush1.bf16.msra.mxu0 %v938
        %3544 = vmatprep.subr.bf16.mxu0 0
        %3545 = vmatpush1.bf16.msra.mxu0 %v943
        %3546 = vmatprep.subr.bf16.mxu0 0
        %3547 = vmatpush1.bf16.msra.mxu0 0
        %3548 = vmatprep.subr.bf16.mxu0 0
        %3549 = vmatpush1.bf16.msra.mxu0 0
        %3550 = vmatprep.subr.bf16.mxu0 0
        %3551 = vmatpush1.bf16.msra.mxu0 0
        %3552 = vmatprep.subr.bf16.mxu0 0
        %3553 = vmatpush1.bf16.msra.mxu0 0
        %3554 = vmatprep.subr.bf16.mxu0 0
        %3555 = vmatpush1.bf16.msra.mxu0 0
        %3556 = vmatprep.subr.bf16.mxu0 0
        %3557 = vmatpush1.bf16.msra.mxu0 0
        %3558 = vmatprep.subr.bf16.mxu0 0
        %3559 = vmatpush1.bf16.msra.mxu0 0
        %3560 = vmatprep.subr.bf16.mxu0 0
        %3561 = vmatpush1.bf16.msra.mxu0 0
        %3562 = vmatprep.mubr.bf16.mxu0 0
        %3563 = vmatmul.mubr.bf16.gmra.mrb[0].mxu0 %v3447
        %v3564 = vpop.f32.mrb[0].mxu0
        %v3565 = vadd.f32 0.0, %v3564
        %v3566 = vpop.f32.mrb[0].mxu0
        %v3567 = vpop.f32.mrb[0].mxu0
        %v3568 = vpop.f32.mrb[0].mxu0
        %3569 = vdwg.mxu0
        %3570 = vmatprep.subr.bf16.mxu0 %v1204
        %3571 = vmatpush1.bf16.msra.mxu0 %v1203
        %3572 = vmatprep.subr.bf16.mxu0 %v1208
        %3573 = vmatpush1.bf16.msra.mxu0 %v1207
        %3574 = vmatprep.subr.bf16.mxu0 %v1212
        %3575 = vmatpush1.bf16.msra.mxu0 %v1211
        %3576 = vmatprep.subr.bf16.mxu0 %v1216
        %3577 = vmatpush1.bf16.msra.mxu0 %v1215
        %3578 = vmatprep.subr.bf16.mxu0 %v1220
        %3579 = vmatpush1.bf16.msra.mxu0 %v1219
        %3580 = vmatprep.subr.bf16.mxu0 %v1224
        %3581 = vmatpush1.bf16.msra.mxu0 %v1223
        %3582 = vmatprep.subr.bf16.mxu0 %v1228
        %3583 = vmatpush1.bf16.msra.mxu0 %v1227
        %3584 = vmatprep.subr.bf16.mxu0 %v1232
        %3585 = vmatpush1.bf16.msra.mxu0 %v1231
        %3586 = vmatprep.subr.bf16.mxu0 0
        %3587 = vmatpush1.bf16.msra.mxu0 0
        %3588 = vmatprep.subr.bf16.mxu0 0
        %3589 = vmatpush1.bf16.msra.mxu0 0
        %3590 = vmatprep.subr.bf16.mxu0 0
        %3591 = vmatpush1.bf16.msra.mxu0 0
        %3592 = vmatprep.subr.bf16.mxu0 0
        %3593 = vmatpush1.bf16.msra.mxu0 0
        %3594 = vmatprep.subr.bf16.mxu0 0
        %3595 = vmatpush1.bf16.msra.mxu0 0
        %3596 = vmatprep.subr.bf16.mxu0 0
        %3597 = vmatpush1.bf16.msra.mxu0 0
        %3598 = vmatprep.subr.bf16.mxu0 0
        %3599 = vmatpush1.bf16.msra.mxu0 0
        %3600 = vmatprep.subr.bf16.mxu0 0
        %3601 = vmatpush1.bf16.msra.mxu0 0
        %3602 = vmatprep.mubr.bf16.mxu0 0
        %3603 = vmatmul.mubr.bf16.gmra.mrb[0].mxu0 %v2993
        %v3604 = vpop.f32.mrb[0].mxu0
        %v3605 = vadd.f32 0.0, %v3604
        %v3606 = vpop.f32.mrb[0].mxu0
        %v3607 = vadd.f32 0.0, %v3606
        %v3608 = vpop.f32.mrb[0].mxu0
        %v3609 = vpop.f32.mrb[0].mxu0
        %3610 = vdwg.mxu0
        %3611 = vmatprep.subr.bf16.mxu0 %v1206
        %3612 = vmatpush1.bf16.msra.mxu0 %v1205
        %3613 = vmatprep.subr.bf16.mxu0 %v1210
        %3614 = vmatpush1.bf16.msra.mxu0 %v1209
        %3615 = vmatprep.subr.bf16.mxu0 %v1214
        %3616 = vmatpush1.bf16.msra.mxu0 %v1213
        %3617 = vmatprep.subr.bf16.mxu0 %v1218
        %3618 = vmatpush1.bf16.msra.mxu0 %v1217
        %3619 = vmatprep.subr.bf16.mxu0 %v1222
        %3620 = vmatpush1.bf16.msra.mxu0 %v1221
        %3621 = vmatprep.subr.bf16.mxu0 %v1226
        %3622 = vmatpush1.bf16.msra.mxu0 %v1225
        %3623 = vmatprep.subr.bf16.mxu0 %v1230
        %3624 = vmatpush1.bf16.msra.mxu0 %v1229
        %3625 = vmatprep.subr.bf16.mxu0 %v1234
        %3626 = vmatpush1.bf16.msra.mxu0 %v1233
        %3627 = vmatprep.subr.bf16.mxu0 0
        %3628 = vmatpush1.bf16.msra.mxu0 0
        %3629 = vmatprep.subr.bf16.mxu0 0
        %3630 = vmatpush1.bf16.msra.mxu0 0
        %3631 = vmatprep.subr.bf16.mxu0 0
        %3632 = vmatpush1.bf16.msra.mxu0 0
        %3633 = vmatprep.subr.bf16.mxu0 0
        %3634 = vmatpush1.bf16.msra.mxu0 0
        %3635 = vmatprep.subr.bf16.mxu0 0
        %3636 = vmatpush1.bf16.msra.mxu0 0
        %3637 = vmatprep.subr.bf16.mxu0 0
        %3638 = vmatpush1.bf16.msra.mxu0 0
        %3639 = vmatprep.subr.bf16.mxu0 0
        %3640 = vmatpush1.bf16.msra.mxu0 0
        %3641 = vmatprep.subr.bf16.mxu0 0
        %3642 = vmatpush1.bf16.msra.mxu0 0
        %3643 = vmatprep.mubr.bf16.mxu0 0
        %3644 = vmatmul.mubr.bf16.gmra.mrb[0].mxu0 %v2993
        %v3645 = vpop.f32.mrb[0].mxu0
        %v3646 = vadd.f32 0.0, %v3645
        %v3647 = vpop.f32.mrb[0].mxu0
        %v3648 = vadd.f32 0.0, %v3647
        %v3649 = vpop.f32.mrb[0].mxu0
        %v3650 = vpop.f32.mrb[0].mxu0
        %3651 = vdwg.mxu0
        %v3654 = vunpack.c.l.s4 1966171168
        %v3655 = vunpack.c.0.s8 %v3654
        %v3656 = vlaneseq
        %v3657 = vshrl.u32 %v3656, 7
        %v3658 = vsub.s32 %v3655, %v3657
        %v3659 = vrot.slane %v3483, %v3658
        %v3660 = vcombine.high %v3659, %v3659
        %v3662 = vunpack.c.l.s4 1966171168
        %v3663 = vunpack.c.0.s8 %v3662
        %v3664 = vlaneseq
        %v3665 = vshrl.u32 %v3664, 7
        %v3666 = vsub.s32 %v3663, %v3665
        %v3667 = vrot.slane %v3659, %v3666
        %v3669 = vunpack.c.l.s4 1966171168
        %v3670 = vunpack.c.0.s8 %v3669
        %v3671 = vlaneseq
        %v3672 = vshrl.u32 %v3671, 7
        %v3673 = vsub.s32 %v3670, %v3672
        %v3674 = vrot.slane %v3660, %v3673
        %v3675 = vlaneseq
        %v3676 = vshrl.u32 %v3675, 7
        %v3677 = vsub.s32 0, %v3676
        %v3678 = vrot.slane %v3667, %v3677
        %v3679 = vlaneseq
        %v3680 = vshrl.u32 %v3679, 7
        %v3681 = vsub.s32 0, %v3680
        %v3682 = vrot.slane %v3674, %v3681
        %v3685 = vadd.f32 %v555, %v3678
        %v3686 = vadd.f32 %v556, %v3678
        %v3687 = vadd.f32 %v557, %v3678
        %v3688 = vadd.f32 %v558, %v3678
        %v3689 = vadd.f32 %v559, %v3678
        %v3690 = vadd.f32 %v560, %v3678
        %v3691 = vadd.f32 %v561, %v3678
        %v3692 = vadd.f32 %v562, %v3678
        %v3693 = vadd.f32 %v563, %v3678
        %v3694 = vadd.f32 %v564, %v3678
        %v3695 = vadd.f32 %v565, %v3678
        %v3696 = vadd.f32 %v566, %v3678
        %v3697 = vadd.f32 %v567, %v3678
        %v3698 = vadd.f32 %v568, %v3678
        %v3699 = vadd.f32 %v569, %v3678
        %v3700 = vadd.f32 %v570, %v3678
        %v3701 = vadd.f32 %v571, %v3682
        %v3702 = vadd.f32 %v572, %v3682
        %v3703 = vadd.f32 %v573, %v3682
        %v3704 = vadd.f32 %v574, %v3682
        %v3705 = vadd.f32 %v575, %v3682
        %v3706 = vadd.f32 %v576, %v3682
        %v3707 = vadd.f32 %v577, %v3682
        %v3708 = vadd.f32 %v578, %v3682
        %v3709 = vadd.f32 %v579, %v3682
        %v3710 = vadd.f32 %v580, %v3682
        %v3711 = vadd.f32 %v581, %v3682
        %v3712 = vadd.f32 %v582, %v3682
        %v3713 = vadd.f32 %v583, %v3682
        %v3714 = vadd.f32 %v584, %v3682
        %v3715 = vadd.f32 %v585, %v3682
        %v3716 = vadd.f32 %v586, %v3682
        %vm3717 = vcmp.gt.f32.partialorder %v3685, 0.0
        %vm3718 = vcmp.gt.f32.partialorder %v3686, 0.0
        %vm3719 = vcmp.gt.f32.partialorder %v3687, 0.0
        %vm3720 = vcmp.gt.f32.partialorder %v3688, 0.0
        %vm3721 = vcmp.gt.f32.partialorder %v3689, 0.0
        %vm3722 = vcmp.gt.f32.partialorder %v3690, 0.0
        %vm3723 = vcmp.gt.f32.partialorder %v3691, 0.0
        %vm3724 = vcmp.gt.f32.partialorder %v3692, 0.0
        %vm3725 = vcmp.gt.f32.partialorder %v3693, 0.0
        %vm3726 = vcmp.gt.f32.partialorder %v3694, 0.0
        %vm3727 = vcmp.gt.f32.partialorder %v3695, 0.0
        %vm3728 = vcmp.gt.f32.partialorder %v3696, 0.0
        %vm3729 = vcmp.gt.f32.partialorder %v3697, 0.0
        %vm3730 = vcmp.gt.f32.partialorder %v3698, 0.0
        %vm3731 = vcmp.gt.f32.partialorder %v3699, 0.0
        %vm3732 = vcmp.gt.f32.partialorder %v3700, 0.0
        %vm3733 = vcmp.gt.f32.partialorder %v3701, 0.0
        %vm3734 = vcmp.gt.f32.partialorder %v3702, 0.0
        %vm3735 = vcmp.gt.f32.partialorder %v3703, 0.0
        %vm3736 = vcmp.gt.f32.partialorder %v3704, 0.0
        %vm3737 = vcmp.gt.f32.partialorder %v3705, 0.0
        %vm3738 = vcmp.gt.f32.partialorder %v3706, 0.0
        %vm3739 = vcmp.gt.f32.partialorder %v3707, 0.0
        %vm3740 = vcmp.gt.f32.partialorder %v3708, 0.0
        %vm3741 = vcmp.gt.f32.partialorder %v3709, 0.0
        %vm3742 = vcmp.gt.f32.partialorder %v3710, 0.0
        %vm3743 = vcmp.gt.f32.partialorder %v3711, 0.0
        %vm3744 = vcmp.gt.f32.partialorder %v3712, 0.0
        %vm3745 = vcmp.gt.f32.partialorder %v3713, 0.0
        %vm3746 = vcmp.gt.f32.partialorder %v3714, 0.0
        %vm3747 = vcmp.gt.f32.partialorder %v3715, 0.0
        %vm3748 = vcmp.gt.f32.partialorder %v3716, 0.0
        %v3749 = vmul.f32 %v3685, 0.2
        %v3750 = vmul.f32 %v3686, 0.2
        %v3751 = vmul.f32 %v3687, 0.2
        %v3752 = vmul.f32 %v3688, 0.2
        %v3753 = vmul.f32 %v3689, 0.2
        %v3754 = vmul.f32 %v3690, 0.2
        %v3755 = vmul.f32 %v3691, 0.2
        %v3756 = vmul.f32 %v3692, 0.2
        %v3757 = vmul.f32 %v3693, 0.2
        %v3758 = vmul.f32 %v3694, 0.2
        %v3759 = vmul.f32 %v3695, 0.2
        %v3760 = vmul.f32 %v3696, 0.2
        %v3761 = vmul.f32 %v3697, 0.2
        %v3762 = vmul.f32 %v3698, 0.2
        %v3763 = vmul.f32 %v3699, 0.2
        %v3764 = vmul.f32 %v3700, 0.2
        %v3765 = vmul.f32 %v3701, 0.2
        %v3766 = vmul.f32 %v3702, 0.2
        %v3767 = vmul.f32 %v3703, 0.2
        %v3768 = vmul.f32 %v3704, 0.2
        %v3769 = vmul.f32 %v3705, 0.2
        %v3770 = vmul.f32 %v3706, 0.2
        %v3771 = vmul.f32 %v3707, 0.2
        %v3772 = vmul.f32 %v3708, 0.2
        %v3773 = vmul.f32 %v3709, 0.2
        %v3774 = vmul.f32 %v3710, 0.2
        %v3775 = vmul.f32 %v3711, 0.2
        %v3776 = vmul.f32 %v3712, 0.2
        %v3777 = vmul.f32 %v3713, 0.2
        %v3778 = vmul.f32 %v3714, 0.2
        %v3779 = vmul.f32 %v3715, 0.2
        %v3780 = vmul.f32 %v3716, 0.2
        %v3781 = vsel %vm3717, %v3685, %v3749
        %v3782 = vsel %vm3718, %v3686, %v3750
        %v3783 = vsel %vm3719, %v3687, %v3751
        %v3784 = vsel %vm3720, %v3688, %v3752
        %v3785 = vsel %vm3721, %v3689, %v3753
        %v3786 = vsel %vm3722, %v3690, %v3754
        %v3787 = vsel %vm3723, %v3691, %v3755
        %v3788 = vsel %vm3724, %v3692, %v3756
        %v3789 = vsel %vm3725, %v3693, %v3757
        %v3790 = vsel %vm3726, %v3694, %v3758
        %v3791 = vsel %vm3727, %v3695, %v3759
        %v3792 = vsel %vm3728, %v3696, %v3760
        %v3793 = vsel %vm3729, %v3697, %v3761
        %v3794 = vsel %vm3730, %v3698, %v3762
        %v3795 = vsel %vm3731, %v3699, %v3763
        %v3796 = vsel %vm3732, %v3700, %v3764
        %v3797 = vsel %vm3733, %v3701, %v3765
        %v3798 = vsel %vm3734, %v3702, %v3766
        %v3799 = vsel %vm3735, %v3703, %v3767
        %v3800 = vsel %vm3736, %v3704, %v3768
        %v3801 = vsel %vm3737, %v3705, %v3769
        %v3802 = vsel %vm3738, %v3706, %v3770
        %v3803 = vsel %vm3739, %v3707, %v3771
        %v3804 = vsel %vm3740, %v3708, %v3772
        %v3805 = vsel %vm3741, %v3709, %v3773
        %v3806 = vsel %vm3742, %v3710, %v3774
        %v3807 = vsel %vm3743, %v3711, %v3775
        %v3808 = vsel %vm3744, %v3712, %v3776
        %v3809 = vsel %vm3745, %v3713, %v3777
        %v3810 = vsel %vm3746, %v3714, %v3778
        %v3811 = vsel %vm3747, %v3715, %v3779
        %v3812 = vsel %vm3748, %v3716, %v3780
        %v3813 = vmul.f32 %v3781, %v1514
        %v3814 = vmul.f32 %v3782, %v1514
        %v3815 = vmul.f32 %v3783, %v1514
        %v3816 = vmul.f32 %v3784, %v1514
        %v3817 = vmul.f32 %v3785, %v1514
        %v3818 = vmul.f32 %v3786, %v1514
        %v3819 = vmul.f32 %v3787, %v1514
        %v3820 = vmul.f32 %v3788, %v1514
        %v3821 = vmul.f32 %v3789, %v1514
        %v3822 = vmul.f32 %v3790, %v1514
        %v3823 = vmul.f32 %v3791, %v1514
        %v3824 = vmul.f32 %v3792, %v1514
        %v3825 = vmul.f32 %v3793, %v1514
        %v3826 = vmul.f32 %v3794, %v1514
        %v3827 = vmul.f32 %v3795, %v1514
        %v3828 = vmul.f32 %v3796, %v1514
        %v3829 = vmul.f32 %v3797, %v1514
        %v3830 = vmul.f32 %v3798, %v1514
        %v3831 = vmul.f32 %v3799, %v1514
        %v3832 = vmul.f32 %v3800, %v1514
        %v3833 = vmul.f32 %v3801, %v1514
        %v3834 = vmul.f32 %v3802, %v1514
        %v3835 = vmul.f32 %v3803, %v1514
        %v3836 = vmul.f32 %v3804, %v1514
        %v3837 = vmul.f32 %v3805, %v1514
        %v3838 = vmul.f32 %v3806, %v1514
        %v3839 = vmul.f32 %v3807, %v1514
        %v3840 = vmul.f32 %v3808, %v1514
        %v3841 = vmul.f32 %v3809, %v1514
        %v3842 = vmul.f32 %v3810, %v1514
        %v3843 = vmul.f32 %v3811, %v1514
        %v3844 = vmul.f32 %v3812, %v1514
        %3845 = vadd.xlane.f32.xlu0 %v3813
        %v3846 = vpop.xlane.xlu0 %3845
        %3847 = vadd.xlane.f32.xlu0 %v3814
        %v3848 = vpop.xlane.xlu0 %3847
        %3849 = vadd.xlane.f32.xlu0 %v3815
        %v3850 = vpop.xlane.xlu0 %3849
        %3851 = vadd.xlane.f32.xlu0 %v3816
        %v3852 = vpop.xlane.xlu0 %3851
        %3853 = vadd.xlane.f32.xlu0 %v3817
        %v3854 = vpop.xlane.xlu0 %3853
        %3855 = vadd.xlane.f32.xlu0 %v3818
        %v3856 = vpop.xlane.xlu0 %3855
        %3857 = vadd.xlane.f32.xlu0 %v3819
        %v3858 = vpop.xlane.xlu0 %3857
        %3859 = vadd.xlane.f32.xlu0 %v3820
        %v3860 = vpop.xlane.xlu0 %3859
        %3861 = vadd.xlane.f32.xlu0 %v3821
        %v3862 = vpop.xlane.xlu0 %3861
        %3863 = vadd.xlane.f32.xlu0 %v3822
        %v3864 = vpop.xlane.xlu0 %3863
        %3865 = vadd.xlane.f32.xlu0 %v3823
        %v3866 = vpop.xlane.xlu0 %3865
        %3867 = vadd.xlane.f32.xlu0 %v3824
        %v3868 = vpop.xlane.xlu0 %3867
        %3869 = vadd.xlane.f32.xlu0 %v3825
        %v3870 = vpop.xlane.xlu0 %3869
        %3871 = vadd.xlane.f32.xlu0 %v3826
        %v3872 = vpop.xlane.xlu0 %3871
        %3873 = vadd.xlane.f32.xlu0 %v3827
        %v3874 = vpop.xlane.xlu0 %3873
        %3875 = vadd.xlane.f32.xlu0 %v3828
        %v3876 = vpop.xlane.xlu0 %3875
        %3877 = vadd.xlane.f32.xlu0 %v3829
        %v3878 = vpop.xlane.xlu0 %3877
        %3879 = vadd.xlane.f32.xlu0 %v3830
        %v3880 = vpop.xlane.xlu0 %3879
        %3881 = vadd.xlane.f32.xlu0 %v3831
        %v3882 = vpop.xlane.xlu0 %3881
        %3883 = vadd.xlane.f32.xlu0 %v3832
        %v3884 = vpop.xlane.xlu0 %3883
        %3885 = vadd.xlane.f32.xlu0 %v3833
        %v3886 = vpop.xlane.xlu0 %3885
        %3887 = vadd.xlane.f32.xlu0 %v3834
        %v3888 = vpop.xlane.xlu0 %3887
        %3889 = vadd.xlane.f32.xlu0 %v3835
        %v3890 = vpop.xlane.xlu0 %3889
        %3891 = vadd.xlane.f32.xlu0 %v3836
        %v3892 = vpop.xlane.xlu0 %3891
        %3893 = vadd.xlane.f32.xlu0 %v3837
        %v3894 = vpop.xlane.xlu0 %3893
        %3895 = vadd.xlane.f32.xlu0 %v3838
        %v3896 = vpop.xlane.xlu0 %3895
        %3897 = vadd.xlane.f32.xlu0 %v3839
        %v3898 = vpop.xlane.xlu0 %3897
        %3899 = vadd.xlane.f32.xlu0 %v3840
        %v3900 = vpop.xlane.xlu0 %3899
        %3901 = vadd.xlane.f32.xlu0 %v3841
        %v3902 = vpop.xlane.xlu0 %3901
        %3903 = vadd.xlane.f32.xlu0 %v3842
        %v3904 = vpop.xlane.xlu0 %3903
        %3905 = vadd.xlane.f32.xlu0 %v3843
        %v3906 = vpop.xlane.xlu0 %3905
        %3907 = vadd.xlane.f32.xlu0 %v3844
        %v3908 = vpop.xlane.xlu0 %3907
        %v3909 = vadd.f32 %v3846, %v1619
        %v3910 = vadd.f32 %v3848, %v1623
        %v3911 = vadd.f32 %v3850, %v1627
        %v3912 = vadd.f32 %v3852, %v1631
        %v3913 = vadd.f32 %v3854, %v1635
        %v3914 = vadd.f32 %v3856, %v1639
        %v3915 = vadd.f32 %v3858, %v1643
        %v3916 = vadd.f32 %v3860, %v1647
        %v3917 = vadd.f32 %v3862, %v1651
        %v3918 = vadd.f32 %v3864, %v1655
        %v3919 = vadd.f32 %v3866, %v1659
        %v3920 = vadd.f32 %v3868, %v1663
        %v3921 = vadd.f32 %v3870, %v1667
        %v3922 = vadd.f32 %v3872, %v1671
        %v3923 = vadd.f32 %v3874, %v1675
        %v3924 = vadd.f32 %v3876, %v1679
        %v3925 = vadd.f32 %v3878, %v1619
        %v3926 = vadd.f32 %v3880, %v1623
        %v3927 = vadd.f32 %v3882, %v1627
        %v3928 = vadd.f32 %v3884, %v1631
        %v3929 = vadd.f32 %v3886, %v1635
        %v3930 = vadd.f32 %v3888, %v1639
        %v3931 = vadd.f32 %v3890, %v1643
        %v3932 = vadd.f32 %v3892, %v1647
        %v3933 = vadd.f32 %v3894, %v1651
        %v3934 = vadd.f32 %v3896, %v1655
        %v3935 = vadd.f32 %v3898, %v1659
        %v3936 = vadd.f32 %v3900, %v1663
        %v3937 = vadd.f32 %v3902, %v1667
        %v3938 = vadd.f32 %v3904, %v1671
        %v3939 = vadd.f32 %v3906, %v1675
        %v3940 = vadd.f32 %v3908, %v1679
        %3973 = vset.pattern.permute.xlu0 0
        %3974 = vperm.xlu0 %3973, %v3909
        %v3975 = vpop.permute.xlu0 %3974
        %3976 = vset.pattern.permute.xlu0 0
        %3977 = vperm.xlu0 %3976, %v3910
        %v3978 = vpop.permute.xlu0 %3977
        %3979 = vset.pattern.permute.xlu0 0
        %3980 = vperm.xlu0 %3979, %v3911
        %v3981 = vpop.permute.xlu0 %3980
        %3982 = vset.pattern.permute.xlu0 0
        %3983 = vperm.xlu0 %3982, %v3912
        %v3984 = vpop.permute.xlu0 %3983
        %3985 = vset.pattern.permute.xlu0 0
        %3986 = vperm.xlu0 %3985, %v3913
        %v3987 = vpop.permute.xlu0 %3986
        %3988 = vset.pattern.permute.xlu0 0
        %3989 = vperm.xlu0 %3988, %v3914
        %v3990 = vpop.permute.xlu0 %3989
        %3991 = vset.pattern.permute.xlu0 0
        %3992 = vperm.xlu0 %3991, %v3915
        %v3993 = vpop.permute.xlu0 %3992
        %3994 = vset.pattern.permute.xlu0 0
        %3995 = vperm.xlu0 %3994, %v3916
        %v3996 = vpop.permute.xlu0 %3995
        %3997 = vset.pattern.permute.xlu0 0
        %3998 = vperm.xlu0 %3997, %v3917
        %v3999 = vpop.permute.xlu0 %3998
        %4000 = vset.pattern.permute.xlu0 0
        %4001 = vperm.xlu0 %4000, %v3918
        %v4002 = vpop.permute.xlu0 %4001
        %4003 = vset.pattern.permute.xlu0 0
        %4004 = vperm.xlu0 %4003, %v3919
        %v4005 = vpop.permute.xlu0 %4004
        %4006 = vset.pattern.permute.xlu0 0
        %4007 = vperm.xlu0 %4006, %v3920
        %v4008 = vpop.permute.xlu0 %4007
        %4009 = vset.pattern.permute.xlu0 0
        %4010 = vperm.xlu0 %4009, %v3921
        %v4011 = vpop.permute.xlu0 %4010
        %4012 = vset.pattern.permute.xlu0 0
        %4013 = vperm.xlu0 %4012, %v3922
        %v4014 = vpop.permute.xlu0 %4013
        %4015 = vset.pattern.permute.xlu0 0
        %4016 = vperm.xlu0 %4015, %v3923
        %v4017 = vpop.permute.xlu0 %4016
        %4018 = vset.pattern.permute.xlu0 0
        %4019 = vperm.xlu0 %4018, %v3924
        %v4020 = vpop.permute.xlu0 %4019
        %4021 = vset.pattern.permute.xlu0 0
        %4022 = vperm.xlu0 %4021, %v3925
        %v4023 = vpop.permute.xlu0 %4022
        %4024 = vset.pattern.permute.xlu0 0
        %4025 = vperm.xlu0 %4024, %v3926
        %v4026 = vpop.permute.xlu0 %4025
        %4027 = vset.pattern.permute.xlu0 0
        %4028 = vperm.xlu0 %4027, %v3927
        %v4029 = vpop.permute.xlu0 %4028
        %4030 = vset.pattern.permute.xlu0 0
        %4031 = vperm.xlu0 %4030, %v3928
        %v4032 = vpop.permute.xlu0 %4031
        %4033 = vset.pattern.permute.xlu0 0
        %4034 = vperm.xlu0 %4033, %v3929
        %v4035 = vpop.permute.xlu0 %4034
        %4036 = vset.pattern.permute.xlu0 0
        %4037 = vperm.xlu0 %4036, %v3930
        %v4038 = vpop.permute.xlu0 %4037
        %4039 = vset.pattern.permute.xlu0 0
        %4040 = vperm.xlu0 %4039, %v3931
        %v4041 = vpop.permute.xlu0 %4040
        %4042 = vset.pattern.permute.xlu0 0
        %4043 = vperm.xlu0 %4042, %v3932
        %v4044 = vpop.permute.xlu0 %4043
        %4045 = vset.pattern.permute.xlu0 0
        %4046 = vperm.xlu0 %4045, %v3933
        %v4047 = vpop.permute.xlu0 %4046
        %4048 = vset.pattern.permute.xlu0 0
        %4049 = vperm.xlu0 %4048, %v3934
        %v4050 = vpop.permute.xlu0 %4049
        %4051 = vset.pattern.permute.xlu0 0
        %4052 = vperm.xlu0 %4051, %v3935
        %v4053 = vpop.permute.xlu0 %4052
        %4054 = vset.pattern.permute.xlu0 0
        %4055 = vperm.xlu0 %4054, %v3936
        %v4056 = vpop.permute.xlu0 %4055
        %4057 = vset.pattern.permute.xlu0 0
        %4058 = vperm.xlu0 %4057, %v3937
        %v4059 = vpop.permute.xlu0 %4058
        %4060 = vset.pattern.permute.xlu0 0
        %4061 = vperm.xlu0 %4060, %v3938
        %v4062 = vpop.permute.xlu0 %4061
        %4063 = vset.pattern.permute.xlu0 0
        %4064 = vperm.xlu0 %4063, %v3939
        %v4065 = vpop.permute.xlu0 %4064
        %4066 = vset.pattern.permute.xlu0 0
        %4067 = vperm.xlu0 %4066, %v3940
        %v4068 = vpop.permute.xlu0 %4067
        %v4069 = vlaneseq
        %v4070 = vshrl.u32 %v4069, 7
        %v4071 = vsub.s32 %v1857, %v4070
        %v4072 = vrot.slane %v3975, %v4071
        %v4073 = vlaneseq
        %v4074 = vshrl.u32 %v4073, 7
        %v4075 = vsub.s32 %v1862, %v4074
        %v4076 = vrot.slane %v3978, %v4075
        %v4077 = vsel %vm1867, %v4076, %v4072
        %v4078 = vlaneseq
        %v4079 = vshrl.u32 %v4078, 7
        %v4080 = vsub.s32 %v1869, %v4079
        %v4081 = vrot.slane %v3981, %v4080
        %v4082 = vsel %vm1874, %v4081, %v4077
        %v4083 = vlaneseq
        %v4084 = vshrl.u32 %v4083, 7
        %v4085 = vsub.s32 %v1876, %v4084
        %v4086 = vrot.slane %v3984, %v4085
        %v4087 = vsel %vm1881, %v4086, %v4082
        %v4088 = vlaneseq
        %v4089 = vshrl.u32 %v4088, 7
        %v4090 = vsub.s32 %v1883, %v4089
        %v4091 = vrot.slane %v3987, %v4090
        %v4092 = vsel %vm1888, %v4091, %v4087
        %v4093 = vlaneseq
        %v4094 = vshrl.u32 %v4093, 7
        %v4095 = vsub.s32 %v1890, %v4094
        %v4096 = vrot.slane %v3990, %v4095
        %v4097 = vsel %vm1895, %v4096, %v4092
        %v4098 = vlaneseq
        %v4099 = vshrl.u32 %v4098, 7
        %v4100 = vsub.s32 %v1897, %v4099
        %v4101 = vrot.slane %v3993, %v4100
        %v4102 = vsel %vm1902, %v4101, %v4097
        %v4103 = vlaneseq
        %v4104 = vshrl.u32 %v4103, 7
        %v4105 = vsub.s32 %v1904, %v4104
        %v4106 = vrot.slane %v3996, %v4105
        %v4107 = vsel %vm1909, %v4106, %v4102
        %v4108 = vlaneseq
        %v4109 = vshrl.u32 %v4108, 7
        %v4110 = vsub.s32 %v1911, %v4109
        %v4111 = vrot.slane %v3999, %v4110
        %v4112 = vsel %vm1916, %v4111, %v4107
        %v4113 = vlaneseq
        %v4114 = vshrl.u32 %v4113, 7
        %v4115 = vsub.s32 %v1918, %v4114
        %v4116 = vrot.slane %v4002, %v4115
        %v4117 = vsel %vm1923, %v4116, %v4112
        %v4118 = vlaneseq
        %v4119 = vshrl.u32 %v4118, 7
        %v4120 = vsub.s32 %v1925, %v4119
        %v4121 = vrot.slane %v4005, %v4120
        %v4122 = vsel %vm1930, %v4121, %v4117
        %v4123 = vlaneseq
        %v4124 = vshrl.u32 %v4123, 7
        %v4125 = vsub.s32 %v1932, %v4124
        %v4126 = vrot.slane %v4008, %v4125
        %v4127 = vsel %vm1937, %v4126, %v4122
        %v4128 = vlaneseq
        %v4129 = vshrl.u32 %v4128, 7
        %v4130 = vsub.s32 %v1939, %v4129
        %v4131 = vrot.slane %v4011, %v4130
        %v4132 = vsel %vm1944, %v4131, %v4127
        %v4133 = vlaneseq
        %v4134 = vshrl.u32 %v4133, 7
        %v4135 = vsub.s32 %v1946, %v4134
        %v4136 = vrot.slane %v4014, %v4135
        %v4137 = vsel %vm1951, %v4136, %v4132
        %v4138 = vlaneseq
        %v4139 = vshrl.u32 %v4138, 7
        %v4140 = vsub.s32 %v1953, %v4139
        %v4141 = vrot.slane %v4017, %v4140
        %v4142 = vsel %vm1958, %v4141, %v4137
        %v4143 = vlaneseq
        %v4144 = vshrl.u32 %v4143, 7
        %v4145 = vsub.s32 %v1960, %v4144
        %v4146 = vrot.slane %v4020, %v4145
        %v4147 = vsel %vm1965, %v4146, %v4142
        %v4148 = vlaneseq
        %v4149 = vshrl.u32 %v4148, 7
        %v4150 = vsub.s32 %v1857, %v4149
        %v4151 = vrot.slane %v4023, %v4150
        %v4152 = vlaneseq
        %v4153 = vshrl.u32 %v4152, 7
        %v4154 = vsub.s32 %v1862, %v4153
        %v4155 = vrot.slane %v4026, %v4154
        %v4156 = vsel %vm1867, %v4155, %v4151
        %v4157 = vlaneseq
        %v4158 = vshrl.u32 %v4157, 7
        %v4159 = vsub.s32 %v1869, %v4158
        %v4160 = vrot.slane %v4029, %v4159
        %v4161 = vsel %vm1874, %v4160, %v4156
        %v4162 = vlaneseq
        %v4163 = vshrl.u32 %v4162, 7
        %v4164 = vsub.s32 %v1876, %v4163
        %v4165 = vrot.slane %v4032, %v4164
        %v4166 = vsel %vm1881, %v4165, %v4161
        %v4167 = vlaneseq
        %v4168 = vshrl.u32 %v4167, 7
        %v4169 = vsub.s32 %v1883, %v4168
        %v4170 = vrot.slane %v4035, %v4169
        %v4171 = vsel %vm1888, %v4170, %v4166
        %v4172 = vlaneseq
        %v4173 = vshrl.u32 %v4172, 7
        %v4174 = vsub.s32 %v1890, %v4173
        %v4175 = vrot.slane %v4038, %v4174
        %v4176 = vsel %vm1895, %v4175, %v4171
        %v4177 = vlaneseq
        %v4178 = vshrl.u32 %v4177, 7
        %v4179 = vsub.s32 %v1897, %v4178
        %v4180 = vrot.slane %v4041, %v4179
        %v4181 = vsel %vm1902, %v4180, %v4176
        %v4182 = vlaneseq
        %v4183 = vshrl.u32 %v4182, 7
        %v4184 = vsub.s32 %v1904, %v4183
        %v4185 = vrot.slane %v4044, %v4184
        %v4186 = vsel %vm1909, %v4185, %v4181
        %v4187 = vlaneseq
        %v4188 = vshrl.u32 %v4187, 7
        %v4189 = vsub.s32 %v1911, %v4188
        %v4190 = vrot.slane %v4047, %v4189
        %v4191 = vsel %vm1916, %v4190, %v4186
        %v4192 = vlaneseq
        %v4193 = vshrl.u32 %v4192, 7
        %v4194 = vsub.s32 %v1918, %v4193
        %v4195 = vrot.slane %v4050, %v4194
        %v4196 = vsel %vm1923, %v4195, %v4191
        %v4197 = vlaneseq
        %v4198 = vshrl.u32 %v4197, 7
        %v4199 = vsub.s32 %v1925, %v4198
        %v4200 = vrot.slane %v4053, %v4199
        %v4201 = vsel %vm1930, %v4200, %v4196
        %v4202 = vlaneseq
        %v4203 = vshrl.u32 %v4202, 7
        %v4204 = vsub.s32 %v1932, %v4203
        %v4205 = vrot.slane %v4056, %v4204
        %v4206 = vsel %vm1937, %v4205, %v4201
        %v4207 = vlaneseq
        %v4208 = vshrl.u32 %v4207, 7
        %v4209 = vsub.s32 %v1939, %v4208
        %v4210 = vrot.slane %v4059, %v4209
        %v4211 = vsel %vm1944, %v4210, %v4206
        %v4212 = vlaneseq
        %v4213 = vshrl.u32 %v4212, 7
        %v4214 = vsub.s32 %v1946, %v4213
        %v4215 = vrot.slane %v4062, %v4214
        %v4216 = vsel %vm1951, %v4215, %v4211
        %v4217 = vlaneseq
        %v4218 = vshrl.u32 %v4217, 7
        %v4219 = vsub.s32 %v1953, %v4218
        %v4220 = vrot.slane %v4065, %v4219
        %v4221 = vsel %vm1958, %v4220, %v4216
        %v4222 = vlaneseq
        %v4223 = vshrl.u32 %v4222, 7
        %v4224 = vsub.s32 %v1960, %v4223
        %v4225 = vrot.slane %v4068, %v4224
        %v4226 = vsel %vm1965, %v4225, %v4221
        %v4227 = vsel %vm2046, %v4226, %v4147
        %v4229 = vsel %vm2049, %v4227, -inf
        %4230 = vmax.xlane.f32.xlu0 %v4229
        %v4231 = vpop.xlane.xlu0 %4230
        %v4233 = vlaneseq
        %v4234 = vshrl.u32 %v4233, 7
        %v4235 = vsub.s32 0, %v4234
        %v4236 = vrot.slane %v4231, %v4235
        %v4237 = vlaneseq
        %v4238 = vshrl.u32 %v4237, 7
        %v4239 = vsub.s32 1, %v4238
        %v4240 = vrot.slane %v4231, %v4239
        %v4243 = vsub.f32 %v3909, %v4236
        %v4244 = vsub.f32 %v3910, %v4236
        %v4245 = vsub.f32 %v3911, %v4236
        %v4246 = vsub.f32 %v3912, %v4236
        %v4247 = vsub.f32 %v3913, %v4236
        %v4248 = vsub.f32 %v3914, %v4236
        %v4249 = vsub.f32 %v3915, %v4236
        %v4250 = vsub.f32 %v3916, %v4236
        %v4251 = vsub.f32 %v3917, %v4236
        %v4252 = vsub.f32 %v3918, %v4236
        %v4253 = vsub.f32 %v3919, %v4236
        %v4254 = vsub.f32 %v3920, %v4236
        %v4255 = vsub.f32 %v3921, %v4236
        %v4256 = vsub.f32 %v3922, %v4236
        %v4257 = vsub.f32 %v3923, %v4236
        %v4258 = vsub.f32 %v3924, %v4236
        %v4259 = vsub.f32 %v3925, %v4240
        %v4260 = vsub.f32 %v3926, %v4240
        %v4261 = vsub.f32 %v3927, %v4240
        %v4262 = vsub.f32 %v3928, %v4240
        %v4263 = vsub.f32 %v3929, %v4240
        %v4264 = vsub.f32 %v3930, %v4240
        %v4265 = vsub.f32 %v3931, %v4240
        %v4266 = vsub.f32 %v3932, %v4240
        %v4267 = vsub.f32 %v3933, %v4240
        %v4268 = vsub.f32 %v3934, %v4240
        %v4269 = vsub.f32 %v3935, %v4240
        %v4270 = vsub.f32 %v3936, %v4240
        %v4271 = vsub.f32 %v3937, %v4240
        %v4272 = vsub.f32 %v3938, %v4240
        %v4273 = vsub.f32 %v3939, %v4240
        %v4274 = vsub.f32 %v3940, %v4240
        %v4275 = vmul.f32 %v4243, 1.442695
        %v4276 = vpow.pop %v4275
        %v4277 = vmul.f32 %v4244, 1.442695
        %v4278 = vpow.pop %v4277
        %v4279 = vmul.f32 %v4245, 1.442695
        %v4280 = vpow.pop %v4279
        %v4281 = vmul.f32 %v4246, 1.442695
        %v4282 = vpow.pop %v4281
        %v4283 = vmul.f32 %v4247, 1.442695
        %v4284 = vpow.pop %v4283
        %v4285 = vmul.f32 %v4248, 1.442695
        %v4286 = vpow.pop %v4285
        %v4287 = vmul.f32 %v4249, 1.442695
        %v4288 = vpow.pop %v4287
        %v4289 = vmul.f32 %v4250, 1.442695
        %v4290 = vpow.pop %v4289
        %v4291 = vmul.f32 %v4251, 1.442695
        %v4292 = vpow.pop %v4291
        %v4293 = vmul.f32 %v4252, 1.442695
        %v4294 = vpow.pop %v4293
        %v4295 = vmul.f32 %v4253, 1.442695
        %v4296 = vpow.pop %v4295
        %v4297 = vmul.f32 %v4254, 1.442695
        %v4298 = vpow.pop %v4297
        %v4299 = vmul.f32 %v4255, 1.442695
        %v4300 = vpow.pop %v4299
        %v4301 = vmul.f32 %v4256, 1.442695
        %v4302 = vpow.pop %v4301
        %v4303 = vmul.f32 %v4257, 1.442695
        %v4304 = vpow.pop %v4303
        %v4305 = vmul.f32 %v4258, 1.442695
        %v4306 = vpow.pop %v4305
        %v4307 = vmul.f32 %v4259, 1.442695
        %v4308 = vpow.pop %v4307
        %v4309 = vmul.f32 %v4260, 1.442695
        %v4310 = vpow.pop %v4309
        %v4311 = vmul.f32 %v4261, 1.442695
        %v4312 = vpow.pop %v4311
        %v4313 = vmul.f32 %v4262, 1.442695
        %v4314 = vpow.pop %v4313
        %v4315 = vmul.f32 %v4263, 1.442695
        %v4316 = vpow.pop %v4315
        %v4317 = vmul.f32 %v4264, 1.442695
        %v4318 = vpow.pop %v4317
        %v4319 = vmul.f32 %v4265, 1.442695
        %v4320 = vpow.pop %v4319
        %v4321 = vmul.f32 %v4266, 1.442695
        %v4322 = vpow.pop %v4321
        %v4323 = vmul.f32 %v4267, 1.442695
        %v4324 = vpow.pop %v4323
        %v4325 = vmul.f32 %v4268, 1.442695
        %v4326 = vpow.pop %v4325
        %v4327 = vmul.f32 %v4269, 1.442695
        %v4328 = vpow.pop %v4327
        %v4329 = vmul.f32 %v4270, 1.442695
        %v4330 = vpow.pop %v4329
        %v4331 = vmul.f32 %v4271, 1.442695
        %v4332 = vpow.pop %v4331
        %v4333 = vmul.f32 %v4272, 1.442695
        %v4334 = vpow.pop %v4333
        %v4335 = vmul.f32 %v4273, 1.442695
        %v4336 = vpow.pop %v4335
        %v4337 = vmul.f32 %v4274, 1.442695
        %v4338 = vpow.pop %v4337
        %4371 = vset.pattern.permute.xlu0 0
        %4372 = vperm.xlu0 %4371, %v4276
        %v4373 = vpop.permute.xlu0 %4372
        %4374 = vset.pattern.permute.xlu0 0
        %4375 = vperm.xlu0 %4374, %v4278
        %v4376 = vpop.permute.xlu0 %4375
        %4377 = vset.pattern.permute.xlu0 0
        %4378 = vperm.xlu0 %4377, %v4280
        %v4379 = vpop.permute.xlu0 %4378
        %4380 = vset.pattern.permute.xlu0 0
        %4381 = vperm.xlu0 %4380, %v4282
        %v4382 = vpop.permute.xlu0 %4381
        %4383 = vset.pattern.permute.xlu0 0
        %4384 = vperm.xlu0 %4383, %v4284
        %v4385 = vpop.permute.xlu0 %4384
        %4386 = vset.pattern.permute.xlu0 0
        %4387 = vperm.xlu0 %4386, %v4286
        %v4388 = vpop.permute.xlu0 %4387
        %4389 = vset.pattern.permute.xlu0 0
        %4390 = vperm.xlu0 %4389, %v4288
        %v4391 = vpop.permute.xlu0 %4390
        %4392 = vset.pattern.permute.xlu0 0
        %4393 = vperm.xlu0 %4392, %v4290
        %v4394 = vpop.permute.xlu0 %4393
        %4395 = vset.pattern.permute.xlu0 0
        %4396 = vperm.xlu0 %4395, %v4292
        %v4397 = vpop.permute.xlu0 %4396
        %4398 = vset.pattern.permute.xlu0 0
        %4399 = vperm.xlu0 %4398, %v4294
        %v4400 = vpop.permute.xlu0 %4399
        %4401 = vset.pattern.permute.xlu0 0
        %4402 = vperm.xlu0 %4401, %v4296
        %v4403 = vpop.permute.xlu0 %4402
        %4404 = vset.pattern.permute.xlu0 0
        %4405 = vperm.xlu0 %4404, %v4298
        %v4406 = vpop.permute.xlu0 %4405
        %4407 = vset.pattern.permute.xlu0 0
        %4408 = vperm.xlu0 %4407, %v4300
        %v4409 = vpop.permute.xlu0 %4408
        %4410 = vset.pattern.permute.xlu0 0
        %4411 = vperm.xlu0 %4410, %v4302
        %v4412 = vpop.permute.xlu0 %4411
        %4413 = vset.pattern.permute.xlu0 0
        %4414 = vperm.xlu0 %4413, %v4304
        %v4415 = vpop.permute.xlu0 %4414
        %4416 = vset.pattern.permute.xlu0 0
        %4417 = vperm.xlu0 %4416, %v4306
        %v4418 = vpop.permute.xlu0 %4417
        %4419 = vset.pattern.permute.xlu0 0
        %4420 = vperm.xlu0 %4419, %v4308
        %v4421 = vpop.permute.xlu0 %4420
        %4422 = vset.pattern.permute.xlu0 0
        %4423 = vperm.xlu0 %4422, %v4310
        %v4424 = vpop.permute.xlu0 %4423
        %4425 = vset.pattern.permute.xlu0 0
        %4426 = vperm.xlu0 %4425, %v4312
        %v4427 = vpop.permute.xlu0 %4426
        %4428 = vset.pattern.permute.xlu0 0
        %4429 = vperm.xlu0 %4428, %v4314
        %v4430 = vpop.permute.xlu0 %4429
        %4431 = vset.pattern.permute.xlu0 0
        %4432 = vperm.xlu0 %4431, %v4316
        %v4433 = vpop.permute.xlu0 %4432
        %4434 = vset.pattern.permute.xlu0 0
        %4435 = vperm.xlu0 %4434, %v4318
        %v4436 = vpop.permute.xlu0 %4435
        %4437 = vset.pattern.permute.xlu0 0
        %4438 = vperm.xlu0 %4437, %v4320
        %v4439 = vpop.permute.xlu0 %4438
        %4440 = vset.pattern.permute.xlu0 0
        %4441 = vperm.xlu0 %4440, %v4322
        %v4442 = vpop.permute.xlu0 %4441
        %4443 = vset.pattern.permute.xlu0 0
        %4444 = vperm.xlu0 %4443, %v4324
        %v4445 = vpop.permute.xlu0 %4444
        %4446 = vset.pattern.permute.xlu0 0
        %4447 = vperm.xlu0 %4446, %v4326
        %v4448 = vpop.permute.xlu0 %4447
        %4449 = vset.pattern.permute.xlu0 0
        %4450 = vperm.xlu0 %4449, %v4328
        %v4451 = vpop.permute.xlu0 %4450
        %4452 = vset.pattern.permute.xlu0 0
        %4453 = vperm.xlu0 %4452, %v4330
        %v4454 = vpop.permute.xlu0 %4453
        %4455 = vset.pattern.permute.xlu0 0
        %4456 = vperm.xlu0 %4455, %v4332
        %v4457 = vpop.permute.xlu0 %4456
        %4458 = vset.pattern.permute.xlu0 0
        %4459 = vperm.xlu0 %4458, %v4334
        %v4460 = vpop.permute.xlu0 %4459
        %4461 = vset.pattern.permute.xlu0 0
        %4462 = vperm.xlu0 %4461, %v4336
        %v4463 = vpop.permute.xlu0 %4462
        %4464 = vset.pattern.permute.xlu0 0
        %4465 = vperm.xlu0 %4464, %v4338
        %v4466 = vpop.permute.xlu0 %4465
        %v4467 = vlaneseq
        %v4468 = vshrl.u32 %v4467, 7
        %v4469 = vsub.s32 %v1857, %v4468
        %v4470 = vrot.slane %v4373, %v4469
        %v4471 = vlaneseq
        %v4472 = vshrl.u32 %v4471, 7
        %v4473 = vsub.s32 %v1862, %v4472
        %v4474 = vrot.slane %v4376, %v4473
        %v4475 = vsel %vm1867, %v4474, %v4470
        %v4476 = vlaneseq
        %v4477 = vshrl.u32 %v4476, 7
        %v4478 = vsub.s32 %v1869, %v4477
        %v4479 = vrot.slane %v4379, %v4478
        %v4480 = vsel %vm1874, %v4479, %v4475
        %v4481 = vlaneseq
        %v4482 = vshrl.u32 %v4481, 7
        %v4483 = vsub.s32 %v1876, %v4482
        %v4484 = vrot.slane %v4382, %v4483
        %v4485 = vsel %vm1881, %v4484, %v4480
        %v4486 = vlaneseq
        %v4487 = vshrl.u32 %v4486, 7
        %v4488 = vsub.s32 %v1883, %v4487
        %v4489 = vrot.slane %v4385, %v4488
        %v4490 = vsel %vm1888, %v4489, %v4485
        %v4491 = vlaneseq
        %v4492 = vshrl.u32 %v4491, 7
        %v4493 = vsub.s32 %v1890, %v4492
        %v4494 = vrot.slane %v4388, %v4493
        %v4495 = vsel %vm1895, %v4494, %v4490
        %v4496 = vlaneseq
        %v4497 = vshrl.u32 %v4496, 7
        %v4498 = vsub.s32 %v1897, %v4497
        %v4499 = vrot.slane %v4391, %v4498
        %v4500 = vsel %vm1902, %v4499, %v4495
        %v4501 = vlaneseq
        %v4502 = vshrl.u32 %v4501, 7
        %v4503 = vsub.s32 %v1904, %v4502
        %v4504 = vrot.slane %v4394, %v4503
        %v4505 = vsel %vm1909, %v4504, %v4500
        %v4506 = vlaneseq
        %v4507 = vshrl.u32 %v4506, 7
        %v4508 = vsub.s32 %v1911, %v4507
        %v4509 = vrot.slane %v4397, %v4508
        %v4510 = vsel %vm1916, %v4509, %v4505
        %v4511 = vlaneseq
        %v4512 = vshrl.u32 %v4511, 7
        %v4513 = vsub.s32 %v1918, %v4512
        %v4514 = vrot.slane %v4400, %v4513
        %v4515 = vsel %vm1923, %v4514, %v4510
        %v4516 = vlaneseq
        %v4517 = vshrl.u32 %v4516, 7
        %v4518 = vsub.s32 %v1925, %v4517
        %v4519 = vrot.slane %v4403, %v4518
        %v4520 = vsel %vm1930, %v4519, %v4515
        %v4521 = vlaneseq
        %v4522 = vshrl.u32 %v4521, 7
        %v4523 = vsub.s32 %v1932, %v4522
        %v4524 = vrot.slane %v4406, %v4523
        %v4525 = vsel %vm1937, %v4524, %v4520
        %v4526 = vlaneseq
        %v4527 = vshrl.u32 %v4526, 7
        %v4528 = vsub.s32 %v1939, %v4527
        %v4529 = vrot.slane %v4409, %v4528
        %v4530 = vsel %vm1944, %v4529, %v4525
        %v4531 = vlaneseq
        %v4532 = vshrl.u32 %v4531, 7
        %v4533 = vsub.s32 %v1946, %v4532
        %v4534 = vrot.slane %v4412, %v4533
        %v4535 = vsel %vm1951, %v4534, %v4530
        %v4536 = vlaneseq
        %v4537 = vshrl.u32 %v4536, 7
        %v4538 = vsub.s32 %v1953, %v4537
        %v4539 = vrot.slane %v4415, %v4538
        %v4540 = vsel %vm1958, %v4539, %v4535
        %v4541 = vlaneseq
        %v4542 = vshrl.u32 %v4541, 7
        %v4543 = vsub.s32 %v1960, %v4542
        %v4544 = vrot.slane %v4418, %v4543
        %v4545 = vsel %vm1965, %v4544, %v4540
        %v4546 = vlaneseq
        %v4547 = vshrl.u32 %v4546, 7
        %v4548 = vsub.s32 %v1857, %v4547
        %v4549 = vrot.slane %v4421, %v4548
        %v4550 = vlaneseq
        %v4551 = vshrl.u32 %v4550, 7
        %v4552 = vsub.s32 %v1862, %v4551
        %v4553 = vrot.slane %v4424, %v4552
        %v4554 = vsel %vm1867, %v4553, %v4549
        %v4555 = vlaneseq
        %v4556 = vshrl.u32 %v4555, 7
        %v4557 = vsub.s32 %v1869, %v4556
        %v4558 = vrot.slane %v4427, %v4557
        %v4559 = vsel %vm1874, %v4558, %v4554
        %v4560 = vlaneseq
        %v4561 = vshrl.u32 %v4560, 7
        %v4562 = vsub.s32 %v1876, %v4561
        %v4563 = vrot.slane %v4430, %v4562
        %v4564 = vsel %vm1881, %v4563, %v4559
        %v4565 = vlaneseq
        %v4566 = vshrl.u32 %v4565, 7
        %v4567 = vsub.s32 %v1883, %v4566
        %v4568 = vrot.slane %v4433, %v4567
        %v4569 = vsel %vm1888, %v4568, %v4564
        %v4570 = vlaneseq
        %v4571 = vshrl.u32 %v4570, 7
        %v4572 = vsub.s32 %v1890, %v4571
        %v4573 = vrot.slane %v4436, %v4572
        %v4574 = vsel %vm1895, %v4573, %v4569
        %v4575 = vlaneseq
        %v4576 = vshrl.u32 %v4575, 7
        %v4577 = vsub.s32 %v1897, %v4576
        %v4578 = vrot.slane %v4439, %v4577
        %v4579 = vsel %vm1902, %v4578, %v4574
        %v4580 = vlaneseq
        %v4581 = vshrl.u32 %v4580, 7
        %v4582 = vsub.s32 %v1904, %v4581
        %v4583 = vrot.slane %v4442, %v4582
        %v4584 = vsel %vm1909, %v4583, %v4579
        %v4585 = vlaneseq
        %v4586 = vshrl.u32 %v4585, 7
        %v4587 = vsub.s32 %v1911, %v4586
        %v4588 = vrot.slane %v4445, %v4587
        %v4589 = vsel %vm1916, %v4588, %v4584
        %v4590 = vlaneseq
        %v4591 = vshrl.u32 %v4590, 7
        %v4592 = vsub.s32 %v1918, %v4591
        %v4593 = vrot.slane %v4448, %v4592
        %v4594 = vsel %vm1923, %v4593, %v4589
        %v4595 = vlaneseq
        %v4596 = vshrl.u32 %v4595, 7
        %v4597 = vsub.s32 %v1925, %v4596
        %v4598 = vrot.slane %v4451, %v4597
        %v4599 = vsel %vm1930, %v4598, %v4594
        %v4600 = vlaneseq
        %v4601 = vshrl.u32 %v4600, 7
        %v4602 = vsub.s32 %v1932, %v4601
        %v4603 = vrot.slane %v4454, %v4602
        %v4604 = vsel %vm1937, %v4603, %v4599
        %v4605 = vlaneseq
        %v4606 = vshrl.u32 %v4605, 7
        %v4607 = vsub.s32 %v1939, %v4606
        %v4608 = vrot.slane %v4457, %v4607
        %v4609 = vsel %vm1944, %v4608, %v4604
        %v4610 = vlaneseq
        %v4611 = vshrl.u32 %v4610, 7
        %v4612 = vsub.s32 %v1946, %v4611
        %v4613 = vrot.slane %v4460, %v4612
        %v4614 = vsel %vm1951, %v4613, %v4609
        %v4615 = vlaneseq
        %v4616 = vshrl.u32 %v4615, 7
        %v4617 = vsub.s32 %v1953, %v4616
        %v4618 = vrot.slane %v4463, %v4617
        %v4619 = vsel %vm1958, %v4618, %v4614
        %v4620 = vlaneseq
        %v4621 = vshrl.u32 %v4620, 7
        %v4622 = vsub.s32 %v1960, %v4621
        %v4623 = vrot.slane %v4466, %v4622
        %v4624 = vsel %vm1965, %v4623, %v4619
        %v4625 = vsel %vm2046, %v4624, %v4545
        %v4627 = vsel %vm2049, %v4625, 0.0
        %4628 = vadd.xlane.f32.xlu0 %v4627
        %v4629 = vpop.xlane.xlu0 %4628
        %v4630 = vrcp.pop %v4629
        %v4632 = vlaneseq
        %v4633 = vshrl.u32 %v4632, 7
        %v4634 = vsub.s32 0, %v4633
        %v4635 = vrot.slane %v4630, %v4634
        %v4636 = vlaneseq
        %v4637 = vshrl.u32 %v4636, 7
        %v4638 = vsub.s32 1, %v4637
        %v4639 = vrot.slane %v4630, %v4638
        %v4642 = vmul.f32 %v4276, %v4635
        %v4643 = vmul.f32 %v4278, %v4635
        %v4644 = vmul.f32 %v4280, %v4635
        %v4645 = vmul.f32 %v4282, %v4635
        %v4646 = vmul.f32 %v4284, %v4635
        %v4647 = vmul.f32 %v4286, %v4635
        %v4648 = vmul.f32 %v4288, %v4635
        %v4649 = vmul.f32 %v4290, %v4635
        %v4650 = vmul.f32 %v4292, %v4635
        %v4651 = vmul.f32 %v4294, %v4635
        %v4652 = vmul.f32 %v4296, %v4635
        %v4653 = vmul.f32 %v4298, %v4635
        %v4654 = vmul.f32 %v4300, %v4635
        %v4655 = vmul.f32 %v4302, %v4635
        %v4656 = vmul.f32 %v4304, %v4635
        %v4657 = vmul.f32 %v4306, %v4635
        %v4658 = vmul.f32 %v4308, %v4639
        %v4659 = vmul.f32 %v4310, %v4639
        %v4660 = vmul.f32 %v4312, %v4639
        %v4661 = vmul.f32 %v4314, %v4639
        %v4662 = vmul.f32 %v4316, %v4639
        %v4663 = vmul.f32 %v4318, %v4639
        %v4664 = vmul.f32 %v4320, %v4639
        %v4665 = vmul.f32 %v4322, %v4639
        %v4666 = vmul.f32 %v4324, %v4639
        %v4667 = vmul.f32 %v4326, %v4639
        %v4668 = vmul.f32 %v4328, %v4639
        %v4669 = vmul.f32 %v4330, %v4639
        %v4670 = vmul.f32 %v4332, %v4639
        %v4671 = vmul.f32 %v4334, %v4639
        %v4672 = vmul.f32 %v4336, %v4639
        %v4673 = vmul.f32 %v4338, %v4639
        %4675 = vset.pattern.permute.xlu0 0
        %4676 = vperm.xlu0 %4675, %v4642
        %v4677 = vpop.permute.xlu0 %4676
        %4680 = vset.pattern.permute.xlu0 0
        %4681 = vperm.xlu0 %4680, %v4643
        %v4682 = vpop.permute.xlu0 %4681
        %4685 = vset.pattern.permute.xlu0 0
        %4686 = vperm.xlu0 %4685, %v4644
        %v4687 = vpop.permute.xlu0 %4686
        %4690 = vset.pattern.permute.xlu0 0
        %4691 = vperm.xlu0 %4690, %v4645
        %v4692 = vpop.permute.xlu0 %4691
        %4695 = vset.pattern.permute.xlu0 0
        %4696 = vperm.xlu0 %4695, %v4646
        %v4697 = vpop.permute.xlu0 %4696
        %4700 = vset.pattern.permute.xlu0 0
        %4701 = vperm.xlu0 %4700, %v4647
        %v4702 = vpop.permute.xlu0 %4701
        %4705 = vset.pattern.permute.xlu0 0
        %4706 = vperm.xlu0 %4705, %v4648
        %v4707 = vpop.permute.xlu0 %4706
        %4710 = vset.pattern.permute.xlu0 0
        %4711 = vperm.xlu0 %4710, %v4649
        %v4712 = vpop.permute.xlu0 %4711
        %4715 = vset.pattern.permute.xlu0 0
        %4716 = vperm.xlu0 %4715, %v4650
        %v4717 = vpop.permute.xlu0 %4716
        %4720 = vset.pattern.permute.xlu0 0
        %4721 = vperm.xlu0 %4720, %v4651
        %v4722 = vpop.permute.xlu0 %4721
        %4725 = vset.pattern.permute.xlu0 0
        %4726 = vperm.xlu0 %4725, %v4652
        %v4727 = vpop.permute.xlu0 %4726
        %4730 = vset.pattern.permute.xlu0 0
        %4731 = vperm.xlu0 %4730, %v4653
        %v4732 = vpop.permute.xlu0 %4731
        %4735 = vset.pattern.permute.xlu0 0
        %4736 = vperm.xlu0 %4735, %v4654
        %v4737 = vpop.permute.xlu0 %4736
        %4740 = vset.pattern.permute.xlu0 0
        %4741 = vperm.xlu0 %4740, %v4655
        %v4742 = vpop.permute.xlu0 %4741
        %4745 = vset.pattern.permute.xlu0 0
        %4746 = vperm.xlu0 %4745, %v4656
        %v4747 = vpop.permute.xlu0 %4746
        %4750 = vset.pattern.permute.xlu0 0
        %4751 = vperm.xlu0 %4750, %v4657
        %v4752 = vpop.permute.xlu0 %4751
        %4755 = vset.pattern.permute.xlu0 0
        %4756 = vperm.xlu0 %4755, %v4658
        %v4757 = vpop.permute.xlu0 %4756
        %4760 = vset.pattern.permute.xlu0 0
        %4761 = vperm.xlu0 %4760, %v4659
        %v4762 = vpop.permute.xlu0 %4761
        %4765 = vset.pattern.permute.xlu0 0
        %4766 = vperm.xlu0 %4765, %v4660
        %v4767 = vpop.permute.xlu0 %4766
        %4770 = vset.pattern.permute.xlu0 0
        %4771 = vperm.xlu0 %4770, %v4661
        %v4772 = vpop.permute.xlu0 %4771
        %4775 = vset.pattern.permute.xlu0 0
        %4776 = vperm.xlu0 %4775, %v4662
        %v4777 = vpop.permute.xlu0 %4776
        %4780 = vset.pattern.permute.xlu0 0
        %4781 = vperm.xlu0 %4780, %v4663
        %v4782 = vpop.permute.xlu0 %4781
        %4785 = vset.pattern.permute.xlu0 0
        %4786 = vperm.xlu0 %4785, %v4664
        %v4787 = vpop.permute.xlu0 %4786
        %4790 = vset.pattern.permute.xlu0 0
        %4791 = vperm.xlu0 %4790, %v4665
        %v4792 = vpop.permute.xlu0 %4791
        %4795 = vset.pattern.permute.xlu0 0
        %4796 = vperm.xlu0 %4795, %v4666
        %v4797 = vpop.permute.xlu0 %4796
        %4800 = vset.pattern.permute.xlu0 0
        %4801 = vperm.xlu0 %4800, %v4667
        %v4802 = vpop.permute.xlu0 %4801
        %4805 = vset.pattern.permute.xlu0 0
        %4806 = vperm.xlu0 %4805, %v4668
        %v4807 = vpop.permute.xlu0 %4806
        %4810 = vset.pattern.permute.xlu0 0
        %4811 = vperm.xlu0 %4810, %v4669
        %v4812 = vpop.permute.xlu0 %4811
        %4815 = vset.pattern.permute.xlu0 0
        %4816 = vperm.xlu0 %4815, %v4670
        %v4817 = vpop.permute.xlu0 %4816
        %4820 = vset.pattern.permute.xlu0 0
        %4821 = vperm.xlu0 %4820, %v4671
        %v4822 = vpop.permute.xlu0 %4821
        %4825 = vset.pattern.permute.xlu0 0
        %4826 = vperm.xlu0 %4825, %v4672
        %v4827 = vpop.permute.xlu0 %4826
        %4830 = vset.pattern.permute.xlu0 0
        %4831 = vperm.xlu0 %4830, %v4673
        %v4832 = vpop.permute.xlu0 %4831
        %v4834 = vmul.f32 %v620, %v4677
        %v4835 = vmul.f32 %v621, %v4682
        %v4836 = vmul.f32 %v622, %v4687
        %v4837 = vmul.f32 %v623, %v4692
        %v4838 = vmul.f32 %v624, %v4697
        %v4839 = vmul.f32 %v625, %v4702
        %v4840 = vmul.f32 %v626, %v4707
        %v4841 = vmul.f32 %v627, %v4712
        %v4842 = vmul.f32 %v628, %v4717
        %v4843 = vmul.f32 %v629, %v4722
        %v4844 = vmul.f32 %v630, %v4727
        %v4845 = vmul.f32 %v631, %v4732
        %v4846 = vmul.f32 %v632, %v4737
        %v4847 = vmul.f32 %v633, %v4742
        %v4848 = vmul.f32 %v634, %v4747
        %v4849 = vmul.f32 %v635, %v4752
        %v4850 = vmul.f32 %v636, %v4757
        %v4851 = vmul.f32 %v637, %v4762
        %v4852 = vmul.f32 %v638, %v4767
        %v4853 = vmul.f32 %v639, %v4772
        %v4854 = vmul.f32 %v640, %v4777
        %v4855 = vmul.f32 %v641, %v4782
        %v4856 = vmul.f32 %v642, %v4787
        %v4857 = vmul.f32 %v643, %v4792
        %v4858 = vmul.f32 %v644, %v4797
        %v4859 = vmul.f32 %v645, %v4802
        %v4860 = vmul.f32 %v646, %v4807
        %v4861 = vmul.f32 %v647, %v4812
        %v4862 = vmul.f32 %v648, %v4817
        %v4863 = vmul.f32 %v649, %v4822
        %v4864 = vmul.f32 %v650, %v4827
        %v4865 = vmul.f32 %v651, %v4832
        %v4866 = vsel %vm2687, %v4834, 0.0
        %v4867 = vsel %vm2687, %v4835, 0.0
        %v4868 = vadd.f32 %v4866, %v4867
        %v4869 = vsel %vm2687, %v4836, 0.0
        %v4870 = vadd.f32 %v4868, %v4869
        %v4871 = vsel %vm2687, %v4837, 0.0
        %v4872 = vadd.f32 %v4870, %v4871
        %v4873 = vsel %vm2687, %v4838, 0.0
        %v4874 = vadd.f32 %v4872, %v4873
        %v4875 = vsel %vm2687, %v4839, 0.0
        %v4876 = vadd.f32 %v4874, %v4875
        %v4877 = vsel %vm2687, %v4840, 0.0
        %v4878 = vadd.f32 %v4876, %v4877
        %v4879 = vsel %vm2687, %v4841, 0.0
        %v4880 = vadd.f32 %v4878, %v4879
        %v4881 = vsel %vm2687, %v4842, 0.0
        %v4882 = vadd.f32 %v4880, %v4881
        %v4883 = vsel %vm2687, %v4843, 0.0
        %v4884 = vadd.f32 %v4882, %v4883
        %v4885 = vsel %vm2687, %v4844, 0.0
        %v4886 = vadd.f32 %v4884, %v4885
        %v4887 = vsel %vm2687, %v4845, 0.0
        %v4888 = vadd.f32 %v4886, %v4887
        %v4889 = vsel %vm2687, %v4846, 0.0
        %v4890 = vadd.f32 %v4888, %v4889
        %v4891 = vsel %vm2687, %v4847, 0.0
        %v4892 = vadd.f32 %v4890, %v4891
        %v4893 = vsel %vm2687, %v4848, 0.0
        %v4894 = vadd.f32 %v4892, %v4893
        %v4895 = vsel %vm2687, %v4849, 0.0
        %v4896 = vadd.f32 %v4894, %v4895
        %v4897 = vrot.slane %v4896, 4
        %v4898 = vadd.f32 %v4896, %v4897
        %v4899 = vrot.slane %v4898, 2
        %v4900 = vadd.f32 %v4898, %v4899
        %v4901 = vrot.slane %v4900, 1
        %v4902 = vadd.f32 %v4900, %v4901
        %v4903 = vsel %vm2687, %v4850, 0.0
        %v4904 = vsel %vm2687, %v4851, 0.0
        %v4905 = vadd.f32 %v4903, %v4904
        %v4906 = vsel %vm2687, %v4852, 0.0
        %v4907 = vadd.f32 %v4905, %v4906
        %v4908 = vsel %vm2687, %v4853, 0.0
        %v4909 = vadd.f32 %v4907, %v4908
        %v4910 = vsel %vm2687, %v4854, 0.0
        %v4911 = vadd.f32 %v4909, %v4910
        %v4912 = vsel %vm2687, %v4855, 0.0
        %v4913 = vadd.f32 %v4911, %v4912
        %v4914 = vsel %vm2687, %v4856, 0.0
        %v4915 = vadd.f32 %v4913, %v4914
        %v4916 = vsel %vm2687, %v4857, 0.0
        %v4917 = vadd.f32 %v4915, %v4916
        %v4918 = vsel %vm2687, %v4858, 0.0
        %v4919 = vadd.f32 %v4917, %v4918
        %v4920 = vsel %vm2687, %v4859, 0.0
        %v4921 = vadd.f32 %v4919, %v4920
        %v4922 = vsel %vm2687, %v4860, 0.0
        %v4923 = vadd.f32 %v4921, %v4922
        %v4924 = vsel %vm2687, %v4861, 0.0
        %v4925 = vadd.f32 %v4923, %v4924
        %v4926 = vsel %vm2687, %v4862, 0.0
        %v4927 = vadd.f32 %v4925, %v4926
        %v4928 = vsel %vm2687, %v4863, 0.0
        %v4929 = vadd.f32 %v4927, %v4928
        %v4930 = vsel %vm2687, %v4864, 0.0
        %v4931 = vadd.f32 %v4929, %v4930
        %v4932 = vsel %vm2687, %v4865, 0.0
        %v4933 = vadd.f32 %v4931, %v4932
        %v4934 = vrot.slane %v4933, 4
        %v4935 = vadd.f32 %v4933, %v4934
        %v4936 = vrot.slane %v4935, 2
        %v4937 = vadd.f32 %v4935, %v4936
        %v4938 = vrot.slane %v4937, 1
        %v4939 = vadd.f32 %v4937, %v4938
        %s4940 = scalar_lea.vmem %s536, 4
        %v4941 = vld [vmem:[%s4940] sm:$0xf]
        %v4942 = vunpack.c.l.bf16 %v4941
        %v4943 = vpack.c.bf16 %v4902, %v4902
        %v4944 = vpack.c.bf16 %v4939, %v4939
        %v4947 = vunpack.c.l.b16 %v4943
        %v4948 = vunpack.c.l.b16 %v4944
        %v4949 = vsel %vm2046, %v4948, %v4947
        %v4950 = vpack.c.b16 %v4949, %v4949
        %v4952 = vsel %vm2687, %v4950, 0
        %4954 = vmatprep.subr.bf16.mxu0 %v2790
        %4955 = vmatpush1.bf16.msra.mxu0 %v2787
        %4956 = vmatprep.subr.bf16.mxu0 0
        %4957 = vmatpush1.bf16.msra.mxu0 0
        %4958 = vmatprep.subr.bf16.mxu0 0
        %4959 = vmatpush1.bf16.msra.mxu0 0
        %4960 = vmatprep.subr.bf16.mxu0 0
        %4961 = vmatpush1.bf16.msra.mxu0 0
        %4962 = vmatprep.subr.bf16.mxu0 0
        %4963 = vmatpush1.bf16.msra.mxu0 0
        %4964 = vmatprep.subr.bf16.mxu0 0
        %4965 = vmatpush1.bf16.msra.mxu0 0
        %4966 = vmatprep.subr.bf16.mxu0 0
        %4967 = vmatpush1.bf16.msra.mxu0 0
        %4968 = vmatprep.subr.bf16.mxu0 0
        %4969 = vmatpush1.bf16.msra.mxu0 0
        %4970 = vmatprep.subr.bf16.mxu0 0
        %4971 = vmatpush1.bf16.msra.mxu0 0
        %4972 = vmatprep.subr.bf16.mxu0 0
        %4973 = vmatpush1.bf16.msra.mxu0 0
        %4974 = vmatprep.subr.bf16.mxu0 0
        %4975 = vmatpush1.bf16.msra.mxu0 0
        %4976 = vmatprep.subr.bf16.mxu0 0
        %4977 = vmatpush1.bf16.msra.mxu0 0
        %4978 = vmatprep.subr.bf16.mxu0 0
        %4979 = vmatpush1.bf16.msra.mxu0 0
        %4980 = vmatprep.subr.bf16.mxu0 0
        %4981 = vmatpush1.bf16.msra.mxu0 0
        %4982 = vmatprep.subr.bf16.mxu0 0
        %4983 = vmatpush1.bf16.msra.mxu0 0
        %4984 = vmatprep.subr.bf16.mxu0 0
        %4985 = vmatpush1.bf16.msra.mxu0 0
        %4986 = vmatprep.mubr.bf16.mxu0 0
        %4987 = vmatmul.mubr.bf16.gmra.mrb[0].mxu0 %v4952
        %v4988 = vpop.f32.mrb[0].mxu0
        %v4989 = vadd.f32 0.0, %v4988
        %v4990 = vpop.f32.mrb[0].mxu0
        %v4991 = vadd.f32 0.0, %v4990
        %v4992 = vpop.f32.mrb[0].mxu0
        %v4993 = vpop.f32.mrb[0].mxu0
        %4994 = vdwg.mxu0
        %4995 = vmatprep.subr.bf16.mxu0 %v2796
        %4996 = vmatpush1.bf16.msra.mxu0 %v2793
        %4997 = vmatprep.subr.bf16.mxu0 0
        %4998 = vmatpush1.bf16.msra.mxu0 0
        %4999 = vmatprep.subr.bf16.mxu0 0
        %5000 = vmatpush1.bf16.msra.mxu0 0
        %5001 = vmatprep.subr.bf16.mxu0 0
        %5002 = vmatpush1.bf16.msra.mxu0 0
        %5003 = vmatprep.subr.bf16.mxu0 0
        %5004 = vmatpush1.bf16.msra.mxu0 0
        %5005 = vmatprep.subr.bf16.mxu0 0
        %5006 = vmatpush1.bf16.msra.mxu0 0
        %5007 = vmatprep.subr.bf16.mxu0 0
        %5008 = vmatpush1.bf16.msra.mxu0 0
        %5009 = vmatprep.subr.bf16.mxu0 0
        %5010 = vmatpush1.bf16.msra.mxu0 0
        %5011 = vmatprep.subr.bf16.mxu0 0
        %5012 = vmatpush1.bf16.msra.mxu0 0
        %5013 = vmatprep.subr.bf16.mxu0 0
        %5014 = vmatpush1.bf16.msra.mxu0 0
        %5015 = vmatprep.subr.bf16.mxu0 0
        %5016 = vmatpush1.bf16.msra.mxu0 0
        %5017 = vmatprep.subr.bf16.mxu0 0
        %5018 = vmatpush1.bf16.msra.mxu0 0
        %5019 = vmatprep.subr.bf16.mxu0 0
        %5020 = vmatpush1.bf16.msra.mxu0 0
        %5021 = vmatprep.subr.bf16.mxu0 0
        %5022 = vmatpush1.bf16.msra.mxu0 0
        %5023 = vmatprep.subr.bf16.mxu0 0
        %5024 = vmatpush1.bf16.msra.mxu0 0
        %5025 = vmatprep.subr.bf16.mxu0 0
        %5026 = vmatpush1.bf16.msra.mxu0 0
        %5027 = vmatprep.mubr.bf16.mxu0 0
        %5028 = vmatmul.mubr.bf16.gmra.mrb[0].mxu0 %v4952
        %v5029 = vpop.f32.mrb[0].mxu0
        %v5030 = vadd.f32 0.0, %v5029
        %v5031 = vpop.f32.mrb[0].mxu0
        %v5032 = vadd.f32 0.0, %v5031
        %v5033 = vpop.f32.mrb[0].mxu0
        %v5034 = vpop.f32.mrb[0].mxu0
        %5035 = vdwg.mxu0
        %v5040 = vcombine.low %v4989, %v4991
        %v5041 = vcombine.low %v5030, %v5032
        %v5043 = vunpack.c.l.s4 1983009808
        %v5044 = vunpack.c.0.s8 %v5043
        %v5045 = vlaneseq
        %v5046 = vshrl.u32 %v5045, 7
        %v5047 = vsub.s32 %v5044, %v5046
        %v5048 = vrot.slane %v5040, %v5047
        %v5050 = vunpack.c.l.s4 1983009808
        %v5051 = vunpack.c.0.s8 %v5050
        %v5052 = vlaneseq
        %v5053 = vshrl.u32 %v5052, 7
        %v5054 = vsub.s32 %v5051, %v5053
        %v5055 = vrot.slane %v5041, %v5054
        %v5056 = vcombine.low %v5048, %v5055
        %v5058 = vadd.f32 %v4942, %v5056
        %v5063 = vcombine.low %v3605, %v3607
        %v5064 = vcombine.low %v3646, %v3648
        %v5066 = vunpack.c.l.s4 1983009808
        %v5067 = vunpack.c.0.s8 %v5066
        %v5068 = vlaneseq
        %v5069 = vshrl.u32 %v5068, 7
        %v5070 = vsub.s32 %v5067, %v5069
        %v5071 = vrot.slane %v5063, %v5070
        %v5073 = vunpack.c.l.s4 1983009808
        %v5074 = vunpack.c.0.s8 %v5073
        %v5075 = vlaneseq
        %v5076 = vshrl.u32 %v5075, 7
        %v5077 = vsub.s32 %v5074, %v5076
        %v5078 = vrot.slane %v5064, %v5077
        %v5079 = vcombine.low %v5071, %v5078
        %v5081 = vadd.f32 %v5058, %v5079
        %v5082 = vadd.f32 %v5081, %v2959
        %v5083 = vxor.u32 %v5082, 2147483648
        %v5084 = vmul.f32 %v5083, 1.442695
        %v5085 = vpow.pop %v5084
        %v5086 = vadd.f32 %v5085, 1.0
        %v5087 = vrcp.pop %v5086
        %v5088 = vmul.f32 1.0, %v5087
        %v5090 = vrot.slane %v5082, 2
        %v5092 = vxor.u32 %v5090, 2147483648
        %v5093 = vmul.f32 %v5092, 1.442695
        %v5094 = vpow.pop %v5093
        %v5095 = vadd.f32 %v5094, 1.0
        %v5096 = vrcp.pop %v5095
        %v5097 = vmul.f32 1.0, %v5096
        %v5098 = vrot.slane %v5082, 4
        %v5100 = vtanh.pop %v5098
        %v5101 = vrot.slane %v5082, 6
        %v5103 = vxor.u32 %v5101, 2147483648
        %v5104 = vmul.f32 %v5103, 1.442695
        %v5105 = vpow.pop %v5104
        %v5106 = vadd.f32 %v5105, 1.0
        %v5107 = vrcp.pop %v5106
        %v5108 = vmul.f32 1.0, %v5107
        %v5109 = vmul.f32 %v5097, %v2990
        %v5110 = vmul.f32 %v5088, %v5100
        %v5111 = vadd.f32 %v5109, %v5110
        %v5112 = vtanh.pop %v5111
        %v5113 = vmul.f32 %v5108, %v5112
        %v5114 = vpack.c.bf16 %v5113, %v5113
        %5115 = vmatprep.subr.bf16.mxu0 %v3091
        %5116 = vmatpush1.bf16.msra.mxu0 %v3090
        %5117 = vmatprep.subr.bf16.mxu0 %v3095
        %5118 = vmatpush1.bf16.msra.mxu0 %v3094
        %5119 = vmatprep.subr.bf16.mxu0 %v3099
        %5120 = vmatpush1.bf16.msra.mxu0 %v3098
        %5121 = vmatprep.subr.bf16.mxu0 %v3103
        %5122 = vmatpush1.bf16.msra.mxu0 %v3102
        %5123 = vmatprep.subr.bf16.mxu0 %v3107
        %5124 = vmatpush1.bf16.msra.mxu0 %v3106
        %5125 = vmatprep.subr.bf16.mxu0 %v3111
        %5126 = vmatpush1.bf16.msra.mxu0 %v3110
        %5127 = vmatprep.subr.bf16.mxu0 %v3115
        %5128 = vmatpush1.bf16.msra.mxu0 %v3114
        %5129 = vmatprep.subr.bf16.mxu0 %v3119
        %5130 = vmatpush1.bf16.msra.mxu0 %v3118
        %5131 = vmatprep.subr.bf16.mxu0 0
        %5132 = vmatpush1.bf16.msra.mxu0 0
        %5133 = vmatprep.subr.bf16.mxu0 0
        %5134 = vmatpush1.bf16.msra.mxu0 0
        %5135 = vmatprep.subr.bf16.mxu0 0
        %5136 = vmatpush1.bf16.msra.mxu0 0
        %5137 = vmatprep.subr.bf16.mxu0 0
        %5138 = vmatpush1.bf16.msra.mxu0 0
        %5139 = vmatprep.subr.bf16.mxu0 0
        %5140 = vmatpush1.bf16.msra.mxu0 0
        %5141 = vmatprep.subr.bf16.mxu0 0
        %5142 = vmatpush1.bf16.msra.mxu0 0
        %5143 = vmatprep.subr.bf16.mxu0 0
        %5144 = vmatpush1.bf16.msra.mxu0 0
        %5145 = vmatprep.subr.bf16.mxu0 0
        %5146 = vmatpush1.bf16.msra.mxu0 0
        %5147 = vmatprep.mubr.bf16.mxu0 0
        %5148 = vmatmul.mubr.bf16.gmra.mrb[0].mxu0 %v5114
        %v5149 = vpop.f32.mrb[0].mxu0
        %v5150 = vadd.f32 %v3485, %v5149
        %v5151 = vpop.f32.mrb[0].mxu0
        %v5152 = vadd.f32 %v3524, %v5151
        %v5153 = vpop.f32.mrb[0].mxu0
        %v5154 = vpop.f32.mrb[0].mxu0
        %5155 = vdwg.mxu0
        %5156 = vmatprep.subr.bf16.mxu0 %v3093
        %5157 = vmatpush1.bf16.msra.mxu0 %v3092
        %5158 = vmatprep.subr.bf16.mxu0 %v3097
        %5159 = vmatpush1.bf16.msra.mxu0 %v3096
        %5160 = vmatprep.subr.bf16.mxu0 %v3101
        %5161 = vmatpush1.bf16.msra.mxu0 %v3100
        %5162 = vmatprep.subr.bf16.mxu0 %v3105
        %5163 = vmatpush1.bf16.msra.mxu0 %v3104
        %5164 = vmatprep.subr.bf16.mxu0 %v3109
        %5165 = vmatpush1.bf16.msra.mxu0 %v3108
        %5166 = vmatprep.subr.bf16.mxu0 %v3113
        %5167 = vmatpush1.bf16.msra.mxu0 %v3112
        %5168 = vmatprep.subr.bf16.mxu0 %v3117
        %5169 = vmatpush1.bf16.msra.mxu0 %v3116
        %5170 = vmatprep.subr.bf16.mxu0 %v3121
        %5171 = vmatpush1.bf16.msra.mxu0 %v3120
        %5172 = vmatprep.subr.bf16.mxu0 0
        %5173 = vmatpush1.bf16.msra.mxu0 0
        %5174 = vmatprep.subr.bf16.mxu0 0
        %5175 = vmatpush1.bf16.msra.mxu0 0
        %5176 = vmatprep.subr.bf16.mxu0 0
        %5177 = vmatpush1.bf16.msra.mxu0 0
        %5178 = vmatprep.subr.bf16.mxu0 0
        %5179 = vmatpush1.bf16.msra.mxu0 0
        %5180 = vmatprep.subr.bf16.mxu0 0
        %5181 = vmatpush1.bf16.msra.mxu0 0
        %5182 = vmatprep.subr.bf16.mxu0 0
        %5183 = vmatpush1.bf16.msra.mxu0 0
        %5184 = vmatprep.subr.bf16.mxu0 0
        %5185 = vmatpush1.bf16.msra.mxu0 0
        %5186 = vmatprep.subr.bf16.mxu0 0
        %5187 = vmatpush1.bf16.msra.mxu0 0
        %5188 = vmatprep.mubr.bf16.mxu0 0
        %5189 = vmatmul.mubr.bf16.gmra.mrb[0].mxu0 %v5114
        %v5190 = vpop.f32.mrb[0].mxu0
        %v5191 = vadd.f32 %v3526, %v5190
        %v5192 = vpop.f32.mrb[0].mxu0
        %v5193 = vadd.f32 %v3565, %v5192
        %v5194 = vpop.f32.mrb[0].mxu0
        %v5195 = vpop.f32.mrb[0].mxu0
        %5196 = vdwg.mxu0
        %v5197 = vadd.f32 %v5150, %v3240
        %v5198 = vadd.f32 %v5152, %v3244
        %v5199 = vadd.f32 %v5191, %v3248
        %v5200 = vadd.f32 %v5193, %v3252
        %v5201 = vxor.u32 %v5197, 2147483648
        %v5202 = vmul.f32 %v5201, 1.442695
        %v5203 = vpow.pop %v5202
        %v5204 = vadd.f32 %v5203, 1.0
        %v5205 = vrcp.pop %v5204
        %v5206 = vmul.f32 1.0, %v5205
        %v5207 = vxor.u32 %v5198, 2147483648
        %v5208 = vmul.f32 %v5207, 1.442695
        %v5209 = vpow.pop %v5208
        %v5210 = vadd.f32 %v5209, 1.0
        %v5211 = vrcp.pop %v5210
        %v5212 = vmul.f32 1.0, %v5211
        %v5213 = vtanh.pop %v5199
        %v5214 = vxor.u32 %v5200, 2147483648
        %v5215 = vmul.f32 %v5214, 1.442695
        %v5216 = vpow.pop %v5215
        %v5217 = vadd.f32 %v5216, 1.0
        %v5218 = vrcp.pop %v5217
        %v5219 = vmul.f32 1.0, %v5218
        %v5220 = vmul.f32 %v5212, %v3282
        %v5221 = vmul.f32 %v5206, %v5213
        %v5222 = vadd.f32 %v5220, %v5221
        %v5223 = vtanh.pop %v5222
        %v5224 = vmul.f32 %v5219, %v5223
        %s5225 = scalar_lea.vmem %s524, 2 [#allocation12]
        %5226 = vst [vmem:[%s5225] sm:$0x3] %v5224
        %v5227 = vlaneseq
        %v5228 = vshrl.u32 %v5227, 7
        %v5229 = vsub.s32 %v1857, %v5228
        %v5230 = vrot.slane %v4677, %v5229
        %v5231 = vlaneseq
        %v5232 = vshrl.u32 %v5231, 7
        %v5233 = vsub.s32 %v1862, %v5232
        %v5234 = vrot.slane %v4682, %v5233
        %v5235 = vsel %vm1867, %v5234, %v5230
        %v5236 = vlaneseq
        %v5237 = vshrl.u32 %v5236, 7
        %v5238 = vsub.s32 %v1869, %v5237
        %v5239 = vrot.slane %v4687, %v5238
        %v5240 = vsel %vm1874, %v5239, %v5235
        %v5241 = vlaneseq
        %v5242 = vshrl.u32 %v5241, 7
        %v5243 = vsub.s32 %v1876, %v5242
        %v5244 = vrot.slane %v4692, %v5243
        %v5245 = vsel %vm1881, %v5244, %v5240
        %v5246 = vlaneseq
        %v5247 = vshrl.u32 %v5246, 7
        %v5248 = vsub.s32 %v1883, %v5247
        %v5249 = vrot.slane %v4697, %v5248
        %v5250 = vsel %vm1888, %v5249, %v5245
        %v5251 = vlaneseq
        %v5252 = vshrl.u32 %v5251, 7
        %v5253 = vsub.s32 %v1890, %v5252
        %v5254 = vrot.slane %v4702, %v5253
        %v5255 = vsel %vm1895, %v5254, %v5250
        %v5256 = vlaneseq
        %v5257 = vshrl.u32 %v5256, 7
        %v5258 = vsub.s32 %v1897, %v5257
        %v5259 = vrot.slane %v4707, %v5258
        %v5260 = vsel %vm1902, %v5259, %v5255
        %v5261 = vlaneseq
        %v5262 = vshrl.u32 %v5261, 7
        %v5263 = vsub.s32 %v1904, %v5262
        %v5264 = vrot.slane %v4712, %v5263
        %v5265 = vsel %vm1909, %v5264, %v5260
        %v5266 = vlaneseq
        %v5267 = vshrl.u32 %v5266, 7
        %v5268 = vsub.s32 %v1911, %v5267
        %v5269 = vrot.slane %v4717, %v5268
        %v5270 = vsel %vm1916, %v5269, %v5265
        %v5271 = vlaneseq
        %v5272 = vshrl.u32 %v5271, 7
        %v5273 = vsub.s32 %v1918, %v5272
        %v5274 = vrot.slane %v4722, %v5273
        %v5275 = vsel %vm1923, %v5274, %v5270
        %v5276 = vlaneseq
        %v5277 = vshrl.u32 %v5276, 7
        %v5278 = vsub.s32 %v1925, %v5277
        %v5279 = vrot.slane %v4727, %v5278
        %v5280 = vsel %vm1930, %v5279, %v5275
        %v5281 = vlaneseq
        %v5282 = vshrl.u32 %v5281, 7
        %v5283 = vsub.s32 %v1932, %v5282
        %v5284 = vrot.slane %v4732, %v5283
        %v5285 = vsel %vm1937, %v5284, %v5280
        %v5286 = vlaneseq
        %v5287 = vshrl.u32 %v5286, 7
        %v5288 = vsub.s32 %v1939, %v5287
        %v5289 = vrot.slane %v4737, %v5288
        %v5290 = vsel %vm1944, %v5289, %v5285
        %v5291 = vlaneseq
        %v5292 = vshrl.u32 %v5291, 7
        %v5293 = vsub.s32 %v1946, %v5292
        %v5294 = vrot.slane %v4742, %v5293
        %v5295 = vsel %vm1951, %v5294, %v5290
        %v5296 = vlaneseq
        %v5297 = vshrl.u32 %v5296, 7
        %v5298 = vsub.s32 %v1953, %v5297
        %v5299 = vrot.slane %v4747, %v5298
        %v5300 = vsel %vm1958, %v5299, %v5295
        %v5301 = vlaneseq
        %v5302 = vshrl.u32 %v5301, 7
        %v5303 = vsub.s32 %v1960, %v5302
        %v5304 = vrot.slane %v4752, %v5303
        %v5305 = vsel %vm1965, %v5304, %v5300
        %v5306 = vlaneseq
        %v5307 = vshrl.u32 %v5306, 7
        %v5308 = vsub.s32 %v1857, %v5307
        %v5309 = vrot.slane %v4757, %v5308
        %v5310 = vlaneseq
        %v5311 = vshrl.u32 %v5310, 7
        %v5312 = vsub.s32 %v1862, %v5311
        %v5313 = vrot.slane %v4762, %v5312
        %v5314 = vsel %vm1867, %v5313, %v5309
        %v5315 = vlaneseq
        %v5316 = vshrl.u32 %v5315, 7
        %v5317 = vsub.s32 %v1869, %v5316
        %v5318 = vrot.slane %v4767, %v5317
        %v5319 = vsel %vm1874, %v5318, %v5314
        %v5320 = vlaneseq
        %v5321 = vshrl.u32 %v5320, 7
        %v5322 = vsub.s32 %v1876, %v5321
        %v5323 = vrot.slane %v4772, %v5322
        %v5324 = vsel %vm1881, %v5323, %v5319
        %v5325 = vlaneseq
        %v5326 = vshrl.u32 %v5325, 7
        %v5327 = vsub.s32 %v1883, %v5326
        %v5328 = vrot.slane %v4777, %v5327
        %v5329 = vsel %vm1888, %v5328, %v5324
        %v5330 = vlaneseq
        %v5331 = vshrl.u32 %v5330, 7
        %v5332 = vsub.s32 %v1890, %v5331
        %v5333 = vrot.slane %v4782, %v5332
        %v5334 = vsel %vm1895, %v5333, %v5329
        %v5335 = vlaneseq
        %v5336 = vshrl.u32 %v5335, 7
        %v5337 = vsub.s32 %v1897, %v5336
        %v5338 = vrot.slane %v4787, %v5337
        %v5339 = vsel %vm1902, %v5338, %v5334
        %v5340 = vlaneseq
        %v5341 = vshrl.u32 %v5340, 7
        %v5342 = vsub.s32 %v1904, %v5341
        %v5343 = vrot.slane %v4792, %v5342
        %v5344 = vsel %vm1909, %v5343, %v5339
        %v5345 = vlaneseq
        %v5346 = vshrl.u32 %v5345, 7
        %v5347 = vsub.s32 %v1911, %v5346
        %v5348 = vrot.slane %v4797, %v5347
        %v5349 = vsel %vm1916, %v5348, %v5344
        %v5350 = vlaneseq
        %v5351 = vshrl.u32 %v5350, 7
        %v5352 = vsub.s32 %v1918, %v5351
        %v5353 = vrot.slane %v4802, %v5352
        %v5354 = vsel %vm1923, %v5353, %v5349
        %v5355 = vlaneseq
        %v5356 = vshrl.u32 %v5355, 7
        %v5357 = vsub.s32 %v1925, %v5356
        %v5358 = vrot.slane %v4807, %v5357
        %v5359 = vsel %vm1930, %v5358, %v5354
        %v5360 = vlaneseq
        %v5361 = vshrl.u32 %v5360, 7
        %v5362 = vsub.s32 %v1932, %v5361
        %v5363 = vrot.slane %v4812, %v5362
        %v5364 = vsel %vm1937, %v5363, %v5359
        %v5365 = vlaneseq
        %v5366 = vshrl.u32 %v5365, 7
        %v5367 = vsub.s32 %v1939, %v5366
        %v5368 = vrot.slane %v4817, %v5367
        %v5369 = vsel %vm1944, %v5368, %v5364
        %v5370 = vlaneseq
        %v5371 = vshrl.u32 %v5370, 7
        %v5372 = vsub.s32 %v1946, %v5371
        %v5373 = vrot.slane %v4822, %v5372
        %v5374 = vsel %vm1951, %v5373, %v5369
        %v5375 = vlaneseq
        %v5376 = vshrl.u32 %v5375, 7
        %v5377 = vsub.s32 %v1953, %v5376
        %v5378 = vrot.slane %v4827, %v5377
        %v5379 = vsel %vm1958, %v5378, %v5374
        %v5380 = vlaneseq
        %v5381 = vshrl.u32 %v5380, 7
        %v5382 = vsub.s32 %v1960, %v5381
        %v5383 = vrot.slane %v4832, %v5382
        %v5384 = vsel %vm1965, %v5383, %v5379
        %v5385 = vsel %vm2046, %v5384, %v5305
        %s5387 = scalar_lea.vmem %s531, 2 [#allocation13]
        %5388 = vst [vmem:[%s5387] sm:$0x3] %v5385
        %v5389 = vpack.c.bf16 %v5224, %v5224
        %5390 = vmatprep.subr.bf16.mxu0 %v905
        %5391 = vmatpush1.bf16.msra.mxu0 %v904
        %5392 = vmatprep.subr.bf16.mxu0 %v910
        %5393 = vmatpush1.bf16.msra.mxu0 %v909
        %5394 = vmatprep.subr.bf16.mxu0 %v915
        %5395 = vmatpush1.bf16.msra.mxu0 %v914
        %5396 = vmatprep.subr.bf16.mxu0 %v920
        %5397 = vmatpush1.bf16.msra.mxu0 %v919
        %5398 = vmatprep.subr.bf16.mxu0 %v925
        %5399 = vmatpush1.bf16.msra.mxu0 %v924
        %5400 = vmatprep.subr.bf16.mxu0 %v930
        %5401 = vmatpush1.bf16.msra.mxu0 %v929
        %5402 = vmatprep.subr.bf16.mxu0 %v935
        %5403 = vmatpush1.bf16.msra.mxu0 %v934
        %5404 = vmatprep.subr.bf16.mxu0 %v940
        %5405 = vmatpush1.bf16.msra.mxu0 %v939
        %5406 = vmatprep.subr.bf16.mxu0 0
        %5407 = vmatpush1.bf16.msra.mxu0 0
        %5408 = vmatprep.subr.bf16.mxu0 0
        %5409 = vmatpush1.bf16.msra.mxu0 0
        %5410 = vmatprep.subr.bf16.mxu0 0
        %5411 = vmatpush1.bf16.msra.mxu0 0
        %5412 = vmatprep.subr.bf16.mxu0 0
        %5413 = vmatpush1.bf16.msra.mxu0 0
        %5414 = vmatprep.subr.bf16.mxu0 0
        %5415 = vmatpush1.bf16.msra.mxu0 0
        %5416 = vmatprep.subr.bf16.mxu0 0
        %5417 = vmatpush1.bf16.msra.mxu0 0
        %5418 = vmatprep.subr.bf16.mxu0 0
        %5419 = vmatpush1.bf16.msra.mxu0 0
        %5420 = vmatprep.subr.bf16.mxu0 0
        %5421 = vmatpush1.bf16.msra.mxu0 0
        %5422 = vmatprep.mubr.bf16.mxu0 0
        %5423 = vmatmul.mubr.bf16.gmra.mrb[0].mxu0 %v5389
        %v5424 = vpop.f32.mrb[0].mxu0
        %v5425 = vadd.f32 0.0, %v5424
        %v5426 = vpop.f32.mrb[0].mxu0
        %v5427 = vadd.f32 0.0, %v5426
        %v5428 = vpop.f32.mrb[0].mxu0
        %v5429 = vpop.f32.mrb[0].mxu0
        %5430 = vdwg.mxu0
        %5431 = vmatprep.subr.bf16.mxu0 %v907
        %5432 = vmatpush1.bf16.msra.mxu0 %v906
        %5433 = vmatprep.subr.bf16.mxu0 %v912
        %5434 = vmatpush1.bf16.msra.mxu0 %v911
        %5435 = vmatprep.subr.bf16.mxu0 %v917
        %5436 = vmatpush1.bf16.msra.mxu0 %v916
        %5437 = vmatprep.subr.bf16.mxu0 %v922
        %5438 = vmatpush1.bf16.msra.mxu0 %v921
        %5439 = vmatprep.subr.bf16.mxu0 %v927
        %5440 = vmatpush1.bf16.msra.mxu0 %v926
        %5441 = vmatprep.subr.bf16.mxu0 %v932
        %5442 = vmatpush1.bf16.msra.mxu0 %v931
        %5443 = vmatprep.subr.bf16.mxu0 %v937
        %5444 = vmatpush1.bf16.msra.mxu0 %v936
        %5445 = vmatprep.subr.bf16.mxu0 %v942
        %5446 = vmatpush1.bf16.msra.mxu0 %v941
        %5447 = vmatprep.subr.bf16.mxu0 0
        %5448 = vmatpush1.bf16.msra.mxu0 0
        %5449 = vmatprep.subr.bf16.mxu0 0
        %5450 = vmatpush1.bf16.msra.mxu0 0
        %5451 = vmatprep.subr.bf16.mxu0 0
        %5452 = vmatpush1.bf16.msra.mxu0 0
        %5453 = vmatprep.subr.bf16.mxu0 0
        %5454 = vmatpush1.bf16.msra.mxu0 0
        %5455 = vmatprep.subr.bf16.mxu0 0
        %5456 = vmatpush1.bf16.msra.mxu0 0
        %5457 = vmatprep.subr.bf16.mxu0 0
        %5458 = vmatpush1.bf16.msra.mxu0 0
        %5459 = vmatprep.subr.bf16.mxu0 0
        %5460 = vmatpush1.bf16.msra.mxu0 0
        %5461 = vmatprep.subr.bf16.mxu0 0
        %5462 = vmatpush1.bf16.msra.mxu0 0
        %5463 = vmatprep.mubr.bf16.mxu0 0
        %5464 = vmatmul.mubr.bf16.gmra.mrb[0].mxu0 %v5389
        %v5465 = vpop.f32.mrb[0].mxu0
        %v5466 = vadd.f32 0.0, %v5465
        %v5467 = vpop.f32.mrb[0].mxu0
        %v5468 = vadd.f32 0.0, %v5467
        %v5469 = vpop.f32.mrb[0].mxu0
        %v5470 = vpop.f32.mrb[0].mxu0
        %5471 = vdwg.mxu0
        %5472 = vmatprep.subr.bf16.mxu0 0
        %5473 = vmatpush1.bf16.msra.mxu0 %v908
        %5474 = vmatprep.subr.bf16.mxu0 0
        %5475 = vmatpush1.bf16.msra.mxu0 %v913
        %5476 = vmatprep.subr.bf16.mxu0 0
        %5477 = vmatpush1.bf16.msra.mxu0 %v918
        %5478 = vmatprep.subr.bf16.mxu0 0
        %5479 = vmatpush1.bf16.msra.mxu0 %v923
        %5480 = vmatprep.subr.bf16.mxu0 0
        %5481 = vmatpush1.bf16.msra.mxu0 %v928
        %5482 = vmatprep.subr.bf16.mxu0 0
        %5483 = vmatpush1.bf16.msra.mxu0 %v933
        %5484 = vmatprep.subr.bf16.mxu0 0
        %5485 = vmatpush1.bf16.msra.mxu0 %v938
        %5486 = vmatprep.subr.bf16.mxu0 0
        %5487 = vmatpush1.bf16.msra.mxu0 %v943
        %5488 = vmatprep.subr.bf16.mxu0 0
        %5489 = vmatpush1.bf16.msra.mxu0 0
        %5490 = vmatprep.subr.bf16.mxu0 0
        %5491 = vmatpush1.bf16.msra.mxu0 0
        %5492 = vmatprep.subr.bf16.mxu0 0
        %5493 = vmatpush1.bf16.msra.mxu0 0
        %5494 = vmatprep.subr.bf16.mxu0 0
        %5495 = vmatpush1.bf16.msra.mxu0 0
        %5496 = vmatprep.subr.bf16.mxu0 0
        %5497 = vmatpush1.bf16.msra.mxu0 0
        %5498 = vmatprep.subr.bf16.mxu0 0
        %5499 = vmatpush1.bf16.msra.mxu0 0
        %5500 = vmatprep.subr.bf16.mxu0 0
        %5501 = vmatpush1.bf16.msra.mxu0 0
        %5502 = vmatprep.subr.bf16.mxu0 0
        %5503 = vmatpush1.bf16.msra.mxu0 0
        %5504 = vmatprep.mubr.bf16.mxu0 0
        %5505 = vmatmul.mubr.bf16.gmra.mrb[0].mxu0 %v5389
        %v5506 = vpop.f32.mrb[0].mxu0
        %v5507 = vadd.f32 0.0, %v5506
        %v5508 = vpop.f32.mrb[0].mxu0
        %v5509 = vpop.f32.mrb[0].mxu0
        %v5510 = vpop.f32.mrb[0].mxu0
        %5511 = vdwg.mxu0
        %5512 = vmatprep.subr.bf16.mxu0 %v1204
        %5513 = vmatpush1.bf16.msra.mxu0 %v1203
        %5514 = vmatprep.subr.bf16.mxu0 %v1208
        %5515 = vmatpush1.bf16.msra.mxu0 %v1207
        %5516 = vmatprep.subr.bf16.mxu0 %v1212
        %5517 = vmatpush1.bf16.msra.mxu0 %v1211
        %5518 = vmatprep.subr.bf16.mxu0 %v1216
        %5519 = vmatpush1.bf16.msra.mxu0 %v1215
        %5520 = vmatprep.subr.bf16.mxu0 %v1220
        %5521 = vmatpush1.bf16.msra.mxu0 %v1219
        %5522 = vmatprep.subr.bf16.mxu0 %v1224
        %5523 = vmatpush1.bf16.msra.mxu0 %v1223
        %5524 = vmatprep.subr.bf16.mxu0 %v1228
        %5525 = vmatpush1.bf16.msra.mxu0 %v1227
        %5526 = vmatprep.subr.bf16.mxu0 %v1232
        %5527 = vmatpush1.bf16.msra.mxu0 %v1231
        %5528 = vmatprep.subr.bf16.mxu0 0
        %5529 = vmatpush1.bf16.msra.mxu0 0
        %5530 = vmatprep.subr.bf16.mxu0 0
        %5531 = vmatpush1.bf16.msra.mxu0 0
        %5532 = vmatprep.subr.bf16.mxu0 0
        %5533 = vmatpush1.bf16.msra.mxu0 0
        %5534 = vmatprep.subr.bf16.mxu0 0
        %5535 = vmatpush1.bf16.msra.mxu0 0
        %5536 = vmatprep.subr.bf16.mxu0 0
        %5537 = vmatpush1.bf16.msra.mxu0 0
        %5538 = vmatprep.subr.bf16.mxu0 0
        %5539 = vmatpush1.bf16.msra.mxu0 0
        %5540 = vmatprep.subr.bf16.mxu0 0
        %5541 = vmatpush1.bf16.msra.mxu0 0
        %5542 = vmatprep.subr.bf16.mxu0 0
        %5543 = vmatpush1.bf16.msra.mxu0 0
        %5544 = vmatprep.mubr.bf16.mxu0 0
        %5545 = vmatmul.mubr.bf16.gmra.mrb[0].mxu0 %v5114
        %v5546 = vpop.f32.mrb[0].mxu0
        %v5547 = vadd.f32 0.0, %v5546
        %v5548 = vpop.f32.mrb[0].mxu0
        %v5549 = vadd.f32 0.0, %v5548
        %v5550 = vpop.f32.mrb[0].mxu0
        %v5551 = vpop.f32.mrb[0].mxu0
        %5552 = vdwg.mxu0
        %5553 = vmatprep.subr.bf16.mxu0 %v1206
        %5554 = vmatpush1.bf16.msra.mxu0 %v1205
        %5555 = vmatprep.subr.bf16.mxu0 %v1210
        %5556 = vmatpush1.bf16.msra.mxu0 %v1209
        %5557 = vmatprep.subr.bf16.mxu0 %v1214
        %5558 = vmatpush1.bf16.msra.mxu0 %v1213
        %5559 = vmatprep.subr.bf16.mxu0 %v1218
        %5560 = vmatpush1.bf16.msra.mxu0 %v1217
        %5561 = vmatprep.subr.bf16.mxu0 %v1222
        %5562 = vmatpush1.bf16.msra.mxu0 %v1221
        %5563 = vmatprep.subr.bf16.mxu0 %v1226
        %5564 = vmatpush1.bf16.msra.mxu0 %v1225
        %5565 = vmatprep.subr.bf16.mxu0 %v1230
        %5566 = vmatpush1.bf16.msra.mxu0 %v1229
        %5567 = vmatprep.subr.bf16.mxu0 %v1234
        %5568 = vmatpush1.bf16.msra.mxu0 %v1233
        %5569 = vmatprep.subr.bf16.mxu0 0
        %5570 = vmatpush1.bf16.msra.mxu0 0
        %5571 = vmatprep.subr.bf16.mxu0 0
        %5572 = vmatpush1.bf16.msra.mxu0 0
        %5573 = vmatprep.subr.bf16.mxu0 0
        %5574 = vmatpush1.bf16.msra.mxu0 0
        %5575 = vmatprep.subr.bf16.mxu0 0
        %5576 = vmatpush1.bf16.msra.mxu0 0
        %5577 = vmatprep.subr.bf16.mxu0 0
        %5578 = vmatpush1.bf16.msra.mxu0 0
        %5579 = vmatprep.subr.bf16.mxu0 0
        %5580 = vmatpush1.bf16.msra.mxu0 0
        %5581 = vmatprep.subr.bf16.mxu0 0
        %5582 = vmatpush1.bf16.msra.mxu0 0
        %5583 = vmatprep.subr.bf16.mxu0 0
        %5584 = vmatpush1.bf16.msra.mxu0 0
        %5585 = vmatprep.mubr.bf16.mxu0 0
        %5586 = vmatmul.mubr.bf16.gmra.mrb[0].mxu0 %v5114
        %v5587 = vpop.f32.mrb[0].mxu0
        %v5588 = vadd.f32 0.0, %v5587
        %v5589 = vpop.f32.mrb[0].mxu0
        %v5590 = vadd.f32 0.0, %v5589
        %v5591 = vpop.f32.mrb[0].mxu0
        %v5592 = vpop.f32.mrb[0].mxu0
        %5593 = vdwg.mxu0
        %v5596 = vunpack.c.l.s4 1966171168
        %v5597 = vunpack.c.0.s8 %v5596
        %v5598 = vlaneseq
        %v5599 = vshrl.u32 %v5598, 7
        %v5600 = vsub.s32 %v5597, %v5599
        %v5601 = vrot.slane %v5425, %v5600
        %v5602 = vcombine.high %v5601, %v5601
        %v5604 = vunpack.c.l.s4 1966171168
        %v5605 = vunpack.c.0.s8 %v5604
        %v5606 = vlaneseq
        %v5607 = vshrl.u32 %v5606, 7
        %v5608 = vsub.s32 %v5605, %v5607
        %v5609 = vrot.slane %v5601, %v5608
        %v5611 = vunpack.c.l.s4 1966171168
        %v5612 = vunpack.c.0.s8 %v5611
        %v5613 = vlaneseq
        %v5614 = vshrl.u32 %v5613, 7
        %v5615 = vsub.s32 %v5612, %v5614
        %v5616 = vrot.slane %v5602, %v5615
        %v5617 = vlaneseq
        %v5618 = vshrl.u32 %v5617, 7
        %v5619 = vsub.s32 0, %v5618
        %v5620 = vrot.slane %v5609, %v5619
        %v5621 = vlaneseq
        %v5622 = vshrl.u32 %v5621, 7
        %v5623 = vsub.s32 0, %v5622
        %v5624 = vrot.slane %v5616, %v5623
        %v5627 = vadd.f32 %v555, %v5620
        %v5628 = vadd.f32 %v556, %v5620
        %v5629 = vadd.f32 %v557, %v5620
        %v5630 = vadd.f32 %v558, %v5620
        %v5631 = vadd.f32 %v559, %v5620
        %v5632 = vadd.f32 %v560, %v5620
        %v5633 = vadd.f32 %v561, %v5620
        %v5634 = vadd.f32 %v562, %v5620
        %v5635 = vadd.f32 %v563, %v5620
        %v5636 = vadd.f32 %v564, %v5620
        %v5637 = vadd.f32 %v565, %v5620
        %v5638 = vadd.f32 %v566, %v5620
        %v5639 = vadd.f32 %v567, %v5620
        %v5640 = vadd.f32 %v568, %v5620
        %v5641 = vadd.f32 %v569, %v5620
        %v5642 = vadd.f32 %v570, %v5620
        %v5643 = vadd.f32 %v571, %v5624
        %v5644 = vadd.f32 %v572, %v5624
        %v5645 = vadd.f32 %v573, %v5624
        %v5646 = vadd.f32 %v574, %v5624
        %v5647 = vadd.f32 %v575, %v5624
        %v5648 = vadd.f32 %v576, %v5624
        %v5649 = vadd.f32 %v577, %v5624
        %v5650 = vadd.f32 %v578, %v5624
        %v5651 = vadd.f32 %v579, %v5624
        %v5652 = vadd.f32 %v580, %v5624
        %v5653 = vadd.f32 %v581, %v5624
        %v5654 = vadd.f32 %v582, %v5624
        %v5655 = vadd.f32 %v583, %v5624
        %v5656 = vadd.f32 %v584, %v5624
        %v5657 = vadd.f32 %v585, %v5624
        %v5658 = vadd.f32 %v586, %v5624
        %vm5659 = vcmp.gt.f32.partialorder %v5627, 0.0
        %vm5660 = vcmp.gt.f32.partialorder %v5628, 0.0
        %vm5661 = vcmp.gt.f32.partialorder %v5629, 0.0
        %vm5662 = vcmp.gt.f32.partialorder %v5630, 0.0
        %vm5663 = vcmp.gt.f32.partialorder %v5631, 0.0
        %vm5664 = vcmp.gt.f32.partialorder %v5632, 0.0
        %vm5665 = vcmp.gt.f32.partialorder %v5633, 0.0
        %vm5666 = vcmp.gt.f32.partialorder %v5634, 0.0
        %vm5667 = vcmp.gt.f32.partialorder %v5635, 0.0
        %vm5668 = vcmp.gt.f32.partialorder %v5636, 0.0
        %vm5669 = vcmp.gt.f32.partialorder %v5637, 0.0
        %vm5670 = vcmp.gt.f32.partialorder %v5638, 0.0
        %vm5671 = vcmp.gt.f32.partialorder %v5639, 0.0
        %vm5672 = vcmp.gt.f32.partialorder %v5640, 0.0
        %vm5673 = vcmp.gt.f32.partialorder %v5641, 0.0
        %vm5674 = vcmp.gt.f32.partialorder %v5642, 0.0
        %vm5675 = vcmp.gt.f32.partialorder %v5643, 0.0
        %vm5676 = vcmp.gt.f32.partialorder %v5644, 0.0
        %vm5677 = vcmp.gt.f32.partialorder %v5645, 0.0
        %vm5678 = vcmp.gt.f32.partialorder %v5646, 0.0
        %vm5679 = vcmp.gt.f32.partialorder %v5647, 0.0
        %vm5680 = vcmp.gt.f32.partialorder %v5648, 0.0
        %vm5681 = vcmp.gt.f32.partialorder %v5649, 0.0
        %vm5682 = vcmp.gt.f32.partialorder %v5650, 0.0
        %vm5683 = vcmp.gt.f32.partialorder %v5651, 0.0
        %vm5684 = vcmp.gt.f32.partialorder %v5652, 0.0
        %vm5685 = vcmp.gt.f32.partialorder %v5653, 0.0
        %vm5686 = vcmp.gt.f32.partialorder %v5654, 0.0
        %vm5687 = vcmp.gt.f32.partialorder %v5655, 0.0
        %vm5688 = vcmp.gt.f32.partialorder %v5656, 0.0
        %vm5689 = vcmp.gt.f32.partialorder %v5657, 0.0
        %vm5690 = vcmp.gt.f32.partialorder %v5658, 0.0
        %v5691 = vmul.f32 %v5627, 0.2
        %v5692 = vmul.f32 %v5628, 0.2
        %v5693 = vmul.f32 %v5629, 0.2
        %v5694 = vmul.f32 %v5630, 0.2
        %v5695 = vmul.f32 %v5631, 0.2
        %v5696 = vmul.f32 %v5632, 0.2
        %v5697 = vmul.f32 %v5633, 0.2
        %v5698 = vmul.f32 %v5634, 0.2
        %v5699 = vmul.f32 %v5635, 0.2
        %v5700 = vmul.f32 %v5636, 0.2
        %v5701 = vmul.f32 %v5637, 0.2
        %v5702 = vmul.f32 %v5638, 0.2
        %v5703 = vmul.f32 %v5639, 0.2
        %v5704 = vmul.f32 %v5640, 0.2
        %v5705 = vmul.f32 %v5641, 0.2
        %v5706 = vmul.f32 %v5642, 0.2
        %v5707 = vmul.f32 %v5643, 0.2
        %v5708 = vmul.f32 %v5644, 0.2
        %v5709 = vmul.f32 %v5645, 0.2
        %v5710 = vmul.f32 %v5646, 0.2
        %v5711 = vmul.f32 %v5647, 0.2
        %v5712 = vmul.f32 %v5648, 0.2
        %v5713 = vmul.f32 %v5649, 0.2
        %v5714 = vmul.f32 %v5650, 0.2
        %v5715 = vmul.f32 %v5651, 0.2
        %v5716 = vmul.f32 %v5652, 0.2
        %v5717 = vmul.f32 %v5653, 0.2
        %v5718 = vmul.f32 %v5654, 0.2
        %v5719 = vmul.f32 %v5655, 0.2
        %v5720 = vmul.f32 %v5656, 0.2
        %v5721 = vmul.f32 %v5657, 0.2
        %v5722 = vmul.f32 %v5658, 0.2
        %v5723 = vsel %vm5659, %v5627, %v5691
        %v5724 = vsel %vm5660, %v5628, %v5692
        %v5725 = vsel %vm5661, %v5629, %v5693
        %v5726 = vsel %vm5662, %v5630, %v5694
        %v5727 = vsel %vm5663, %v5631, %v5695
        %v5728 = vsel %vm5664, %v5632, %v5696
        %v5729 = vsel %vm5665, %v5633, %v5697
        %v5730 = vsel %vm5666, %v5634, %v5698
        %v5731 = vsel %vm5667, %v5635, %v5699
        %v5732 = vsel %vm5668, %v5636, %v5700
        %v5733 = vsel %vm5669, %v5637, %v5701
        %v5734 = vsel %vm5670, %v5638, %v5702
        %v5735 = vsel %vm5671, %v5639, %v5703
        %v5736 = vsel %vm5672, %v5640, %v5704
        %v5737 = vsel %vm5673, %v5641, %v5705
        %v5738 = vsel %vm5674, %v5642, %v5706
        %v5739 = vsel %vm5675, %v5643, %v5707
        %v5740 = vsel %vm5676, %v5644, %v5708
        %v5741 = vsel %vm5677, %v5645, %v5709
        %v5742 = vsel %vm5678, %v5646, %v5710
        %v5743 = vsel %vm5679, %v5647, %v5711
        %v5744 = vsel %vm5680, %v5648, %v5712
        %v5745 = vsel %vm5681, %v5649, %v5713
        %v5746 = vsel %vm5682, %v5650, %v5714
        %v5747 = vsel %vm5683, %v5651, %v5715
        %v5748 = vsel %vm5684, %v5652, %v5716
        %v5749 = vsel %vm5685, %v5653, %v5717
        %v5750 = vsel %vm5686, %v5654, %v5718
        %v5751 = vsel %vm5687, %v5655, %v5719
        %v5752 = vsel %vm5688, %v5656, %v5720
        %v5753 = vsel %vm5689, %v5657, %v5721
        %v5754 = vsel %vm5690, %v5658, %v5722
        %v5755 = vmul.f32 %v5723, %v1514
        %v5756 = vmul.f32 %v5724, %v1514
        %v5757 = vmul.f32 %v5725, %v1514
        %v5758 = vmul.f32 %v5726, %v1514
        %v5759 = vmul.f32 %v5727, %v1514
        %v5760 = vmul.f32 %v5728, %v1514
        %v5761 = vmul.f32 %v5729, %v1514
        %v5762 = vmul.f32 %v5730, %v1514
        %v5763 = vmul.f32 %v5731, %v1514
        %v5764 = vmul.f32 %v5732, %v1514
        %v5765 = vmul.f32 %v5733, %v1514
        %v5766 = vmul.f32 %v5734, %v1514
        %v5767 = vmul.f32 %v5735, %v1514
        %v5768 = vmul.f32 %v5736, %v1514
        %v5769 = vmul.f32 %v5737, %v1514
        %v5770 = vmul.f32 %v5738, %v1514
        %v5771 = vmul.f32 %v5739, %v1514
        %v5772 = vmul.f32 %v5740, %v1514
        %v5773 = vmul.f32 %v5741, %v1514
        %v5774 = vmul.f32 %v5742, %v1514
        %v5775 = vmul.f32 %v5743, %v1514
        %v5776 = vmul.f32 %v5744, %v1514
        %v5777 = vmul.f32 %v5745, %v1514
        %v5778 = vmul.f32 %v5746, %v1514
        %v5779 = vmul.f32 %v5747, %v1514
        %v5780 = vmul.f32 %v5748, %v1514
        %v5781 = vmul.f32 %v5749, %v1514
        %v5782 = vmul.f32 %v5750, %v1514
        %v5783 = vmul.f32 %v5751, %v1514
        %v5784 = vmul.f32 %v5752, %v1514
        %v5785 = vmul.f32 %v5753, %v1514
        %v5786 = vmul.f32 %v5754, %v1514
        %5787 = vadd.xlane.f32.xlu0 %v5755
        %v5788 = vpop.xlane.xlu0 %5787
        %5789 = vadd.xlane.f32.xlu0 %v5756
        %v5790 = vpop.xlane.xlu0 %5789
        %5791 = vadd.xlane.f32.xlu0 %v5757
        %v5792 = vpop.xlane.xlu0 %5791
        %5793 = vadd.xlane.f32.xlu0 %v5758
        %v5794 = vpop.xlane.xlu0 %5793
        %5795 = vadd.xlane.f32.xlu0 %v5759
        %v5796 = vpop.xlane.xlu0 %5795
        %5797 = vadd.xlane.f32.xlu0 %v5760
        %v5798 = vpop.xlane.xlu0 %5797
        %5799 = vadd.xlane.f32.xlu0 %v5761
        %v5800 = vpop.xlane.xlu0 %5799
        %5801 = vadd.xlane.f32.xlu0 %v5762
        %v5802 = vpop.xlane.xlu0 %5801
        %5803 = vadd.xlane.f32.xlu0 %v5763
        %v5804 = vpop.xlane.xlu0 %5803
        %5805 = vadd.xlane.f32.xlu0 %v5764
        %v5806 = vpop.xlane.xlu0 %5805
        %5807 = vadd.xlane.f32.xlu0 %v5765
        %v5808 = vpop.xlane.xlu0 %5807
        %5809 = vadd.xlane.f32.xlu0 %v5766
        %v5810 = vpop.xlane.xlu0 %5809
        %5811 = vadd.xlane.f32.xlu0 %v5767
        %v5812 = vpop.xlane.xlu0 %5811
        %5813 = vadd.xlane.f32.xlu0 %v5768
        %v5814 = vpop.xlane.xlu0 %5813
        %5815 = vadd.xlane.f32.xlu0 %v5769
        %v5816 = vpop.xlane.xlu0 %5815
        %5817 = vadd.xlane.f32.xlu0 %v5770
        %v5818 = vpop.xlane.xlu0 %5817
        %5819 = vadd.xlane.f32.xlu0 %v5771
        %v5820 = vpop.xlane.xlu0 %5819
        %5821 = vadd.xlane.f32.xlu0 %v5772
        %v5822 = vpop.xlane.xlu0 %5821
        %5823 = vadd.xlane.f32.xlu0 %v5773
        %v5824 = vpop.xlane.xlu0 %5823
        %5825 = vadd.xlane.f32.xlu0 %v5774
        %v5826 = vpop.xlane.xlu0 %5825
        %5827 = vadd.xlane.f32.xlu0 %v5775
        %v5828 = vpop.xlane.xlu0 %5827
        %5829 = vadd.xlane.f32.xlu0 %v5776
        %v5830 = vpop.xlane.xlu0 %5829
        %5831 = vadd.xlane.f32.xlu0 %v5777
        %v5832 = vpop.xlane.xlu0 %5831
        %5833 = vadd.xlane.f32.xlu0 %v5778
        %v5834 = vpop.xlane.xlu0 %5833
        %5835 = vadd.xlane.f32.xlu0 %v5779
        %v5836 = vpop.xlane.xlu0 %5835
        %5837 = vadd.xlane.f32.xlu0 %v5780
        %v5838 = vpop.xlane.xlu0 %5837
        %5839 = vadd.xlane.f32.xlu0 %v5781
        %v5840 = vpop.xlane.xlu0 %5839
        %5841 = vadd.xlane.f32.xlu0 %v5782
        %v5842 = vpop.xlane.xlu0 %5841
        %5843 = vadd.xlane.f32.xlu0 %v5783
        %v5844 = vpop.xlane.xlu0 %5843
        %5845 = vadd.xlane.f32.xlu0 %v5784
        %v5846 = vpop.xlane.xlu0 %5845
        %5847 = vadd.xlane.f32.xlu0 %v5785
        %v5848 = vpop.xlane.xlu0 %5847
        %5849 = vadd.xlane.f32.xlu0 %v5786
        %v5850 = vpop.xlane.xlu0 %5849
        %v5851 = vadd.f32 %v5788, %v1619
        %v5852 = vadd.f32 %v5790, %v1623
        %v5853 = vadd.f32 %v5792, %v1627
        %v5854 = vadd.f32 %v5794, %v1631
        %v5855 = vadd.f32 %v5796, %v1635
        %v5856 = vadd.f32 %v5798, %v1639
        %v5857 = vadd.f32 %v5800, %v1643
        %v5858 = vadd.f32 %v5802, %v1647
        %v5859 = vadd.f32 %v5804, %v1651
        %v5860 = vadd.f32 %v5806, %v1655
        %v5861 = vadd.f32 %v5808, %v1659
        %v5862 = vadd.f32 %v5810, %v1663
        %v5863 = vadd.f32 %v5812, %v1667
        %v5864 = vadd.f32 %v5814, %v1671
        %v5865 = vadd.f32 %v5816, %v1675
        %v5866 = vadd.f32 %v5818, %v1679
        %v5867 = vadd.f32 %v5820, %v1619
        %v5868 = vadd.f32 %v5822, %v1623
        %v5869 = vadd.f32 %v5824, %v1627
        %v5870 = vadd.f32 %v5826, %v1631
        %v5871 = vadd.f32 %v5828, %v1635
        %v5872 = vadd.f32 %v5830, %v1639
        %v5873 = vadd.f32 %v5832, %v1643
        %v5874 = vadd.f32 %v5834, %v1647
        %v5875 = vadd.f32 %v5836, %v1651
        %v5876 = vadd.f32 %v5838, %v1655
        %v5877 = vadd.f32 %v5840, %v1659
        %v5878 = vadd.f32 %v5842, %v1663
        %v5879 = vadd.f32 %v5844, %v1667
        %v5880 = vadd.f32 %v5846, %v1671
        %v5881 = vadd.f32 %v5848, %v1675
        %v5882 = vadd.f32 %v5850, %v1679
        %5915 = vset.pattern.permute.xlu0 0
        %5916 = vperm.xlu0 %5915, %v5851
        %v5917 = vpop.permute.xlu0 %5916
        %5918 = vset.pattern.permute.xlu0 0
        %5919 = vperm.xlu0 %5918, %v5852
        %v5920 = vpop.permute.xlu0 %5919
        %5921 = vset.pattern.permute.xlu0 0
        %5922 = vperm.xlu0 %5921, %v5853
        %v5923 = vpop.permute.xlu0 %5922
        %5924 = vset.pattern.permute.xlu0 0
        %5925 = vperm.xlu0 %5924, %v5854
        %v5926 = vpop.permute.xlu0 %5925
        %5927 = vset.pattern.permute.xlu0 0
        %5928 = vperm.xlu0 %5927, %v5855
        %v5929 = vpop.permute.xlu0 %5928
        %5930 = vset.pattern.permute.xlu0 0
        %5931 = vperm.xlu0 %5930, %v5856
        %v5932 = vpop.permute.xlu0 %5931
        %5933 = vset.pattern.permute.xlu0 0
        %5934 = vperm.xlu0 %5933, %v5857
        %v5935 = vpop.permute.xlu0 %5934
        %5936 = vset.pattern.permute.xlu0 0
        %5937 = vperm.xlu0 %5936, %v5858
        %v5938 = vpop.permute.xlu0 %5937
        %5939 = vset.pattern.permute.xlu0 0
        %5940 = vperm.xlu0 %5939, %v5859
        %v5941 = vpop.permute.xlu0 %5940
        %5942 = vset.pattern.permute.xlu0 0
        %5943 = vperm.xlu0 %5942, %v5860
        %v5944 = vpop.permute.xlu0 %5943
        %5945 = vset.pattern.permute.xlu0 0
        %5946 = vperm.xlu0 %5945, %v5861
        %v5947 = vpop.permute.xlu0 %5946
        %5948 = vset.pattern.permute.xlu0 0
        %5949 = vperm.xlu0 %5948, %v5862
        %v5950 = vpop.permute.xlu0 %5949
        %5951 = vset.pattern.permute.xlu0 0
        %5952 = vperm.xlu0 %5951, %v5863
        %v5953 = vpop.permute.xlu0 %5952
        %5954 = vset.pattern.permute.xlu0 0
        %5955 = vperm.xlu0 %5954, %v5864
        %v5956 = vpop.permute.xlu0 %5955
        %5957 = vset.pattern.permute.xlu0 0
        %5958 = vperm.xlu0 %5957, %v5865
        %v5959 = vpop.permute.xlu0 %5958
        %5960 = vset.pattern.permute.xlu0 0
        %5961 = vperm.xlu0 %5960, %v5866
        %v5962 = vpop.permute.xlu0 %5961
        %5963 = vset.pattern.permute.xlu0 0
        %5964 = vperm.xlu0 %5963, %v5867
        %v5965 = vpop.permute.xlu0 %5964
        %5966 = vset.pattern.permute.xlu0 0
        %5967 = vperm.xlu0 %5966, %v5868
        %v5968 = vpop.permute.xlu0 %5967
        %5969 = vset.pattern.permute.xlu0 0
        %5970 = vperm.xlu0 %5969, %v5869
        %v5971 = vpop.permute.xlu0 %5970
        %5972 = vset.pattern.permute.xlu0 0
        %5973 = vperm.xlu0 %5972, %v5870
        %v5974 = vpop.permute.xlu0 %5973
        %5975 = vset.pattern.permute.xlu0 0
        %5976 = vperm.xlu0 %5975, %v5871
        %v5977 = vpop.permute.xlu0 %5976
        %5978 = vset.pattern.permute.xlu0 0
        %5979 = vperm.xlu0 %5978, %v5872
        %v5980 = vpop.permute.xlu0 %5979
        %5981 = vset.pattern.permute.xlu0 0
        %5982 = vperm.xlu0 %5981, %v5873
        %v5983 = vpop.permute.xlu0 %5982
        %5984 = vset.pattern.permute.xlu0 0
        %5985 = vperm.xlu0 %5984, %v5874
        %v5986 = vpop.permute.xlu0 %5985
        %5987 = vset.pattern.permute.xlu0 0
        %5988 = vperm.xlu0 %5987, %v5875
        %v5989 = vpop.permute.xlu0 %5988
        %5990 = vset.pattern.permute.xlu0 0
        %5991 = vperm.xlu0 %5990, %v5876
        %v5992 = vpop.permute.xlu0 %5991
        %5993 = vset.pattern.permute.xlu0 0
        %5994 = vperm.xlu0 %5993, %v5877
        %v5995 = vpop.permute.xlu0 %5994
        %5996 = vset.pattern.permute.xlu0 0
        %5997 = vperm.xlu0 %5996, %v5878
        %v5998 = vpop.permute.xlu0 %5997
        %5999 = vset.pattern.permute.xlu0 0
        %6000 = vperm.xlu0 %5999, %v5879
        %v6001 = vpop.permute.xlu0 %6000
        %6002 = vset.pattern.permute.xlu0 0
        %6003 = vperm.xlu0 %6002, %v5880
        %v6004 = vpop.permute.xlu0 %6003
        %6005 = vset.pattern.permute.xlu0 0
        %6006 = vperm.xlu0 %6005, %v5881
        %v6007 = vpop.permute.xlu0 %6006
        %6008 = vset.pattern.permute.xlu0 0
        %6009 = vperm.xlu0 %6008, %v5882
        %v6010 = vpop.permute.xlu0 %6009
        %v6011 = vlaneseq
        %v6012 = vshrl.u32 %v6011, 7
        %v6013 = vsub.s32 %v1857, %v6012
        %v6014 = vrot.slane %v5917, %v6013
        %v6015 = vlaneseq
        %v6016 = vshrl.u32 %v6015, 7
        %v6017 = vsub.s32 %v1862, %v6016
        %v6018 = vrot.slane %v5920, %v6017
        %v6019 = vsel %vm1867, %v6018, %v6014
        %v6020 = vlaneseq
        %v6021 = vshrl.u32 %v6020, 7
        %v6022 = vsub.s32 %v1869, %v6021
        %v6023 = vrot.slane %v5923, %v6022
        %v6024 = vsel %vm1874, %v6023, %v6019
        %v6025 = vlaneseq
        %v6026 = vshrl.u32 %v6025, 7
        %v6027 = vsub.s32 %v1876, %v6026
        %v6028 = vrot.slane %v5926, %v6027
        %v6029 = vsel %vm1881, %v6028, %v6024
        %v6030 = vlaneseq
        %v6031 = vshrl.u32 %v6030, 7
        %v6032 = vsub.s32 %v1883, %v6031
        %v6033 = vrot.slane %v5929, %v6032
        %v6034 = vsel %vm1888, %v6033, %v6029
        %v6035 = vlaneseq
        %v6036 = vshrl.u32 %v6035, 7
        %v6037 = vsub.s32 %v1890, %v6036
        %v6038 = vrot.slane %v5932, %v6037
        %v6039 = vsel %vm1895, %v6038, %v6034
        %v6040 = vlaneseq
        %v6041 = vshrl.u32 %v6040, 7
        %v6042 = vsub.s32 %v1897, %v6041
        %v6043 = vrot.slane %v5935, %v6042
        %v6044 = vsel %vm1902, %v6043, %v6039
        %v6045 = vlaneseq
        %v6046 = vshrl.u32 %v6045, 7
        %v6047 = vsub.s32 %v1904, %v6046
        %v6048 = vrot.slane %v5938, %v6047
        %v6049 = vsel %vm1909, %v6048, %v6044
        %v6050 = vlaneseq
        %v6051 = vshrl.u32 %v6050, 7
        %v6052 = vsub.s32 %v1911, %v6051
        %v6053 = vrot.slane %v5941, %v6052
        %v6054 = vsel %vm1916, %v6053, %v6049
        %v6055 = vlaneseq
        %v6056 = vshrl.u32 %v6055, 7
        %v6057 = vsub.s32 %v1918, %v6056
        %v6058 = vrot.slane %v5944, %v6057
        %v6059 = vsel %vm1923, %v6058, %v6054
        %v6060 = vlaneseq
        %v6061 = vshrl.u32 %v6060, 7
        %v6062 = vsub.s32 %v1925, %v6061
        %v6063 = vrot.slane %v5947, %v6062
        %v6064 = vsel %vm1930, %v6063, %v6059
        %v6065 = vlaneseq
        %v6066 = vshrl.u32 %v6065, 7
        %v6067 = vsub.s32 %v1932, %v6066
        %v6068 = vrot.slane %v5950, %v6067
        %v6069 = vsel %vm1937, %v6068, %v6064
        %v6070 = vlaneseq
        %v6071 = vshrl.u32 %v6070, 7
        %v6072 = vsub.s32 %v1939, %v6071
        %v6073 = vrot.slane %v5953, %v6072
        %v6074 = vsel %vm1944, %v6073, %v6069
        %v6075 = vlaneseq
        %v6076 = vshrl.u32 %v6075, 7
        %v6077 = vsub.s32 %v1946, %v6076
        %v6078 = vrot.slane %v5956, %v6077
        %v6079 = vsel %vm1951, %v6078, %v6074
        %v6080 = vlaneseq
        %v6081 = vshrl.u32 %v6080, 7
        %v6082 = vsub.s32 %v1953, %v6081
        %v6083 = vrot.slane %v5959, %v6082
        %v6084 = vsel %vm1958, %v6083, %v6079
        %v6085 = vlaneseq
        %v6086 = vshrl.u32 %v6085, 7
        %v6087 = vsub.s32 %v1960, %v6086
        %v6088 = vrot.slane %v5962, %v6087
        %v6089 = vsel %vm1965, %v6088, %v6084
        %v6090 = vlaneseq
        %v6091 = vshrl.u32 %v6090, 7
        %v6092 = vsub.s32 %v1857, %v6091
        %v6093 = vrot.slane %v5965, %v6092
        %v6094 = vlaneseq
        %v6095 = vshrl.u32 %v6094, 7
        %v6096 = vsub.s32 %v1862, %v6095
        %v6097 = vrot.slane %v5968, %v6096
        %v6098 = vsel %vm1867, %v6097, %v6093
        %v6099 = vlaneseq
        %v6100 = vshrl.u32 %v6099, 7
        %v6101 = vsub.s32 %v1869, %v6100
        %v6102 = vrot.slane %v5971, %v6101
        %v6103 = vsel %vm1874, %v6102, %v6098
        %v6104 = vlaneseq
        %v6105 = vshrl.u32 %v6104, 7
        %v6106 = vsub.s32 %v1876, %v6105
        %v6107 = vrot.slane %v5974, %v6106
        %v6108 = vsel %vm1881, %v6107, %v6103
        %v6109 = vlaneseq
        %v6110 = vshrl.u32 %v6109, 7
        %v6111 = vsub.s32 %v1883, %v6110
        %v6112 = vrot.slane %v5977, %v6111
        %v6113 = vsel %vm1888, %v6112, %v6108
        %v6114 = vlaneseq
        %v6115 = vshrl.u32 %v6114, 7
        %v6116 = vsub.s32 %v1890, %v6115
        %v6117 = vrot.slane %v5980, %v6116
        %v6118 = vsel %vm1895, %v6117, %v6113
        %v6119 = vlaneseq
        %v6120 = vshrl.u32 %v6119, 7
        %v6121 = vsub.s32 %v1897, %v6120
        %v6122 = vrot.slane %v5983, %v6121
        %v6123 = vsel %vm1902, %v6122, %v6118
        %v6124 = vlaneseq
        %v6125 = vshrl.u32 %v6124, 7
        %v6126 = vsub.s32 %v1904, %v6125
        %v6127 = vrot.slane %v5986, %v6126
        %v6128 = vsel %vm1909, %v6127, %v6123
        %v6129 = vlaneseq
        %v6130 = vshrl.u32 %v6129, 7
        %v6131 = vsub.s32 %v1911, %v6130
        %v6132 = vrot.slane %v5989, %v6131
        %v6133 = vsel %vm1916, %v6132, %v6128
        %v6134 = vlaneseq
        %v6135 = vshrl.u32 %v6134, 7
        %v6136 = vsub.s32 %v1918, %v6135
        %v6137 = vrot.slane %v5992, %v6136
        %v6138 = vsel %vm1923, %v6137, %v6133
        %v6139 = vlaneseq
        %v6140 = vshrl.u32 %v6139, 7
        %v6141 = vsub.s32 %v1925, %v6140
        %v6142 = vrot.slane %v5995, %v6141
        %v6143 = vsel %vm1930, %v6142, %v6138
        %v6144 = vlaneseq
        %v6145 = vshrl.u32 %v6144, 7
        %v6146 = vsub.s32 %v1932, %v6145
        %v6147 = vrot.slane %v5998, %v6146
        %v6148 = vsel %vm1937, %v6147, %v6143
        %v6149 = vlaneseq
        %v6150 = vshrl.u32 %v6149, 7
        %v6151 = vsub.s32 %v1939, %v6150
        %v6152 = vrot.slane %v6001, %v6151
        %v6153 = vsel %vm1944, %v6152, %v6148
        %v6154 = vlaneseq
        %v6155 = vshrl.u32 %v6154, 7
        %v6156 = vsub.s32 %v1946, %v6155
        %v6157 = vrot.slane %v6004, %v6156
        %v6158 = vsel %vm1951, %v6157, %v6153
        %v6159 = vlaneseq
        %v6160 = vshrl.u32 %v6159, 7
        %v6161 = vsub.s32 %v1953, %v6160
        %v6162 = vrot.slane %v6007, %v6161
        %v6163 = vsel %vm1958, %v6162, %v6158
        %v6164 = vlaneseq
        %v6165 = vshrl.u32 %v6164, 7
        %v6166 = vsub.s32 %v1960, %v6165
        %v6167 = vrot.slane %v6010, %v6166
        %v6168 = vsel %vm1965, %v6167, %v6163
        %v6169 = vsel %vm2046, %v6168, %v6089
        %v6171 = vsel %vm2049, %v6169, -inf
        %6172 = vmax.xlane.f32.xlu0 %v6171
        %v6173 = vpop.xlane.xlu0 %6172
        %v6175 = vlaneseq
        %v6176 = vshrl.u32 %v6175, 7
        %v6177 = vsub.s32 0, %v6176
        %v6178 = vrot.slane %v6173, %v6177
        %v6179 = vlaneseq
        %v6180 = vshrl.u32 %v6179, 7
        %v6181 = vsub.s32 1, %v6180
        %v6182 = vrot.slane %v6173, %v6181
        %v6185 = vsub.f32 %v5851, %v6178
        %v6186 = vsub.f32 %v5852, %v6178
        %v6187 = vsub.f32 %v5853, %v6178
        %v6188 = vsub.f32 %v5854, %v6178
        %v6189 = vsub.f32 %v5855, %v6178
        %v6190 = vsub.f32 %v5856, %v6178
        %v6191 = vsub.f32 %v5857, %v6178
        %v6192 = vsub.f32 %v5858, %v6178
        %v6193 = vsub.f32 %v5859, %v6178
        %v6194 = vsub.f32 %v5860, %v6178
        %v6195 = vsub.f32 %v5861, %v6178
        %v6196 = vsub.f32 %v5862, %v6178
        %v6197 = vsub.f32 %v5863, %v6178
        %v6198 = vsub.f32 %v5864, %v6178
        %v6199 = vsub.f32 %v5865, %v6178
        %v6200 = vsub.f32 %v5866, %v6178
        %v6201 = vsub.f32 %v5867, %v6182
        %v6202 = vsub.f32 %v5868, %v6182
        %v6203 = vsub.f32 %v5869, %v6182
        %v6204 = vsub.f32 %v5870, %v6182
        %v6205 = vsub.f32 %v5871, %v6182
        %v6206 = vsub.f32 %v5872, %v6182
        %v6207 = vsub.f32 %v5873, %v6182
        %v6208 = vsub.f32 %v5874, %v6182
        %v6209 = vsub.f32 %v5875, %v6182
        %v6210 = vsub.f32 %v5876, %v6182
        %v6211 = vsub.f32 %v5877, %v6182
        %v6212 = vsub.f32 %v5878, %v6182
        %v6213 = vsub.f32 %v5879, %v6182
        %v6214 = vsub.f32 %v5880, %v6182
        %v6215 = vsub.f32 %v5881, %v6182
        %v6216 = vsub.f32 %v5882, %v6182
        %v6217 = vmul.f32 %v6185, 1.442695
        %v6218 = vpow.pop %v6217
        %v6219 = vmul.f32 %v6186, 1.442695
        %v6220 = vpow.pop %v6219
        %v6221 = vmul.f32 %v6187, 1.442695
        %v6222 = vpow.pop %v6221
        %v6223 = vmul.f32 %v6188, 1.442695
        %v6224 = vpow.pop %v6223
        %v6225 = vmul.f32 %v6189, 1.442695
        %v6226 = vpow.pop %v6225
        %v6227 = vmul.f32 %v6190, 1.442695
        %v6228 = vpow.pop %v6227
        %v6229 = vmul.f32 %v6191, 1.442695
        %v6230 = vpow.pop %v6229
        %v6231 = vmul.f32 %v6192, 1.442695
        %v6232 = vpow.pop %v6231
        %v6233 = vmul.f32 %v6193, 1.442695
        %v6234 = vpow.pop %v6233
        %v6235 = vmul.f32 %v6194, 1.442695
        %v6236 = vpow.pop %v6235
        %v6237 = vmul.f32 %v6195, 1.442695
        %v6238 = vpow.pop %v6237
        %v6239 = vmul.f32 %v6196, 1.442695
        %v6240 = vpow.pop %v6239
        %v6241 = vmul.f32 %v6197, 1.442695
        %v6242 = vpow.pop %v6241
        %v6243 = vmul.f32 %v6198, 1.442695
        %v6244 = vpow.pop %v6243
        %v6245 = vmul.f32 %v6199, 1.442695
        %v6246 = vpow.pop %v6245
        %v6247 = vmul.f32 %v6200, 1.442695
        %v6248 = vpow.pop %v6247
        %v6249 = vmul.f32 %v6201, 1.442695
        %v6250 = vpow.pop %v6249
        %v6251 = vmul.f32 %v6202, 1.442695
        %v6252 = vpow.pop %v6251
        %v6253 = vmul.f32 %v6203, 1.442695
        %v6254 = vpow.pop %v6253
        %v6255 = vmul.f32 %v6204, 1.442695
        %v6256 = vpow.pop %v6255
        %v6257 = vmul.f32 %v6205, 1.442695
        %v6258 = vpow.pop %v6257
        %v6259 = vmul.f32 %v6206, 1.442695
        %v6260 = vpow.pop %v6259
        %v6261 = vmul.f32 %v6207, 1.442695
        %v6262 = vpow.pop %v6261
        %v6263 = vmul.f32 %v6208, 1.442695
        %v6264 = vpow.pop %v6263
        %v6265 = vmul.f32 %v6209, 1.442695
        %v6266 = vpow.pop %v6265
        %v6267 = vmul.f32 %v6210, 1.442695
        %v6268 = vpow.pop %v6267
        %v6269 = vmul.f32 %v6211, 1.442695
        %v6270 = vpow.pop %v6269
        %v6271 = vmul.f32 %v6212, 1.442695
        %v6272 = vpow.pop %v6271
        %v6273 = vmul.f32 %v6213, 1.442695
        %v6274 = vpow.pop %v6273
        %v6275 = vmul.f32 %v6214, 1.442695
        %v6276 = vpow.pop %v6275
        %v6277 = vmul.f32 %v6215, 1.442695
        %v6278 = vpow.pop %v6277
        %v6279 = vmul.f32 %v6216, 1.442695
        %v6280 = vpow.pop %v6279
        %6313 = vset.pattern.permute.xlu0 0
        %6314 = vperm.xlu0 %6313, %v6218
        %v6315 = vpop.permute.xlu0 %6314
        %6316 = vset.pattern.permute.xlu0 0
        %6317 = vperm.xlu0 %6316, %v6220
        %v6318 = vpop.permute.xlu0 %6317
        %6319 = vset.pattern.permute.xlu0 0
        %6320 = vperm.xlu0 %6319, %v6222
        %v6321 = vpop.permute.xlu0 %6320
        %6322 = vset.pattern.permute.xlu0 0
        %6323 = vperm.xlu0 %6322, %v6224
        %v6324 = vpop.permute.xlu0 %6323
        %6325 = vset.pattern.permute.xlu0 0
        %6326 = vperm.xlu0 %6325, %v6226
        %v6327 = vpop.permute.xlu0 %6326
        %6328 = vset.pattern.permute.xlu0 0
        %6329 = vperm.xlu0 %6328, %v6228
        %v6330 = vpop.permute.xlu0 %6329
        %6331 = vset.pattern.permute.xlu0 0
        %6332 = vperm.xlu0 %6331, %v6230
        %v6333 = vpop.permute.xlu0 %6332
        %6334 = vset.pattern.permute.xlu0 0
        %6335 = vperm.xlu0 %6334, %v6232
        %v6336 = vpop.permute.xlu0 %6335
        %6337 = vset.pattern.permute.xlu0 0
        %6338 = vperm.xlu0 %6337, %v6234
        %v6339 = vpop.permute.xlu0 %6338
        %6340 = vset.pattern.permute.xlu0 0
        %6341 = vperm.xlu0 %6340, %v6236
        %v6342 = vpop.permute.xlu0 %6341
        %6343 = vset.pattern.permute.xlu0 0
        %6344 = vperm.xlu0 %6343, %v6238
        %v6345 = vpop.permute.xlu0 %6344
        %6346 = vset.pattern.permute.xlu0 0
        %6347 = vperm.xlu0 %6346, %v6240
        %v6348 = vpop.permute.xlu0 %6347
        %6349 = vset.pattern.permute.xlu0 0
        %6350 = vperm.xlu0 %6349, %v6242
        %v6351 = vpop.permute.xlu0 %6350
        %6352 = vset.pattern.permute.xlu0 0
        %6353 = vperm.xlu0 %6352, %v6244
        %v6354 = vpop.permute.xlu0 %6353
        %6355 = vset.pattern.permute.xlu0 0
        %6356 = vperm.xlu0 %6355, %v6246
        %v6357 = vpop.permute.xlu0 %6356
        %6358 = vset.pattern.permute.xlu0 0
        %6359 = vperm.xlu0 %6358, %v6248
        %v6360 = vpop.permute.xlu0 %6359
        %6361 = vset.pattern.permute.xlu0 0
        %6362 = vperm.xlu0 %6361, %v6250
        %v6363 = vpop.permute.xlu0 %6362
        %6364 = vset.pattern.permute.xlu0 0
        %6365 = vperm.xlu0 %6364, %v6252
        %v6366 = vpop.permute.xlu0 %6365
        %6367 = vset.pattern.permute.xlu0 0
        %6368 = vperm.xlu0 %6367, %v6254
        %v6369 = vpop.permute.xlu0 %6368
        %6370 = vset.pattern.permute.xlu0 0
        %6371 = vperm.xlu0 %6370, %v6256
        %v6372 = vpop.permute.xlu0 %6371
        %6373 = vset.pattern.permute.xlu0 0
        %6374 = vperm.xlu0 %6373, %v6258
        %v6375 = vpop.permute.xlu0 %6374
        %6376 = vset.pattern.permute.xlu0 0
        %6377 = vperm.xlu0 %6376, %v6260
        %v6378 = vpop.permute.xlu0 %6377
        %6379 = vset.pattern.permute.xlu0 0
        %6380 = vperm.xlu0 %6379, %v6262
        %v6381 = vpop.permute.xlu0 %6380
        %6382 = vset.pattern.permute.xlu0 0
        %6383 = vperm.xlu0 %6382, %v6264
        %v6384 = vpop.permute.xlu0 %6383
        %6385 = vset.pattern.permute.xlu0 0
        %6386 = vperm.xlu0 %6385, %v6266
        %v6387 = vpop.permute.xlu0 %6386
        %6388 = vset.pattern.permute.xlu0 0
        %6389 = vperm.xlu0 %6388, %v6268
        %v6390 = vpop.permute.xlu0 %6389
        %6391 = vset.pattern.permute.xlu0 0
        %6392 = vperm.xlu0 %6391, %v6270
        %v6393 = vpop.permute.xlu0 %6392
        %6394 = vset.pattern.permute.xlu0 0
        %6395 = vperm.xlu0 %6394, %v6272
        %v6396 = vpop.permute.xlu0 %6395
        %6397 = vset.pattern.permute.xlu0 0
        %6398 = vperm.xlu0 %6397, %v6274
        %v6399 = vpop.permute.xlu0 %6398
        %6400 = vset.pattern.permute.xlu0 0
        %6401 = vperm.xlu0 %6400, %v6276
        %v6402 = vpop.permute.xlu0 %6401
        %6403 = vset.pattern.permute.xlu0 0
        %6404 = vperm.xlu0 %6403, %v6278
        %v6405 = vpop.permute.xlu0 %6404
        %6406 = vset.pattern.permute.xlu0 0
        %6407 = vperm.xlu0 %6406, %v6280
        %v6408 = vpop.permute.xlu0 %6407
        %v6409 = vlaneseq
        %v6410 = vshrl.u32 %v6409, 7
        %v6411 = vsub.s32 %v1857, %v6410
        %v6412 = vrot.slane %v6315, %v6411
        %v6413 = vlaneseq
        %v6414 = vshrl.u32 %v6413, 7
        %v6415 = vsub.s32 %v1862, %v6414
        %v6416 = vrot.slane %v6318, %v6415
        %v6417 = vsel %vm1867, %v6416, %v6412
        %v6418 = vlaneseq
        %v6419 = vshrl.u32 %v6418, 7
        %v6420 = vsub.s32 %v1869, %v6419
        %v6421 = vrot.slane %v6321, %v6420
        %v6422 = vsel %vm1874, %v6421, %v6417
        %v6423 = vlaneseq
        %v6424 = vshrl.u32 %v6423, 7
        %v6425 = vsub.s32 %v1876, %v6424
        %v6426 = vrot.slane %v6324, %v6425
        %v6427 = vsel %vm1881, %v6426, %v6422
        %v6428 = vlaneseq
        %v6429 = vshrl.u32 %v6428, 7
        %v6430 = vsub.s32 %v1883, %v6429
        %v6431 = vrot.slane %v6327, %v6430
        %v6432 = vsel %vm1888, %v6431, %v6427
        %v6433 = vlaneseq
        %v6434 = vshrl.u32 %v6433, 7
        %v6435 = vsub.s32 %v1890, %v6434
        %v6436 = vrot.slane %v6330, %v6435
        %v6437 = vsel %vm1895, %v6436, %v6432
        %v6438 = vlaneseq
        %v6439 = vshrl.u32 %v6438, 7
        %v6440 = vsub.s32 %v1897, %v6439
        %v6441 = vrot.slane %v6333, %v6440
        %v6442 = vsel %vm1902, %v6441, %v6437
        %v6443 = vlaneseq
        %v6444 = vshrl.u32 %v6443, 7
        %v6445 = vsub.s32 %v1904, %v6444
        %v6446 = vrot.slane %v6336, %v6445
        %v6447 = vsel %vm1909, %v6446, %v6442
        %v6448 = vlaneseq
        %v6449 = vshrl.u32 %v6448, 7
        %v6450 = vsub.s32 %v1911, %v6449
        %v6451 = vrot.slane %v6339, %v6450
        %v6452 = vsel %vm1916, %v6451, %v6447
        %v6453 = vlaneseq
        %v6454 = vshrl.u32 %v6453, 7
        %v6455 = vsub.s32 %v1918, %v6454
        %v6456 = vrot.slane %v6342, %v6455
        %v6457 = vsel %vm1923, %v6456, %v6452
        %v6458 = vlaneseq
        %v6459 = vshrl.u32 %v6458, 7
        %v6460 = vsub.s32 %v1925, %v6459
        %v6461 = vrot.slane %v6345, %v6460
        %v6462 = vsel %vm1930, %v6461, %v6457
        %v6463 = vlaneseq
        %v6464 = vshrl.u32 %v6463, 7
        %v6465 = vsub.s32 %v1932, %v6464
        %v6466 = vrot.slane %v6348, %v6465
        %v6467 = vsel %vm1937, %v6466, %v6462
        %v6468 = vlaneseq
        %v6469 = vshrl.u32 %v6468, 7
        %v6470 = vsub.s32 %v1939, %v6469
        %v6471 = vrot.slane %v6351, %v6470
        %v6472 = vsel %vm1944, %v6471, %v6467
        %v6473 = vlaneseq
        %v6474 = vshrl.u32 %v6473, 7
        %v6475 = vsub.s32 %v1946, %v6474
        %v6476 = vrot.slane %v6354, %v6475
        %v6477 = vsel %vm1951, %v6476, %v6472
        %v6478 = vlaneseq
        %v6479 = vshrl.u32 %v6478, 7
        %v6480 = vsub.s32 %v1953, %v6479
        %v6481 = vrot.slane %v6357, %v6480
        %v6482 = vsel %vm1958, %v6481, %v6477
        %v6483 = vlaneseq
        %v6484 = vshrl.u32 %v6483, 7
        %v6485 = vsub.s32 %v1960, %v6484
        %v6486 = vrot.slane %v6360, %v6485
        %v6487 = vsel %vm1965, %v6486, %v6482
        %v6488 = vlaneseq
        %v6489 = vshrl.u32 %v6488, 7
        %v6490 = vsub.s32 %v1857, %v6489
        %v6491 = vrot.slane %v6363, %v6490
        %v6492 = vlaneseq
        %v6493 = vshrl.u32 %v6492, 7
        %v6494 = vsub.s32 %v1862, %v6493
        %v6495 = vrot.slane %v6366, %v6494
        %v6496 = vsel %vm1867, %v6495, %v6491
        %v6497 = vlaneseq
        %v6498 = vshrl.u32 %v6497, 7
        %v6499 = vsub.s32 %v1869, %v6498
        %v6500 = vrot.slane %v6369, %v6499
        %v6501 = vsel %vm1874, %v6500, %v6496
        %v6502 = vlaneseq
        %v6503 = vshrl.u32 %v6502, 7
        %v6504 = vsub.s32 %v1876, %v6503
        %v6505 = vrot.slane %v6372, %v6504
        %v6506 = vsel %vm1881, %v6505, %v6501
        %v6507 = vlaneseq
        %v6508 = vshrl.u32 %v6507, 7
        %v6509 = vsub.s32 %v1883, %v6508
        %v6510 = vrot.slane %v6375, %v6509
        %v6511 = vsel %vm1888, %v6510, %v6506
        %v6512 = vlaneseq
        %v6513 = vshrl.u32 %v6512, 7
        %v6514 = vsub.s32 %v1890, %v6513
        %v6515 = vrot.slane %v6378, %v6514
        %v6516 = vsel %vm1895, %v6515, %v6511
        %v6517 = vlaneseq
        %v6518 = vshrl.u32 %v6517, 7
        %v6519 = vsub.s32 %v1897, %v6518
        %v6520 = vrot.slane %v6381, %v6519
        %v6521 = vsel %vm1902, %v6520, %v6516
        %v6522 = vlaneseq
        %v6523 = vshrl.u32 %v6522, 7
        %v6524 = vsub.s32 %v1904, %v6523
        %v6525 = vrot.slane %v6384, %v6524
        %v6526 = vsel %vm1909, %v6525, %v6521
        %v6527 = vlaneseq
        %v6528 = vshrl.u32 %v6527, 7
        %v6529 = vsub.s32 %v1911, %v6528
        %v6530 = vrot.slane %v6387, %v6529
        %v6531 = vsel %vm1916, %v6530, %v6526
        %v6532 = vlaneseq
        %v6533 = vshrl.u32 %v6532, 7
        %v6534 = vsub.s32 %v1918, %v6533
        %v6535 = vrot.slane %v6390, %v6534
        %v6536 = vsel %vm1923, %v6535, %v6531
        %v6537 = vlaneseq
        %v6538 = vshrl.u32 %v6537, 7
        %v6539 = vsub.s32 %v1925, %v6538
        %v6540 = vrot.slane %v6393, %v6539
        %v6541 = vsel %vm1930, %v6540, %v6536
        %v6542 = vlaneseq
        %v6543 = vshrl.u32 %v6542, 7
        %v6544 = vsub.s32 %v1932, %v6543
        %v6545 = vrot.slane %v6396, %v6544
        %v6546 = vsel %vm1937, %v6545, %v6541
        %v6547 = vlaneseq
        %v6548 = vshrl.u32 %v6547, 7
        %v6549 = vsub.s32 %v1939, %v6548
        %v6550 = vrot.slane %v6399, %v6549
        %v6551 = vsel %vm1944, %v6550, %v6546
        %v6552 = vlaneseq
        %v6553 = vshrl.u32 %v6552, 7
        %v6554 = vsub.s32 %v1946, %v6553
        %v6555 = vrot.slane %v6402, %v6554
        %v6556 = vsel %vm1951, %v6555, %v6551
        %v6557 = vlaneseq
        %v6558 = vshrl.u32 %v6557, 7
        %v6559 = vsub.s32 %v1953, %v6558
        %v6560 = vrot.slane %v6405, %v6559
        %v6561 = vsel %vm1958, %v6560, %v6556
        %v6562 = vlaneseq
        %v6563 = vshrl.u32 %v6562, 7
        %v6564 = vsub.s32 %v1960, %v6563
        %v6565 = vrot.slane %v6408, %v6564
        %v6566 = vsel %vm1965, %v6565, %v6561
        %v6567 = vsel %vm2046, %v6566, %v6487
        %v6569 = vsel %vm2049, %v6567, 0.0
        %6570 = vadd.xlane.f32.xlu0 %v6569
        %v6571 = vpop.xlane.xlu0 %6570
        %v6572 = vrcp.pop %v6571
        %v6574 = vlaneseq
        %v6575 = vshrl.u32 %v6574, 7
        %v6576 = vsub.s32 0, %v6575
        %v6577 = vrot.slane %v6572, %v6576
        %v6578 = vlaneseq
        %v6579 = vshrl.u32 %v6578, 7
        %v6580 = vsub.s32 1, %v6579
        %v6581 = vrot.slane %v6572, %v6580
        %v6584 = vmul.f32 %v6218, %v6577
        %v6585 = vmul.f32 %v6220, %v6577
        %v6586 = vmul.f32 %v6222, %v6577
        %v6587 = vmul.f32 %v6224, %v6577
        %v6588 = vmul.f32 %v6226, %v6577
        %v6589 = vmul.f32 %v6228, %v6577
        %v6590 = vmul.f32 %v6230, %v6577
        %v6591 = vmul.f32 %v6232, %v6577
        %v6592 = vmul.f32 %v6234, %v6577
        %v6593 = vmul.f32 %v6236, %v6577
        %v6594 = vmul.f32 %v6238, %v6577
        %v6595 = vmul.f32 %v6240, %v6577
        %v6596 = vmul.f32 %v6242, %v6577
        %v6597 = vmul.f32 %v6244, %v6577
        %v6598 = vmul.f32 %v6246, %v6577
        %v6599 = vmul.f32 %v6248, %v6577
        %v6600 = vmul.f32 %v6250, %v6581
        %v6601 = vmul.f32 %v6252, %v6581
        %v6602 = vmul.f32 %v6254, %v6581
        %v6603 = vmul.f32 %v6256, %v6581
        %v6604 = vmul.f32 %v6258, %v6581
        %v6605 = vmul.f32 %v6260, %v6581
        %v6606 = vmul.f32 %v6262, %v6581
        %v6607 = vmul.f32 %v6264, %v6581
        %v6608 = vmul.f32 %v6266, %v6581
        %v6609 = vmul.f32 %v6268, %v6581
        %v6610 = vmul.f32 %v6270, %v6581
        %v6611 = vmul.f32 %v6272, %v6581
        %v6612 = vmul.f32 %v6274, %v6581
        %v6613 = vmul.f32 %v6276, %v6581
        %v6614 = vmul.f32 %v6278, %v6581
        %v6615 = vmul.f32 %v6280, %v6581
        %6617 = vset.pattern.permute.xlu0 0
        %6618 = vperm.xlu0 %6617, %v6584
        %v6619 = vpop.permute.xlu0 %6618
        %6622 = vset.pattern.permute.xlu0 0
        %6623 = vperm.xlu0 %6622, %v6585
        %v6624 = vpop.permute.xlu0 %6623
        %6627 = vset.pattern.permute.xlu0 0
        %6628 = vperm.xlu0 %6627, %v6586
        %v6629 = vpop.permute.xlu0 %6628
        %6632 = vset.pattern.permute.xlu0 0
        %6633 = vperm.xlu0 %6632, %v6587
        %v6634 = vpop.permute.xlu0 %6633
        %6637 = vset.pattern.permute.xlu0 0
        %6638 = vperm.xlu0 %6637, %v6588
        %v6639 = vpop.permute.xlu0 %6638
        %6642 = vset.pattern.permute.xlu0 0
        %6643 = vperm.xlu0 %6642, %v6589
        %v6644 = vpop.permute.xlu0 %6643
        %6647 = vset.pattern.permute.xlu0 0
        %6648 = vperm.xlu0 %6647, %v6590
        %v6649 = vpop.permute.xlu0 %6648
        %6652 = vset.pattern.permute.xlu0 0
        %6653 = vperm.xlu0 %6652, %v6591
        %v6654 = vpop.permute.xlu0 %6653
        %6657 = vset.pattern.permute.xlu0 0
        %6658 = vperm.xlu0 %6657, %v6592
        %v6659 = vpop.permute.xlu0 %6658
        %6662 = vset.pattern.permute.xlu0 0
        %6663 = vperm.xlu0 %6662, %v6593
        %v6664 = vpop.permute.xlu0 %6663
        %6667 = vset.pattern.permute.xlu0 0
        %6668 = vperm.xlu0 %6667, %v6594
        %v6669 = vpop.permute.xlu0 %6668
        %6672 = vset.pattern.permute.xlu0 0
        %6673 = vperm.xlu0 %6672, %v6595
        %v6674 = vpop.permute.xlu0 %6673
        %6677 = vset.pattern.permute.xlu0 0
        %6678 = vperm.xlu0 %6677, %v6596
        %v6679 = vpop.permute.xlu0 %6678
        %6682 = vset.pattern.permute.xlu0 0
        %6683 = vperm.xlu0 %6682, %v6597
        %v6684 = vpop.permute.xlu0 %6683
        %6687 = vset.pattern.permute.xlu0 0
        %6688 = vperm.xlu0 %6687, %v6598
        %v6689 = vpop.permute.xlu0 %6688
        %6692 = vset.pattern.permute.xlu0 0
        %6693 = vperm.xlu0 %6692, %v6599
        %v6694 = vpop.permute.xlu0 %6693
        %6697 = vset.pattern.permute.xlu0 0
        %6698 = vperm.xlu0 %6697, %v6600
        %v6699 = vpop.permute.xlu0 %6698
        %6702 = vset.pattern.permute.xlu0 0
        %6703 = vperm.xlu0 %6702, %v6601
        %v6704 = vpop.permute.xlu0 %6703
        %6707 = vset.pattern.permute.xlu0 0
        %6708 = vperm.xlu0 %6707, %v6602
        %v6709 = vpop.permute.xlu0 %6708
        %6712 = vset.pattern.permute.xlu0 0
        %6713 = vperm.xlu0 %6712, %v6603
        %v6714 = vpop.permute.xlu0 %6713
        %6717 = vset.pattern.permute.xlu0 0
        %6718 = vperm.xlu0 %6717, %v6604
        %v6719 = vpop.permute.xlu0 %6718
        %6722 = vset.pattern.permute.xlu0 0
        %6723 = vperm.xlu0 %6722, %v6605
        %v6724 = vpop.permute.xlu0 %6723
        %6727 = vset.pattern.permute.xlu0 0
        %6728 = vperm.xlu0 %6727, %v6606
        %v6729 = vpop.permute.xlu0 %6728
        %6732 = vset.pattern.permute.xlu0 0
        %6733 = vperm.xlu0 %6732, %v6607
        %v6734 = vpop.permute.xlu0 %6733
        %6737 = vset.pattern.permute.xlu0 0
        %6738 = vperm.xlu0 %6737, %v6608
        %v6739 = vpop.permute.xlu0 %6738
        %6742 = vset.pattern.permute.xlu0 0
        %6743 = vperm.xlu0 %6742, %v6609
        %v6744 = vpop.permute.xlu0 %6743
        %6747 = vset.pattern.permute.xlu0 0
        %6748 = vperm.xlu0 %6747, %v6610
        %v6749 = vpop.permute.xlu0 %6748
        %6752 = vset.pattern.permute.xlu0 0
        %6753 = vperm.xlu0 %6752, %v6611
        %v6754 = vpop.permute.xlu0 %6753
        %6757 = vset.pattern.permute.xlu0 0
        %6758 = vperm.xlu0 %6757, %v6612
        %v6759 = vpop.permute.xlu0 %6758
        %6762 = vset.pattern.permute.xlu0 0
        %6763 = vperm.xlu0 %6762, %v6613
        %v6764 = vpop.permute.xlu0 %6763
        %6767 = vset.pattern.permute.xlu0 0
        %6768 = vperm.xlu0 %6767, %v6614
        %v6769 = vpop.permute.xlu0 %6768
        %6772 = vset.pattern.permute.xlu0 0
        %6773 = vperm.xlu0 %6772, %v6615
        %v6774 = vpop.permute.xlu0 %6773
        %v6776 = vmul.f32 %v620, %v6619
        %v6777 = vmul.f32 %v621, %v6624
        %v6778 = vmul.f32 %v622, %v6629
        %v6779 = vmul.f32 %v623, %v6634
        %v6780 = vmul.f32 %v624, %v6639
        %v6781 = vmul.f32 %v625, %v6644
        %v6782 = vmul.f32 %v626, %v6649
        %v6783 = vmul.f32 %v627, %v6654
        %v6784 = vmul.f32 %v628, %v6659
        %v6785 = vmul.f32 %v629, %v6664
        %v6786 = vmul.f32 %v630, %v6669
        %v6787 = vmul.f32 %v631, %v6674
        %v6788 = vmul.f32 %v632, %v6679
        %v6789 = vmul.f32 %v633, %v6684
        %v6790 = vmul.f32 %v634, %v6689
        %v6791 = vmul.f32 %v635, %v6694
        %v6792 = vmul.f32 %v636, %v6699
        %v6793 = vmul.f32 %v637, %v6704
        %v6794 = vmul.f32 %v638, %v6709
        %v6795 = vmul.f32 %v639, %v6714
        %v6796 = vmul.f32 %v640, %v6719
        %v6797 = vmul.f32 %v641, %v6724
        %v6798 = vmul.f32 %v642, %v6729
        %v6799 = vmul.f32 %v643, %v6734
        %v6800 = vmul.f32 %v644, %v6739
        %v6801 = vmul.f32 %v645, %v6744
        %v6802 = vmul.f32 %v646, %v6749
        %v6803 = vmul.f32 %v647, %v6754
        %v6804 = vmul.f32 %v648, %v6759
        %v6805 = vmul.f32 %v649, %v6764
        %v6806 = vmul.f32 %v650, %v6769
        %v6807 = vmul.f32 %v651, %v6774
        %v6808 = vsel %vm2687, %v6776, 0.0
        %v6809 = vsel %vm2687, %v6777, 0.0
        %v6810 = vadd.f32 %v6808, %v6809
        %v6811 = vsel %vm2687, %v6778, 0.0
        %v6812 = vadd.f32 %v6810, %v6811
        %v6813 = vsel %vm2687, %v6779, 0.0
        %v6814 = vadd.f32 %v6812, %v6813
        %v6815 = vsel %vm2687, %v6780, 0.0
        %v6816 = vadd.f32 %v6814, %v6815
        %v6817 = vsel %vm2687, %v6781, 0.0
        %v6818 = vadd.f32 %v6816, %v6817
        %v6819 = vsel %vm2687, %v6782, 0.0
        %v6820 = vadd.f32 %v6818, %v6819
        %v6821 = vsel %vm2687, %v6783, 0.0
        %v6822 = vadd.f32 %v6820, %v6821
        %v6823 = vsel %vm2687, %v6784, 0.0
        %v6824 = vadd.f32 %v6822, %v6823
        %v6825 = vsel %vm2687, %v6785, 0.0
        %v6826 = vadd.f32 %v6824, %v6825
        %v6827 = vsel %vm2687, %v6786, 0.0
        %v6828 = vadd.f32 %v6826, %v6827
        %v6829 = vsel %vm2687, %v6787, 0.0
        %v6830 = vadd.f32 %v6828, %v6829
        %v6831 = vsel %vm2687, %v6788, 0.0
        %v6832 = vadd.f32 %v6830, %v6831
        %v6833 = vsel %vm2687, %v6789, 0.0
        %v6834 = vadd.f32 %v6832, %v6833
        %v6835 = vsel %vm2687, %v6790, 0.0
        %v6836 = vadd.f32 %v6834, %v6835
        %v6837 = vsel %vm2687, %v6791, 0.0
        %v6838 = vadd.f32 %v6836, %v6837
        %v6839 = vrot.slane %v6838, 4
        %v6840 = vadd.f32 %v6838, %v6839
        %v6841 = vrot.slane %v6840, 2
        %v6842 = vadd.f32 %v6840, %v6841
        %v6843 = vrot.slane %v6842, 1
        %v6844 = vadd.f32 %v6842, %v6843
        %v6845 = vsel %vm2687, %v6792, 0.0
        %v6846 = vsel %vm2687, %v6793, 0.0
        %v6847 = vadd.f32 %v6845, %v6846
        %v6848 = vsel %vm2687, %v6794, 0.0
        %v6849 = vadd.f32 %v6847, %v6848
        %v6850 = vsel %vm2687, %v6795, 0.0
        %v6851 = vadd.f32 %v6849, %v6850
        %v6852 = vsel %vm2687, %v6796, 0.0
        %v6853 = vadd.f32 %v6851, %v6852
        %v6854 = vsel %vm2687, %v6797, 0.0
        %v6855 = vadd.f32 %v6853, %v6854
        %v6856 = vsel %vm2687, %v6798, 0.0
        %v6857 = vadd.f32 %v6855, %v6856
        %v6858 = vsel %vm2687, %v6799, 0.0
        %v6859 = vadd.f32 %v6857, %v6858
        %v6860 = vsel %vm2687, %v6800, 0.0
        %v6861 = vadd.f32 %v6859, %v6860
        %v6862 = vsel %vm2687, %v6801, 0.0
        %v6863 = vadd.f32 %v6861, %v6862
        %v6864 = vsel %vm2687, %v6802, 0.0
        %v6865 = vadd.f32 %v6863, %v6864
        %v6866 = vsel %vm2687, %v6803, 0.0
        %v6867 = vadd.f32 %v6865, %v6866
        %v6868 = vsel %vm2687, %v6804, 0.0
        %v6869 = vadd.f32 %v6867, %v6868
        %v6870 = vsel %vm2687, %v6805, 0.0
        %v6871 = vadd.f32 %v6869, %v6870
        %v6872 = vsel %vm2687, %v6806, 0.0
        %v6873 = vadd.f32 %v6871, %v6872
        %v6874 = vsel %vm2687, %v6807, 0.0
        %v6875 = vadd.f32 %v6873, %v6874
        %v6876 = vrot.slane %v6875, 4
        %v6877 = vadd.f32 %v6875, %v6876
        %v6878 = vrot.slane %v6877, 2
        %v6879 = vadd.f32 %v6877, %v6878
        %v6880 = vrot.slane %v6879, 1
        %v6881 = vadd.f32 %v6879, %v6880
        %s6882 = scalar_lea.vmem %s536, 8
        %v6883 = vld [vmem:[%s6882] sm:$0xf]
        %v6884 = vunpack.c.l.bf16 %v6883
        %v6885 = vpack.c.bf16 %v6844, %v6844
        %v6886 = vpack.c.bf16 %v6881, %v6881
        %v6889 = vunpack.c.l.b16 %v6885
        %v6890 = vunpack.c.l.b16 %v6886
        %v6891 = vsel %vm2046, %v6890, %v6889
        %v6892 = vpack.c.b16 %v6891, %v6891
        %v6894 = vsel %vm2687, %v6892, 0
        %6896 = vmatprep.subr.bf16.mxu0 %v2790
        %6897 = vmatpush1.bf16.msra.mxu0 %v2787
        %6898 = vmatprep.subr.bf16.mxu0 0
        %6899 = vmatpush1.bf16.msra.mxu0 0
        %6900 = vmatprep.subr.bf16.mxu0 0
        %6901 = vmatpush1.bf16.msra.mxu0 0
        %6902 = vmatprep.subr.bf16.mxu0 0
        %6903 = vmatpush1.bf16.msra.mxu0 0
        %6904 = vmatprep.subr.bf16.mxu0 0
        %6905 = vmatpush1.bf16.msra.mxu0 0
        %6906 = vmatprep.subr.bf16.mxu0 0
        %6907 = vmatpush1.bf16.msra.mxu0 0
        %6908 = vmatprep.subr.bf16.mxu0 0
        %6909 = vmatpush1.bf16.msra.mxu0 0
        %6910 = vmatprep.subr.bf16.mxu0 0
        %6911 = vmatpush1.bf16.msra.mxu0 0
        %6912 = vmatprep.subr.bf16.mxu0 0
        %6913 = vmatpush1.bf16.msra.mxu0 0
        %6914 = vmatprep.subr.bf16.mxu0 0
        %6915 = vmatpush1.bf16.msra.mxu0 0
        %6916 = vmatprep.subr.bf16.mxu0 0
        %6917 = vmatpush1.bf16.msra.mxu0 0
        %6918 = vmatprep.subr.bf16.mxu0 0
        %6919 = vmatpush1.bf16.msra.mxu0 0
        %6920 = vmatprep.subr.bf16.mxu0 0
        %6921 = vmatpush1.bf16.msra.mxu0 0
        %6922 = vmatprep.subr.bf16.mxu0 0
        %6923 = vmatpush1.bf16.msra.mxu0 0
        %6924 = vmatprep.subr.bf16.mxu0 0
        %6925 = vmatpush1.bf16.msra.mxu0 0
        %6926 = vmatprep.subr.bf16.mxu0 0
        %6927 = vmatpush1.bf16.msra.mxu0 0
        %6928 = vmatprep.mubr.bf16.mxu0 0
        %6929 = vmatmul.mubr.bf16.gmra.mrb[0].mxu0 %v6894
        %v6930 = vpop.f32.mrb[0].mxu0
        %v6931 = vadd.f32 0.0, %v6930
        %v6932 = vpop.f32.mrb[0].mxu0
        %v6933 = vadd.f32 0.0, %v6932
        %v6934 = vpop.f32.mrb[0].mxu0
        %v6935 = vpop.f32.mrb[0].mxu0
        %6936 = vdwg.mxu0
        %6937 = vmatprep.subr.bf16.mxu0 %v2796
        %6938 = vmatpush1.bf16.msra.mxu0 %v2793
        %6939 = vmatprep.subr.bf16.mxu0 0
        %6940 = vmatpush1.bf16.msra.mxu0 0
        %6941 = vmatprep.subr.bf16.mxu0 0
        %6942 = vmatpush1.bf16.msra.mxu0 0
        %6943 = vmatprep.subr.bf16.mxu0 0
        %6944 = vmatpush1.bf16.msra.mxu0 0
        %6945 = vmatprep.subr.bf16.mxu0 0
        %6946 = vmatpush1.bf16.msra.mxu0 0
        %6947 = vmatprep.subr.bf16.mxu0 0
        %6948 = vmatpush1.bf16.msra.mxu0 0
        %6949 = vmatprep.subr.bf16.mxu0 0
        %6950 = vmatpush1.bf16.msra.mxu0 0
        %6951 = vmatprep.subr.bf16.mxu0 0
        %6952 = vmatpush1.bf16.msra.mxu0 0
        %6953 = vmatprep.subr.bf16.mxu0 0
        %6954 = vmatpush1.bf16.msra.mxu0 0
        %6955 = vmatprep.subr.bf16.mxu0 0
        %6956 = vmatpush1.bf16.msra.mxu0 0
        %6957 = vmatprep.subr.bf16.mxu0 0
        %6958 = vmatpush1.bf16.msra.mxu0 0
        %6959 = vmatprep.subr.bf16.mxu0 0
        %6960 = vmatpush1.bf16.msra.mxu0 0
        %6961 = vmatprep.subr.bf16.mxu0 0
        %6962 = vmatpush1.bf16.msra.mxu0 0
        %6963 = vmatprep.subr.bf16.mxu0 0
        %6964 = vmatpush1.bf16.msra.mxu0 0
        %6965 = vmatprep.subr.bf16.mxu0 0
        %6966 = vmatpush1.bf16.msra.mxu0 0
        %6967 = vmatprep.subr.bf16.mxu0 0
        %6968 = vmatpush1.bf16.msra.mxu0 0
        %6969 = vmatprep.mubr.bf16.mxu0 0
        %6970 = vmatmul.mubr.bf16.gmra.mrb[0].mxu0 %v6894
        %v6971 = vpop.f32.mrb[0].mxu0
        %v6972 = vadd.f32 0.0, %v6971
        %v6973 = vpop.f32.mrb[0].mxu0
        %v6974 = vadd.f32 0.0, %v6973
        %v6975 = vpop.f32.mrb[0].mxu0
        %v6976 = vpop.f32.mrb[0].mxu0
        %6977 = vdwg.mxu0
        %v6982 = vcombine.low %v6931, %v6933
        %v6983 = vcombine.low %v6972, %v6974
        %v6985 = vunpack.c.l.s4 1983009808
        %v6986 = vunpack.c.0.s8 %v6985
        %v6987 = vlaneseq
        %v6988 = vshrl.u32 %v6987, 7
        %v6989 = vsub.s32 %v6986, %v6988
        %v6990 = vrot.slane %v6982, %v6989
        %v6992 = vunpack.c.l.s4 1983009808
        %v6993 = vunpack.c.0.s8 %v6992
        %v6994 = vlaneseq
        %v6995 = vshrl.u32 %v6994, 7
        %v6996 = vsub.s32 %v6993, %v6995
        %v6997 = vrot.slane %v6983, %v6996
        %v6998 = vcombine.low %v6990, %v6997
        %v7000 = vadd.f32 %v6884, %v6998
        %v7005 = vcombine.low %v5547, %v5549
        %v7006 = vcombine.low %v5588, %v5590
        %v7008 = vunpack.c.l.s4 1983009808
        %v7009 = vunpack.c.0.s8 %v7008
        %v7010 = vlaneseq
        %v7011 = vshrl.u32 %v7010, 7
        %v7012 = vsub.s32 %v7009, %v7011
        %v7013 = vrot.slane %v7005, %v7012
        %v7015 = vunpack.c.l.s4 1983009808
        %v7016 = vunpack.c.0.s8 %v7015
        %v7017 = vlaneseq
        %v7018 = vshrl.u32 %v7017, 7
        %v7019 = vsub.s32 %v7016, %v7018
        %v7020 = vrot.slane %v7006, %v7019
        %v7021 = vcombine.low %v7013, %v7020
        %v7023 = vadd.f32 %v7000, %v7021
        %v7024 = vadd.f32 %v7023, %v2959
        %v7025 = vxor.u32 %v7024, 2147483648
        %v7026 = vmul.f32 %v7025, 1.442695
        %v7027 = vpow.pop %v7026
        %v7028 = vadd.f32 %v7027, 1.0
        %v7029 = vrcp.pop %v7028
        %v7030 = vmul.f32 1.0, %v7029
        %v7032 = vrot.slane %v7024, 2
        %v7034 = vxor.u32 %v7032, 2147483648
        %v7035 = vmul.f32 %v7034, 1.442695
        %v7036 = vpow.pop %v7035
        %v7037 = vadd.f32 %v7036, 1.0
        %v7038 = vrcp.pop %v7037
        %v7039 = vmul.f32 1.0, %v7038
        %v7040 = vrot.slane %v7024, 4
        %v7042 = vtanh.pop %v7040
        %v7043 = vrot.slane %v7024, 6
        %v7045 = vxor.u32 %v7043, 2147483648
        %v7046 = vmul.f32 %v7045, 1.442695
        %v7047 = vpow.pop %v7046
        %v7048 = vadd.f32 %v7047, 1.0
        %v7049 = vrcp.pop %v7048
        %v7050 = vmul.f32 1.0, %v7049
        %v7051 = vmul.f32 %v7039, %v5111
        %v7052 = vmul.f32 %v7030, %v7042
        %v7053 = vadd.f32 %v7051, %v7052
        %v7054 = vtanh.pop %v7053
        %v7055 = vmul.f32 %v7050, %v7054
        %v7056 = vpack.c.bf16 %v7055, %v7055
        %7057 = vmatprep.subr.bf16.mxu0 %v3091
        %7058 = vmatpush1.bf16.msra.mxu0 %v3090
        %7059 = vmatprep.subr.bf16.mxu0 %v3095
        %7060 = vmatpush1.bf16.msra.mxu0 %v3094
        %7061 = vmatprep.subr.bf16.mxu0 %v3099
        %7062 = vmatpush1.bf16.msra.mxu0 %v3098
        %7063 = vmatprep.subr.bf16.mxu0 %v3103
        %7064 = vmatpush1.bf16.msra.mxu0 %v3102
        %7065 = vmatprep.subr.bf16.mxu0 %v3107
        %7066 = vmatpush1.bf16.msra.mxu0 %v3106
        %7067 = vmatprep.subr.bf16.mxu0 %v3111
        %7068 = vmatpush1.bf16.msra.mxu0 %v3110
        %7069 = vmatprep.subr.bf16.mxu0 %v3115
        %7070 = vmatpush1.bf16.msra.mxu0 %v3114
        %7071 = vmatprep.subr.bf16.mxu0 %v3119
        %7072 = vmatpush1.bf16.msra.mxu0 %v3118
        %7073 = vmatprep.subr.bf16.mxu0 0
        %7074 = vmatpush1.bf16.msra.mxu0 0
        %7075 = vmatprep.subr.bf16.mxu0 0
        %7076 = vmatpush1.bf16.msra.mxu0 0
        %7077 = vmatprep.subr.bf16.mxu0 0
        %7078 = vmatpush1.bf16.msra.mxu0 0
        %7079 = vmatprep.subr.bf16.mxu0 0
        %7080 = vmatpush1.bf16.msra.mxu0 0
        %7081 = vmatprep.subr.bf16.mxu0 0
        %7082 = vmatpush1.bf16.msra.mxu0 0
        %7083 = vmatprep.subr.bf16.mxu0 0
        %7084 = vmatpush1.bf16.msra.mxu0 0
        %7085 = vmatprep.subr.bf16.mxu0 0
        %7086 = vmatpush1.bf16.msra.mxu0 0
        %7087 = vmatprep.subr.bf16.mxu0 0
        %7088 = vmatpush1.bf16.msra.mxu0 0
        %7089 = vmatprep.mubr.bf16.mxu0 0
        %7090 = vmatmul.mubr.bf16.gmra.mrb[0].mxu0 %v7056
        %v7091 = vpop.f32.mrb[0].mxu0
        %v7092 = vadd.f32 %v5427, %v7091
        %v7093 = vpop.f32.mrb[0].mxu0
        %v7094 = vadd.f32 %v5466, %v7093
        %v7095 = vpop.f32.mrb[0].mxu0
        %v7096 = vpop.f32.mrb[0].mxu0
        %7097 = vdwg.mxu0
        %7098 = vmatprep.subr.bf16.mxu0 %v3093
        %7099 = vmatpush1.bf16.msra.mxu0 %v3092
        %7100 = vmatprep.subr.bf16.mxu0 %v3097
        %7101 = vmatpush1.bf16.msra.mxu0 %v3096
        %7102 = vmatprep.subr.bf16.mxu0 %v3101
        %7103 = vmatpush1.bf16.msra.mxu0 %v3100
        %7104 = vmatprep.subr.bf16.mxu0 %v3105
        %7105 = vmatpush1.bf16.msra.mxu0 %v3104
        %7106 = vmatprep.subr.bf16.mxu0 %v3109
        %7107 = vmatpush1.bf16.msra.mxu0 %v3108
        %7108 = vmatprep.subr.bf16.mxu0 %v3113
        %7109 = vmatpush1.bf16.msra.mxu0 %v3112
        %7110 = vmatprep.subr.bf16.mxu0 %v3117
        %7111 = vmatpush1.bf16.msra.mxu0 %v3116
        %7112 = vmatprep.subr.bf16.mxu0 %v3121
        %7113 = vmatpush1.bf16.msra.mxu0 %v3120
        %7114 = vmatprep.subr.bf16.mxu0 0
        %7115 = vmatpush1.bf16.msra.mxu0 0
        %7116 = vmatprep.subr.bf16.mxu0 0
        %7117 = vmatpush1.bf16.msra.mxu0 0
        %7118 = vmatprep.subr.bf16.mxu0 0
        %7119 = vmatpush1.bf16.msra.mxu0 0
        %7120 = vmatprep.subr.bf16.mxu0 0
        %7121 = vmatpush1.bf16.msra.mxu0 0
        %7122 = vmatprep.subr.bf16.mxu0 0
        %7123 = vmatpush1.bf16.msra.mxu0 0
        %7124 = vmatprep.subr.bf16.mxu0 0
        %7125 = vmatpush1.bf16.msra.mxu0 0
        %7126 = vmatprep.subr.bf16.mxu0 0
        %7127 = vmatpush1.bf16.msra.mxu0 0
        %7128 = vmatprep.subr.bf16.mxu0 0
        %7129 = vmatpush1.bf16.msra.mxu0 0
        %7130 = vmatprep.mubr.bf16.mxu0 0
        %7131 = vmatmul.mubr.bf16.gmra.mrb[0].mxu0 %v7056
        %v7132 = vpop.f32.mrb[0].mxu0
        %v7133 = vadd.f32 %v5468, %v7132
        %v7134 = vpop.f32.mrb[0].mxu0
        %v7135 = vadd.f32 %v5507, %v7134
        %v7136 = vpop.f32.mrb[0].mxu0
        %v7137 = vpop.f32.mrb[0].mxu0
        %7138 = vdwg.mxu0
        %v7139 = vadd.f32 %v7092, %v3240
        %v7140 = vadd.f32 %v7094, %v3244
        %v7141 = vadd.f32 %v7133, %v3248
        %v7142 = vadd.f32 %v7135, %v3252
        %v7143 = vxor.u32 %v7139, 2147483648
        %v7144 = vmul.f32 %v7143, 1.442695
        %v7145 = vpow.pop %v7144
        %v7146 = vadd.f32 %v7145, 1.0
        %v7147 = vrcp.pop %v7146
        %v7148 = vmul.f32 1.0, %v7147
        %v7149 = vxor.u32 %v7140, 2147483648
        %v7150 = vmul.f32 %v7149, 1.442695
        %v7151 = vpow.pop %v7150
        %v7152 = vadd.f32 %v7151, 1.0
        %v7153 = vrcp.pop %v7152
        %v7154 = vmul.f32 1.0, %v7153
        %v7155 = vtanh.pop %v7141
        %v7156 = vxor.u32 %v7142, 2147483648
        %v7157 = vmul.f32 %v7156, 1.442695
        %v7158 = vpow.pop %v7157
        %v7159 = vadd.f32 %v7158, 1.0
        %v7160 = vrcp.pop %v7159
        %v7161 = vmul.f32 1.0, %v7160
        %v7162 = vmul.f32 %v7154, %v5222
        %v7163 = vmul.f32 %v7148, %v7155
        %v7164 = vadd.f32 %v7162, %v7163
        %v7165 = vtanh.pop %v7164
        %v7166 = vmul.f32 %v7161, %v7165
        %s7167 = scalar_lea.vmem %s524, 4 [#allocation12]
        %7168 = vst [vmem:[%s7167] sm:$0x3] %v7166
        %v7169 = vlaneseq
        %v7170 = vshrl.u32 %v7169, 7
        %v7171 = vsub.s32 %v1857, %v7170
        %v7172 = vrot.slane %v6619, %v7171
        %v7173 = vlaneseq
        %v7174 = vshrl.u32 %v7173, 7
        %v7175 = vsub.s32 %v1862, %v7174
        %v7176 = vrot.slane %v6624, %v7175
        %v7177 = vsel %vm1867, %v7176, %v7172
        %v7178 = vlaneseq
        %v7179 = vshrl.u32 %v7178, 7
        %v7180 = vsub.s32 %v1869, %v7179
        %v7181 = vrot.slane %v6629, %v7180
        %v7182 = vsel %vm1874, %v7181, %v7177
        %v7183 = vlaneseq
        %v7184 = vshrl.u32 %v7183, 7
        %v7185 = vsub.s32 %v1876, %v7184
        %v7186 = vrot.slane %v6634, %v7185
        %v7187 = vsel %vm1881, %v7186, %v7182
        %v7188 = vlaneseq
        %v7189 = vshrl.u32 %v7188, 7
        %v7190 = vsub.s32 %v1883, %v7189
        %v7191 = vrot.slane %v6639, %v7190
        %v7192 = vsel %vm1888, %v7191, %v7187
        %v7193 = vlaneseq
        %v7194 = vshrl.u32 %v7193, 7
        %v7195 = vsub.s32 %v1890, %v7194
        %v7196 = vrot.slane %v6644, %v7195
        %v7197 = vsel %vm1895, %v7196, %v7192
        %v7198 = vlaneseq
        %v7199 = vshrl.u32 %v7198, 7
        %v7200 = vsub.s32 %v1897, %v7199
        %v7201 = vrot.slane %v6649, %v7200
        %v7202 = vsel %vm1902, %v7201, %v7197
        %v7203 = vlaneseq
        %v7204 = vshrl.u32 %v7203, 7
        %v7205 = vsub.s32 %v1904, %v7204
        %v7206 = vrot.slane %v6654, %v7205
        %v7207 = vsel %vm1909, %v7206, %v7202
        %v7208 = vlaneseq
        %v7209 = vshrl.u32 %v7208, 7
        %v7210 = vsub.s32 %v1911, %v7209
        %v7211 = vrot.slane %v6659, %v7210
        %v7212 = vsel %vm1916, %v7211, %v7207
        %v7213 = vlaneseq
        %v7214 = vshrl.u32 %v7213, 7
        %v7215 = vsub.s32 %v1918, %v7214
        %v7216 = vrot.slane %v6664, %v7215
        %v7217 = vsel %vm1923, %v7216, %v7212
        %v7218 = vlaneseq
        %v7219 = vshrl.u32 %v7218, 7
        %v7220 = vsub.s32 %v1925, %v7219
        %v7221 = vrot.slane %v6669, %v7220
        %v7222 = vsel %vm1930, %v7221, %v7217
        %v7223 = vlaneseq
        %v7224 = vshrl.u32 %v7223, 7
        %v7225 = vsub.s32 %v1932, %v7224
        %v7226 = vrot.slane %v6674, %v7225
        %v7227 = vsel %vm1937, %v7226, %v7222
        %v7228 = vlaneseq
        %v7229 = vshrl.u32 %v7228, 7
        %v7230 = vsub.s32 %v1939, %v7229
        %v7231 = vrot.slane %v6679, %v7230
        %v7232 = vsel %vm1944, %v7231, %v7227
        %v7233 = vlaneseq
        %v7234 = vshrl.u32 %v7233, 7
        %v7235 = vsub.s32 %v1946, %v7234
        %v7236 = vrot.slane %v6684, %v7235
        %v7237 = vsel %vm1951, %v7236, %v7232
        %v7238 = vlaneseq
        %v7239 = vshrl.u32 %v7238, 7
        %v7240 = vsub.s32 %v1953, %v7239
        %v7241 = vrot.slane %v6689, %v7240
        %v7242 = vsel %vm1958, %v7241, %v7237
        %v7243 = vlaneseq
        %v7244 = vshrl.u32 %v7243, 7
        %v7245 = vsub.s32 %v1960, %v7244
        %v7246 = vrot.slane %v6694, %v7245
        %v7247 = vsel %vm1965, %v7246, %v7242
        %v7248 = vlaneseq
        %v7249 = vshrl.u32 %v7248, 7
        %v7250 = vsub.s32 %v1857, %v7249
        %v7251 = vrot.slane %v6699, %v7250
        %v7252 = vlaneseq
        %v7253 = vshrl.u32 %v7252, 7
        %v7254 = vsub.s32 %v1862, %v7253
        %v7255 = vrot.slane %v6704, %v7254
        %v7256 = vsel %vm1867, %v7255, %v7251
        %v7257 = vlaneseq
        %v7258 = vshrl.u32 %v7257, 7
        %v7259 = vsub.s32 %v1869, %v7258
        %v7260 = vrot.slane %v6709, %v7259
        %v7261 = vsel %vm1874, %v7260, %v7256
        %v7262 = vlaneseq
        %v7263 = vshrl.u32 %v7262, 7
        %v7264 = vsub.s32 %v1876, %v7263
        %v7265 = vrot.slane %v6714, %v7264
        %v7266 = vsel %vm1881, %v7265, %v7261
        %v7267 = vlaneseq
        %v7268 = vshrl.u32 %v7267, 7
        %v7269 = vsub.s32 %v1883, %v7268
        %v7270 = vrot.slane %v6719, %v7269
        %v7271 = vsel %vm1888, %v7270, %v7266
        %v7272 = vlaneseq
        %v7273 = vshrl.u32 %v7272, 7
        %v7274 = vsub.s32 %v1890, %v7273
        %v7275 = vrot.slane %v6724, %v7274
        %v7276 = vsel %vm1895, %v7275, %v7271
        %v7277 = vlaneseq
        %v7278 = vshrl.u32 %v7277, 7
        %v7279 = vsub.s32 %v1897, %v7278
        %v7280 = vrot.slane %v6729, %v7279
        %v7281 = vsel %vm1902, %v7280, %v7276
        %v7282 = vlaneseq
        %v7283 = vshrl.u32 %v7282, 7
        %v7284 = vsub.s32 %v1904, %v7283
        %v7285 = vrot.slane %v6734, %v7284
        %v7286 = vsel %vm1909, %v7285, %v7281
        %v7287 = vlaneseq
        %v7288 = vshrl.u32 %v7287, 7
        %v7289 = vsub.s32 %v1911, %v7288
        %v7290 = vrot.slane %v6739, %v7289
        %v7291 = vsel %vm1916, %v7290, %v7286
        %v7292 = vlaneseq
        %v7293 = vshrl.u32 %v7292, 7
        %v7294 = vsub.s32 %v1918, %v7293
        %v7295 = vrot.slane %v6744, %v7294
        %v7296 = vsel %vm1923, %v7295, %v7291
        %v7297 = vlaneseq
        %v7298 = vshrl.u32 %v7297, 7
        %v7299 = vsub.s32 %v1925, %v7298
        %v7300 = vrot.slane %v6749, %v7299
        %v7301 = vsel %vm1930, %v7300, %v7296
        %v7302 = vlaneseq
        %v7303 = vshrl.u32 %v7302, 7
        %v7304 = vsub.s32 %v1932, %v7303
        %v7305 = vrot.slane %v6754, %v7304
        %v7306 = vsel %vm1937, %v7305, %v7301
        %v7307 = vlaneseq
        %v7308 = vshrl.u32 %v7307, 7
        %v7309 = vsub.s32 %v1939, %v7308
        %v7310 = vrot.slane %v6759, %v7309
        %v7311 = vsel %vm1944, %v7310, %v7306
        %v7312 = vlaneseq
        %v7313 = vshrl.u32 %v7312, 7
        %v7314 = vsub.s32 %v1946, %v7313
        %v7315 = vrot.slane %v6764, %v7314
        %v7316 = vsel %vm1951, %v7315, %v7311
        %v7317 = vlaneseq
        %v7318 = vshrl.u32 %v7317, 7
        %v7319 = vsub.s32 %v1953, %v7318
        %v7320 = vrot.slane %v6769, %v7319
        %v7321 = vsel %vm1958, %v7320, %v7316
        %v7322 = vlaneseq
        %v7323 = vshrl.u32 %v7322, 7
        %v7324 = vsub.s32 %v1960, %v7323
        %v7325 = vrot.slane %v6774, %v7324
        %v7326 = vsel %vm1965, %v7325, %v7321
        %v7327 = vsel %vm2046, %v7326, %v7247
        %s7329 = scalar_lea.vmem %s531, 4 [#allocation13]
        %7330 = vst [vmem:[%s7329] sm:$0x3] %v7327
        %v7331 = vpack.c.bf16 %v7166, %v7166
        %7332 = vmatprep.subr.bf16.mxu0 %v905
        %7333 = vmatpush1.bf16.msra.mxu0 %v904
        %7334 = vmatprep.subr.bf16.mxu0 %v910
        %7335 = vmatpush1.bf16.msra.mxu0 %v909
        %7336 = vmatprep.subr.bf16.mxu0 %v915
        %7337 = vmatpush1.bf16.msra.mxu0 %v914
        %7338 = vmatprep.subr.bf16.mxu0 %v920
        %7339 = vmatpush1.bf16.msra.mxu0 %v919
        %7340 = vmatprep.subr.bf16.mxu0 %v925
        %7341 = vmatpush1.bf16.msra.mxu0 %v924
        %7342 = vmatprep.subr.bf16.mxu0 %v930
        %7343 = vmatpush1.bf16.msra.mxu0 %v929
        %7344 = vmatprep.subr.bf16.mxu0 %v935
        %7345 = vmatpush1.bf16.msra.mxu0 %v934
        %7346 = vmatprep.subr.bf16.mxu0 %v940
        %7347 = vmatpush1.bf16.msra.mxu0 %v939
        %7348 = vmatprep.subr.bf16.mxu0 0
        %7349 = vmatpush1.bf16.msra.mxu0 0
        %7350 = vmatprep.subr.bf16.mxu0 0
        %7351 = vmatpush1.bf16.msra.mxu0 0
        %7352 = vmatprep.subr.bf16.mxu0 0
        %7353 = vmatpush1.bf16.msra.mxu0 0
        %7354 = vmatprep.subr.bf16.mxu0 0
        %7355 = vmatpush1.bf16.msra.mxu0 0
        %7356 = vmatprep.subr.bf16.mxu0 0
        %7357 = vmatpush1.bf16.msra.mxu0 0
        %7358 = vmatprep.subr.bf16.mxu0 0
        %7359 = vmatpush1.bf16.msra.mxu0 0
        %7360 = vmatprep.subr.bf16.mxu0 0
        %7361 = vmatpush1.bf16.msra.mxu0 0
        %7362 = vmatprep.subr.bf16.mxu0 0
        %7363 = vmatpush1.bf16.msra.mxu0 0
        %7364 = vmatprep.mubr.bf16.mxu0 0
        %7365 = vmatmul.mubr.bf16.gmra.mrb[0].mxu0 %v7331
        %v7366 = vpop.f32.mrb[0].mxu0
        %v7367 = vadd.f32 0.0, %v7366
        %v7368 = vpop.f32.mrb[0].mxu0
        %v7369 = vadd.f32 0.0, %v7368
        %v7370 = vpop.f32.mrb[0].mxu0
        %v7371 = vpop.f32.mrb[0].mxu0
        %7372 = vdwg.mxu0
        %7373 = vmatprep.subr.bf16.mxu0 %v907
        %7374 = vmatpush1.bf16.msra.mxu0 %v906
        %7375 = vmatprep.subr.bf16.mxu0 %v912
        %7376 = vmatpush1.bf16.msra.mxu0 %v911
        %7377 = vmatprep.subr.bf16.mxu0 %v917
        %7378 = vmatpush1.bf16.msra.mxu0 %v916
        %7379 = vmatprep.subr.bf16.mxu0 %v922
        %7380 = vmatpush1.bf16.msra.mxu0 %v921
        %7381 = vmatprep.subr.bf16.mxu0 %v927
        %7382 = vmatpush1.bf16.msra.mxu0 %v926
        %7383 = vmatprep.subr.bf16.mxu0 %v932
        %7384 = vmatpush1.bf16.msra.mxu0 %v931
        %7385 = vmatprep.subr.bf16.mxu0 %v937
        %7386 = vmatpush1.bf16.msra.mxu0 %v936
        %7387 = vmatprep.subr.bf16.mxu0 %v942
        %7388 = vmatpush1.bf16.msra.mxu0 %v941
        %7389 = vmatprep.subr.bf16.mxu0 0
        %7390 = vmatpush1.bf16.msra.mxu0 0
        %7391 = vmatprep.subr.bf16.mxu0 0
        %7392 = vmatpush1.bf16.msra.mxu0 0
        %7393 = vmatprep.subr.bf16.mxu0 0
        %7394 = vmatpush1.bf16.msra.mxu0 0
        %7395 = vmatprep.subr.bf16.mxu0 0
        %7396 = vmatpush1.bf16.msra.mxu0 0
        %7397 = vmatprep.subr.bf16.mxu0 0
        %7398 = vmatpush1.bf16.msra.mxu0 0
        %7399 = vmatprep.subr.bf16.mxu0 0
        %7400 = vmatpush1.bf16.msra.mxu0 0
        %7401 = vmatprep.subr.bf16.mxu0 0
        %7402 = vmatpush1.bf16.msra.mxu0 0
        %7403 = vmatprep.subr.bf16.mxu0 0
        %7404 = vmatpush1.bf16.msra.mxu0 0
        %7405 = vmatprep.mubr.bf16.mxu0 0
        %7406 = vmatmul.mubr.bf16.gmra.mrb[0].mxu0 %v7331
        %v7407 = vpop.f32.mrb[0].mxu0
        %v7408 = vadd.f32 0.0, %v7407
        %v7409 = vpop.f32.mrb[0].mxu0
        %v7410 = vadd.f32 0.0, %v7409
        %v7411 = vpop.f32.mrb[0].mxu0
        %v7412 = vpop.f32.mrb[0].mxu0
        %7413 = vdwg.mxu0
        %7414 = vmatprep.subr.bf16.mxu0 0
        %7415 = vmatpush1.bf16.msra.mxu0 %v908
        %7416 = vmatprep.subr.bf16.mxu0 0
        %7417 = vmatpush1.bf16.msra.mxu0 %v913
        %7418 = vmatprep.subr.bf16.mxu0 0
        %7419 = vmatpush1.bf16.msra.mxu0 %v918
        %7420 = vmatprep.subr.bf16.mxu0 0
        %7421 = vmatpush1.bf16.msra.mxu0 %v923
        %7422 = vmatprep.subr.bf16.mxu0 0
        %7423 = vmatpush1.bf16.msra.mxu0 %v928
        %7424 = vmatprep.subr.bf16.mxu0 0
        %7425 = vmatpush1.bf16.msra.mxu0 %v933
        %7426 = vmatprep.subr.bf16.mxu0 0
        %7427 = vmatpush1.bf16.msra.mxu0 %v938
        %7428 = vmatprep.subr.bf16.mxu0 0
        %7429 = vmatpush1.bf16.msra.mxu0 %v943
        %7430 = vmatprep.subr.bf16.mxu0 0
        %7431 = vmatpush1.bf16.msra.mxu0 0
        %7432 = vmatprep.subr.bf16.mxu0 0
        %7433 = vmatpush1.bf16.msra.mxu0 0
        %7434 = vmatprep.subr.bf16.mxu0 0
        %7435 = vmatpush1.bf16.msra.mxu0 0
        %7436 = vmatprep.subr.bf16.mxu0 0
        %7437 = vmatpush1.bf16.msra.mxu0 0
        %7438 = vmatprep.subr.bf16.mxu0 0
        %7439 = vmatpush1.bf16.msra.mxu0 0
        %7440 = vmatprep.subr.bf16.mxu0 0
        %7441 = vmatpush1.bf16.msra.mxu0 0
        %7442 = vmatprep.subr.bf16.mxu0 0
        %7443 = vmatpush1.bf16.msra.mxu0 0
        %7444 = vmatprep.subr.bf16.mxu0 0
        %7445 = vmatpush1.bf16.msra.mxu0 0
        %7446 = vmatprep.mubr.bf16.mxu0 0
        %7447 = vmatmul.mubr.bf16.gmra.mrb[0].mxu0 %v7331
        %v7448 = vpop.f32.mrb[0].mxu0
        %v7449 = vadd.f32 0.0, %v7448
        %v7450 = vpop.f32.mrb[0].mxu0
        %v7451 = vpop.f32.mrb[0].mxu0
        %v7452 = vpop.f32.mrb[0].mxu0
        %7453 = vdwg.mxu0
        %7454 = vmatprep.subr.bf16.mxu0 %v1204
        %7455 = vmatpush1.bf16.msra.mxu0 %v1203
        %7456 = vmatprep.subr.bf16.mxu0 %v1208
        %7457 = vmatpush1.bf16.msra.mxu0 %v1207
        %7458 = vmatprep.subr.bf16.mxu0 %v1212
        %7459 = vmatpush1.bf16.msra.mxu0 %v1211
        %7460 = vmatprep.subr.bf16.mxu0 %v1216
        %7461 = vmatpush1.bf16.msra.mxu0 %v1215
        %7462 = vmatprep.subr.bf16.mxu0 %v1220
        %7463 = vmatpush1.bf16.msra.mxu0 %v1219
        %7464 = vmatprep.subr.bf16.mxu0 %v1224
        %7465 = vmatpush1.bf16.msra.mxu0 %v1223
        %7466 = vmatprep.subr.bf16.mxu0 %v1228
        %7467 = vmatpush1.bf16.msra.mxu0 %v1227
        %7468 = vmatprep.subr.bf16.mxu0 %v1232
        %7469 = vmatpush1.bf16.msra.mxu0 %v1231
        %7470 = vmatprep.subr.bf16.mxu0 0
        %7471 = vmatpush1.bf16.msra.mxu0 0
        %7472 = vmatprep.subr.bf16.mxu0 0
        %7473 = vmatpush1.bf16.msra.mxu0 0
        %7474 = vmatprep.subr.bf16.mxu0 0
        %7475 = vmatpush1.bf16.msra.mxu0 0
        %7476 = vmatprep.subr.bf16.mxu0 0
        %7477 = vmatpush1.bf16.msra.mxu0 0
        %7478 = vmatprep.subr.bf16.mxu0 0
        %7479 = vmatpush1.bf16.msra.mxu0 0
        %7480 = vmatprep.subr.bf16.mxu0 0
        %7481 = vmatpush1.bf16.msra.mxu0 0
        %7482 = vmatprep.subr.bf16.mxu0 0
        %7483 = vmatpush1.bf16.msra.mxu0 0
        %7484 = vmatprep.subr.bf16.mxu0 0
        %7485 = vmatpush1.bf16.msra.mxu0 0
        %7486 = vmatprep.mubr.bf16.mxu0 0
        %7487 = vmatmul.mubr.bf16.gmra.mrb[0].mxu0 %v7056
        %v7488 = vpop.f32.mrb[0].mxu0
        %v7489 = vadd.f32 0.0, %v7488
        %v7490 = vpop.f32.mrb[0].mxu0
        %v7491 = vadd.f32 0.0, %v7490
        %v7492 = vpop.f32.mrb[0].mxu0
        %v7493 = vpop.f32.mrb[0].mxu0
        %7494 = vdwg.mxu0
        %7495 = vmatprep.subr.bf16.mxu0 %v1206
        %7496 = vmatpush1.bf16.msra.mxu0 %v1205
        %7497 = vmatprep.subr.bf16.mxu0 %v1210
        %7498 = vmatpush1.bf16.msra.mxu0 %v1209
        %7499 = vmatprep.subr.bf16.mxu0 %v1214
        %7500 = vmatpush1.bf16.msra.mxu0 %v1213
        %7501 = vmatprep.subr.bf16.mxu0 %v1218
        %7502 = vmatpush1.bf16.msra.mxu0 %v1217
        %7503 = vmatprep.subr.bf16.mxu0 %v1222
        %7504 = vmatpush1.bf16.msra.mxu0 %v1221
        %7505 = vmatprep.subr.bf16.mxu0 %v1226
        %7506 = vmatpush1.bf16.msra.mxu0 %v1225
        %7507 = vmatprep.subr.bf16.mxu0 %v1230
        %7508 = vmatpush1.bf16.msra.mxu0 %v1229
        %7509 = vmatprep.subr.bf16.mxu0 %v1234
        %7510 = vmatpush1.bf16.msra.mxu0 %v1233
        %7511 = vmatprep.subr.bf16.mxu0 0
        %7512 = vmatpush1.bf16.msra.mxu0 0
        %7513 = vmatprep.subr.bf16.mxu0 0
        %7514 = vmatpush1.bf16.msra.mxu0 0
        %7515 = vmatprep.subr.bf16.mxu0 0
        %7516 = vmatpush1.bf16.msra.mxu0 0
        %7517 = vmatprep.subr.bf16.mxu0 0
        %7518 = vmatpush1.bf16.msra.mxu0 0
        %7519 = vmatprep.subr.bf16.mxu0 0
        %7520 = vmatpush1.bf16.msra.mxu0 0
        %7521 = vmatprep.subr.bf16.mxu0 0
        %7522 = vmatpush1.bf16.msra.mxu0 0
        %7523 = vmatprep.subr.bf16.mxu0 0
        %7524 = vmatpush1.bf16.msra.mxu0 0
        %7525 = vmatprep.subr.bf16.mxu0 0
        %7526 = vmatpush1.bf16.msra.mxu0 0
        %7527 = vmatprep.mubr.bf16.mxu0 0
        %7528 = vmatmul.mubr.bf16.gmra.mrb[0].mxu0 %v7056
        %v7529 = vpop.f32.mrb[0].mxu0
        %v7530 = vadd.f32 0.0, %v7529
        %v7531 = vpop.f32.mrb[0].mxu0
        %v7532 = vadd.f32 0.0, %v7531
        %v7533 = vpop.f32.mrb[0].mxu0
        %v7534 = vpop.f32.mrb[0].mxu0
        %7535 = vdwg.mxu0
        %v7538 = vunpack.c.l.s4 1966171168
        %v7539 = vunpack.c.0.s8 %v7538
        %v7540 = vlaneseq
        %v7541 = vshrl.u32 %v7540, 7
        %v7542 = vsub.s32 %v7539, %v7541
        %v7543 = vrot.slane %v7367, %v7542
        %v7544 = vcombine.high %v7543, %v7543
        %v7546 = vunpack.c.l.s4 1966171168
        %v7547 = vunpack.c.0.s8 %v7546
        %v7548 = vlaneseq
        %v7549 = vshrl.u32 %v7548, 7
        %v7550 = vsub.s32 %v7547, %v7549
        %v7551 = vrot.slane %v7543, %v7550
        %v7553 = vunpack.c.l.s4 1966171168
        %v7554 = vunpack.c.0.s8 %v7553
        %v7555 = vlaneseq
        %v7556 = vshrl.u32 %v7555, 7
        %v7557 = vsub.s32 %v7554, %v7556
        %v7558 = vrot.slane %v7544, %v7557
        %v7559 = vlaneseq
        %v7560 = vshrl.u32 %v7559, 7
        %v7561 = vsub.s32 0, %v7560
        %v7562 = vrot.slane %v7551, %v7561
        %v7563 = vlaneseq
        %v7564 = vshrl.u32 %v7563, 7
        %v7565 = vsub.s32 0, %v7564
        %v7566 = vrot.slane %v7558, %v7565
        %v7569 = vadd.f32 %v555, %v7562
        %v7570 = vadd.f32 %v556, %v7562
        %v7571 = vadd.f32 %v557, %v7562
        %v7572 = vadd.f32 %v558, %v7562
        %v7573 = vadd.f32 %v559, %v7562
        %v7574 = vadd.f32 %v560, %v7562
        %v7575 = vadd.f32 %v561, %v7562
        %v7576 = vadd.f32 %v562, %v7562
        %v7577 = vadd.f32 %v563, %v7562
        %v7578 = vadd.f32 %v564, %v7562
        %v7579 = vadd.f32 %v565, %v7562
        %v7580 = vadd.f32 %v566, %v7562
        %v7581 = vadd.f32 %v567, %v7562
        %v7582 = vadd.f32 %v568, %v7562
        %v7583 = vadd.f32 %v569, %v7562
        %v7584 = vadd.f32 %v570, %v7562
        %v7585 = vadd.f32 %v571, %v7566
        %v7586 = vadd.f32 %v572, %v7566
        %v7587 = vadd.f32 %v573, %v7566
        %v7588 = vadd.f32 %v574, %v7566
        %v7589 = vadd.f32 %v575, %v7566
        %v7590 = vadd.f32 %v576, %v7566
        %v7591 = vadd.f32 %v577, %v7566
        %v7592 = vadd.f32 %v578, %v7566
        %v7593 = vadd.f32 %v579, %v7566
        %v7594 = vadd.f32 %v580, %v7566
        %v7595 = vadd.f32 %v581, %v7566
        %v7596 = vadd.f32 %v582, %v7566
        %v7597 = vadd.f32 %v583, %v7566
        %v7598 = vadd.f32 %v584, %v7566
        %v7599 = vadd.f32 %v585, %v7566
        %v7600 = vadd.f32 %v586, %v7566
        %vm7601 = vcmp.gt.f32.partialorder %v7569, 0.0
        %vm7602 = vcmp.gt.f32.partialorder %v7570, 0.0
        %vm7603 = vcmp.gt.f32.partialorder %v7571, 0.0
        %vm7604 = vcmp.gt.f32.partialorder %v7572, 0.0
        %vm7605 = vcmp.gt.f32.partialorder %v7573, 0.0
        %vm7606 = vcmp.gt.f32.partialorder %v7574, 0.0
        %vm7607 = vcmp.gt.f32.partialorder %v7575, 0.0
        %vm7608 = vcmp.gt.f32.partialorder %v7576, 0.0
        %vm7609 = vcmp.gt.f32.partialorder %v7577, 0.0
        %vm7610 = vcmp.gt.f32.partialorder %v7578, 0.0
        %vm7611 = vcmp.gt.f32.partialorder %v7579, 0.0
        %vm7612 = vcmp.gt.f32.partialorder %v7580, 0.0
        %vm7613 = vcmp.gt.f32.partialorder %v7581, 0.0
        %vm7614 = vcmp.gt.f32.partialorder %v7582, 0.0
        %vm7615 = vcmp.gt.f32.partialorder %v7583, 0.0
        %vm7616 = vcmp.gt.f32.partialorder %v7584, 0.0
        %vm7617 = vcmp.gt.f32.partialorder %v7585, 0.0
        %vm7618 = vcmp.gt.f32.partialorder %v7586, 0.0
        %vm7619 = vcmp.gt.f32.partialorder %v7587, 0.0
        %vm7620 = vcmp.gt.f32.partialorder %v7588, 0.0
        %vm7621 = vcmp.gt.f32.partialorder %v7589, 0.0
        %vm7622 = vcmp.gt.f32.partialorder %v7590, 0.0
        %vm7623 = vcmp.gt.f32.partialorder %v7591, 0.0
        %vm7624 = vcmp.gt.f32.partialorder %v7592, 0.0
        %vm7625 = vcmp.gt.f32.partialorder %v7593, 0.0
        %vm7626 = vcmp.gt.f32.partialorder %v7594, 0.0
        %vm7627 = vcmp.gt.f32.partialorder %v7595, 0.0
        %vm7628 = vcmp.gt.f32.partialorder %v7596, 0.0
        %vm7629 = vcmp.gt.f32.partialorder %v7597, 0.0
        %vm7630 = vcmp.gt.f32.partialorder %v7598, 0.0
        %vm7631 = vcmp.gt.f32.partialorder %v7599, 0.0
        %vm7632 = vcmp.gt.f32.partialorder %v7600, 0.0
        %v7633 = vmul.f32 %v7569, 0.2
        %v7634 = vmul.f32 %v7570, 0.2
        %v7635 = vmul.f32 %v7571, 0.2
        %v7636 = vmul.f32 %v7572, 0.2
        %v7637 = vmul.f32 %v7573, 0.2
        %v7638 = vmul.f32 %v7574, 0.2
        %v7639 = vmul.f32 %v7575, 0.2
        %v7640 = vmul.f32 %v7576, 0.2
        %v7641 = vmul.f32 %v7577, 0.2
        %v7642 = vmul.f32 %v7578, 0.2
        %v7643 = vmul.f32 %v7579, 0.2
        %v7644 = vmul.f32 %v7580, 0.2
        %v7645 = vmul.f32 %v7581, 0.2
        %v7646 = vmul.f32 %v7582, 0.2
        %v7647 = vmul.f32 %v7583, 0.2
        %v7648 = vmul.f32 %v7584, 0.2
        %v7649 = vmul.f32 %v7585, 0.2
        %v7650 = vmul.f32 %v7586, 0.2
        %v7651 = vmul.f32 %v7587, 0.2
        %v7652 = vmul.f32 %v7588, 0.2
        %v7653 = vmul.f32 %v7589, 0.2
        %v7654 = vmul.f32 %v7590, 0.2
        %v7655 = vmul.f32 %v7591, 0.2
        %v7656 = vmul.f32 %v7592, 0.2
        %v7657 = vmul.f32 %v7593, 0.2
        %v7658 = vmul.f32 %v7594, 0.2
        %v7659 = vmul.f32 %v7595, 0.2
        %v7660 = vmul.f32 %v7596, 0.2
        %v7661 = vmul.f32 %v7597, 0.2
        %v7662 = vmul.f32 %v7598, 0.2
        %v7663 = vmul.f32 %v7599, 0.2
        %v7664 = vmul.f32 %v7600, 0.2
        %v7665 = vsel %vm7601, %v7569, %v7633
        %v7666 = vsel %vm7602, %v7570, %v7634
        %v7667 = vsel %vm7603, %v7571, %v7635
        %v7668 = vsel %vm7604, %v7572, %v7636
        %v7669 = vsel %vm7605, %v7573, %v7637
        %v7670 = vsel %vm7606, %v7574, %v7638
        %v7671 = vsel %vm7607, %v7575, %v7639
        %v7672 = vsel %vm7608, %v7576, %v7640
        %v7673 = vsel %vm7609, %v7577, %v7641
        %v7674 = vsel %vm7610, %v7578, %v7642
        %v7675 = vsel %vm7611, %v7579, %v7643
        %v7676 = vsel %vm7612, %v7580, %v7644
        %v7677 = vsel %vm7613, %v7581, %v7645
        %v7678 = vsel %vm7614, %v7582, %v7646
        %v7679 = vsel %vm7615, %v7583, %v7647
        %v7680 = vsel %vm7616, %v7584, %v7648
        %v7681 = vsel %vm7617, %v7585, %v7649
        %v7682 = vsel %vm7618, %v7586, %v7650
        %v7683 = vsel %vm7619, %v7587, %v7651
        %v7684 = vsel %vm7620, %v7588, %v7652
        %v7685 = vsel %vm7621, %v7589, %v7653
        %v7686 = vsel %vm7622, %v7590, %v7654
        %v7687 = vsel %vm7623, %v7591, %v7655
        %v7688 = vsel %vm7624, %v7592, %v7656
        %v7689 = vsel %vm7625, %v7593, %v7657
        %v7690 = vsel %vm7626, %v7594, %v7658
        %v7691 = vsel %vm7627, %v7595, %v7659
        %v7692 = vsel %vm7628, %v7596, %v7660
        %v7693 = vsel %vm7629, %v7597, %v7661
        %v7694 = vsel %vm7630, %v7598, %v7662
        %v7695 = vsel %vm7631, %v7599, %v7663
        %v7696 = vsel %vm7632, %v7600, %v7664
        %v7697 = vmul.f32 %v7665, %v1514
        %v7698 = vmul.f32 %v7666, %v1514
        %v7699 = vmul.f32 %v7667, %v1514
        %v7700 = vmul.f32 %v7668, %v1514
        %v7701 = vmul.f32 %v7669, %v1514
        %v7702 = vmul.f32 %v7670, %v1514
        %v7703 = vmul.f32 %v7671, %v1514
        %v7704 = vmul.f32 %v7672, %v1514
        %v7705 = vmul.f32 %v7673, %v1514
        %v7706 = vmul.f32 %v7674, %v1514
        %v7707 = vmul.f32 %v7675, %v1514
        %v7708 = vmul.f32 %v7676, %v1514
        %v7709 = vmul.f32 %v7677, %v1514
        %v7710 = vmul.f32 %v7678, %v1514
        %v7711 = vmul.f32 %v7679, %v1514
        %v7712 = vmul.f32 %v7680, %v1514
        %v7713 = vmul.f32 %v7681, %v1514
        %v7714 = vmul.f32 %v7682, %v1514
        %v7715 = vmul.f32 %v7683, %v1514
        %v7716 = vmul.f32 %v7684, %v1514
        %v7717 = vmul.f32 %v7685, %v1514
        %v7718 = vmul.f32 %v7686, %v1514
        %v7719 = vmul.f32 %v7687, %v1514
        %v7720 = vmul.f32 %v7688, %v1514
        %v7721 = vmul.f32 %v7689, %v1514
        %v7722 = vmul.f32 %v7690, %v1514
        %v7723 = vmul.f32 %v7691, %v1514
        %v7724 = vmul.f32 %v7692, %v1514
        %v7725 = vmul.f32 %v7693, %v1514
        %v7726 = vmul.f32 %v7694, %v1514
        %v7727 = vmul.f32 %v7695, %v1514
        %v7728 = vmul.f32 %v7696, %v1514
        %7729 = vadd.xlane.f32.xlu0 %v7697
        %v7730 = vpop.xlane.xlu0 %7729
        %7731 = vadd.xlane.f32.xlu0 %v7698
        %v7732 = vpop.xlane.xlu0 %7731
        %7733 = vadd.xlane.f32.xlu0 %v7699
        %v7734 = vpop.xlane.xlu0 %7733
        %7735 = vadd.xlane.f32.xlu0 %v7700
        %v7736 = vpop.xlane.xlu0 %7735
        %7737 = vadd.xlane.f32.xlu0 %v7701
        %v7738 = vpop.xlane.xlu0 %7737
        %7739 = vadd.xlane.f32.xlu0 %v7702
        %v7740 = vpop.xlane.xlu0 %7739
        %7741 = vadd.xlane.f32.xlu0 %v7703
        %v7742 = vpop.xlane.xlu0 %7741
        %7743 = vadd.xlane.f32.xlu0 %v7704
        %v7744 = vpop.xlane.xlu0 %7743
        %7745 = vadd.xlane.f32.xlu0 %v7705
        %v7746 = vpop.xlane.xlu0 %7745
        %7747 = vadd.xlane.f32.xlu0 %v7706
        %v7748 = vpop.xlane.xlu0 %7747
        %7749 = vadd.xlane.f32.xlu0 %v7707
        %v7750 = vpop.xlane.xlu0 %7749
        %7751 = vadd.xlane.f32.xlu0 %v7708
        %v7752 = vpop.xlane.xlu0 %7751
        %7753 = vadd.xlane.f32.xlu0 %v7709
        %v7754 = vpop.xlane.xlu0 %7753
        %7755 = vadd.xlane.f32.xlu0 %v7710
        %v7756 = vpop.xlane.xlu0 %7755
        %7757 = vadd.xlane.f32.xlu0 %v7711
        %v7758 = vpop.xlane.xlu0 %7757
        %7759 = vadd.xlane.f32.xlu0 %v7712
        %v7760 = vpop.xlane.xlu0 %7759
        %7761 = vadd.xlane.f32.xlu0 %v7713
        %v7762 = vpop.xlane.xlu0 %7761
        %7763 = vadd.xlane.f32.xlu0 %v7714
        %v7764 = vpop.xlane.xlu0 %7763
        %7765 = vadd.xlane.f32.xlu0 %v7715
        %v7766 = vpop.xlane.xlu0 %7765
        %7767 = vadd.xlane.f32.xlu0 %v7716
        %v7768 = vpop.xlane.xlu0 %7767
        %7769 = vadd.xlane.f32.xlu0 %v7717
        %v7770 = vpop.xlane.xlu0 %7769
        %7771 = vadd.xlane.f32.xlu0 %v7718
        %v7772 = vpop.xlane.xlu0 %7771
        %7773 = vadd.xlane.f32.xlu0 %v7719
        %v7774 = vpop.xlane.xlu0 %7773
        %7775 = vadd.xlane.f32.xlu0 %v7720
        %v7776 = vpop.xlane.xlu0 %7775
        %7777 = vadd.xlane.f32.xlu0 %v7721
        %v7778 = vpop.xlane.xlu0 %7777
        %7779 = vadd.xlane.f32.xlu0 %v7722
        %v7780 = vpop.xlane.xlu0 %7779
        %7781 = vadd.xlane.f32.xlu0 %v7723
        %v7782 = vpop.xlane.xlu0 %7781
        %7783 = vadd.xlane.f32.xlu0 %v7724
        %v7784 = vpop.xlane.xlu0 %7783
        %7785 = vadd.xlane.f32.xlu0 %v7725
        %v7786 = vpop.xlane.xlu0 %7785
        %7787 = vadd.xlane.f32.xlu0 %v7726
        %v7788 = vpop.xlane.xlu0 %7787
        %7789 = vadd.xlane.f32.xlu0 %v7727
        %v7790 = vpop.xlane.xlu0 %7789
        %7791 = vadd.xlane.f32.xlu0 %v7728
        %v7792 = vpop.xlane.xlu0 %7791
        %v7793 = vadd.f32 %v7730, %v1619
        %v7794 = vadd.f32 %v7732, %v1623
        %v7795 = vadd.f32 %v7734, %v1627
        %v7796 = vadd.f32 %v7736, %v1631
        %v7797 = vadd.f32 %v7738, %v1635
        %v7798 = vadd.f32 %v7740, %v1639
        %v7799 = vadd.f32 %v7742, %v1643
        %v7800 = vadd.f32 %v7744, %v1647
        %v7801 = vadd.f32 %v7746, %v1651
        %v7802 = vadd.f32 %v7748, %v1655
        %v7803 = vadd.f32 %v7750, %v1659
        %v7804 = vadd.f32 %v7752, %v1663
        %v7805 = vadd.f32 %v7754, %v1667
        %v7806 = vadd.f32 %v7756, %v1671
        %v7807 = vadd.f32 %v7758, %v1675
        %v7808 = vadd.f32 %v7760, %v1679
        %v7809 = vadd.f32 %v7762, %v1619
        %v7810 = vadd.f32 %v7764, %v1623
        %v7811 = vadd.f32 %v7766, %v1627
        %v7812 = vadd.f32 %v7768, %v1631
        %v7813 = vadd.f32 %v7770, %v1635
        %v7814 = vadd.f32 %v7772, %v1639
        %v7815 = vadd.f32 %v7774, %v1643
        %v7816 = vadd.f32 %v7776, %v1647
        %v7817 = vadd.f32 %v7778, %v1651
        %v7818 = vadd.f32 %v7780, %v1655
        %v7819 = vadd.f32 %v7782, %v1659
        %v7820 = vadd.f32 %v7784, %v1663
        %v7821 = vadd.f32 %v7786, %v1667
        %v7822 = vadd.f32 %v7788, %v1671
        %v7823 = vadd.f32 %v7790, %v1675
        %v7824 = vadd.f32 %v7792, %v1679
        %7857 = vset.pattern.permute.xlu0 0
        %7858 = vperm.xlu0 %7857, %v7793
        %v7859 = vpop.permute.xlu0 %7858
        %7860 = vset.pattern.permute.xlu0 0
        %7861 = vperm.xlu0 %7860, %v7794
        %v7862 = vpop.permute.xlu0 %7861
        %7863 = vset.pattern.permute.xlu0 0
        %7864 = vperm.xlu0 %7863, %v7795
        %v7865 = vpop.permute.xlu0 %7864
        %7866 = vset.pattern.permute.xlu0 0
        %7867 = vperm.xlu0 %7866, %v7796
        %v7868 = vpop.permute.xlu0 %7867
        %7869 = vset.pattern.permute.xlu0 0
        %7870 = vperm.xlu0 %7869, %v7797
        %v7871 = vpop.permute.xlu0 %7870
        %7872 = vset.pattern.permute.xlu0 0
        %7873 = vperm.xlu0 %7872, %v7798
        %v7874 = vpop.permute.xlu0 %7873
        %7875 = vset.pattern.permute.xlu0 0
        %7876 = vperm.xlu0 %7875, %v7799
        %v7877 = vpop.permute.xlu0 %7876
        %7878 = vset.pattern.permute.xlu0 0
        %7879 = vperm.xlu0 %7878, %v7800
        %v7880 = vpop.permute.xlu0 %7879
        %7881 = vset.pattern.permute.xlu0 0
        %7882 = vperm.xlu0 %7881, %v7801
        %v7883 = vpop.permute.xlu0 %7882
        %7884 = vset.pattern.permute.xlu0 0
        %7885 = vperm.xlu0 %7884, %v7802
        %v7886 = vpop.permute.xlu0 %7885
        %7887 = vset.pattern.permute.xlu0 0
        %7888 = vperm.xlu0 %7887, %v7803
        %v7889 = vpop.permute.xlu0 %7888
        %7890 = vset.pattern.permute.xlu0 0
        %7891 = vperm.xlu0 %7890, %v7804
        %v7892 = vpop.permute.xlu0 %7891
        %7893 = vset.pattern.permute.xlu0 0
        %7894 = vperm.xlu0 %7893, %v7805
        %v7895 = vpop.permute.xlu0 %7894
        %7896 = vset.pattern.permute.xlu0 0
        %7897 = vperm.xlu0 %7896, %v7806
        %v7898 = vpop.permute.xlu0 %7897
        %7899 = vset.pattern.permute.xlu0 0
        %7900 = vperm.xlu0 %7899, %v7807
        %v7901 = vpop.permute.xlu0 %7900
        %7902 = vset.pattern.permute.xlu0 0
        %7903 = vperm.xlu0 %7902, %v7808
        %v7904 = vpop.permute.xlu0 %7903
        %7905 = vset.pattern.permute.xlu0 0
        %7906 = vperm.xlu0 %7905, %v7809
        %v7907 = vpop.permute.xlu0 %7906
        %7908 = vset.pattern.permute.xlu0 0
        %7909 = vperm.xlu0 %7908, %v7810
        %v7910 = vpop.permute.xlu0 %7909
        %7911 = vset.pattern.permute.xlu0 0
        %7912 = vperm.xlu0 %7911, %v7811
        %v7913 = vpop.permute.xlu0 %7912
        %7914 = vset.pattern.permute.xlu0 0
        %7915 = vperm.xlu0 %7914, %v7812
        %v7916 = vpop.permute.xlu0 %7915
        %7917 = vset.pattern.permute.xlu0 0
        %7918 = vperm.xlu0 %7917, %v7813
        %v7919 = vpop.permute.xlu0 %7918
        %7920 = vset.pattern.permute.xlu0 0
        %7921 = vperm.xlu0 %7920, %v7814
        %v7922 = vpop.permute.xlu0 %7921
        %7923 = vset.pattern.permute.xlu0 0
        %7924 = vperm.xlu0 %7923, %v7815
        %v7925 = vpop.permute.xlu0 %7924
        %7926 = vset.pattern.permute.xlu0 0
        %7927 = vperm.xlu0 %7926, %v7816
        %v7928 = vpop.permute.xlu0 %7927
        %7929 = vset.pattern.permute.xlu0 0
        %7930 = vperm.xlu0 %7929, %v7817
        %v7931 = vpop.permute.xlu0 %7930
        %7932 = vset.pattern.permute.xlu0 0
        %7933 = vperm.xlu0 %7932, %v7818
        %v7934 = vpop.permute.xlu0 %7933
        %7935 = vset.pattern.permute.xlu0 0
        %7936 = vperm.xlu0 %7935, %v7819
        %v7937 = vpop.permute.xlu0 %7936
        %7938 = vset.pattern.permute.xlu0 0
        %7939 = vperm.xlu0 %7938, %v7820
        %v7940 = vpop.permute.xlu0 %7939
        %7941 = vset.pattern.permute.xlu0 0
        %7942 = vperm.xlu0 %7941, %v7821
        %v7943 = vpop.permute.xlu0 %7942
        %7944 = vset.pattern.permute.xlu0 0
        %7945 = vperm.xlu0 %7944, %v7822
        %v7946 = vpop.permute.xlu0 %7945
        %7947 = vset.pattern.permute.xlu0 0
        %7948 = vperm.xlu0 %7947, %v7823
        %v7949 = vpop.permute.xlu0 %7948
        %7950 = vset.pattern.permute.xlu0 0
        %7951 = vperm.xlu0 %7950, %v7824
        %v7952 = vpop.permute.xlu0 %7951
        %v7953 = vlaneseq
        %v7954 = vshrl.u32 %v7953, 7
        %v7955 = vsub.s32 %v1857, %v7954
        %v7956 = vrot.slane %v7859, %v7955
        %v7957 = vlaneseq
        %v7958 = vshrl.u32 %v7957, 7
        %v7959 = vsub.s32 %v1862, %v7958
        %v7960 = vrot.slane %v7862, %v7959
        %v7961 = vsel %vm1867, %v7960, %v7956
        %v7962 = vlaneseq
        %v7963 = vshrl.u32 %v7962, 7
        %v7964 = vsub.s32 %v1869, %v7963
        %v7965 = vrot.slane %v7865, %v7964
        %v7966 = vsel %vm1874, %v7965, %v7961
        %v7967 = vlaneseq
        %v7968 = vshrl.u32 %v7967, 7
        %v7969 = vsub.s32 %v1876, %v7968
        %v7970 = vrot.slane %v7868, %v7969
        %v7971 = vsel %vm1881, %v7970, %v7966
        %v7972 = vlaneseq
        %v7973 = vshrl.u32 %v7972, 7
        %v7974 = vsub.s32 %v1883, %v7973
        %v7975 = vrot.slane %v7871, %v7974
        %v7976 = vsel %vm1888, %v7975, %v7971
        %v7977 = vlaneseq
        %v7978 = vshrl.u32 %v7977, 7
        %v7979 = vsub.s32 %v1890, %v7978
        %v7980 = vrot.slane %v7874, %v7979
        %v7981 = vsel %vm1895, %v7980, %v7976
        %v7982 = vlaneseq
        %v7983 = vshrl.u32 %v7982, 7
        %v7984 = vsub.s32 %v1897, %v7983
        %v7985 = vrot.slane %v7877, %v7984
        %v7986 = vsel %vm1902, %v7985, %v7981
        %v7987 = vlaneseq
        %v7988 = vshrl.u32 %v7987, 7
        %v7989 = vsub.s32 %v1904, %v7988
        %v7990 = vrot.slane %v7880, %v7989
        %v7991 = vsel %vm1909, %v7990, %v7986
        %v7992 = vlaneseq
        %v7993 = vshrl.u32 %v7992, 7
        %v7994 = vsub.s32 %v1911, %v7993
        %v7995 = vrot.slane %v7883, %v7994
        %v7996 = vsel %vm1916, %v7995, %v7991
        %v7997 = vlaneseq
        %v7998 = vshrl.u32 %v7997, 7
        %v7999 = vsub.s32 %v1918, %v7998
        %v8000 = vrot.slane %v7886, %v7999
        %v8001 = vsel %vm1923, %v8000, %v7996
        %v8002 = vlaneseq
        %v8003 = vshrl.u32 %v8002, 7
        %v8004 = vsub.s32 %v1925, %v8003
        %v8005 = vrot.slane %v7889, %v8004
        %v8006 = vsel %vm1930, %v8005, %v8001
        %v8007 = vlaneseq
        %v8008 = vshrl.u32 %v8007, 7
        %v8009 = vsub.s32 %v1932, %v8008
        %v8010 = vrot.slane %v7892, %v8009
        %v8011 = vsel %vm1937, %v8010, %v8006
        %v8012 = vlaneseq
        %v8013 = vshrl.u32 %v8012, 7
        %v8014 = vsub.s32 %v1939, %v8013
        %v8015 = vrot.slane %v7895, %v8014
        %v8016 = vsel %vm1944, %v8015, %v8011
        %v8017 = vlaneseq
        %v8018 = vshrl.u32 %v8017, 7
        %v8019 = vsub.s32 %v1946, %v8018
        %v8020 = vrot.slane %v7898, %v8019
        %v8021 = vsel %vm1951, %v8020, %v8016
        %v8022 = vlaneseq
        %v8023 = vshrl.u32 %v8022, 7
        %v8024 = vsub.s32 %v1953, %v8023
        %v8025 = vrot.slane %v7901, %v8024
        %v8026 = vsel %vm1958, %v8025, %v8021
        %v8027 = vlaneseq
        %v8028 = vshrl.u32 %v8027, 7
        %v8029 = vsub.s32 %v1960, %v8028
        %v8030 = vrot.slane %v7904, %v8029
        %v8031 = vsel %vm1965, %v8030, %v8026
        %v8032 = vlaneseq
        %v8033 = vshrl.u32 %v8032, 7
        %v8034 = vsub.s32 %v1857, %v8033
        %v8035 = vrot.slane %v7907, %v8034
        %v8036 = vlaneseq
        %v8037 = vshrl.u32 %v8036, 7
        %v8038 = vsub.s32 %v1862, %v8037
        %v8039 = vrot.slane %v7910, %v8038
        %v8040 = vsel %vm1867, %v8039, %v8035
        %v8041 = vlaneseq
        %v8042 = vshrl.u32 %v8041, 7
        %v8043 = vsub.s32 %v1869, %v8042
        %v8044 = vrot.slane %v7913, %v8043
        %v8045 = vsel %vm1874, %v8044, %v8040
        %v8046 = vlaneseq
        %v8047 = vshrl.u32 %v8046, 7
        %v8048 = vsub.s32 %v1876, %v8047
        %v8049 = vrot.slane %v7916, %v8048
        %v8050 = vsel %vm1881, %v8049, %v8045
        %v8051 = vlaneseq
        %v8052 = vshrl.u32 %v8051, 7
        %v8053 = vsub.s32 %v1883, %v8052
        %v8054 = vrot.slane %v7919, %v8053
        %v8055 = vsel %vm1888, %v8054, %v8050
        %v8056 = vlaneseq
        %v8057 = vshrl.u32 %v8056, 7
        %v8058 = vsub.s32 %v1890, %v8057
        %v8059 = vrot.slane %v7922, %v8058
        %v8060 = vsel %vm1895, %v8059, %v8055
        %v8061 = vlaneseq
        %v8062 = vshrl.u32 %v8061, 7
        %v8063 = vsub.s32 %v1897, %v8062
        %v8064 = vrot.slane %v7925, %v8063
        %v8065 = vsel %vm1902, %v8064, %v8060
        %v8066 = vlaneseq
        %v8067 = vshrl.u32 %v8066, 7
        %v8068 = vsub.s32 %v1904, %v8067
        %v8069 = vrot.slane %v7928, %v8068
        %v8070 = vsel %vm1909, %v8069, %v8065
        %v8071 = vlaneseq
        %v8072 = vshrl.u32 %v8071, 7
        %v8073 = vsub.s32 %v1911, %v8072
        %v8074 = vrot.slane %v7931, %v8073
        %v8075 = vsel %vm1916, %v8074, %v8070
        %v8076 = vlaneseq
        %v8077 = vshrl.u32 %v8076, 7
        %v8078 = vsub.s32 %v1918, %v8077
        %v8079 = vrot.slane %v7934, %v8078
        %v8080 = vsel %vm1923, %v8079, %v8075
        %v8081 = vlaneseq
        %v8082 = vshrl.u32 %v8081, 7
        %v8083 = vsub.s32 %v1925, %v8082
        %v8084 = vrot.slane %v7937, %v8083
        %v8085 = vsel %vm1930, %v8084, %v8080
        %v8086 = vlaneseq
        %v8087 = vshrl.u32 %v8086, 7
        %v8088 = vsub.s32 %v1932, %v8087
        %v8089 = vrot.slane %v7940, %v8088
        %v8090 = vsel %vm1937, %v8089, %v8085
        %v8091 = vlaneseq
        %v8092 = vshrl.u32 %v8091, 7
        %v8093 = vsub.s32 %v1939, %v8092
        %v8094 = vrot.slane %v7943, %v8093
        %v8095 = vsel %vm1944, %v8094, %v8090
        %v8096 = vlaneseq
        %v8097 = vshrl.u32 %v8096, 7
        %v8098 = vsub.s32 %v1946, %v8097
        %v8099 = vrot.slane %v7946, %v8098
        %v8100 = vsel %vm1951, %v8099, %v8095
        %v8101 = vlaneseq
        %v8102 = vshrl.u32 %v8101, 7
        %v8103 = vsub.s32 %v1953, %v8102
        %v8104 = vrot.slane %v7949, %v8103
        %v8105 = vsel %vm1958, %v8104, %v8100
        %v8106 = vlaneseq
        %v8107 = vshrl.u32 %v8106, 7
        %v8108 = vsub.s32 %v1960, %v8107
        %v8109 = vrot.slane %v7952, %v8108
        %v8110 = vsel %vm1965, %v8109, %v8105
        %v8111 = vsel %vm2046, %v8110, %v8031
        %v8113 = vsel %vm2049, %v8111, -inf
        %8114 = vmax.xlane.f32.xlu0 %v8113
        %v8115 = vpop.xlane.xlu0 %8114
        %v8117 = vlaneseq
        %v8118 = vshrl.u32 %v8117, 7
        %v8119 = vsub.s32 0, %v8118
        %v8120 = vrot.slane %v8115, %v8119
        %v8121 = vlaneseq
        %v8122 = vshrl.u32 %v8121, 7
        %v8123 = vsub.s32 1, %v8122
        %v8124 = vrot.slane %v8115, %v8123
        %v8127 = vsub.f32 %v7793, %v8120
        %v8128 = vsub.f32 %v7794, %v8120
        %v8129 = vsub.f32 %v7795, %v8120
        %v8130 = vsub.f32 %v7796, %v8120
        %v8131 = vsub.f32 %v7797, %v8120
        %v8132 = vsub.f32 %v7798, %v8120
        %v8133 = vsub.f32 %v7799, %v8120
        %v8134 = vsub.f32 %v7800, %v8120
        %v8135 = vsub.f32 %v7801, %v8120
        %v8136 = vsub.f32 %v7802, %v8120
        %v8137 = vsub.f32 %v7803, %v8120
        %v8138 = vsub.f32 %v7804, %v8120
        %v8139 = vsub.f32 %v7805, %v8120
        %v8140 = vsub.f32 %v7806, %v8120
        %v8141 = vsub.f32 %v7807, %v8120
        %v8142 = vsub.f32 %v7808, %v8120
        %v8143 = vsub.f32 %v7809, %v8124
        %v8144 = vsub.f32 %v7810, %v8124
        %v8145 = vsub.f32 %v7811, %v8124
        %v8146 = vsub.f32 %v7812, %v8124
        %v8147 = vsub.f32 %v7813, %v8124
        %v8148 = vsub.f32 %v7814, %v8124
        %v8149 = vsub.f32 %v7815, %v8124
        %v8150 = vsub.f32 %v7816, %v8124
        %v8151 = vsub.f32 %v7817, %v8124
        %v8152 = vsub.f32 %v7818, %v8124
        %v8153 = vsub.f32 %v7819, %v8124
        %v8154 = vsub.f32 %v7820, %v8124
        %v8155 = vsub.f32 %v7821, %v8124
        %v8156 = vsub.f32 %v7822, %v8124
        %v8157 = vsub.f32 %v7823, %v8124
        %v8158 = vsub.f32 %v7824, %v8124
        %v8159 = vmul.f32 %v8127, 1.442695
        %v8160 = vpow.pop %v8159
        %v8161 = vmul.f32 %v8128, 1.442695
        %v8162 = vpow.pop %v8161
        %v8163 = vmul.f32 %v8129, 1.442695
        %v8164 = vpow.pop %v8163
        %v8165 = vmul.f32 %v8130, 1.442695
        %v8166 = vpow.pop %v8165
        %v8167 = vmul.f32 %v8131, 1.442695
        %v8168 = vpow.pop %v8167
        %v8169 = vmul.f32 %v8132, 1.442695
        %v8170 = vpow.pop %v8169
        %v8171 = vmul.f32 %v8133, 1.442695
        %v8172 = vpow.pop %v8171
        %v8173 = vmul.f32 %v8134, 1.442695
        %v8174 = vpow.pop %v8173
        %v8175 = vmul.f32 %v8135, 1.442695
        %v8176 = vpow.pop %v8175
        %v8177 = vmul.f32 %v8136, 1.442695
        %v8178 = vpow.pop %v8177
        %v8179 = vmul.f32 %v8137, 1.442695
        %v8180 = vpow.pop %v8179
        %v8181 = vmul.f32 %v8138, 1.442695
        %v8182 = vpow.pop %v8181
        %v8183 = vmul.f32 %v8139, 1.442695
        %v8184 = vpow.pop %v8183
        %v8185 = vmul.f32 %v8140, 1.442695
        %v8186 = vpow.pop %v8185
        %v8187 = vmul.f32 %v8141, 1.442695
        %v8188 = vpow.pop %v8187
        %v8189 = vmul.f32 %v8142, 1.442695
        %v8190 = vpow.pop %v8189
        %v8191 = vmul.f32 %v8143, 1.442695
        %v8192 = vpow.pop %v8191
        %v8193 = vmul.f32 %v8144, 1.442695
        %v8194 = vpow.pop %v8193
        %v8195 = vmul.f32 %v8145, 1.442695
        %v8196 = vpow.pop %v8195
        %v8197 = vmul.f32 %v8146, 1.442695
        %v8198 = vpow.pop %v8197
        %v8199 = vmul.f32 %v8147, 1.442695
        %v8200 = vpow.pop %v8199
        %v8201 = vmul.f32 %v8148, 1.442695
        %v8202 = vpow.pop %v8201
        %v8203 = vmul.f32 %v8149, 1.442695
        %v8204 = vpow.pop %v8203
        %v8205 = vmul.f32 %v8150, 1.442695
        %v8206 = vpow.pop %v8205
        %v8207 = vmul.f32 %v8151, 1.442695
        %v8208 = vpow.pop %v8207
        %v8209 = vmul.f32 %v8152, 1.442695
        %v8210 = vpow.pop %v8209
        %v8211 = vmul.f32 %v8153, 1.442695
        %v8212 = vpow.pop %v8211
        %v8213 = vmul.f32 %v8154, 1.442695
        %v8214 = vpow.pop %v8213
        %v8215 = vmul.f32 %v8155, 1.442695
        %v8216 = vpow.pop %v8215
        %v8217 = vmul.f32 %v8156, 1.442695
        %v8218 = vpow.pop %v8217
        %v8219 = vmul.f32 %v8157, 1.442695
        %v8220 = vpow.pop %v8219
        %v8221 = vmul.f32 %v8158, 1.442695
        %v8222 = vpow.pop %v8221
        %8255 = vset.pattern.permute.xlu0 0
        %8256 = vperm.xlu0 %8255, %v8160
        %v8257 = vpop.permute.xlu0 %8256
        %8258 = vset.pattern.permute.xlu0 0
        %8259 = vperm.xlu0 %8258, %v8162
        %v8260 = vpop.permute.xlu0 %8259
        %8261 = vset.pattern.permute.xlu0 0
        %8262 = vperm.xlu0 %8261, %v8164
        %v8263 = vpop.permute.xlu0 %8262
        %8264 = vset.pattern.permute.xlu0 0
        %8265 = vperm.xlu0 %8264, %v8166
        %v8266 = vpop.permute.xlu0 %8265
        %8267 = vset.pattern.permute.xlu0 0
        %8268 = vperm.xlu0 %8267, %v8168
        %v8269 = vpop.permute.xlu0 %8268
        %8270 = vset.pattern.permute.xlu0 0
        %8271 = vperm.xlu0 %8270, %v8170
        %v8272 = vpop.permute.xlu0 %8271
        %8273 = vset.pattern.permute.xlu0 0
        %8274 = vperm.xlu0 %8273, %v8172
        %v8275 = vpop.permute.xlu0 %8274
        %8276 = vset.pattern.permute.xlu0 0
        %8277 = vperm.xlu0 %8276, %v8174
        %v8278 = vpop.permute.xlu0 %8277
        %8279 = vset.pattern.permute.xlu0 0
        %8280 = vperm.xlu0 %8279, %v8176
        %v8281 = vpop.permute.xlu0 %8280
        %8282 = vset.pattern.permute.xlu0 0
        %8283 = vperm.xlu0 %8282, %v8178
        %v8284 = vpop.permute.xlu0 %8283
        %8285 = vset.pattern.permute.xlu0 0
        %8286 = vperm.xlu0 %8285, %v8180
        %v8287 = vpop.permute.xlu0 %8286
        %8288 = vset.pattern.permute.xlu0 0
        %8289 = vperm.xlu0 %8288, %v8182
        %v8290 = vpop.permute.xlu0 %8289
        %8291 = vset.pattern.permute.xlu0 0
        %8292 = vperm.xlu0 %8291, %v8184
        %v8293 = vpop.permute.xlu0 %8292
        %8294 = vset.pattern.permute.xlu0 0
        %8295 = vperm.xlu0 %8294, %v8186
        %v8296 = vpop.permute.xlu0 %8295
        %8297 = vset.pattern.permute.xlu0 0
        %8298 = vperm.xlu0 %8297, %v8188
        %v8299 = vpop.permute.xlu0 %8298
        %8300 = vset.pattern.permute.xlu0 0
        %8301 = vperm.xlu0 %8300, %v8190
        %v8302 = vpop.permute.xlu0 %8301
        %8303 = vset.pattern.permute.xlu0 0
        %8304 = vperm.xlu0 %8303, %v8192
        %v8305 = vpop.permute.xlu0 %8304
        %8306 = vset.pattern.permute.xlu0 0
        %8307 = vperm.xlu0 %8306, %v8194
        %v8308 = vpop.permute.xlu0 %8307
        %8309 = vset.pattern.permute.xlu0 0
        %8310 = vperm.xlu0 %8309, %v8196
        %v8311 = vpop.permute.xlu0 %8310
        %8312 = vset.pattern.permute.xlu0 0
        %8313 = vperm.xlu0 %8312, %v8198
        %v8314 = vpop.permute.xlu0 %8313
        %8315 = vset.pattern.permute.xlu0 0
        %8316 = vperm.xlu0 %8315, %v8200
        %v8317 = vpop.permute.xlu0 %8316
        %8318 = vset.pattern.permute.xlu0 0
        %8319 = vperm.xlu0 %8318, %v8202
        %v8320 = vpop.permute.xlu0 %8319
        %8321 = vset.pattern.permute.xlu0 0
        %8322 = vperm.xlu0 %8321, %v8204
        %v8323 = vpop.permute.xlu0 %8322
        %8324 = vset.pattern.permute.xlu0 0
        %8325 = vperm.xlu0 %8324, %v8206
        %v8326 = vpop.permute.xlu0 %8325
        %8327 = vset.pattern.permute.xlu0 0
        %8328 = vperm.xlu0 %8327, %v8208
        %v8329 = vpop.permute.xlu0 %8328
        %8330 = vset.pattern.permute.xlu0 0
        %8331 = vperm.xlu0 %8330, %v8210
        %v8332 = vpop.permute.xlu0 %8331
        %8333 = vset.pattern.permute.xlu0 0
        %8334 = vperm.xlu0 %8333, %v8212
        %v8335 = vpop.permute.xlu0 %8334
        %8336 = vset.pattern.permute.xlu0 0
        %8337 = vperm.xlu0 %8336, %v8214
        %v8338 = vpop.permute.xlu0 %8337
        %8339 = vset.pattern.permute.xlu0 0
        %8340 = vperm.xlu0 %8339, %v8216
        %v8341 = vpop.permute.xlu0 %8340
        %8342 = vset.pattern.permute.xlu0 0
        %8343 = vperm.xlu0 %8342, %v8218
        %v8344 = vpop.permute.xlu0 %8343
        %8345 = vset.pattern.permute.xlu0 0
        %8346 = vperm.xlu0 %8345, %v8220
        %v8347 = vpop.permute.xlu0 %8346
        %8348 = vset.pattern.permute.xlu0 0
        %8349 = vperm.xlu0 %8348, %v8222
        %v8350 = vpop.permute.xlu0 %8349
        %v8351 = vlaneseq
        %v8352 = vshrl.u32 %v8351, 7
        %v8353 = vsub.s32 %v1857, %v8352
        %v8354 = vrot.slane %v8257, %v8353
        %v8355 = vlaneseq
        %v8356 = vshrl.u32 %v8355, 7
        %v8357 = vsub.s32 %v1862, %v8356
        %v8358 = vrot.slane %v8260, %v8357
        %v8359 = vsel %vm1867, %v8358, %v8354
        %v8360 = vlaneseq
        %v8361 = vshrl.u32 %v8360, 7
        %v8362 = vsub.s32 %v1869, %v8361
        %v8363 = vrot.slane %v8263, %v8362
        %v8364 = vsel %vm1874, %v8363, %v8359
        %v8365 = vlaneseq
        %v8366 = vshrl.u32 %v8365, 7
        %v8367 = vsub.s32 %v1876, %v8366
        %v8368 = vrot.slane %v8266, %v8367
        %v8369 = vsel %vm1881, %v8368, %v8364
        %v8370 = vlaneseq
        %v8371 = vshrl.u32 %v8370, 7
        %v8372 = vsub.s32 %v1883, %v8371
        %v8373 = vrot.slane %v8269, %v8372
        %v8374 = vsel %vm1888, %v8373, %v8369
        %v8375 = vlaneseq
        %v8376 = vshrl.u32 %v8375, 7
        %v8377 = vsub.s32 %v1890, %v8376
        %v8378 = vrot.slane %v8272, %v8377
        %v8379 = vsel %vm1895, %v8378, %v8374
        %v8380 = vlaneseq
        %v8381 = vshrl.u32 %v8380, 7
        %v8382 = vsub.s32 %v1897, %v8381
        %v8383 = vrot.slane %v8275, %v8382
        %v8384 = vsel %vm1902, %v8383, %v8379
        %v8385 = vlaneseq
        %v8386 = vshrl.u32 %v8385, 7
        %v8387 = vsub.s32 %v1904, %v8386
        %v8388 = vrot.slane %v8278, %v8387
        %v8389 = vsel %vm1909, %v8388, %v8384
        %v8390 = vlaneseq
        %v8391 = vshrl.u32 %v8390, 7
        %v8392 = vsub.s32 %v1911, %v8391
        %v8393 = vrot.slane %v8281, %v8392
        %v8394 = vsel %vm1916, %v8393, %v8389
        %v8395 = vlaneseq
        %v8396 = vshrl.u32 %v8395, 7
        %v8397 = vsub.s32 %v1918, %v8396
        %v8398 = vrot.slane %v8284, %v8397
        %v8399 = vsel %vm1923, %v8398, %v8394
        %v8400 = vlaneseq
        %v8401 = vshrl.u32 %v8400, 7
        %v8402 = vsub.s32 %v1925, %v8401
        %v8403 = vrot.slane %v8287, %v8402
        %v8404 = vsel %vm1930, %v8403, %v8399
        %v8405 = vlaneseq
        %v8406 = vshrl.u32 %v8405, 7
        %v8407 = vsub.s32 %v1932, %v8406
        %v8408 = vrot.slane %v8290, %v8407
        %v8409 = vsel %vm1937, %v8408, %v8404
        %v8410 = vlaneseq
        %v8411 = vshrl.u32 %v8410, 7
        %v8412 = vsub.s32 %v1939, %v8411
        %v8413 = vrot.slane %v8293, %v8412
        %v8414 = vsel %vm1944, %v8413, %v8409
        %v8415 = vlaneseq
        %v8416 = vshrl.u32 %v8415, 7
        %v8417 = vsub.s32 %v1946, %v8416
        %v8418 = vrot.slane %v8296, %v8417
        %v8419 = vsel %vm1951, %v8418, %v8414
        %v8420 = vlaneseq
        %v8421 = vshrl.u32 %v8420, 7
        %v8422 = vsub.s32 %v1953, %v8421
        %v8423 = vrot.slane %v8299, %v8422
        %v8424 = vsel %vm1958, %v8423, %v8419
        %v8425 = vlaneseq
        %v8426 = vshrl.u32 %v8425, 7
        %v8427 = vsub.s32 %v1960, %v8426
        %v8428 = vrot.slane %v8302, %v8427
        %v8429 = vsel %vm1965, %v8428, %v8424
        %v8430 = vlaneseq
        %v8431 = vshrl.u32 %v8430, 7
        %v8432 = vsub.s32 %v1857, %v8431
        %v8433 = vrot.slane %v8305, %v8432
        %v8434 = vlaneseq
        %v8435 = vshrl.u32 %v8434, 7
        %v8436 = vsub.s32 %v1862, %v8435
        %v8437 = vrot.slane %v8308, %v8436
        %v8438 = vsel %vm1867, %v8437, %v8433
        %v8439 = vlaneseq
        %v8440 = vshrl.u32 %v8439, 7
        %v8441 = vsub.s32 %v1869, %v8440
        %v8442 = vrot.slane %v8311, %v8441
        %v8443 = vsel %vm1874, %v8442, %v8438
        %v8444 = vlaneseq
        %v8445 = vshrl.u32 %v8444, 7
        %v8446 = vsub.s32 %v1876, %v8445
        %v8447 = vrot.slane %v8314, %v8446
        %v8448 = vsel %vm1881, %v8447, %v8443
        %v8449 = vlaneseq
        %v8450 = vshrl.u32 %v8449, 7
        %v8451 = vsub.s32 %v1883, %v8450
        %v8452 = vrot.slane %v8317, %v8451
        %v8453 = vsel %vm1888, %v8452, %v8448
        %v8454 = vlaneseq
        %v8455 = vshrl.u32 %v8454, 7
        %v8456 = vsub.s32 %v1890, %v8455
        %v8457 = vrot.slane %v8320, %v8456
        %v8458 = vsel %vm1895, %v8457, %v8453
        %v8459 = vlaneseq
        %v8460 = vshrl.u32 %v8459, 7
        %v8461 = vsub.s32 %v1897, %v8460
        %v8462 = vrot.slane %v8323, %v8461
        %v8463 = vsel %vm1902, %v8462, %v8458
        %v8464 = vlaneseq
        %v8465 = vshrl.u32 %v8464, 7
        %v8466 = vsub.s32 %v1904, %v8465
        %v8467 = vrot.slane %v8326, %v8466
        %v8468 = vsel %vm1909, %v8467, %v8463
        %v8469 = vlaneseq
        %v8470 = vshrl.u32 %v8469, 7
        %v8471 = vsub.s32 %v1911, %v8470
        %v8472 = vrot.slane %v8329, %v8471
        %v8473 = vsel %vm1916, %v8472, %v8468
        %v8474 = vlaneseq
        %v8475 = vshrl.u32 %v8474, 7
        %v8476 = vsub.s32 %v1918, %v8475
        %v8477 = vrot.slane %v8332, %v8476
        %v8478 = vsel %vm1923, %v8477, %v8473
        %v8479 = vlaneseq
        %v8480 = vshrl.u32 %v8479, 7
        %v8481 = vsub.s32 %v1925, %v8480
        %v8482 = vrot.slane %v8335, %v8481
        %v8483 = vsel %vm1930, %v8482, %v8478
        %v8484 = vlaneseq
        %v8485 = vshrl.u32 %v8484, 7
        %v8486 = vsub.s32 %v1932, %v8485
        %v8487 = vrot.slane %v8338, %v8486
        %v8488 = vsel %vm1937, %v8487, %v8483
        %v8489 = vlaneseq
        %v8490 = vshrl.u32 %v8489, 7
        %v8491 = vsub.s32 %v1939, %v8490
        %v8492 = vrot.slane %v8341, %v8491
        %v8493 = vsel %vm1944, %v8492, %v8488
        %v8494 = vlaneseq
        %v8495 = vshrl.u32 %v8494, 7
        %v8496 = vsub.s32 %v1946, %v8495
        %v8497 = vrot.slane %v8344, %v8496
        %v8498 = vsel %vm1951, %v8497, %v8493
        %v8499 = vlaneseq
        %v8500 = vshrl.u32 %v8499, 7
        %v8501 = vsub.s32 %v1953, %v8500
        %v8502 = vrot.slane %v8347, %v8501
        %v8503 = vsel %vm1958, %v8502, %v8498
        %v8504 = vlaneseq
        %v8505 = vshrl.u32 %v8504, 7
        %v8506 = vsub.s32 %v1960, %v8505
        %v8507 = vrot.slane %v8350, %v8506
        %v8508 = vsel %vm1965, %v8507, %v8503
        %v8509 = vsel %vm2046, %v8508, %v8429
        %v8511 = vsel %vm2049, %v8509, 0.0
        %8512 = vadd.xlane.f32.xlu0 %v8511
        %v8513 = vpop.xlane.xlu0 %8512
        %v8514 = vrcp.pop %v8513
        %v8516 = vlaneseq
        %v8517 = vshrl.u32 %v8516, 7
        %v8518 = vsub.s32 0, %v8517
        %v8519 = vrot.slane %v8514, %v8518
        %v8520 = vlaneseq
        %v8521 = vshrl.u32 %v8520, 7
        %v8522 = vsub.s32 1, %v8521
        %v8523 = vrot.slane %v8514, %v8522
        %v8526 = vmul.f32 %v8160, %v8519
        %v8527 = vmul.f32 %v8162, %v8519
        %v8528 = vmul.f32 %v8164, %v8519
        %v8529 = vmul.f32 %v8166, %v8519
        %v8530 = vmul.f32 %v8168, %v8519
        %v8531 = vmul.f32 %v8170, %v8519
        %v8532 = vmul.f32 %v8172, %v8519
        %v8533 = vmul.f32 %v8174, %v8519
        %v8534 = vmul.f32 %v8176, %v8519
        %v8535 = vmul.f32 %v8178, %v8519
        %v8536 = vmul.f32 %v8180, %v8519
        %v8537 = vmul.f32 %v8182, %v8519
        %v8538 = vmul.f32 %v8184, %v8519
        %v8539 = vmul.f32 %v8186, %v8519
        %v8540 = vmul.f32 %v8188, %v8519
        %v8541 = vmul.f32 %v8190, %v8519
        %v8542 = vmul.f32 %v8192, %v8523
        %v8543 = vmul.f32 %v8194, %v8523
        %v8544 = vmul.f32 %v8196, %v8523
        %v8545 = vmul.f32 %v8198, %v8523
        %v8546 = vmul.f32 %v8200, %v8523
        %v8547 = vmul.f32 %v8202, %v8523
        %v8548 = vmul.f32 %v8204, %v8523
        %v8549 = vmul.f32 %v8206, %v8523
        %v8550 = vmul.f32 %v8208, %v8523
        %v8551 = vmul.f32 %v8210, %v8523
        %v8552 = vmul.f32 %v8212, %v8523
        %v8553 = vmul.f32 %v8214, %v8523
        %v8554 = vmul.f32 %v8216, %v8523
        %v8555 = vmul.f32 %v8218, %v8523
        %v8556 = vmul.f32 %v8220, %v8523
        %v8557 = vmul.f32 %v8222, %v8523
        %8559 = vset.pattern.permute.xlu0 0
        %8560 = vperm.xlu0 %8559, %v8526
        %v8561 = vpop.permute.xlu0 %8560
        %8564 = vset.pattern.permute.xlu0 0
        %8565 = vperm.xlu0 %8564, %v8527
        %v8566 = vpop.permute.xlu0 %8565
        %8569 = vset.pattern.permute.xlu0 0
        %8570 = vperm.xlu0 %8569, %v8528
        %v8571 = vpop.permute.xlu0 %8570
        %8574 = vset.pattern.permute.xlu0 0
        %8575 = vperm.xlu0 %8574, %v8529
        %v8576 = vpop.permute.xlu0 %8575
        %8579 = vset.pattern.permute.xlu0 0
        %8580 = vperm.xlu0 %8579, %v8530
        %v8581 = vpop.permute.xlu0 %8580
        %8584 = vset.pattern.permute.xlu0 0
        %8585 = vperm.xlu0 %8584, %v8531
        %v8586 = vpop.permute.xlu0 %8585
        %8589 = vset.pattern.permute.xlu0 0
        %8590 = vperm.xlu0 %8589, %v8532
        %v8591 = vpop.permute.xlu0 %8590
        %8594 = vset.pattern.permute.xlu0 0
        %8595 = vperm.xlu0 %8594, %v8533
        %v8596 = vpop.permute.xlu0 %8595
        %8599 = vset.pattern.permute.xlu0 0
        %8600 = vperm.xlu0 %8599, %v8534
        %v8601 = vpop.permute.xlu0 %8600
        %8604 = vset.pattern.permute.xlu0 0
        %8605 = vperm.xlu0 %8604, %v8535
        %v8606 = vpop.permute.xlu0 %8605
        %8609 = vset.pattern.permute.xlu0 0
        %8610 = vperm.xlu0 %8609, %v8536
        %v8611 = vpop.permute.xlu0 %8610
        %8614 = vset.pattern.permute.xlu0 0
        %8615 = vperm.xlu0 %8614, %v8537
        %v8616 = vpop.permute.xlu0 %8615
        %8619 = vset.pattern.permute.xlu0 0
        %8620 = vperm.xlu0 %8619, %v8538
        %v8621 = vpop.permute.xlu0 %8620
        %8624 = vset.pattern.permute.xlu0 0
        %8625 = vperm.xlu0 %8624, %v8539
        %v8626 = vpop.permute.xlu0 %8625
        %8629 = vset.pattern.permute.xlu0 0
        %8630 = vperm.xlu0 %8629, %v8540
        %v8631 = vpop.permute.xlu0 %8630
        %8634 = vset.pattern.permute.xlu0 0
        %8635 = vperm.xlu0 %8634, %v8541
        %v8636 = vpop.permute.xlu0 %8635
        %8639 = vset.pattern.permute.xlu0 0
        %8640 = vperm.xlu0 %8639, %v8542
        %v8641 = vpop.permute.xlu0 %8640
        %8644 = vset.pattern.permute.xlu0 0
        %8645 = vperm.xlu0 %8644, %v8543
        %v8646 = vpop.permute.xlu0 %8645
        %8649 = vset.pattern.permute.xlu0 0
        %8650 = vperm.xlu0 %8649, %v8544
        %v8651 = vpop.permute.xlu0 %8650
        %8654 = vset.pattern.permute.xlu0 0
        %8655 = vperm.xlu0 %8654, %v8545
        %v8656 = vpop.permute.xlu0 %8655
        %8659 = vset.pattern.permute.xlu0 0
        %8660 = vperm.xlu0 %8659, %v8546
        %v8661 = vpop.permute.xlu0 %8660
        %8664 = vset.pattern.permute.xlu0 0
        %8665 = vperm.xlu0 %8664, %v8547
        %v8666 = vpop.permute.xlu0 %8665
        %8669 = vset.pattern.permute.xlu0 0
        %8670 = vperm.xlu0 %8669, %v8548
        %v8671 = vpop.permute.xlu0 %8670
        %8674 = vset.pattern.permute.xlu0 0
        %8675 = vperm.xlu0 %8674, %v8549
        %v8676 = vpop.permute.xlu0 %8675
        %8679 = vset.pattern.permute.xlu0 0
        %8680 = vperm.xlu0 %8679, %v8550
        %v8681 = vpop.permute.xlu0 %8680
        %8684 = vset.pattern.permute.xlu0 0
        %8685 = vperm.xlu0 %8684, %v8551
        %v8686 = vpop.permute.xlu0 %8685
        %8689 = vset.pattern.permute.xlu0 0
        %8690 = vperm.xlu0 %8689, %v8552
        %v8691 = vpop.permute.xlu0 %8690
        %8694 = vset.pattern.permute.xlu0 0
        %8695 = vperm.xlu0 %8694, %v8553
        %v8696 = vpop.permute.xlu0 %8695
        %8699 = vset.pattern.permute.xlu0 0
        %8700 = vperm.xlu0 %8699, %v8554
        %v8701 = vpop.permute.xlu0 %8700
        %8704 = vset.pattern.permute.xlu0 0
        %8705 = vperm.xlu0 %8704, %v8555
        %v8706 = vpop.permute.xlu0 %8705
        %8709 = vset.pattern.permute.xlu0 0
        %8710 = vperm.xlu0 %8709, %v8556
        %v8711 = vpop.permute.xlu0 %8710
        %8714 = vset.pattern.permute.xlu0 0
        %8715 = vperm.xlu0 %8714, %v8557
        %v8716 = vpop.permute.xlu0 %8715
        %v8718 = vmul.f32 %v620, %v8561
        %v8719 = vmul.f32 %v621, %v8566
        %v8720 = vmul.f32 %v622, %v8571
        %v8721 = vmul.f32 %v623, %v8576
        %v8722 = vmul.f32 %v624, %v8581
        %v8723 = vmul.f32 %v625, %v8586
        %v8724 = vmul.f32 %v626, %v8591
        %v8725 = vmul.f32 %v627, %v8596
        %v8726 = vmul.f32 %v628, %v8601
        %v8727 = vmul.f32 %v629, %v8606
        %v8728 = vmul.f32 %v630, %v8611
        %v8729 = vmul.f32 %v631, %v8616
        %v8730 = vmul.f32 %v632, %v8621
        %v8731 = vmul.f32 %v633, %v8626
        %v8732 = vmul.f32 %v634, %v8631
        %v8733 = vmul.f32 %v635, %v8636
        %v8734 = vmul.f32 %v636, %v8641
        %v8735 = vmul.f32 %v637, %v8646
        %v8736 = vmul.f32 %v638, %v8651
        %v8737 = vmul.f32 %v639, %v8656
        %v8738 = vmul.f32 %v640, %v8661
        %v8739 = vmul.f32 %v641, %v8666
        %v8740 = vmul.f32 %v642, %v8671
        %v8741 = vmul.f32 %v643, %v8676
        %v8742 = vmul.f32 %v644, %v8681
        %v8743 = vmul.f32 %v645, %v8686
        %v8744 = vmul.f32 %v646, %v8691
        %v8745 = vmul.f32 %v647, %v8696
        %v8746 = vmul.f32 %v648, %v8701
        %v8747 = vmul.f32 %v649, %v8706
        %v8748 = vmul.f32 %v650, %v8711
        %v8749 = vmul.f32 %v651, %v8716
        %v8750 = vsel %vm2687, %v8718, 0.0
        %v8751 = vsel %vm2687, %v8719, 0.0
        %v8752 = vadd.f32 %v8750, %v8751
        %v8753 = vsel %vm2687, %v8720, 0.0
        %v8754 = vadd.f32 %v8752, %v8753
        %v8755 = vsel %vm2687, %v8721, 0.0
        %v8756 = vadd.f32 %v8754, %v8755
        %v8757 = vsel %vm2687, %v8722, 0.0
        %v8758 = vadd.f32 %v8756, %v8757
        %v8759 = vsel %vm2687, %v8723, 0.0
        %v8760 = vadd.f32 %v8758, %v8759
        %v8761 = vsel %vm2687, %v8724, 0.0
        %v8762 = vadd.f32 %v8760, %v8761
        %v8763 = vsel %vm2687, %v8725, 0.0
        %v8764 = vadd.f32 %v8762, %v8763
        %v8765 = vsel %vm2687, %v8726, 0.0
        %v8766 = vadd.f32 %v8764, %v8765
        %v8767 = vsel %vm2687, %v8727, 0.0
        %v8768 = vadd.f32 %v8766, %v8767
        %v8769 = vsel %vm2687, %v8728, 0.0
        %v8770 = vadd.f32 %v8768, %v8769
        %v8771 = vsel %vm2687, %v8729, 0.0
        %v8772 = vadd.f32 %v8770, %v8771
        %v8773 = vsel %vm2687, %v8730, 0.0
        %v8774 = vadd.f32 %v8772, %v8773
        %v8775 = vsel %vm2687, %v8731, 0.0
        %v8776 = vadd.f32 %v8774, %v8775
        %v8777 = vsel %vm2687, %v8732, 0.0
        %v8778 = vadd.f32 %v8776, %v8777
        %v8779 = vsel %vm2687, %v8733, 0.0
        %v8780 = vadd.f32 %v8778, %v8779
        %v8781 = vrot.slane %v8780, 4
        %v8782 = vadd.f32 %v8780, %v8781
        %v8783 = vrot.slane %v8782, 2
        %v8784 = vadd.f32 %v8782, %v8783
        %v8785 = vrot.slane %v8784, 1
        %v8786 = vadd.f32 %v8784, %v8785
        %v8787 = vsel %vm2687, %v8734, 0.0
        %v8788 = vsel %vm2687, %v8735, 0.0
        %v8789 = vadd.f32 %v8787, %v8788
        %v8790 = vsel %vm2687, %v8736, 0.0
        %v8791 = vadd.f32 %v8789, %v8790
        %v8792 = vsel %vm2687, %v8737, 0.0
        %v8793 = vadd.f32 %v8791, %v8792
        %v8794 = vsel %vm2687, %v8738, 0.0
        %v8795 = vadd.f32 %v8793, %v8794
        %v8796 = vsel %vm2687, %v8739, 0.0
        %v8797 = vadd.f32 %v8795, %v8796
        %v8798 = vsel %vm2687, %v8740, 0.0
        %v8799 = vadd.f32 %v8797, %v8798
        %v8800 = vsel %vm2687, %v8741, 0.0
        %v8801 = vadd.f32 %v8799, %v8800
        %v8802 = vsel %vm2687, %v8742, 0.0
        %v8803 = vadd.f32 %v8801, %v8802
        %v8804 = vsel %vm2687, %v8743, 0.0
        %v8805 = vadd.f32 %v8803, %v8804
        %v8806 = vsel %vm2687, %v8744, 0.0
        %v8807 = vadd.f32 %v8805, %v8806
        %v8808 = vsel %vm2687, %v8745, 0.0
        %v8809 = vadd.f32 %v8807, %v8808
        %v8810 = vsel %vm2687, %v8746, 0.0
        %v8811 = vadd.f32 %v8809, %v8810
        %v8812 = vsel %vm2687, %v8747, 0.0
        %v8813 = vadd.f32 %v8811, %v8812
        %v8814 = vsel %vm2687, %v8748, 0.0
        %v8815 = vadd.f32 %v8813, %v8814
        %v8816 = vsel %vm2687, %v8749, 0.0
        %v8817 = vadd.f32 %v8815, %v8816
        %v8818 = vrot.slane %v8817, 4
        %v8819 = vadd.f32 %v8817, %v8818
        %v8820 = vrot.slane %v8819, 2
        %v8821 = vadd.f32 %v8819, %v8820
        %v8822 = vrot.slane %v8821, 1
        %v8823 = vadd.f32 %v8821, %v8822
        %s8824 = scalar_lea.vmem %s536, 12
        %v8825 = vld [vmem:[%s8824] sm:$0xf]
        %v8826 = vunpack.c.l.bf16 %v8825
        %v8827 = vpack.c.bf16 %v8786, %v8786
        %v8828 = vpack.c.bf16 %v8823, %v8823
        %v8831 = vunpack.c.l.b16 %v8827
        %v8832 = vunpack.c.l.b16 %v8828
        %v8833 = vsel %vm2046, %v8832, %v8831
        %v8834 = vpack.c.b16 %v8833, %v8833
        %v8836 = vsel %vm2687, %v8834, 0
        %8838 = vmatprep.subr.bf16.mxu0 %v2790
        %8839 = vmatpush1.bf16.msra.mxu0 %v2787
        %8840 = vmatprep.subr.bf16.mxu0 0
        %8841 = vmatpush1.bf16.msra.mxu0 0
        %8842 = vmatprep.subr.bf16.mxu0 0
        %8843 = vmatpush1.bf16.msra.mxu0 0
        %8844 = vmatprep.subr.bf16.mxu0 0
        %8845 = vmatpush1.bf16.msra.mxu0 0
        %8846 = vmatprep.subr.bf16.mxu0 0
        %8847 = vmatpush1.bf16.msra.mxu0 0
        %8848 = vmatprep.subr.bf16.mxu0 0
        %8849 = vmatpush1.bf16.msra.mxu0 0
        %8850 = vmatprep.subr.bf16.mxu0 0
        %8851 = vmatpush1.bf16.msra.mxu0 0
        %8852 = vmatprep.subr.bf16.mxu0 0
        %8853 = vmatpush1.bf16.msra.mxu0 0
        %8854 = vmatprep.subr.bf16.mxu0 0
        %8855 = vmatpush1.bf16.msra.mxu0 0
        %8856 = vmatprep.subr.bf16.mxu0 0
        %8857 = vmatpush1.bf16.msra.mxu0 0
        %8858 = vmatprep.subr.bf16.mxu0 0
        %8859 = vmatpush1.bf16.msra.mxu0 0
        %8860 = vmatprep.subr.bf16.mxu0 0
        %8861 = vmatpush1.bf16.msra.mxu0 0
        %8862 = vmatprep.subr.bf16.mxu0 0
        %8863 = vmatpush1.bf16.msra.mxu0 0
        %8864 = vmatprep.subr.bf16.mxu0 0
        %8865 = vmatpush1.bf16.msra.mxu0 0
        %8866 = vmatprep.subr.bf16.mxu0 0
        %8867 = vmatpush1.bf16.msra.mxu0 0
        %8868 = vmatprep.subr.bf16.mxu0 0
        %8869 = vmatpush1.bf16.msra.mxu0 0
        %8870 = vmatprep.mubr.bf16.mxu0 0
        %8871 = vmatmul.mubr.bf16.gmra.mrb[0].mxu0 %v8836
        %v8872 = vpop.f32.mrb[0].mxu0
        %v8873 = vadd.f32 0.0, %v8872
        %v8874 = vpop.f32.mrb[0].mxu0
        %v8875 = vadd.f32 0.0, %v8874
        %v8876 = vpop.f32.mrb[0].mxu0
        %v8877 = vpop.f32.mrb[0].mxu0
        %8878 = vdwg.mxu0
        %8879 = vmatprep.subr.bf16.mxu0 %v2796
        %8880 = vmatpush1.bf16.msra.mxu0 %v2793
        %8881 = vmatprep.subr.bf16.mxu0 0
        %8882 = vmatpush1.bf16.msra.mxu0 0
        %8883 = vmatprep.subr.bf16.mxu0 0
        %8884 = vmatpush1.bf16.msra.mxu0 0
        %8885 = vmatprep.subr.bf16.mxu0 0
        %8886 = vmatpush1.bf16.msra.mxu0 0
        %8887 = vmatprep.subr.bf16.mxu0 0
        %8888 = vmatpush1.bf16.msra.mxu0 0
        %8889 = vmatprep.subr.bf16.mxu0 0
        %8890 = vmatpush1.bf16.msra.mxu0 0
        %8891 = vmatprep.subr.bf16.mxu0 0
        %8892 = vmatpush1.bf16.msra.mxu0 0
        %8893 = vmatprep.subr.bf16.mxu0 0
        %8894 = vmatpush1.bf16.msra.mxu0 0
        %8895 = vmatprep.subr.bf16.mxu0 0
        %8896 = vmatpush1.bf16.msra.mxu0 0
        %8897 = vmatprep.subr.bf16.mxu0 0
        %8898 = vmatpush1.bf16.msra.mxu0 0
        %8899 = vmatprep.subr.bf16.mxu0 0
        %8900 = vmatpush1.bf16.msra.mxu0 0
        %8901 = vmatprep.subr.bf16.mxu0 0
        %8902 = vmatpush1.bf16.msra.mxu0 0
        %8903 = vmatprep.subr.bf16.mxu0 0
        %8904 = vmatpush1.bf16.msra.mxu0 0
        %8905 = vmatprep.subr.bf16.mxu0 0
        %8906 = vmatpush1.bf16.msra.mxu0 0
        %8907 = vmatprep.subr.bf16.mxu0 0
        %8908 = vmatpush1.bf16.msra.mxu0 0
        %8909 = vmatprep.subr.bf16.mxu0 0
        %8910 = vmatpush1.bf16.msra.mxu0 0
        %8911 = vmatprep.mubr.bf16.mxu0 0
        %8912 = vmatmul.mubr.bf16.gmra.mrb[0].mxu0 %v8836
        %v8913 = vpop.f32.mrb[0].mxu0
        %v8914 = vadd.f32 0.0, %v8913
        %v8915 = vpop.f32.mrb[0].mxu0
        %v8916 = vadd.f32 0.0, %v8915
        %v8917 = vpop.f32.mrb[0].mxu0
        %v8918 = vpop.f32.mrb[0].mxu0
        %8919 = vdwg.mxu0
        %v8924 = vcombine.low %v8873, %v8875
        %v8925 = vcombine.low %v8914, %v8916
        %v8927 = vunpack.c.l.s4 1983009808
        %v8928 = vunpack.c.0.s8 %v8927
        %v8929 = vlaneseq
        %v8930 = vshrl.u32 %v8929, 7
        %v8931 = vsub.s32 %v8928, %v8930
        %v8932 = vrot.slane %v8924, %v8931
        %v8934 = vunpack.c.l.s4 1983009808
        %v8935 = vunpack.c.0.s8 %v8934
        %v8936 = vlaneseq
        %v8937 = vshrl.u32 %v8936, 7
        %v8938 = vsub.s32 %v8935, %v8937
        %v8939 = vrot.slane %v8925, %v8938
        %v8940 = vcombine.low %v8932, %v8939
        %v8942 = vadd.f32 %v8826, %v8940
        %v8947 = vcombine.low %v7489, %v7491
        %v8948 = vcombine.low %v7530, %v7532
        %v8950 = vunpack.c.l.s4 1983009808
        %v8951 = vunpack.c.0.s8 %v8950
        %v8952 = vlaneseq
        %v8953 = vshrl.u32 %v8952, 7
        %v8954 = vsub.s32 %v8951, %v8953
        %v8955 = vrot.slane %v8947, %v8954
        %v8957 = vunpack.c.l.s4 1983009808
        %v8958 = vunpack.c.0.s8 %v8957
        %v8959 = vlaneseq
        %v8960 = vshrl.u32 %v8959, 7
        %v8961 = vsub.s32 %v8958, %v8960
        %v8962 = vrot.slane %v8948, %v8961
        %v8963 = vcombine.low %v8955, %v8962
        %v8965 = vadd.f32 %v8942, %v8963
        %v8966 = vadd.f32 %v8965, %v2959
        %v8967 = vxor.u32 %v8966, 2147483648
        %v8968 = vmul.f32 %v8967, 1.442695
        %v8969 = vpow.pop %v8968
        %v8970 = vadd.f32 %v8969, 1.0
        %v8971 = vrcp.pop %v8970
        %v8972 = vmul.f32 1.0, %v8971
        %v8974 = vrot.slane %v8966, 2
        %v8976 = vxor.u32 %v8974, 2147483648
        %v8977 = vmul.f32 %v8976, 1.442695
        %v8978 = vpow.pop %v8977
        %v8979 = vadd.f32 %v8978, 1.0
        %v8980 = vrcp.pop %v8979
        %v8981 = vmul.f32 1.0, %v8980
        %v8982 = vrot.slane %v8966, 4
        %v8984 = vtanh.pop %v8982
        %v8985 = vrot.slane %v8966, 6
        %v8987 = vxor.u32 %v8985, 2147483648
        %v8988 = vmul.f32 %v8987, 1.442695
        %v8989 = vpow.pop %v8988
        %v8990 = vadd.f32 %v8989, 1.0
        %v8991 = vrcp.pop %v8990
        %v8992 = vmul.f32 1.0, %v8991
        %v8993 = vmul.f32 %v8981, %v7053
        %v8994 = vmul.f32 %v8972, %v8984
        %v8995 = vadd.f32 %v8993, %v8994
        %v8996 = vtanh.pop %v8995
        %v8997 = vmul.f32 %v8992, %v8996
        %v8998 = vpack.c.bf16 %v8997, %v8997
        %8999 = vmatprep.subr.bf16.mxu0 %v3091
        %9000 = vmatpush1.bf16.msra.mxu0 %v3090
        %9001 = vmatprep.subr.bf16.mxu0 %v3095
        %9002 = vmatpush1.bf16.msra.mxu0 %v3094
        %9003 = vmatprep.subr.bf16.mxu0 %v3099
        %9004 = vmatpush1.bf16.msra.mxu0 %v3098
        %9005 = vmatprep.subr.bf16.mxu0 %v3103
        %9006 = vmatpush1.bf16.msra.mxu0 %v3102
        %9007 = vmatprep.subr.bf16.mxu0 %v3107
        %9008 = vmatpush1.bf16.msra.mxu0 %v3106
        %9009 = vmatprep.subr.bf16.mxu0 %v3111
        %9010 = vmatpush1.bf16.msra.mxu0 %v3110
        %9011 = vmatprep.subr.bf16.mxu0 %v3115
        %9012 = vmatpush1.bf16.msra.mxu0 %v3114
        %9013 = vmatprep.subr.bf16.mxu0 %v3119
        %9014 = vmatpush1.bf16.msra.mxu0 %v3118
        %9015 = vmatprep.subr.bf16.mxu0 0
        %9016 = vmatpush1.bf16.msra.mxu0 0
        %9017 = vmatprep.subr.bf16.mxu0 0
        %9018 = vmatpush1.bf16.msra.mxu0 0
        %9019 = vmatprep.subr.bf16.mxu0 0
        %9020 = vmatpush1.bf16.msra.mxu0 0
        %9021 = vmatprep.subr.bf16.mxu0 0
        %9022 = vmatpush1.bf16.msra.mxu0 0
        %9023 = vmatprep.subr.bf16.mxu0 0
        %9024 = vmatpush1.bf16.msra.mxu0 0
        %9025 = vmatprep.subr.bf16.mxu0 0
        %9026 = vmatpush1.bf16.msra.mxu0 0
        %9027 = vmatprep.subr.bf16.mxu0 0
        %9028 = vmatpush1.bf16.msra.mxu0 0
        %9029 = vmatprep.subr.bf16.mxu0 0
        %9030 = vmatpush1.bf16.msra.mxu0 0
        %9031 = vmatprep.mubr.bf16.mxu0 0
        %9032 = vmatmul.mubr.bf16.gmra.mrb[0].mxu0 %v8998
        %v9033 = vpop.f32.mrb[0].mxu0
        %v9034 = vadd.f32 %v7369, %v9033
        %v9035 = vpop.f32.mrb[0].mxu0
        %v9036 = vadd.f32 %v7408, %v9035
        %v9037 = vpop.f32.mrb[0].mxu0
        %v9038 = vpop.f32.mrb[0].mxu0
        %9039 = vdwg.mxu0
        %9040 = vmatprep.subr.bf16.mxu0 %v3093
        %9041 = vmatpush1.bf16.msra.mxu0 %v3092
        %9042 = vmatprep.subr.bf16.mxu0 %v3097
        %9043 = vmatpush1.bf16.msra.mxu0 %v3096
        %9044 = vmatprep.subr.bf16.mxu0 %v3101
        %9045 = vmatpush1.bf16.msra.mxu0 %v3100
        %9046 = vmatprep.subr.bf16.mxu0 %v3105
        %9047 = vmatpush1.bf16.msra.mxu0 %v3104
        %9048 = vmatprep.subr.bf16.mxu0 %v3109
        %9049 = vmatpush1.bf16.msra.mxu0 %v3108
        %9050 = vmatprep.subr.bf16.mxu0 %v3113
        %9051 = vmatpush1.bf16.msra.mxu0 %v3112
        %9052 = vmatprep.subr.bf16.mxu0 %v3117
        %9053 = vmatpush1.bf16.msra.mxu0 %v3116
        %9054 = vmatprep.subr.bf16.mxu0 %v3121
        %9055 = vmatpush1.bf16.msra.mxu0 %v3120
        %9056 = vmatprep.subr.bf16.mxu0 0
        %9057 = vmatpush1.bf16.msra.mxu0 0
        %9058 = vmatprep.subr.bf16.mxu0 0
        %9059 = vmatpush1.bf16.msra.mxu0 0
        %9060 = vmatprep.subr.bf16.mxu0 0
        %9061 = vmatpush1.bf16.msra.mxu0 0
        %9062 = vmatprep.subr.bf16.mxu0 0
        %9063 = vmatpush1.bf16.msra.mxu0 0
        %9064 = vmatprep.subr.bf16.mxu0 0
        %9065 = vmatpush1.bf16.msra.mxu0 0
        %9066 = vmatprep.subr.bf16.mxu0 0
        %9067 = vmatpush1.bf16.msra.mxu0 0
        %9068 = vmatprep.subr.bf16.mxu0 0
        %9069 = vmatpush1.bf16.msra.mxu0 0
        %9070 = vmatprep.subr.bf16.mxu0 0
        %9071 = vmatpush1.bf16.msra.mxu0 0
        %9072 = vmatprep.mubr.bf16.mxu0 0
        %9073 = vmatmul.mubr.bf16.gmra.mrb[0].mxu0 %v8998
        %v9074 = vpop.f32.mrb[0].mxu0
        %v9075 = vadd.f32 %v7410, %v9074
        %v9076 = vpop.f32.mrb[0].mxu0
        %v9077 = vadd.f32 %v7449, %v9076
        %v9078 = vpop.f32.mrb[0].mxu0
        %v9079 = vpop.f32.mrb[0].mxu0
        %9080 = vdwg.mxu0
        %v9081 = vadd.f32 %v9034, %v3240
        %v9082 = vadd.f32 %v9036, %v3244
        %v9083 = vadd.f32 %v9075, %v3248
        %v9084 = vadd.f32 %v9077, %v3252
        %v9085 = vxor.u32 %v9081, 2147483648
        %v9086 = vmul.f32 %v9085, 1.442695
        %v9087 = vpow.pop %v9086
        %v9088 = vadd.f32 %v9087, 1.0
        %v9089 = vrcp.pop %v9088
        %v9090 = vmul.f32 1.0, %v9089
        %v9091 = vxor.u32 %v9082, 2147483648
        %v9092 = vmul.f32 %v9091, 1.442695
        %v9093 = vpow.pop %v9092
        %v9094 = vadd.f32 %v9093, 1.0
        %v9095 = vrcp.pop %v9094
        %v9096 = vmul.f32 1.0, %v9095
        %v9097 = vtanh.pop %v9083
        %v9098 = vxor.u32 %v9084, 2147483648
        %v9099 = vmul.f32 %v9098, 1.442695
        %v9100 = vpow.pop %v9099
        %v9101 = vadd.f32 %v9100, 1.0
        %v9102 = vrcp.pop %v9101
        %v9103 = vmul.f32 1.0, %v9102
        %v9104 = vmul.f32 %v9096, %v7164
        %v9105 = vmul.f32 %v9090, %v9097
        %v9106 = vadd.f32 %v9104, %v9105
        %v9107 = vtanh.pop %v9106
        %v9108 = vmul.f32 %v9103, %v9107
        %s9109 = scalar_lea.vmem %s524, 6 [#allocation12]
        %9110 = vst [vmem:[%s9109] sm:$0x3] %v9108
        %v9111 = vlaneseq
        %v9112 = vshrl.u32 %v9111, 7
        %v9113 = vsub.s32 %v1857, %v9112
        %v9114 = vrot.slane %v8561, %v9113
        %v9115 = vlaneseq
        %v9116 = vshrl.u32 %v9115, 7
        %v9117 = vsub.s32 %v1862, %v9116
        %v9118 = vrot.slane %v8566, %v9117
        %v9119 = vsel %vm1867, %v9118, %v9114
        %v9120 = vlaneseq
        %v9121 = vshrl.u32 %v9120, 7
        %v9122 = vsub.s32 %v1869, %v9121
        %v9123 = vrot.slane %v8571, %v9122
        %v9124 = vsel %vm1874, %v9123, %v9119
        %v9125 = vlaneseq
        %v9126 = vshrl.u32 %v9125, 7
        %v9127 = vsub.s32 %v1876, %v9126
        %v9128 = vrot.slane %v8576, %v9127
        %v9129 = vsel %vm1881, %v9128, %v9124
        %v9130 = vlaneseq
        %v9131 = vshrl.u32 %v9130, 7
        %v9132 = vsub.s32 %v1883, %v9131
        %v9133 = vrot.slane %v8581, %v9132
        %v9134 = vsel %vm1888, %v9133, %v9129
        %v9135 = vlaneseq
        %v9136 = vshrl.u32 %v9135, 7
        %v9137 = vsub.s32 %v1890, %v9136
        %v9138 = vrot.slane %v8586, %v9137
        %v9139 = vsel %vm1895, %v9138, %v9134
        %v9140 = vlaneseq
        %v9141 = vshrl.u32 %v9140, 7
        %v9142 = vsub.s32 %v1897, %v9141
        %v9143 = vrot.slane %v8591, %v9142
        %v9144 = vsel %vm1902, %v9143, %v9139
        %v9145 = vlaneseq
        %v9146 = vshrl.u32 %v9145, 7
        %v9147 = vsub.s32 %v1904, %v9146
        %v9148 = vrot.slane %v8596, %v9147
        %v9149 = vsel %vm1909, %v9148, %v9144
        %v9150 = vlaneseq
        %v9151 = vshrl.u32 %v9150, 7
        %v9152 = vsub.s32 %v1911, %v9151
        %v9153 = vrot.slane %v8601, %v9152
        %v9154 = vsel %vm1916, %v9153, %v9149
        %v9155 = vlaneseq
        %v9156 = vshrl.u32 %v9155, 7
        %v9157 = vsub.s32 %v1918, %v9156
        %v9158 = vrot.slane %v8606, %v9157
        %v9159 = vsel %vm1923, %v9158, %v9154
        %v9160 = vlaneseq
        %v9161 = vshrl.u32 %v9160, 7
        %v9162 = vsub.s32 %v1925, %v9161
        %v9163 = vrot.slane %v8611, %v9162
        %v9164 = vsel %vm1930, %v9163, %v9159
        %v9165 = vlaneseq
        %v9166 = vshrl.u32 %v9165, 7
        %v9167 = vsub.s32 %v1932, %v9166
        %v9168 = vrot.slane %v8616, %v9167
        %v9169 = vsel %vm1937, %v9168, %v9164
        %v9170 = vlaneseq
        %v9171 = vshrl.u32 %v9170, 7
        %v9172 = vsub.s32 %v1939, %v9171
        %v9173 = vrot.slane %v8621, %v9172
        %v9174 = vsel %vm1944, %v9173, %v9169
        %v9175 = vlaneseq
        %v9176 = vshrl.u32 %v9175, 7
        %v9177 = vsub.s32 %v1946, %v9176
        %v9178 = vrot.slane %v8626, %v9177
        %v9179 = vsel %vm1951, %v9178, %v9174
        %v9180 = vlaneseq
        %v9181 = vshrl.u32 %v9180, 7
        %v9182 = vsub.s32 %v1953, %v9181
        %v9183 = vrot.slane %v8631, %v9182
        %v9184 = vsel %vm1958, %v9183, %v9179
        %v9185 = vlaneseq
        %v9186 = vshrl.u32 %v9185, 7
        %v9187 = vsub.s32 %v1960, %v9186
        %v9188 = vrot.slane %v8636, %v9187
        %v9189 = vsel %vm1965, %v9188, %v9184
        %v9190 = vlaneseq
        %v9191 = vshrl.u32 %v9190, 7
        %v9192 = vsub.s32 %v1857, %v9191
        %v9193 = vrot.slane %v8641, %v9192
        %v9194 = vlaneseq
        %v9195 = vshrl.u32 %v9194, 7
        %v9196 = vsub.s32 %v1862, %v9195
        %v9197 = vrot.slane %v8646, %v9196
        %v9198 = vsel %vm1867, %v9197, %v9193
        %v9199 = vlaneseq
        %v9200 = vshrl.u32 %v9199, 7
        %v9201 = vsub.s32 %v1869, %v9200
        %v9202 = vrot.slane %v8651, %v9201
        %v9203 = vsel %vm1874, %v9202, %v9198
        %v9204 = vlaneseq
        %v9205 = vshrl.u32 %v9204, 7
        %v9206 = vsub.s32 %v1876, %v9205
        %v9207 = vrot.slane %v8656, %v9206
        %v9208 = vsel %vm1881, %v9207, %v9203
        %v9209 = vlaneseq
        %v9210 = vshrl.u32 %v9209, 7
        %v9211 = vsub.s32 %v1883, %v9210
        %v9212 = vrot.slane %v8661, %v9211
        %v9213 = vsel %vm1888, %v9212, %v9208
        %v9214 = vlaneseq
        %v9215 = vshrl.u32 %v9214, 7
        %v9216 = vsub.s32 %v1890, %v9215
        %v9217 = vrot.slane %v8666, %v9216
        %v9218 = vsel %vm1895, %v9217, %v9213
        %v9219 = vlaneseq
        %v9220 = vshrl.u32 %v9219, 7
        %v9221 = vsub.s32 %v1897, %v9220
        %v9222 = vrot.slane %v8671, %v9221
        %v9223 = vsel %vm1902, %v9222, %v9218
        %v9224 = vlaneseq
        %v9225 = vshrl.u32 %v9224, 7
        %v9226 = vsub.s32 %v1904, %v9225
        %v9227 = vrot.slane %v8676, %v9226
        %v9228 = vsel %vm1909, %v9227, %v9223
        %v9229 = vlaneseq
        %v9230 = vshrl.u32 %v9229, 7
        %v9231 = vsub.s32 %v1911, %v9230
        %v9232 = vrot.slane %v8681, %v9231
        %v9233 = vsel %vm1916, %v9232, %v9228
        %v9234 = vlaneseq
        %v9235 = vshrl.u32 %v9234, 7
        %v9236 = vsub.s32 %v1918, %v9235
        %v9237 = vrot.slane %v8686, %v9236
        %v9238 = vsel %vm1923, %v9237, %v9233
        %v9239 = vlaneseq
        %v9240 = vshrl.u32 %v9239, 7
        %v9241 = vsub.s32 %v1925, %v9240
        %v9242 = vrot.slane %v8691, %v9241
        %v9243 = vsel %vm1930, %v9242, %v9238
        %v9244 = vlaneseq
        %v9245 = vshrl.u32 %v9244, 7
        %v9246 = vsub.s32 %v1932, %v9245
        %v9247 = vrot.slane %v8696, %v9246
        %v9248 = vsel %vm1937, %v9247, %v9243
        %v9249 = vlaneseq
        %v9250 = vshrl.u32 %v9249, 7
        %v9251 = vsub.s32 %v1939, %v9250
        %v9252 = vrot.slane %v8701, %v9251
        %v9253 = vsel %vm1944, %v9252, %v9248
        %v9254 = vlaneseq
        %v9255 = vshrl.u32 %v9254, 7
        %v9256 = vsub.s32 %v1946, %v9255
        %v9257 = vrot.slane %v8706, %v9256
        %v9258 = vsel %vm1951, %v9257, %v9253
        %v9259 = vlaneseq
        %v9260 = vshrl.u32 %v9259, 7
        %v9261 = vsub.s32 %v1953, %v9260
        %v9262 = vrot.slane %v8711, %v9261
        %v9263 = vsel %vm1958, %v9262, %v9258
        %v9264 = vlaneseq
        %v9265 = vshrl.u32 %v9264, 7
        %v9266 = vsub.s32 %v1960, %v9265
        %v9267 = vrot.slane %v8716, %v9266
        %v9268 = vsel %vm1965, %v9267, %v9263
        %v9269 = vsel %vm2046, %v9268, %v9189
        %s9271 = scalar_lea.vmem %s531, 6 [#allocation13]
        %9272 = vst [vmem:[%s9271] sm:$0x3] %v9269
        %9273 = vst [vmem:[#allocation2] sm:$0x3] %v8997
        %9274 = vst [vmem:[#allocation3] sm:$0x3] %v8995
        %9275 = vst [vmem:[%s771] sm:$0x3] %v9108
        %9276 = vst [vmem:[%s773] sm:$0x3] %v9106
        %s9277 = sand.u32 %s321, 1
        %s9278 = scalar_lea.sflag [#allocation6], %s9277
        %s9279 = sand.u32 %s321, 1
        %s9280 = smul.addr %s9279, 8
        %s9281 = scalar_lea.vmem [#allocation12], %s9280
        %s9282 = sand.u32 %s347, 1
        %s9283 = scalar_lea.sflag [#allocation14], %s9282
        %s9284 = sand.u32 %s347, 1
        %s9285 = smul.addr %s9284, 8
        %s9286 = scalar_lea.vmem [#allocation13], %s9285
        // Predicated region
        $region93: #{tpu_custom_call.1} parent=71 // pred_check
          %p9287 = pneg %p331
        $region94: #{tpu_custom_call.1} parent=71 // pred_check_branch
          %9289 = sbr.rel (%p9287) target = $region96
        $region95: #{tpu_custom_call.1} parent=71 // pred_region
          %s9290 = smul.u32 4, %s35
          %s9292 = ssub.s32 128, 128
          %9293 = vsyncadd %s9278, %s9292
          %s9294 = smul.addr %s9290, 32
          %s9295 = scalar_lea.hbm %s13, %s9294
          %s9296 = sshll.u32 %s9281, 4
          %s9297 = int_to_ptr.vmem [resolvable:$true] %s9296
          %9302 = dma.vmem_to_hbm [thread:$0]  %s9297, 128, %s9295, %s9278, 32, 32, 2
        $region96: #{tpu_custom_call.1} parent=71 // pred_fallthru
          _
        // Predicated region
        $region97: #{tpu_custom_call.1} parent=71 // pred_check
          %p9303 = pneg %p357
        $region98: #{tpu_custom_call.1} parent=71 // pred_check_branch
          %9305 = sbr.rel (%p9303) target = $region100
        $region99: #{tpu_custom_call.1} parent=71 // pred_region
          %s9306 = smul.u32 4, %s35
          %s9308 = ssub.s32 128, 128
          %9309 = vsyncadd %s9283, %s9308
          %s9310 = smul.addr %s9306, 32
          %s9311 = scalar_lea.hbm %s14, %s9310
          %s9312 = sshll.u32 %s9286, 4
          %s9313 = int_to_ptr.vmem [resolvable:$true] %s9312
          %9318 = dma.vmem_to_hbm [thread:$0]  %s9313, 128, %s9311, %s9283, 32, 32, 2
        $region100: #{tpu_custom_call.1} parent=71 // pred_fallthru
          _
      $region72: #{tpu_custom_call.1} parent=5 // pred_fallthru
        _
      %p9319 = scmp.le.s32.totalorder 2, %s30
      // Predicated region
      $region101: #{tpu_custom_call.1} parent=5 // pred_check
        %p9320 = pneg %p9319
      $region102: #{tpu_custom_call.1} parent=5 // pred_check_branch
        %9322 = sbr.rel (%p9320) target = $region104
      $region103: #{tpu_custom_call.1} parent=5 // pred_region
        %s9323 = ssub.s32 %s30, 2
        // Predicated region
        $region105: #{tpu_custom_call.1} parent=103 // pred_check
          %p9324 = pneg %p337
        $region106: #{tpu_custom_call.1} parent=103 // pred_check_branch
          %9326 = sbr.rel (%p9324) target = $region108
        $region107: #{tpu_custom_call.1} parent=103 // pred_region
          %s9327 = sand.u32 %s322, 1
          %s9328 = scalar_lea.sflag [#allocation6], %s9327
          %s9329 = sand.u32 %s322, 1
          %s9330 = smul.addr %s9329, 8
          %s9331 = scalar_lea.vmem [#allocation12], %s9330
          %9332 = dma.done %s9328, 128
        $region108: #{tpu_custom_call.1} parent=103 // pred_fallthru
          _
        // Predicated region
        $region109: #{tpu_custom_call.1} parent=103 // pred_check
          %p9333 = pneg %p363
        $region110: #{tpu_custom_call.1} parent=103 // pred_check_branch
          %9335 = sbr.rel (%p9333) target = $region112
        $region111: #{tpu_custom_call.1} parent=103 // pred_region
          %s9336 = sand.u32 %s348, 1
          %s9337 = scalar_lea.sflag [#allocation14], %s9336
          %s9338 = sand.u32 %s348, 1
          %s9339 = smul.addr %s9338, 8
          %s9340 = scalar_lea.vmem [#allocation13], %s9339
          %9341 = dma.done %s9337, 128
        $region112: #{tpu_custom_call.1} parent=103 // pred_fallthru
          _
      $region104: #{tpu_custom_call.1} parent=5 // pred_fallthru
        _
    $region6: #{tpu_custom_call.1} parent=1 // loop_footer
      %s34 = sadd.s32 1, %s30
    $region7: #{tpu_custom_call.1} parent=1 // loop_footer_branch
      %29 = sbr.rel target = $region3
    $region8: #{tpu_custom_call.1} parent=1 // loop_exit
      _
    %9342 = vsyncpa [#allocation5], 1
    %s9343 = scalar_lea.sflag [#allocation5], 1
    %9344 = vsyncpa %s9343, 1
    %9345 = vsyncpa [#allocation8], 1
    %9346 = vsyncpa [#allocation11], 1
    %9347 = vsyncpa [#allocation6], 1
    %s9348 = scalar_lea.sflag [#allocation6], 1
    %9349 = vsyncpa %s9348, 1
    %9350 = vsyncpa [#allocation14], 1
    %s9351 = scalar_lea.sflag [#allocation14], 1
    %9352 = vsyncpa %s9351, 1

</llo_original>
